<compile_context>
chip_gen: v7x
topology: tpu7x:2x2x1
jax: 0.10.0
libtpu: 0.0.40
codegen_flags: <defaults>
</compile_context>

<pallas_src>
import math
import functools

import jax
import jax.numpy as jnp
from jax.experimental import pallas as pl
from jax.experimental.pallas import tpu as pltpu


_MXU_DTYPE = jnp.bfloat16     # matmul operand dtype (f32 accumulation)
_ACT_DTYPE = jnp.bfloat16     # inter-layer activation carrier dtype


# ------------------------------- helpers ------------------------------------

def _round_up(x, m):
    return ((x + m - 1) // m) * m


def _row_block(n, target=512, mult=8):
    """Row-block size (multiple of `mult`, >=2 blocks whenever easy)."""
    nm = _round_up(max(n, 1), mult)
    bb = min(target, nm)
    if bb == nm and nm >= 2 * mult:      # split so both v7x TensorCores get work
        bb = _round_up(nm // 2, mult)
    return bb, _round_up(n, bb)


def _pick_bb(n_seq, seq_len):
    """Sequences packed per attention block.

    rows = bb*seq_len must be a multiple of 8.  bb is kept small (masked score
    matmul / exp / XLU reductions scale with rows^2 while useful work is only
    bb*seq_len^2) and we prefer >=2 grid steps so both v7x TensorCores get
    work, then larger MXU row tiles, then less sequence padding.
    """
    g = 8 // math.gcd(seq_len, 8)                      # bb must be multiple of g
    max_bb = max(g, (max(1, 32 // seq_len) // g) * g)  # cap rows around 32
    best, best_key = g, None
    for bb in range(g, max_bb + 1, g):
        n_pad = -(-n_seq // bb) * bb
        key = (0 if n_pad // bb >= 2 else 1, -bb, n_pad - n_seq)
        if best_key is None or key < best_key:
            best, best_key = bb, key
    return best


def _mm(a, b):
    """MXU matmul: bf16 operands (no-op if already bf16), f32 accumulation."""
    return jnp.dot(a.astype(_MXU_DTYPE), b.astype(_MXU_DTYPE),
                   preferred_element_type=jnp.float32)


def _mm_nt(a, b):
    """a @ b.T without materializing the transpose (contract last dims)."""
    return jax.lax.dot_general(
        a.astype(_MXU_DTYPE), b.astype(_MXU_DTYPE),
        dimension_numbers=(((1,), (1,)), ((), ())),
        preferred_element_type=jnp.float32)


def _ln2d(x, g, b, eps):
    mu = jnp.mean(x, axis=-1, keepdims=True)
    d = x - mu
    var = jnp.mean(d * d, axis=-1, keepdims=True)
    return d * jax.lax.rsqrt(var + eps) * g + b


# ----------------------------- Pallas kernels -------------------------------

def _layernorm_kernel(x_ref, g_ref, b_ref, o_ref, *, eps):
    x = x_ref[...].astype(jnp.float32)
    o_ref[...] = _ln2d(x, g_ref[...], b_ref[...], eps)


def _ff_kernel(x_ref, w1_ref, b1_ref, w2_ref, b2_ref, o_ref, *, final_act):
    # Fused Linear -> ReLU -> Linear (+ optional sigmoid): one HBM round-trip.
    h = jnp.maximum(_mm(x_ref[...], w1_ref[...]) + b1_ref[...], 0.0)
    y = _mm(h, w2_ref[...]) + b2_ref[...]
    if final_act == "sigmoid":
        y = 1.0 / (1.0 + jnp.exp(-y))          # exact: this is the final prob
    o_ref[...] = y.astype(o_ref.dtype)


def _encoder_layer_kernel(x_ref, wqkv_ref, bqkv_ref, wo_ref, bo_ref,
                          ln1g_ref, ln1b_ref, w1_ref, b1_ref, w2_ref, b2_ref,
                          ln2g_ref, ln2b_ref, o_ref, *, num_heads, seq_len, eps):
    """Fused post-norm TransformerEncoderLayer on a block of packed sequences.

    x_ref block is (rows, H) with rows = bb * seq_len (bb whole sequences).
    The block-diagonal mask (attend within a sequence only) is generated
    in-kernel from iota — no rows^2 HBM input.
    """
    x = x_ref[...].astype(jnp.float32)                    # (rows, H)
    rows, H = x.shape
    dh = H // num_heads
    scale = 1.0 / math.sqrt(dh)

    # seq_id = row // seq_len, via float floor((i+0.5)/L) (exact for these
    # integer ranges; avoids relying on integer-division lowering).
    inv_l = 1.0 / float(seq_len)
    ri = jax.lax.broadcasted_iota(jnp.int32, (rows, rows), 0).astype(jnp.float32)
    ci = jax.lax.broadcasted_iota(jnp.int32, (rows, rows), 1).astype(jnp.float32)
    same_seq = jnp.floor((ri + 0.5) * inv_l) == jnp.floor((ci + 0.5) * inv_l)
    bias = jnp.where(same_seq, 0.0, -1e30)                # f32, added post-MXU

    qkv = _mm(x, wqkv_ref[...]) + bqkv_ref[...]           # (rows, 3H) f32
    qkv_bf = qkv.astype(_MXU_DTYPE)                       # single cast for Q/K/V

    ctx = []
    for h in range(num_heads):                            # heads = lane slices
        q = qkv_bf[:, h * dh:(h + 1) * dh]
        k = qkv_bf[:, H + h * dh:H + (h + 1) * dh]
        v = qkv_bf[:, 2 * H + h * dh:2 * H + (h + 1) * dh]
        s = _mm_nt(q, k) * scale + bias                   # QK^T, no transpose
        s = s - jnp.max(s, axis=-1, keepdims=True)
        p = jnp.exp(s)
        p = p * pl.reciprocal(jnp.sum(p, axis=-1, keepdims=True), approx=True)
        ctx.append(_mm(p, v))                             # (rows, dh) f32
    ctx = jnp.concatenate(ctx, axis=-1)                   # (rows, H)
    attn = _mm(ctx, wo_ref[...]) + bo_ref[...]            # ONE K=H out-proj

    h1 = _ln2d(x + attn, ln1g_ref[...], ln1b_ref[...], eps)       # res + LN1
    f = jnp.maximum(_mm(h1, w1_ref[...]) + b1_ref[...], 0.0)      # FFN (ReLU)
    f = _mm(f, w2_ref[...]) + b2_ref[...]
    o_ref[...] = _ln2d(h1 + f, ln2g_ref[...], ln2b_ref[...], eps).astype(
        o_ref.dtype)                                              # res + LN2


# ------------------------------ wrappers -------------------------------------

def layernorm(x, g, b, eps=1e-5):
    orig = x.shape
    H = orig[-1]
    x2 = x.reshape(-1, H)
    M = x2.shape[0]
    mult = 32 // jnp.dtype(x2.dtype).itemsize            # 8 for f32, 16 for bf16
    tm, Mp = _row_block(M, mult=mult)
    if Mp != M:
        x2 = jnp.pad(x2, ((0, Mp - M), (0, 0)))
    out = pl.pallas_call(
        functools.partial(_layernorm_kernel, eps=eps),
        out_shape=jax.ShapeDtypeStruct((Mp, H), jnp.float32),
        grid=(Mp // tm,),
        in_specs=[pl.BlockSpec((tm, H), lambda i: (i, 0)),
                  pl.BlockSpec((1, H), lambda i: (0, 0)),
                  pl.BlockSpec((1, H), lambda i: (0, 0))],
        out_specs=pl.BlockSpec((tm, H), lambda i: (i, 0)),
        compiler_params=pltpu.CompilerParams(dimension_semantics=("parallel",)),
    )(x2, g, b)
    return out[:M].reshape(orig)


def feedforward(x, p, final_act=None, pad_out=None):
    """Fused Linear -> ReLU -> Linear (+ optional sigmoid)."""
    orig = x.shape
    K = orig[-1]
    F = p["l1"]["w"].shape[1]
    N = p["l2"]["w"].shape[1]
    x2 = x.reshape(-1, K)
    M = x2.shape[0]
    tm, Mp = _row_block(M)
    if Mp != M:
        x2 = jnp.pad(x2, ((0, Mp - M), (0, 0)))
    w2, b2 = p["l2"]["w"], p["l2"]["b"]
    Np = N
    if pad_out is not None and pad_out > N:               # lane-dense output
        Np = pad_out
        w2 = jnp.pad(w2, ((0, 0), (0, Np - N)))
        b2 = jnp.pad(b2, ((0, 0), (0, Np - N)))
    # Pre-cast matmul weights to bf16 outside the kernel; biases stay f32.
    w1 = p["l1"]["w"].astype(_MXU_DTYPE)
    w2 = w2.astype(_MXU_DTYPE)
    out = pl.pallas_call(
        functools.partial(_ff_kernel, final_act=final_act),
        out_shape=jax.ShapeDtypeStruct((Mp, Np), jnp.float32),
        grid=(Mp // tm,),
        in_specs=[pl.BlockSpec((tm, K), lambda i: (i, 0)),
                  pl.BlockSpec((K, F), lambda i: (0, 0)),
                  pl.BlockSpec((1, F), lambda i: (0, 0)),
                  pl.BlockSpec((F, Np), lambda i: (0, 0)),
                  pl.BlockSpec((1, Np), lambda i: (0, 0))],
        out_specs=pl.BlockSpec((tm, Np), lambda i: (i, 0)),
        compiler_params=pltpu.CompilerParams(dimension_semantics=("parallel",)),
    )(x2, w1, p["l1"]["b"], w2, b2)
    return out[:M, :N].reshape(orig[:-1] + (N,))


def encoder_layer(x2, p, num_heads, rows, seq_len):
    Rp, H = x2.shape
    c0 = lambda i: (0, 0)
    bf = lambda a: a.astype(_MXU_DTYPE)                   # pre-cast outside kernel
    # bf16 carrier only when the row block respects bf16 sublane tiling.
    out_dtype = _ACT_DTYPE if (rows % 16 == 0 or rows == Rp) else jnp.float32
    # Generous working-set-derived VMEM bound, clamped to [8 MiB, 32 MiB].
    est = 4 * (8 * rows * H + 8 * rows * rows + 10 * H * H + 64 * H) * 4
    vmem_limit = int(min(32 << 20, max(8 << 20, est)))
    return pl.pallas_call(
        functools.partial(_encoder_layer_kernel, num_heads=num_heads,
                          seq_len=seq_len, eps=1e-5),
        out_shape=jax.ShapeDtypeStruct((Rp, H), out_dtype),
        grid=(Rp // rows,),
        in_specs=[pl.BlockSpec((rows, H), lambda i: (i, 0)),
                  pl.BlockSpec((H, 3 * H), c0), pl.BlockSpec((1, 3 * H), c0),
                  pl.BlockSpec((H, H), c0), pl.BlockSpec((1, H), c0),
                  pl.BlockSpec((1, H), c0), pl.BlockSpec((1, H), c0),
                  pl.BlockSpec((H, H), c0), pl.BlockSpec((1, H), c0),
                  pl.BlockSpec((H, H), c0), pl.BlockSpec((1, H), c0),
                  pl.BlockSpec((1, H), c0), pl.BlockSpec((1, H), c0)],
        out_specs=pl.BlockSpec((rows, H), lambda i: (i, 0)),
        compiler_params=pltpu.CompilerParams(
            dimension_semantics=("parallel",),
            vmem_limit_bytes=vmem_limit),
    )(x2, bf(p["in_w"]), p["in_b"], bf(p["out_w"]), p["out_b"],
      p["ln1_g"], p["ln1_b"], bf(p["lin1_w"]), p["lin1_b"],
      bf(p["lin2_w"]), p["lin2_b"], p["ln2_g"], p["ln2_b"])


def transformer_module(x, p, num_heads):
    """x: (L, Nb, H) seq-major.  Returns the final-norm'ed last token (Nb, H).

    Equals TransformerModule(x)[-1] of the reference: the encoder's final
    LayerNorm is per-token, so applying it only to the last token is exact.
    """
    L, Nb, H = x.shape
    xb = jnp.transpose(x, (1, 0, 2))                 # (Nb, L, H) batch-major
    bb = _pick_bb(Nb, L)                             # sequences per kernel block
    Nbp = _round_up(Nb, bb)
    if Nbp != Nb:
        xb = jnp.pad(xb, ((0, Nbp - Nb), (0, 0), (0, 0)))   # zero-pad sequences
    rows = bb * L
    x2 = xb.reshape(Nbp * L, H)                      # row-major flatten (free)

    for lp in p["layers"]:
        x2 = encoder_layer(x2, lp, num_heads, rows, L)

    last = x2.reshape(Nbp, L, H)[:Nb, L - 1, :]      # (Nb, H) last token
    return layernorm(last, p["norm_g"], p["norm_b"])


def make_positional_encoding(max_len, d_model):
    pos = jnp.arange(max_len, dtype=jnp.float32)[:, None]
    div = jnp.exp(jnp.arange(0, d_model, 2, dtype=jnp.float32)
                  * (-math.log(10000.0) / d_model))
    pe = jnp.zeros((max_len, d_model), jnp.float32)
    pe = pe.at[:, 0::2].set(jnp.sin(pos * div))
    pe = pe.at[:, 1::2].set(jnp.cos(pos * div))
    return pe


# ------------------------------- forward ------------------------------------

def spatial_first_transformer_forward(params, state_trace, body_trace,
                                      description, *, num_heads):
    H = params["query"].shape[0]

    # dim_adjust with the sensory / linguistic one-hot folded into its bias,
    # and the whole (linear) dim_adjust folded into each fc_cast Feedforward:
    #   dim_adjust(ff(x) + pe) = relu(xW1+b1)@(W2 Wa) + (b2 Wa + ba') + pe@Wa
    dw, db = params["dim_adjust"]["w"], params["dim_adjust"]["b"]
    w_main = dw[:H]                                   # (H, H)
    b_sens = db + dw[H][None, :]
    b_ling = db + dw[H + 1][None, :]

    def fold(ff, b_adj):
        return {"l1": ff["l1"],
                "l2": {"w": ff["l2"]["w"] @ w_main,
                       "b": ff["l2"]["b"] @ w_main + b_adj}}

    st = feedforward(state_trace, fold(params["fc_cast_obj"], b_sens))    # (B,T,Nobj,H)
    bt = feedforward(body_trace, fold(params["fc_cast_body"], b_sens))    # (B,T,1,H)
    words = feedforward(description, fold(params["fc_cast_words"], b_ling))  # (B,S,H)

    B, T, Nobj, _ = st.shape
    S = words.shape[1]

    pe_adj = params["pe"][:max(T, S)] @ w_main        # PE pushed through dim_adjust

    st = jnp.transpose(st, (1, 2, 0, 3)) + pe_adj[:T][:, None, None, :]   # (T,Nobj,B,H)
    bt = jnp.transpose(bt, (1, 2, 0, 3)) + pe_adj[:T][:, None, None, :]   # (T,1,B,H)
    words = jnp.transpose(words, (1, 0, 2)) + pe_adj[:S][:, None, :]      # (S,B,H)

    # word_aggreg=False branch of the reference model.
    query = params["query"]
    words_e = jnp.broadcast_to(words[None], (T, S, B, H))
    q_spatial = jnp.broadcast_to(query, (T, 1, B, H))

    sp_in = jnp.concatenate([st, bt, words_e, q_spatial], axis=1)  # (T,Ntot,B,H)
    Ntot = Nobj + 1 + S + 1
    # NOTE: the reference calls `.transpose(0, 1)` without assignment -> no-op,
    # so the "spatial" transformer actually attends over the T axis.
    temp_tokens = transformer_module(sp_in.reshape(T, Ntot * B, H),
                                     params["spatial_tfm"], num_heads)
    temp_in = temp_tokens.reshape(Ntot, B, H)
    q_temporal = jnp.broadcast_to(query, (1, B, H))
    temp_in = jnp.concatenate([temp_in, q_temporal], axis=0)       # (Ntot+1,B,H)
    out = transformer_module(temp_in, params["temporal_tfm"], num_heads)  # (B,H)

    # Final head: Linear->ReLU->Linear(1)+sigmoid fused; output padded to 128
    # lanes for lane-dense stores, sliced back to (B, 1) outside the kernel.
    return feedforward(out, params["fc_out"], final_act="sigmoid", pad_out=128)


# ------------------------------ param init ----------------------------------

def _w(key, shape, scale=0.1):
    return jax.random.normal(key, shape, jnp.float32) * scale


def _init_linear(key, fan_in, fan_out):
    kw, kb = jax.random.split(key)
    return {"w": _w(kw, (fan_in, fan_out)), "b": _w(kb, (1, fan_out), 0.01)}


def _init_feedforward(key, in_size, ff_size, out_size):
    k1, k2 = jax.random.split(key)
    return {"l1": _init_linear(k1, in_size, ff_size),
            "l2": _init_linear(k2, ff_size, out_size)}


def _init_tfm_layer(key, h):
    ks = jax.random.split(key, 8)
    ones = jnp.ones((1, h), jnp.float32)
    zeros = jnp.zeros((1, h), jnp.float32)
    return {
        "in_w": _w(ks[0], (h, 3 * h)), "in_b": _w(ks[1], (1, 3 * h), 0.01),
        "out_w": _w(ks[2], (h, h)),    "out_b": _w(ks[3], (1, h), 0.01),
        "lin1_w": _w(ks[4], (h, h)),   "lin1_b": _w(ks[5], (1, h), 0.01),
        "lin2_w": _w(ks[6], (h, h)),   "lin2_b": _w(ks[7], (1, h), 0.01),
        "ln1_g": ones, "ln1_b": zeros, "ln2_g": ones, "ln2_b": zeros,
    }


def _init_tfm_module(key, h, num_layers):
    keys = jax.random.split(key, num_layers)
    return {"layers": [_init_tfm_layer(k, h) for k in keys],
            "norm_g": jnp.ones((1, h), jnp.float32),
            "norm_b": jnp.zeros((1, h), jnp.float32)}


def init_params(key, body_size, obj_size, voc_size, hidden, num_layers,
                max_len=64):
    ks = jax.random.split(key, 7)
    return {
        "fc_cast_body": _init_feedforward(ks[0], body_size, hidden, hidden),
        "fc_cast_obj": _init_feedforward(ks[1], obj_size, hidden, hidden),
        "fc_cast_words": _init_feedforward(ks[2], voc_size, hidden, hidden),
        "dim_adjust": _init_linear(ks[3], hidden + 2, hidden),
        "fc_out": _init_feedforward(ks[4], hidden, hidden, 1),
        "spatial_tfm": _init_tfm_module(ks[5], hidden, num_layers),
        "temporal_tfm": _init_tfm_module(ks[6], hidden, num_layers),
        "query": jnp.zeros((hidden,), jnp.float32),   # torch.zeros(hidden)
        "pe": make_positional_encoding(max_len, hidden),
    }


# --------------------------------- main --------------------------------------

if __name__ == "__main__":
    B, T, Nobj, S = 2, 4, 3, 8
    body_size, obj_size, voc_size = 6, 9, 12
    hidden, num_heads, num_layers = 32, 4, 2

    key = jax.random.PRNGKey(0)
    kp, ks, kb, kd = jax.random.split(key, 4)

    params = init_params(kp, body_size, obj_size, voc_size, hidden, num_layers)

    state_trace = jax.random.normal(ks, (B, T, Nobj, obj_size), jnp.float32)
    body_trace = jax.random.normal(kb, (B, T, 1, body_size), jnp.float32)
    description = jax.random.normal(kd, (B, S, voc_size), jnp.float32)

    fwd = jax.jit(functools.partial(spatial_first_transformer_forward,
                                    num_heads=num_heads))
    out = jax.block_until_ready(fwd(params, state_trace, body_trace, description))

    assert out.shape == (B, 1), out.shape
    assert bool(jnp.all(jnp.isfinite(out)))
    print("KERNEL_OK")
</pallas_src>

<mosaic_0001>
module attributes {stable_mosaic.version = 11 : i64} {
  func.func @_ff_kernel(%arg0: i32, %arg1: memref<16x9xf32, #tpu.memory_space<vmem>>, %arg2: memref<9x32xbf16, #tpu.memory_space<vmem>>, %arg3: memref<1x32xf32, #tpu.memory_space<vmem>>, %arg4: memref<32x32xbf16, #tpu.memory_space<vmem>>, %arg5: memref<1x32xf32, #tpu.memory_space<vmem>>, %arg6: memref<16x32xf32, #tpu.memory_space<vmem>>) attributes {dimension_semantics = [#tpu.dimension_semantics<parallel>], iteration_bounds = array<i64: 2>, scalar_prefetch = 0 : i64, scratch_operands = 0 : i64, tpu.core_type = #tpu.core_type<tc>, window_params = [{transform_indices = @transform_0, window_bounds = array<i64: 16, 9>}, {pipeline_mode = #tpu.pipeline_mode<synchronous>, transform_indices = @transform_1, window_bounds = array<i64: 9, 32>}, {pipeline_mode = #tpu.pipeline_mode<synchronous>, transform_indices = @transform_2, window_bounds = array<i64: 1, 32>}, {pipeline_mode = #tpu.pipeline_mode<synchronous>, transform_indices = @transform_3, window_bounds = array<i64: 32, 32>}, {pipeline_mode = #tpu.pipeline_mode<synchronous>, transform_indices = @transform_4, window_bounds = array<i64: 1, 32>}, {transform_indices = @transform_5, window_bounds = array<i64: 16, 32>}]} {
    %c0 = arith.constant 0 : index
    %c0_0 = arith.constant 0 : index
    %0 = vector.load %arg1[%c0, %c0_0] : memref<16x9xf32, #tpu.memory_space<vmem>>, vector<16x9xf32>
    %c0_1 = arith.constant 0 : index
    %c0_2 = arith.constant 0 : index
    %1 = vector.load %arg2[%c0_1, %c0_2] : memref<9x32xbf16, #tpu.memory_space<vmem>>, vector<9x32xbf16>
    %2 = arith.truncf %0 : vector<16x9xf32> to vector<16x9xbf16>
    %cst = arith.constant dense<0.000000e+00> : vector<16x32xf32>
    %3 = tpu.matmul %2, %1, %cst {dimension_numbers = #tpu.dot_dimension_numbers<[1], [0], [0], [1], [0, 0, 1, 1], [], []>} : vector<16x9xbf16>, vector<9x32xbf16>, vector<16x32xf32> -> vector<16x32xf32>
    %c0_3 = arith.constant 0 : index
    %c0_4 = arith.constant 0 : index
    %4 = vector.load %arg3[%c0_3, %c0_4] : memref<1x32xf32, #tpu.memory_space<vmem>>, vector<1x32xf32>
    %5 = vector.broadcast %4 : vector<1x32xf32> to vector<16x32xf32>
    %6 = arith.addf %3, %5 : vector<16x32xf32>
    %cst_5 = arith.constant 0.000000e+00 : f32
    %7 = vector.broadcast %cst_5 : f32 to vector<16x32xf32>
    %8 = arith.maximumf %6, %7 : vector<16x32xf32>
    %c0_6 = arith.constant 0 : index
    %c0_7 = arith.constant 0 : index
    %9 = vector.load %arg4[%c0_6, %c0_7] : memref<32x32xbf16, #tpu.memory_space<vmem>>, vector<32x32xbf16>
    %10 = arith.truncf %8 : vector<16x32xf32> to vector<16x32xbf16>
    %cst_8 = arith.constant dense<0.000000e+00> : vector<16x32xf32>
    %11 = tpu.matmul %10, %9, %cst_8 {dimension_numbers = #tpu.dot_dimension_numbers<[1], [0], [0], [1], [0, 0, 1, 1], [], []>} : vector<16x32xbf16>, vector<32x32xbf16>, vector<16x32xf32> -> vector<16x32xf32>
    %c0_9 = arith.constant 0 : index
    %c0_10 = arith.constant 0 : index
    %12 = vector.load %arg5[%c0_9, %c0_10] : memref<1x32xf32, #tpu.memory_space<vmem>>, vector<1x32xf32>
    %13 = vector.broadcast %12 : vector<1x32xf32> to vector<16x32xf32>
    %14 = arith.addf %11, %13 : vector<16x32xf32>
    %c0_11 = arith.constant 0 : index
    %c0_12 = arith.constant 0 : index
    %15 = vector.load %arg6[%c0_11, %c0_12] : memref<16x32xf32, #tpu.memory_space<vmem>>, vector<16x32xf32>
    tpu.vector_store %arg6[%c0_11, %c0_12], %14 {strides = array<i32>} : memref<16x32xf32, #tpu.memory_space<vmem>>, vector<16x32xf32>,
    return
  }
  func.func @transform_0(%arg0: i32) -> (i32, i32) {
    %c0_i32 = arith.constant 0 : i32
    %c0_i32_0 = arith.constant 0 : i32
    return %arg0, %c0_i32 : i32, i32
  }
  func.func @transform_1(%arg0: i32) -> (i32, i32) {
    %c0_i32 = arith.constant 0 : i32
    %c0_i32_0 = arith.constant 0 : i32
    %c0_i32_1 = arith.constant 0 : i32
    return %c0_i32, %c0_i32_0 : i32, i32
  }
  func.func @transform_2(%arg0: i32) -> (i32, i32) {
    %c0_i32 = arith.constant 0 : i32
    %c0_i32_0 = arith.constant 0 : i32
    %c0_i32_1 = arith.constant 0 : i32
    return %c0_i32, %c0_i32_0 : i32, i32
  }
  func.func @transform_3(%arg0: i32) -> (i32, i32) {
    %c0_i32 = arith.constant 0 : i32
    %c0_i32_0 = arith.constant 0 : i32
    %c0_i32_1 = arith.constant 0 : i32
    return %c0_i32, %c0_i32_0 : i32, i32
  }
  func.func @transform_4(%arg0: i32) -> (i32, i32) {
    %c0_i32 = arith.constant 0 : i32
    %c0_i32_0 = arith.constant 0 : i32
    %c0_i32_1 = arith.constant 0 : i32
    return %c0_i32, %c0_i32_0 : i32, i32
  }
  func.func @transform_5(%arg0: i32) -> (i32, i32) {
    %c0_i32 = arith.constant 0 : i32
    %c0_i32_0 = arith.constant 0 : i32
    return %arg0, %c0_i32 : i32, i32
  }
}

module attributes {stable_mosaic.version = 11 : i64} {
  func.func @_ff_kernel(%arg0: i32, %arg1: memref<8x6xf32, #tpu.memory_space<vmem>>, %arg2: memref<6x32xbf16, #tpu.memory_space<vmem>>, %arg3: memref<1x32xf32, #tpu.memory_space<vmem>>, %arg4: memref<32x32xbf16, #tpu.memory_space<vmem>>, %arg5: memref<1x32xf32, #tpu.memory_space<vmem>>, %arg6: memref<8x32xf32, #tpu.memory_space<vmem>>) attributes {dimension_semantics = [#tpu.dimension_semantics<parallel>], iteration_bounds = array<i64: 1>, scalar_prefetch = 0 : i64, scratch_operands = 0 : i64, tpu.core_type = #tpu.core_type<tc>, window_params = [{transform_indices = @transform_0, window_bounds = array<i64: 8, 6>}, {pipeline_mode = #tpu.pipeline_mode<synchronous>, transform_indices = @transform_1, window_bounds = array<i64: 6, 32>}, {pipeline_mode = #tpu.pipeline_mode<synchronous>, transform_indices = @transform_2, window_bounds = array<i64: 1, 32>}, {pipeline_mode = #tpu.pipeline_mode<synchronous>, transform_indices = @transform_3, window_bounds = array<i64: 32, 32>}, {pipeline_mode = #tpu.pipeline_mode<synchronous>, transform_indices = @transform_4, window_bounds = array<i64: 1, 32>}, {transform_indices = @transform_5, window_bounds = array<i64: 8, 32>}]} {
    %c0 = arith.constant 0 : index
    %c0_0 = arith.constant 0 : index
    %0 = vector.load %arg1[%c0, %c0_0] : memref<8x6xf32, #tpu.memory_space<vmem>>, vector<8x6xf32>
    %c0_1 = arith.constant 0 : index
    %c0_2 = arith.constant 0 : index
    %1 = vector.load %arg2[%c0_1, %c0_2] : memref<6x32xbf16, #tpu.memory_space<vmem>>, vector<6x32xbf16>
    %2 = arith.truncf %0 : vector<8x6xf32> to vector<8x6xbf16>
    %cst = arith.constant dense<0.000000e+00> : vector<8x32xf32>
    %3 = tpu.matmul %2, %1, %cst {dimension_numbers = #tpu.dot_dimension_numbers<[1], [0], [0], [1], [0, 0, 1, 1], [], []>} : vector<8x6xbf16>, vector<6x32xbf16>, vector<8x32xf32> -> vector<8x32xf32>
    %c0_3 = arith.constant 0 : index
    %c0_4 = arith.constant 0 : index
    %4 = vector.load %arg3[%c0_3, %c0_4] : memref<1x32xf32, #tpu.memory_space<vmem>>, vector<1x32xf32>
    %5 = vector.broadcast %4 : vector<1x32xf32> to vector<8x32xf32>
    %6 = arith.addf %3, %5 : vector<8x32xf32>
    %cst_5 = arith.constant 0.000000e+00 : f32
    %7 = vector.broadcast %cst_5 : f32 to vector<8x32xf32>
    %8 = arith.maximumf %6, %7 : vector<8x32xf32>
    %c0_6 = arith.constant 0 : index
    %c0_7 = arith.constant 0 : index
    %9 = vector.load %arg4[%c0_6, %c0_7] : memref<32x32xbf16, #tpu.memory_space<vmem>>, vector<32x32xbf16>
    %10 = arith.truncf %8 : vector<8x32xf32> to vector<8x32xbf16>
    %cst_8 = arith.constant dense<0.000000e+00> : vector<8x32xf32>
    %11 = tpu.matmul %10, %9, %cst_8 {dimension_numbers = #tpu.dot_dimension_numbers<[1], [0], [0], [1], [0, 0, 1, 1], [], []>} : vector<8x32xbf16>, vector<32x32xbf16>, vector<8x32xf32> -> vector<8x32xf32>
    %c0_9 = arith.constant 0 : index
    %c0_10 = arith.constant 0 : index
    %12 = vector.load %arg5[%c0_9, %c0_10] : memref<1x32xf32, #tpu.memory_space<vmem>>, vector<1x32xf32>
    %13 = vector.broadcast %12 : vector<1x32xf32> to vector<8x32xf32>
    %14 = arith.addf %11, %13 : vector<8x32xf32>
    %c0_11 = arith.constant 0 : index
    %c0_12 = arith.constant 0 : index
    %15 = vector.load %arg6[%c0_11, %c0_12] : memref<8x32xf32, #tpu.memory_space<vmem>>, vector<8x32xf32>
    tpu.vector_store %arg6[%c0_11, %c0_12], %14 {strides = array<i32>} : memref<8x32xf32, #tpu.memory_space<vmem>>, vector<8x32xf32>,
    return
  }
  func.func @transform_0(%arg0: i32) -> (i32, i32) {
    %c0_i32 = arith.constant 0 : i32
    %c0_i32_0 = arith.constant 0 : i32
    return %arg0, %c0_i32 : i32, i32
  }
  func.func @transform_1(%arg0: i32) -> (i32, i32) {
    %c0_i32 = arith.constant 0 : i32
    %c0_i32_0 = arith.constant 0 : i32
    %c0_i32_1 = arith.constant 0 : i32
    return %c0_i32, %c0_i32_0 : i32, i32
  }
  func.func @transform_2(%arg0: i32) -> (i32, i32) {
    %c0_i32 = arith.constant 0 : i32
    %c0_i32_0 = arith.constant 0 : i32
    %c0_i32_1 = arith.constant 0 : i32
    return %c0_i32, %c0_i32_0 : i32, i32
  }
  func.func @transform_3(%arg0: i32) -> (i32, i32) {
    %c0_i32 = arith.constant 0 : i32
    %c0_i32_0 = arith.constant 0 : i32
    %c0_i32_1 = arith.constant 0 : i32
    return %c0_i32, %c0_i32_0 : i32, i32
  }
  func.func @transform_4(%arg0: i32) -> (i32, i32) {
    %c0_i32 = arith.constant 0 : i32
    %c0_i32_0 = arith.constant 0 : i32
    %c0_i32_1 = arith.constant 0 : i32
    return %c0_i32, %c0_i32_0 : i32, i32
  }
  func.func @transform_5(%arg0: i32) -> (i32, i32) {
    %c0_i32 = arith.constant 0 : i32
    %c0_i32_0 = arith.constant 0 : i32
    return %arg0, %c0_i32 : i32, i32
  }
}

module attributes {stable_mosaic.version = 11 : i64} {
  func.func @_ff_kernel(%arg0: i32, %arg1: memref<8x12xf32, #tpu.memory_space<vmem>>, %arg2: memref<12x32xbf16, #tpu.memory_space<vmem>>, %arg3: memref<1x32xf32, #tpu.memory_space<vmem>>, %arg4: memref<32x32xbf16, #tpu.memory_space<vmem>>, %arg5: memref<1x32xf32, #tpu.memory_space<vmem>>, %arg6: memref<8x32xf32, #tpu.memory_space<vmem>>) attributes {dimension_semantics = [#tpu.dimension_semantics<parallel>], iteration_bounds = array<i64: 2>, scalar_prefetch = 0 : i64, scratch_operands = 0 : i64, tpu.core_type = #tpu.core_type<tc>, window_params = [{transform_indices = @transform_0, window_bounds = array<i64: 8, 12>}, {pipeline_mode = #tpu.pipeline_mode<synchronous>, transform_indices = @transform_1, window_bounds = array<i64: 12, 32>}, {pipeline_mode = #tpu.pipeline_mode<synchronous>, transform_indices = @transform_2, window_bounds = array<i64: 1, 32>}, {pipeline_mode = #tpu.pipeline_mode<synchronous>, transform_indices = @transform_3, window_bounds = array<i64: 32, 32>}, {pipeline_mode = #tpu.pipeline_mode<synchronous>, transform_indices = @transform_4, window_bounds = array<i64: 1, 32>}, {transform_indices = @transform_5, window_bounds = array<i64: 8, 32>}]} {
    %c0 = arith.constant 0 : index
    %c0_0 = arith.constant 0 : index
    %0 = vector.load %arg1[%c0, %c0_0] : memref<8x12xf32, #tpu.memory_space<vmem>>, vector<8x12xf32>
    %c0_1 = arith.constant 0 : index
    %c0_2 = arith.constant 0 : index
    %1 = vector.load %arg2[%c0_1, %c0_2] : memref<12x32xbf16, #tpu.memory_space<vmem>>, vector<12x32xbf16>
    %2 = arith.truncf %0 : vector<8x12xf32> to vector<8x12xbf16>
    %cst = arith.constant dense<0.000000e+00> : vector<8x32xf32>
    %3 = tpu.matmul %2, %1, %cst {dimension_numbers = #tpu.dot_dimension_numbers<[1], [0], [0], [1], [0, 0, 1, 1], [], []>} : vector<8x12xbf16>, vector<12x32xbf16>, vector<8x32xf32> -> vector<8x32xf32>
    %c0_3 = arith.constant 0 : index
    %c0_4 = arith.constant 0 : index
    %4 = vector.load %arg3[%c0_3, %c0_4] : memref<1x32xf32, #tpu.memory_space<vmem>>, vector<1x32xf32>
    %5 = vector.broadcast %4 : vector<1x32xf32> to vector<8x32xf32>
    %6 = arith.addf %3, %5 : vector<8x32xf32>
    %cst_5 = arith.constant 0.000000e+00 : f32
    %7 = vector.broadcast %cst_5 : f32 to vector<8x32xf32>
    %8 = arith.maximumf %6, %7 : vector<8x32xf32>
    %c0_6 = arith.constant 0 : index
    %c0_7 = arith.constant 0 : index
    %9 = vector.load %arg4[%c0_6, %c0_7] : memref<32x32xbf16, #tpu.memory_space<vmem>>, vector<32x32xbf16>
    %10 = arith.truncf %8 : vector<8x32xf32> to vector<8x32xbf16>
    %cst_8 = arith.constant dense<0.000000e+00> : vector<8x32xf32>
    %11 = tpu.matmul %10, %9, %cst_8 {dimension_numbers = #tpu.dot_dimension_numbers<[1], [0], [0], [1], [0, 0, 1, 1], [], []>} : vector<8x32xbf16>, vector<32x32xbf16>, vector<8x32xf32> -> vector<8x32xf32>
    %c0_9 = arith.constant 0 : index
    %c0_10 = arith.constant 0 : index
    %12 = vector.load %arg5[%c0_9, %c0_10] : memref<1x32xf32, #tpu.memory_space<vmem>>, vector<1x32xf32>
    %13 = vector.broadcast %12 : vector<1x32xf32> to vector<8x32xf32>
    %14 = arith.addf %11, %13 : vector<8x32xf32>
    %c0_11 = arith.constant 0 : index
    %c0_12 = arith.constant 0 : index
    %15 = vector.load %arg6[%c0_11, %c0_12] : memref<8x32xf32, #tpu.memory_space<vmem>>, vector<8x32xf32>
    tpu.vector_store %arg6[%c0_11, %c0_12], %14 {strides = array<i32>} : memref<8x32xf32, #tpu.memory_space<vmem>>, vector<8x32xf32>,
    return
  }
  func.func @transform_0(%arg0: i32) -> (i32, i32) {
    %c0_i32 = arith.constant 0 : i32
    %c0_i32_0 = arith.constant 0 : i32
    return %arg0, %c0_i32 : i32, i32
  }
  func.func @transform_1(%arg0: i32) -> (i32, i32) {
    %c0_i32 = arith.constant 0 : i32
    %c0_i32_0 = arith.constant 0 : i32
    %c0_i32_1 = arith.constant 0 : i32
    return %c0_i32, %c0_i32_0 : i32, i32
  }
  func.func @transform_2(%arg0: i32) -> (i32, i32) {
    %c0_i32 = arith.constant 0 : i32
    %c0_i32_0 = arith.constant 0 : i32
    %c0_i32_1 = arith.constant 0 : i32
    return %c0_i32, %c0_i32_0 : i32, i32
  }
  func.func @transform_3(%arg0: i32) -> (i32, i32) {
    %c0_i32 = arith.constant 0 : i32
    %c0_i32_0 = arith.constant 0 : i32
    %c0_i32_1 = arith.constant 0 : i32
    return %c0_i32, %c0_i32_0 : i32, i32
  }
  func.func @transform_4(%arg0: i32) -> (i32, i32) {
    %c0_i32 = arith.constant 0 : i32
    %c0_i32_0 = arith.constant 0 : i32
    %c0_i32_1 = arith.constant 0 : i32
    return %c0_i32, %c0_i32_0 : i32, i32
  }
  func.func @transform_5(%arg0: i32) -> (i32, i32) {
    %c0_i32 = arith.constant 0 : i32
    %c0_i32_0 = arith.constant 0 : i32
    return %arg0, %c0_i32 : i32, i32
  }
}

module attributes {stable_mosaic.version = 11 : i64} {
  func.func @_encoder_layer_kernel(%arg0: i32, %arg1: memref<32x32xf32, #tpu.memory_space<vmem>>, %arg2: memref<32x96xbf16, #tpu.memory_space<vmem>>, %arg3: memref<1x96xf32, #tpu.memory_space<vmem>>, %arg4: memref<32x32xbf16, #tpu.memory_space<vmem>>, %arg5: memref<1x32xf32, #tpu.memory_space<vmem>>, %arg6: memref<1x32xf32, #tpu.memory_space<vmem>>, %arg7: memref<1x32xf32, #tpu.memory_space<vmem>>, %arg8: memref<32x32xbf16, #tpu.memory_space<vmem>>, %arg9: memref<1x32xf32, #tpu.memory_space<vmem>>, %arg10: memref<32x32xbf16, #tpu.memory_space<vmem>>, %arg11: memref<1x32xf32, #tpu.memory_space<vmem>>, %arg12: memref<1x32xf32, #tpu.memory_space<vmem>>, %arg13: memref<1x32xf32, #tpu.memory_space<vmem>>, %arg14: memref<32x32xbf16, #tpu.memory_space<vmem>>) attributes {dimension_semantics = [#tpu.dimension_semantics<parallel>], iteration_bounds = array<i64: 4>, scalar_prefetch = 0 : i64, scratch_operands = 0 : i64, tpu.core_type = #tpu.core_type<tc>, window_params = [{transform_indices = @transform_0, window_bounds = array<i64: 32, 32>}, {pipeline_mode = #tpu.pipeline_mode<synchronous>, transform_indices = @transform_1, window_bounds = array<i64: 32, 96>}, {pipeline_mode = #tpu.pipeline_mode<synchronous>, transform_indices = @transform_2, window_bounds = array<i64: 1, 96>}, {pipeline_mode = #tpu.pipeline_mode<synchronous>, transform_indices = @transform_3, window_bounds = array<i64: 32, 32>}, {pipeline_mode = #tpu.pipeline_mode<synchronous>, transform_indices = @transform_4, window_bounds = array<i64: 1, 32>}, {pipeline_mode = #tpu.pipeline_mode<synchronous>, transform_indices = @transform_5, window_bounds = array<i64: 1, 32>}, {pipeline_mode = #tpu.pipeline_mode<synchronous>, transform_indices = @transform_6, window_bounds = array<i64: 1, 32>}, {pipeline_mode = #tpu.pipeline_mode<synchronous>, transform_indices = @transform_7, window_bounds = array<i64: 32, 32>}, {pipeline_mode = #tpu.pipeline_mode<synchronous>, transform_indices = @transform_8, window_bounds = array<i64: 1, 32>}, {pipeline_mode = #tpu.pipeline_mode<synchronous>, transform_indices = @transform_9, window_bounds = array<i64: 32, 32>}, {pipeline_mode = #tpu.pipeline_mode<synchronous>, transform_indices = @transform_10, window_bounds = array<i64: 1, 32>}, {pipeline_mode = #tpu.pipeline_mode<synchronous>, transform_indices = @transform_11, window_bounds = array<i64: 1, 32>}, {pipeline_mode = #tpu.pipeline_mode<synchronous>, transform_indices = @transform_12, window_bounds = array<i64: 1, 32>}, {transform_indices = @transform_13, window_bounds = array<i64: 32, 32>}]} {
    %c0 = arith.constant 0 : index
    %c0_0 = arith.constant 0 : index
    %0 = vector.load %arg1[%c0, %c0_0] : memref<32x32xf32, #tpu.memory_space<vmem>>, vector<32x32xf32>
    %1 = tpu.iota {dimensions = array<i32: 0>} : vector<32x32xi32>
    %2 = arith.sitofp %1 : vector<32x32xi32> to vector<32x32xf32>
    %3 = tpu.iota {dimensions = array<i32: 1>} : vector<32x32xi32>
    %4 = arith.sitofp %3 : vector<32x32xi32> to vector<32x32xf32>
    %cst = arith.constant 5.000000e-01 : f32
    %5 = vector.broadcast %cst : f32 to vector<32x32xf32>
    %6 = arith.addf %2, %5 : vector<32x32xf32>
    %cst_1 = arith.constant 2.500000e-01 : f32
    %7 = vector.broadcast %cst_1 : f32 to vector<32x32xf32>
    %8 = arith.mulf %6, %7 : vector<32x32xf32>
    %9 = math.floor %8 : vector<32x32xf32>
    %cst_2 = arith.constant 5.000000e-01 : f32
    %10 = vector.broadcast %cst_2 : f32 to vector<32x32xf32>
    %11 = arith.addf %4, %10 : vector<32x32xf32>
    %cst_3 = arith.constant 2.500000e-01 : f32
    %12 = vector.broadcast %cst_3 : f32 to vector<32x32xf32>
    %13 = arith.mulf %11, %12 : vector<32x32xf32>
    %14 = math.floor %13 : vector<32x32xf32>
    %15 = arith.cmpf oeq, %9, %14 : vector<32x32xf32>
    %cst_4 = arith.constant 0.000000e+00 : f32
    %cst_5 = arith.constant -1.000000e+30 : f32
    %16 = vector.broadcast %cst_4 : f32 to vector<32x32xf32>
    %17 = vector.broadcast %cst_5 : f32 to vector<32x32xf32>
    %18 = arith.select %15, %16, %17 : vector<32x32xi1>, vector<32x32xf32>
    %c0_6 = arith.constant 0 : index
    %c0_7 = arith.constant 0 : index
    %19 = vector.load %arg2[%c0_6, %c0_7] : memref<32x96xbf16, #tpu.memory_space<vmem>>, vector<32x96xbf16>
    %20 = arith.truncf %0 : vector<32x32xf32> to vector<32x32xbf16>
    %cst_8 = arith.constant dense<0.000000e+00> : vector<32x96xf32>
    %21 = tpu.matmul %20, %19, %cst_8 {dimension_numbers = #tpu.dot_dimension_numbers<[1], [0], [0], [1], [0, 0, 1, 1], [], []>} : vector<32x32xbf16>, vector<32x96xbf16>, vector<32x96xf32> -> vector<32x96xf32>
    %c0_9 = arith.constant 0 : index
    %c0_10 = arith.constant 0 : index
    %22 = vector.load %arg3[%c0_9, %c0_10] : memref<1x96xf32, #tpu.memory_space<vmem>>, vector<1x96xf32>
    %23 = vector.broadcast %22 : vector<1x96xf32> to vector<32x96xf32>
    %24 = arith.addf %21, %23 : vector<32x96xf32>
    %25 = arith.truncf %24 : vector<32x96xf32> to vector<32x96xbf16>
    %26 = vector.extract_strided_slice %25 {offsets = [0, 0], sizes = [32, 8], strides = [1, 1]} : vector<32x96xbf16> to vector<32x8xbf16>
    %27 = vector.extract_strided_slice %25 {offsets = [0, 32], sizes = [32, 8], strides = [1, 1]} : vector<32x96xbf16> to vector<32x8xbf16>
    %28 = vector.extract_strided_slice %25 {offsets = [0, 64], sizes = [32, 8], strides = [1, 1]} : vector<32x96xbf16> to vector<32x8xbf16>
    %cst_11 = arith.constant dense<0.000000e+00> : vector<32x32xf32>
    %29 = tpu.matmul %26, %27, %cst_11 {dimension_numbers = #tpu.dot_dimension_numbers<[1], [1], [0], [0], [0, 0, 1, 0], [], []>} : vector<32x8xbf16>, vector<32x8xbf16>, vector<32x32xf32> -> vector<32x32xf32>
    %cst_12 = arith.constant 0.353553385 : f32
    %30 = vector.broadcast %cst_12 : f32 to vector<32x32xf32>
    %31 = arith.mulf %29, %30 : vector<32x32xf32>
    %32 = arith.addf %31, %18 : vector<32x32xf32>
    %cst_13 = arith.constant dense<0xFF800000> : vector<32xf32>
    %33 = vector.multi_reduction <maximumf>, %32, %cst_13 [1] : vector<32x32xf32> to vector<32xf32>
    %34 = vector.shape_cast %33 : vector<32xf32> to vector<32x1xf32>
    %35 = vector.broadcast %34 : vector<32x1xf32> to vector<32x32xf32>
    %36 = arith.subf %32, %35 : vector<32x32xf32>
    %37 = math.exp %36 : vector<32x32xf32>
    %cst_14 = arith.constant dense<0.000000e+00> : vector<32xf32>
    %38 = vector.multi_reduction <add>, %37, %cst_14 [1] : vector<32x32xf32> to vector<32xf32>
    %39 = vector.shape_cast %38 : vector<32xf32> to vector<32x1xf32>
    %40 = tpu.reciprocal %39 {approx = true} : vector<32x1xf32> -> vector<32x1xf32>
    %41 = vector.broadcast %40 : vector<32x1xf32> to vector<32x32xf32>
    %42 = arith.mulf %37, %41 : vector<32x32xf32>
    %43 = arith.truncf %42 : vector<32x32xf32> to vector<32x32xbf16>
    %cst_15 = arith.constant dense<0.000000e+00> : vector<32x8xf32>
    %44 = tpu.matmul %43, %28, %cst_15 {dimension_numbers = #tpu.dot_dimension_numbers<[1], [0], [0], [1], [0, 0, 1, 1], [], []>} : vector<32x32xbf16>, vector<32x8xbf16>, vector<32x8xf32> -> vector<32x8xf32>
    %45 = vector.extract_strided_slice %25 {offsets = [0, 8], sizes = [32, 8], strides = [1, 1]} : vector<32x96xbf16> to vector<32x8xbf16>
    %46 = vector.extract_strided_slice %25 {offsets = [0, 40], sizes = [32, 8], strides = [1, 1]} : vector<32x96xbf16> to vector<32x8xbf16>
    %47 = vector.extract_strided_slice %25 {offsets = [0, 72], sizes = [32, 8], strides = [1, 1]} : vector<32x96xbf16> to vector<32x8xbf16>
    %cst_16 = arith.constant dense<0.000000e+00> : vector<32x32xf32>
    %48 = tpu.matmul %45, %46, %cst_16 {dimension_numbers = #tpu.dot_dimension_numbers<[1], [1], [0], [0], [0, 0, 1, 0], [], []>} : vector<32x8xbf16>, vector<32x8xbf16>, vector<32x32xf32> -> vector<32x32xf32>
    %cst_17 = arith.constant 0.353553385 : f32
    %49 = vector.broadcast %cst_17 : f32 to vector<32x32xf32>
    %50 = arith.mulf %48, %49 : vector<32x32xf32>
    %51 = arith.addf %50, %18 : vector<32x32xf32>
    %cst_18 = arith.constant dense<0xFF800000> : vector<32xf32>
    %52 = vector.multi_reduction <maximumf>, %51, %cst_18 [1] : vector<32x32xf32> to vector<32xf32>
    %53 = vector.shape_cast %52 : vector<32xf32> to vector<32x1xf32>
    %54 = vector.broadcast %53 : vector<32x1xf32> to vector<32x32xf32>
    %55 = arith.subf %51, %54 : vector<32x32xf32>
    %56 = math.exp %55 : vector<32x32xf32>
    %cst_19 = arith.constant dense<0.000000e+00> : vector<32xf32>
    %57 = vector.multi_reduction <add>, %56, %cst_19 [1] : vector<32x32xf32> to vector<32xf32>
    %58 = vector.shape_cast %57 : vector<32xf32> to vector<32x1xf32>
    %59 = tpu.reciprocal %58 {approx = true} : vector<32x1xf32> -> vector<32x1xf32>
    %60 = vector.broadcast %59 : vector<32x1xf32> to vector<32x32xf32>
    %61 = arith.mulf %56, %60 : vector<32x32xf32>
    %62 = arith.truncf %61 : vector<32x32xf32> to vector<32x32xbf16>
    %cst_20 = arith.constant dense<0.000000e+00> : vector<32x8xf32>
    %63 = tpu.matmul %62, %47, %cst_20 {dimension_numbers = #tpu.dot_dimension_numbers<[1], [0], [0], [1], [0, 0, 1, 1], [], []>} : vector<32x32xbf16>, vector<32x8xbf16>, vector<32x8xf32> -> vector<32x8xf32>
    %64 = vector.extract_strided_slice %25 {offsets = [0, 16], sizes = [32, 8], strides = [1, 1]} : vector<32x96xbf16> to vector<32x8xbf16>
    %65 = vector.extract_strided_slice %25 {offsets = [0, 48], sizes = [32, 8], strides = [1, 1]} : vector<32x96xbf16> to vector<32x8xbf16>
    %66 = vector.extract_strided_slice %25 {offsets = [0, 80], sizes = [32, 8], strides = [1, 1]} : vector<32x96xbf16> to vector<32x8xbf16>
    %cst_21 = arith.constant dense<0.000000e+00> : vector<32x32xf32>
    %67 = tpu.matmul %64, %65, %cst_21 {dimension_numbers = #tpu.dot_dimension_numbers<[1], [1], [0], [0], [0, 0, 1, 0], [], []>} : vector<32x8xbf16>, vector<32x8xbf16>, vector<32x32xf32> -> vector<32x32xf32>
    %cst_22 = arith.constant 0.353553385 : f32
    %68 = vector.broadcast %cst_22 : f32 to vector<32x32xf32>
    %69 = arith.mulf %67, %68 : vector<32x32xf32>
    %70 = arith.addf %69, %18 : vector<32x32xf32>
    %cst_23 = arith.constant dense<0xFF800000> : vector<32xf32>
    %71 = vector.multi_reduction <maximumf>, %70, %cst_23 [1] : vector<32x32xf32> to vector<32xf32>
    %72 = vector.shape_cast %71 : vector<32xf32> to vector<32x1xf32>
    %73 = vector.broadcast %72 : vector<32x1xf32> to vector<32x32xf32>
    %74 = arith.subf %70, %73 : vector<32x32xf32>
    %75 = math.exp %74 : vector<32x32xf32>
    %cst_24 = arith.constant dense<0.000000e+00> : vector<32xf32>
    %76 = vector.multi_reduction <add>, %75, %cst_24 [1] : vector<32x32xf32> to vector<32xf32>
    %77 = vector.shape_cast %76 : vector<32xf32> to vector<32x1xf32>
    %78 = tpu.reciprocal %77 {approx = true} : vector<32x1xf32> -> vector<32x1xf32>
    %79 = vector.broadcast %78 : vector<32x1xf32> to vector<32x32xf32>
    %80 = arith.mulf %75, %79 : vector<32x32xf32>
    %81 = arith.truncf %80 : vector<32x32xf32> to vector<32x32xbf16>
    %cst_25 = arith.constant dense<0.000000e+00> : vector<32x8xf32>
    %82 = tpu.matmul %81, %66, %cst_25 {dimension_numbers = #tpu.dot_dimension_numbers<[1], [0], [0], [1], [0, 0, 1, 1], [], []>} : vector<32x32xbf16>, vector<32x8xbf16>, vector<32x8xf32> -> vector<32x8xf32>
    %83 = vector.extract_strided_slice %25 {offsets = [0, 24], sizes = [32, 8], strides = [1, 1]} : vector<32x96xbf16> to vector<32x8xbf16>
    %84 = vector.extract_strided_slice %25 {offsets = [0, 56], sizes = [32, 8], strides = [1, 1]} : vector<32x96xbf16> to vector<32x8xbf16>
    %85 = vector.extract_strided_slice %25 {offsets = [0, 88], sizes = [32, 8], strides = [1, 1]} : vector<32x96xbf16> to vector<32x8xbf16>
    %cst_26 = arith.constant dense<0.000000e+00> : vector<32x32xf32>
    %86 = tpu.matmul %83, %84, %cst_26 {dimension_numbers = #tpu.dot_dimension_numbers<[1], [1], [0], [0], [0, 0, 1, 0], [], []>} : vector<32x8xbf16>, vector<32x8xbf16>, vector<32x32xf32> -> vector<32x32xf32>
    %cst_27 = arith.constant 0.353553385 : f32
    %87 = vector.broadcast %cst_27 : f32 to vector<32x32xf32>
    %88 = arith.mulf %86, %87 : vector<32x32xf32>
    %89 = arith.addf %88, %18 : vector<32x32xf32>
    %cst_28 = arith.constant dense<0xFF800000> : vector<32xf32>
    %90 = vector.multi_reduction <maximumf>, %89, %cst_28 [1] : vector<32x32xf32> to vector<32xf32>
    %91 = vector.shape_cast %90 : vector<32xf32> to vector<32x1xf32>
    %92 = vector.broadcast %91 : vector<32x1xf32> to vector<32x32xf32>
    %93 = arith.subf %89, %92 : vector<32x32xf32>
    %94 = math.exp %93 : vector<32x32xf32>
    %cst_29 = arith.constant dense<0.000000e+00> : vector<32xf32>
    %95 = vector.multi_reduction <add>, %94, %cst_29 [1] : vector<32x32xf32> to vector<32xf32>
    %96 = vector.shape_cast %95 : vector<32xf32> to vector<32x1xf32>
    %97 = tpu.reciprocal %96 {approx = true} : vector<32x1xf32> -> vector<32x1xf32>
    %98 = vector.broadcast %97 : vector<32x1xf32> to vector<32x32xf32>
    %99 = arith.mulf %94, %98 : vector<32x32xf32>
    %100 = arith.truncf %99 : vector<32x32xf32> to vector<32x32xbf16>
    %cst_30 = arith.constant dense<0.000000e+00> : vector<32x8xf32>
    %101 = tpu.matmul %100, %85, %cst_30 {dimension_numbers = #tpu.dot_dimension_numbers<[1], [0], [0], [1], [0, 0, 1, 1], [], []>} : vector<32x32xbf16>, vector<32x8xbf16>, vector<32x8xf32> -> vector<32x8xf32>
    %102 = tpu.concatenate %44, %63, %82, %101 in 1 : vector<32x8xf32>, vector<32x8xf32>, vector<32x8xf32>, vector<32x8xf32> -> vector<32x32xf32>
    %c0_31 = arith.constant 0 : index
    %c0_32 = arith.constant 0 : index
    %103 = vector.load %arg4[%c0_31, %c0_32] : memref<32x32xbf16, #tpu.memory_space<vmem>>, vector<32x32xbf16>
    %104 = arith.truncf %102 : vector<32x32xf32> to vector<32x32xbf16>
    %cst_33 = arith.constant dense<0.000000e+00> : vector<32x32xf32>
    %105 = tpu.matmul %104, %103, %cst_33 {dimension_numbers = #tpu.dot_dimension_numbers<[1], [0], [0], [1], [0, 0, 1, 1], [], []>} : vector<32x32xbf16>, vector<32x32xbf16>, vector<32x32xf32> -> vector<32x32xf32>
    %c0_34 = arith.constant 0 : index
    %c0_35 = arith.constant 0 : index
    %106 = vector.load %arg5[%c0_34, %c0_35] : memref<1x32xf32, #tpu.memory_space<vmem>>, vector<1x32xf32>
    %107 = vector.broadcast %106 : vector<1x32xf32> to vector<32x32xf32>
    %108 = arith.addf %105, %107 : vector<32x32xf32>
    %109 = arith.addf %0, %108 : vector<32x32xf32>
    %c0_36 = arith.constant 0 : index
    %c0_37 = arith.constant 0 : index
    %110 = vector.load %arg6[%c0_36, %c0_37] : memref<1x32xf32, #tpu.memory_space<vmem>>, vector<1x32xf32>
    %c0_38 = arith.constant 0 : index
    %c0_39 = arith.constant 0 : index
    %111 = vector.load %arg7[%c0_38, %c0_39] : memref<1x32xf32, #tpu.memory_space<vmem>>, vector<1x32xf32>
    %cst_40 = arith.constant dense<0.000000e+00> : vector<32xf32>
    %112 = vector.multi_reduction <add>, %109, %cst_40 [1] : vector<32x32xf32> to vector<32xf32>
    %113 = vector.shape_cast %112 : vector<32xf32> to vector<32x1xf32>
    %cst_41 = arith.constant 3.200000e+01 : f32
    %114 = vector.broadcast %cst_41 : f32 to vector<32x1xf32>
    %115 = arith.divf %113, %114 : vector<32x1xf32>
    %116 = vector.broadcast %115 : vector<32x1xf32> to vector<32x32xf32>
    %117 = arith.subf %109, %116 : vector<32x32xf32>
    %118 = arith.mulf %117, %117 : vector<32x32xf32>
    %cst_42 = arith.constant dense<0.000000e+00> : vector<32xf32>
    %119 = vector.multi_reduction <add>, %118, %cst_42 [1] : vector<32x32xf32> to vector<32xf32>
    %120 = vector.shape_cast %119 : vector<32xf32> to vector<32x1xf32>
    %cst_43 = arith.constant 3.200000e+01 : f32
    %121 = vector.broadcast %cst_43 : f32 to vector<32x1xf32>
    %122 = arith.divf %120, %121 : vector<32x1xf32>
    %cst_44 = arith.constant 9.99999974E-6 : f32
    %123 = vector.broadcast %cst_44 : f32 to vector<32x1xf32>
    %124 = arith.addf %122, %123 : vector<32x1xf32>
    %125 = math.rsqrt %124 : vector<32x1xf32>
    %126 = vector.broadcast %125 : vector<32x1xf32> to vector<32x32xf32>
    %127 = arith.mulf %117, %126 : vector<32x32xf32>
    %128 = vector.broadcast %110 : vector<1x32xf32> to vector<32x32xf32>
    %129 = arith.mulf %127, %128 : vector<32x32xf32>
    %130 = vector.broadcast %111 : vector<1x32xf32> to vector<32x32xf32>
    %131 = arith.addf %129, %130 : vector<32x32xf32>
    %c0_45 = arith.constant 0 : index
    %c0_46 = arith.constant 0 : index
    %132 = vector.load %arg8[%c0_45, %c0_46] : memref<32x32xbf16, #tpu.memory_space<vmem>>, vector<32x32xbf16>
    %133 = arith.truncf %131 : vector<32x32xf32> to vector<32x32xbf16>
    %cst_47 = arith.constant dense<0.000000e+00> : vector<32x32xf32>
    %134 = tpu.matmul %133, %132, %cst_47 {dimension_numbers = #tpu.dot_dimension_numbers<[1], [0], [0], [1], [0, 0, 1, 1], [], []>} : vector<32x32xbf16>, vector<32x32xbf16>, vector<32x32xf32> -> vector<32x32xf32>
    %c0_48 = arith.constant 0 : index
    %c0_49 = arith.constant 0 : index
    %135 = vector.load %arg9[%c0_48, %c0_49] : memref<1x32xf32, #tpu.memory_space<vmem>>, vector<1x32xf32>
    %136 = vector.broadcast %135 : vector<1x32xf32> to vector<32x32xf32>
    %137 = arith.addf %134, %136 : vector<32x32xf32>
    %cst_50 = arith.constant 0.000000e+00 : f32
    %138 = vector.broadcast %cst_50 : f32 to vector<32x32xf32>
    %139 = arith.maximumf %137, %138 : vector<32x32xf32>
    %c0_51 = arith.constant 0 : index
    %c0_52 = arith.constant 0 : index
    %140 = vector.load %arg10[%c0_51, %c0_52] : memref<32x32xbf16, #tpu.memory_space<vmem>>, vector<32x32xbf16>
    %141 = arith.truncf %139 : vector<32x32xf32> to vector<32x32xbf16>
    %cst_53 = arith.constant dense<0.000000e+00> : vector<32x32xf32>
    %142 = tpu.matmul %141, %140, %cst_53 {dimension_numbers = #tpu.dot_dimension_numbers<[1], [0], [0], [1], [0, 0, 1, 1], [], []>} : vector<32x32xbf16>, vector<32x32xbf16>, vector<32x32xf32> -> vector<32x32xf32>
    %c0_54 = arith.constant 0 : index
    %c0_55 = arith.constant 0 : index
    %143 = vector.load %arg11[%c0_54, %c0_55] : memref<1x32xf32, #tpu.memory_space<vmem>>, vector<1x32xf32>
    %144 = vector.broadcast %143 : vector<1x32xf32> to vector<32x32xf32>
    %145 = arith.addf %142, %144 : vector<32x32xf32>
    %146 = arith.addf %131, %145 : vector<32x32xf32>
    %c0_56 = arith.constant 0 : index
    %c0_57 = arith.constant 0 : index
    %147 = vector.load %arg12[%c0_56, %c0_57] : memref<1x32xf32, #tpu.memory_space<vmem>>, vector<1x32xf32>
    %c0_58 = arith.constant 0 : index
    %c0_59 = arith.constant 0 : index
    %148 = vector.load %arg13[%c0_58, %c0_59] : memref<1x32xf32, #tpu.memory_space<vmem>>, vector<1x32xf32>
    %cst_60 = arith.constant dense<0.000000e+00> : vector<32xf32>
    %149 = vector.multi_reduction <add>, %146, %cst_60 [1] : vector<32x32xf32> to vector<32xf32>
    %150 = vector.shape_cast %149 : vector<32xf32> to vector<32x1xf32>
    %cst_61 = arith.constant 3.200000e+01 : f32
    %151 = vector.broadcast %cst_61 : f32 to vector<32x1xf32>
    %152 = arith.divf %150, %151 : vector<32x1xf32>
    %153 = vector.broadcast %152 : vector<32x1xf32> to vector<32x32xf32>
    %154 = arith.subf %146, %153 : vector<32x32xf32>
    %155 = arith.mulf %154, %154 : vector<32x32xf32>
    %cst_62 = arith.constant dense<0.000000e+00> : vector<32xf32>
    %156 = vector.multi_reduction <add>, %155, %cst_62 [1] : vector<32x32xf32> to vector<32xf32>
    %157 = vector.shape_cast %156 : vector<32xf32> to vector<32x1xf32>
    %cst_63 = arith.constant 3.200000e+01 : f32
    %158 = vector.broadcast %cst_63 : f32 to vector<32x1xf32>
    %159 = arith.divf %157, %158 : vector<32x1xf32>
    %cst_64 = arith.constant 9.99999974E-6 : f32
    %160 = vector.broadcast %cst_64 : f32 to vector<32x1xf32>
    %161 = arith.addf %159, %160 : vector<32x1xf32>
    %162 = math.rsqrt %161 : vector<32x1xf32>
    %163 = vector.broadcast %162 : vector<32x1xf32> to vector<32x32xf32>
    %164 = arith.mulf %154, %163 : vector<32x32xf32>
    %165 = vector.broadcast %147 : vector<1x32xf32> to vector<32x32xf32>
    %166 = arith.mulf %164, %165 : vector<32x32xf32>
    %167 = vector.broadcast %148 : vector<1x32xf32> to vector<32x32xf32>
    %168 = arith.addf %166, %167 : vector<32x32xf32>
    %169 = arith.truncf %168 : vector<32x32xf32> to vector<32x32xbf16>
    %c0_65 = arith.constant 0 : index
    %c0_66 = arith.constant 0 : index
    %170 = vector.load %arg14[%c0_65, %c0_66] : memref<32x32xbf16, #tpu.memory_space<vmem>>, vector<32x32xbf16>
    tpu.vector_store %arg14[%c0_65, %c0_66], %169 {strides = array<i32>} : memref<32x32xbf16, #tpu.memory_space<vmem>>, vector<32x32xbf16>,
    return
  }
  func.func @transform_0(%arg0: i32) -> (i32, i32) {
    %c0_i32 = arith.constant 0 : i32
    %c0_i32_0 = arith.constant 0 : i32
    return %arg0, %c0_i32 : i32, i32
  }
  func.func @transform_1(%arg0: i32) -> (i32, i32) {
    %c0_i32 = arith.constant 0 : i32
    %c0_i32_0 = arith.constant 0 : i32
    %c0_i32_1 = arith.constant 0 : i32
    return %c0_i32, %c0_i32_0 : i32, i32
  }
  func.func @transform_2(%arg0: i32) -> (i32, i32) {
    %c0_i32 = arith.constant 0 : i32
    %c0_i32_0 = arith.constant 0 : i32
    %c0_i32_1 = arith.constant 0 : i32
    return %c0_i32, %c0_i32_0 : i32, i32
  }
  func.func @transform_3(%arg0: i32) -> (i32, i32) {
    %c0_i32 = arith.constant 0 : i32
    %c0_i32_0 = arith.constant 0 : i32
    %c0_i32_1 = arith.constant 0 : i32
    return %c0_i32, %c0_i32_0 : i32, i32
  }
  func.func @transform_4(%arg0: i32) -> (i32, i32) {
    %c0_i32 = arith.constant 0 : i32
    %c0_i32_0 = arith.constant 0 : i32
    %c0_i32_1 = arith.constant 0 : i32
    return %c0_i32, %c0_i32_0 : i32, i32
  }
  func.func @transform_5(%arg0: i32) -> (i32, i32) {
    %c0_i32 = arith.constant 0 : i32
    %c0_i32_0 = arith.constant 0 : i32
    %c0_i32_1 = arith.constant 0 : i32
    return %c0_i32, %c0_i32_0 : i32, i32
  }
  func.func @transform_6(%arg0: i32) -> (i32, i32) {
    %c0_i32 = arith.constant 0 : i32
    %c0_i32_0 = arith.constant 0 : i32
    %c0_i32_1 = arith.constant 0 : i32
    return %c0_i32, %c0_i32_0 : i32, i32
  }
  func.func @transform_7(%arg0: i32) -> (i32, i32) {
    %c0_i32 = arith.constant 0 : i32
    %c0_i32_0 = arith.constant 0 : i32
    %c0_i32_1 = arith.constant 0 : i32
    return %c0_i32, %c0_i32_0 : i32, i32
  }
  func.func @transform_8(%arg0: i32) -> (i32, i32) {
    %c0_i32 = arith.constant 0 : i32
    %c0_i32_0 = arith.constant 0 : i32
    %c0_i32_1 = arith.constant 0 : i32
    return %c0_i32, %c0_i32_0 : i32, i32
  }
  func.func @transform_9(%arg0: i32) -> (i32, i32) {
    %c0_i32 = arith.constant 0 : i32
    %c0_i32_0 = arith.constant 0 : i32
    %c0_i32_1 = arith.constant 0 : i32
    return %c0_i32, %c0_i32_0 : i32, i32
  }
  func.func @transform_10(%arg0: i32) -> (i32, i32) {
    %c0_i32 = arith.constant 0 : i32
    %c0_i32_0 = arith.constant 0 : i32
    %c0_i32_1 = arith.constant 0 : i32
    return %c0_i32, %c0_i32_0 : i32, i32
  }
  func.func @transform_11(%arg0: i32) -> (i32, i32) {
    %c0_i32 = arith.constant 0 : i32
    %c0_i32_0 = arith.constant 0 : i32
    %c0_i32_1 = arith.constant 0 : i32
    return %c0_i32, %c0_i32_0 : i32, i32
  }
  func.func @transform_12(%arg0: i32) -> (i32, i32) {
    %c0_i32 = arith.constant 0 : i32
    %c0_i32_0 = arith.constant 0 : i32
    %c0_i32_1 = arith.constant 0 : i32
    return %c0_i32, %c0_i32_0 : i32, i32
  }
  func.func @transform_13(%arg0: i32) -> (i32, i32) {
    %c0_i32 = arith.constant 0 : i32
    %c0_i32_0 = arith.constant 0 : i32
    return %arg0, %c0_i32 : i32, i32
  }
}

module attributes {stable_mosaic.version = 11 : i64} {
  func.func @_encoder_layer_kernel(%arg0: i32, %arg1: memref<32x32xbf16, #tpu.memory_space<vmem>>, %arg2: memref<32x96xbf16, #tpu.memory_space<vmem>>, %arg3: memref<1x96xf32, #tpu.memory_space<vmem>>, %arg4: memref<32x32xbf16, #tpu.memory_space<vmem>>, %arg5: memref<1x32xf32, #tpu.memory_space<vmem>>, %arg6: memref<1x32xf32, #tpu.memory_space<vmem>>, %arg7: memref<1x32xf32, #tpu.memory_space<vmem>>, %arg8: memref<32x32xbf16, #tpu.memory_space<vmem>>, %arg9: memref<1x32xf32, #tpu.memory_space<vmem>>, %arg10: memref<32x32xbf16, #tpu.memory_space<vmem>>, %arg11: memref<1x32xf32, #tpu.memory_space<vmem>>, %arg12: memref<1x32xf32, #tpu.memory_space<vmem>>, %arg13: memref<1x32xf32, #tpu.memory_space<vmem>>, %arg14: memref<32x32xbf16, #tpu.memory_space<vmem>>) attributes {dimension_semantics = [#tpu.dimension_semantics<parallel>], iteration_bounds = array<i64: 4>, scalar_prefetch = 0 : i64, scratch_operands = 0 : i64, tpu.core_type = #tpu.core_type<tc>, window_params = [{transform_indices = @transform_0, window_bounds = array<i64: 32, 32>}, {pipeline_mode = #tpu.pipeline_mode<synchronous>, transform_indices = @transform_1, window_bounds = array<i64: 32, 96>}, {pipeline_mode = #tpu.pipeline_mode<synchronous>, transform_indices = @transform_2, window_bounds = array<i64: 1, 96>}, {pipeline_mode = #tpu.pipeline_mode<synchronous>, transform_indices = @transform_3, window_bounds = array<i64: 32, 32>}, {pipeline_mode = #tpu.pipeline_mode<synchronous>, transform_indices = @transform_4, window_bounds = array<i64: 1, 32>}, {pipeline_mode = #tpu.pipeline_mode<synchronous>, transform_indices = @transform_5, window_bounds = array<i64: 1, 32>}, {pipeline_mode = #tpu.pipeline_mode<synchronous>, transform_indices = @transform_6, window_bounds = array<i64: 1, 32>}, {pipeline_mode = #tpu.pipeline_mode<synchronous>, transform_indices = @transform_7, window_bounds = array<i64: 32, 32>}, {pipeline_mode = #tpu.pipeline_mode<synchronous>, transform_indices = @transform_8, window_bounds = array<i64: 1, 32>}, {pipeline_mode = #tpu.pipeline_mode<synchronous>, transform_indices = @transform_9, window_bounds = array<i64: 32, 32>}, {pipeline_mode = #tpu.pipeline_mode<synchronous>, transform_indices = @transform_10, window_bounds = array<i64: 1, 32>}, {pipeline_mode = #tpu.pipeline_mode<synchronous>, transform_indices = @transform_11, window_bounds = array<i64: 1, 32>}, {pipeline_mode = #tpu.pipeline_mode<synchronous>, transform_indices = @transform_12, window_bounds = array<i64: 1, 32>}, {transform_indices = @transform_13, window_bounds = array<i64: 32, 32>}]} {
    %c0 = arith.constant 0 : index
    %c0_0 = arith.constant 0 : index
    %0 = vector.load %arg1[%c0, %c0_0] : memref<32x32xbf16, #tpu.memory_space<vmem>>, vector<32x32xbf16>
    %1 = arith.extf %0 : vector<32x32xbf16> to vector<32x32xf32>
    %2 = tpu.iota {dimensions = array<i32: 0>} : vector<32x32xi32>
    %3 = arith.sitofp %2 : vector<32x32xi32> to vector<32x32xf32>
    %4 = tpu.iota {dimensions = array<i32: 1>} : vector<32x32xi32>
    %5 = arith.sitofp %4 : vector<32x32xi32> to vector<32x32xf32>
    %cst = arith.constant 5.000000e-01 : f32
    %6 = vector.broadcast %cst : f32 to vector<32x32xf32>
    %7 = arith.addf %3, %6 : vector<32x32xf32>
    %cst_1 = arith.constant 2.500000e-01 : f32
    %8 = vector.broadcast %cst_1 : f32 to vector<32x32xf32>
    %9 = arith.mulf %7, %8 : vector<32x32xf32>
    %10 = math.floor %9 : vector<32x32xf32>
    %cst_2 = arith.constant 5.000000e-01 : f32
    %11 = vector.broadcast %cst_2 : f32 to vector<32x32xf32>
    %12 = arith.addf %5, %11 : vector<32x32xf32>
    %cst_3 = arith.constant 2.500000e-01 : f32
    %13 = vector.broadcast %cst_3 : f32 to vector<32x32xf32>
    %14 = arith.mulf %12, %13 : vector<32x32xf32>
    %15 = math.floor %14 : vector<32x32xf32>
    %16 = arith.cmpf oeq, %10, %15 : vector<32x32xf32>
    %cst_4 = arith.constant 0.000000e+00 : f32
    %cst_5 = arith.constant -1.000000e+30 : f32
    %17 = vector.broadcast %cst_4 : f32 to vector<32x32xf32>
    %18 = vector.broadcast %cst_5 : f32 to vector<32x32xf32>
    %19 = arith.select %16, %17, %18 : vector<32x32xi1>, vector<32x32xf32>
    %c0_6 = arith.constant 0 : index
    %c0_7 = arith.constant 0 : index
    %20 = vector.load %arg2[%c0_6, %c0_7] : memref<32x96xbf16, #tpu.memory_space<vmem>>, vector<32x96xbf16>
    %21 = arith.truncf %1 : vector<32x32xf32> to vector<32x32xbf16>
    %cst_8 = arith.constant dense<0.000000e+00> : vector<32x96xf32>
    %22 = tpu.matmul %21, %20, %cst_8 {dimension_numbers = #tpu.dot_dimension_numbers<[1], [0], [0], [1], [0, 0, 1, 1], [], []>} : vector<32x32xbf16>, vector<32x96xbf16>, vector<32x96xf32> -> vector<32x96xf32>
    %c0_9 = arith.constant 0 : index
    %c0_10 = arith.constant 0 : index
    %23 = vector.load %arg3[%c0_9, %c0_10] : memref<1x96xf32, #tpu.memory_space<vmem>>, vector<1x96xf32>
    %24 = vector.broadcast %23 : vector<1x96xf32> to vector<32x96xf32>
    %25 = arith.addf %22, %24 : vector<32x96xf32>
    %26 = arith.truncf %25 : vector<32x96xf32> to vector<32x96xbf16>
    %27 = vector.extract_strided_slice %26 {offsets = [0, 0], sizes = [32, 8], strides = [1, 1]} : vector<32x96xbf16> to vector<32x8xbf16>
    %28 = vector.extract_strided_slice %26 {offsets = [0, 32], sizes = [32, 8], strides = [1, 1]} : vector<32x96xbf16> to vector<32x8xbf16>
    %29 = vector.extract_strided_slice %26 {offsets = [0, 64], sizes = [32, 8], strides = [1, 1]} : vector<32x96xbf16> to vector<32x8xbf16>
    %cst_11 = arith.constant dense<0.000000e+00> : vector<32x32xf32>
    %30 = tpu.matmul %27, %28, %cst_11 {dimension_numbers = #tpu.dot_dimension_numbers<[1], [1], [0], [0], [0, 0, 1, 0], [], []>} : vector<32x8xbf16>, vector<32x8xbf16>, vector<32x32xf32> -> vector<32x32xf32>
    %cst_12 = arith.constant 0.353553385 : f32
    %31 = vector.broadcast %cst_12 : f32 to vector<32x32xf32>
    %32 = arith.mulf %30, %31 : vector<32x32xf32>
    %33 = arith.addf %32, %19 : vector<32x32xf32>
    %cst_13 = arith.constant dense<0xFF800000> : vector<32xf32>
    %34 = vector.multi_reduction <maximumf>, %33, %cst_13 [1] : vector<32x32xf32> to vector<32xf32>
    %35 = vector.shape_cast %34 : vector<32xf32> to vector<32x1xf32>
    %36 = vector.broadcast %35 : vector<32x1xf32> to vector<32x32xf32>
    %37 = arith.subf %33, %36 : vector<32x32xf32>
    %38 = math.exp %37 : vector<32x32xf32>
    %cst_14 = arith.constant dense<0.000000e+00> : vector<32xf32>
    %39 = vector.multi_reduction <add>, %38, %cst_14 [1] : vector<32x32xf32> to vector<32xf32>
    %40 = vector.shape_cast %39 : vector<32xf32> to vector<32x1xf32>
    %41 = tpu.reciprocal %40 {approx = true} : vector<32x1xf32> -> vector<32x1xf32>
    %42 = vector.broadcast %41 : vector<32x1xf32> to vector<32x32xf32>
    %43 = arith.mulf %38, %42 : vector<32x32xf32>
    %44 = arith.truncf %43 : vector<32x32xf32> to vector<32x32xbf16>
    %cst_15 = arith.constant dense<0.000000e+00> : vector<32x8xf32>
    %45 = tpu.matmul %44, %29, %cst_15 {dimension_numbers = #tpu.dot_dimension_numbers<[1], [0], [0], [1], [0, 0, 1, 1], [], []>} : vector<32x32xbf16>, vector<32x8xbf16>, vector<32x8xf32> -> vector<32x8xf32>
    %46 = vector.extract_strided_slice %26 {offsets = [0, 8], sizes = [32, 8], strides = [1, 1]} : vector<32x96xbf16> to vector<32x8xbf16>
    %47 = vector.extract_strided_slice %26 {offsets = [0, 40], sizes = [32, 8], strides = [1, 1]} : vector<32x96xbf16> to vector<32x8xbf16>
    %48 = vector.extract_strided_slice %26 {offsets = [0, 72], sizes = [32, 8], strides = [1, 1]} : vector<32x96xbf16> to vector<32x8xbf16>
    %cst_16 = arith.constant dense<0.000000e+00> : vector<32x32xf32>
    %49 = tpu.matmul %46, %47, %cst_16 {dimension_numbers = #tpu.dot_dimension_numbers<[1], [1], [0], [0], [0, 0, 1, 0], [], []>} : vector<32x8xbf16>, vector<32x8xbf16>, vector<32x32xf32> -> vector<32x32xf32>
    %cst_17 = arith.constant 0.353553385 : f32
    %50 = vector.broadcast %cst_17 : f32 to vector<32x32xf32>
    %51 = arith.mulf %49, %50 : vector<32x32xf32>
    %52 = arith.addf %51, %19 : vector<32x32xf32>
    %cst_18 = arith.constant dense<0xFF800000> : vector<32xf32>
    %53 = vector.multi_reduction <maximumf>, %52, %cst_18 [1] : vector<32x32xf32> to vector<32xf32>
    %54 = vector.shape_cast %53 : vector<32xf32> to vector<32x1xf32>
    %55 = vector.broadcast %54 : vector<32x1xf32> to vector<32x32xf32>
    %56 = arith.subf %52, %55 : vector<32x32xf32>
    %57 = math.exp %56 : vector<32x32xf32>
    %cst_19 = arith.constant dense<0.000000e+00> : vector<32xf32>
    %58 = vector.multi_reduction <add>, %57, %cst_19 [1] : vector<32x32xf32> to vector<32xf32>
    %59 = vector.shape_cast %58 : vector<32xf32> to vector<32x1xf32>
    %60 = tpu.reciprocal %59 {approx = true} : vector<32x1xf32> -> vector<32x1xf32>
    %61 = vector.broadcast %60 : vector<32x1xf32> to vector<32x32xf32>
    %62 = arith.mulf %57, %61 : vector<32x32xf32>
    %63 = arith.truncf %62 : vector<32x32xf32> to vector<32x32xbf16>
    %cst_20 = arith.constant dense<0.000000e+00> : vector<32x8xf32>
    %64 = tpu.matmul %63, %48, %cst_20 {dimension_numbers = #tpu.dot_dimension_numbers<[1], [0], [0], [1], [0, 0, 1, 1], [], []>} : vector<32x32xbf16>, vector<32x8xbf16>, vector<32x8xf32> -> vector<32x8xf32>
    %65 = vector.extract_strided_slice %26 {offsets = [0, 16], sizes = [32, 8], strides = [1, 1]} : vector<32x96xbf16> to vector<32x8xbf16>
    %66 = vector.extract_strided_slice %26 {offsets = [0, 48], sizes = [32, 8], strides = [1, 1]} : vector<32x96xbf16> to vector<32x8xbf16>
    %67 = vector.extract_strided_slice %26 {offsets = [0, 80], sizes = [32, 8], strides = [1, 1]} : vector<32x96xbf16> to vector<32x8xbf16>
    %cst_21 = arith.constant dense<0.000000e+00> : vector<32x32xf32>
    %68 = tpu.matmul %65, %66, %cst_21 {dimension_numbers = #tpu.dot_dimension_numbers<[1], [1], [0], [0], [0, 0, 1, 0], [], []>} : vector<32x8xbf16>, vector<32x8xbf16>, vector<32x32xf32> -> vector<32x32xf32>
    %cst_22 = arith.constant 0.353553385 : f32
    %69 = vector.broadcast %cst_22 : f32 to vector<32x32xf32>
    %70 = arith.mulf %68, %69 : vector<32x32xf32>
    %71 = arith.addf %70, %19 : vector<32x32xf32>
    %cst_23 = arith.constant dense<0xFF800000> : vector<32xf32>
    %72 = vector.multi_reduction <maximumf>, %71, %cst_23 [1] : vector<32x32xf32> to vector<32xf32>
    %73 = vector.shape_cast %72 : vector<32xf32> to vector<32x1xf32>
    %74 = vector.broadcast %73 : vector<32x1xf32> to vector<32x32xf32>
    %75 = arith.subf %71, %74 : vector<32x32xf32>
    %76 = math.exp %75 : vector<32x32xf32>
    %cst_24 = arith.constant dense<0.000000e+00> : vector<32xf32>
    %77 = vector.multi_reduction <add>, %76, %cst_24 [1] : vector<32x32xf32> to vector<32xf32>
    %78 = vector.shape_cast %77 : vector<32xf32> to vector<32x1xf32>
    %79 = tpu.reciprocal %78 {approx = true} : vector<32x1xf32> -> vector<32x1xf32>
    %80 = vector.broadcast %79 : vector<32x1xf32> to vector<32x32xf32>
    %81 = arith.mulf %76, %80 : vector<32x32xf32>
    %82 = arith.truncf %81 : vector<32x32xf32> to vector<32x32xbf16>
    %cst_25 = arith.constant dense<0.000000e+00> : vector<32x8xf32>
    %83 = tpu.matmul %82, %67, %cst_25 {dimension_numbers = #tpu.dot_dimension_numbers<[1], [0], [0], [1], [0, 0, 1, 1], [], []>} : vector<32x32xbf16>, vector<32x8xbf16>, vector<32x8xf32> -> vector<32x8xf32>
    %84 = vector.extract_strided_slice %26 {offsets = [0, 24], sizes = [32, 8], strides = [1, 1]} : vector<32x96xbf16> to vector<32x8xbf16>
    %85 = vector.extract_strided_slice %26 {offsets = [0, 56], sizes = [32, 8], strides = [1, 1]} : vector<32x96xbf16> to vector<32x8xbf16>
    %86 = vector.extract_strided_slice %26 {offsets = [0, 88], sizes = [32, 8], strides = [1, 1]} : vector<32x96xbf16> to vector<32x8xbf16>
    %cst_26 = arith.constant dense<0.000000e+00> : vector<32x32xf32>
    %87 = tpu.matmul %84, %85, %cst_26 {dimension_numbers = #tpu.dot_dimension_numbers<[1], [1], [0], [0], [0, 0, 1, 0], [], []>} : vector<32x8xbf16>, vector<32x8xbf16>, vector<32x32xf32> -> vector<32x32xf32>
    %cst_27 = arith.constant 0.353553385 : f32
    %88 = vector.broadcast %cst_27 : f32 to vector<32x32xf32>
    %89 = arith.mulf %87, %88 : vector<32x32xf32>
    %90 = arith.addf %89, %19 : vector<32x32xf32>
    %cst_28 = arith.constant dense<0xFF800000> : vector<32xf32>
    %91 = vector.multi_reduction <maximumf>, %90, %cst_28 [1] : vector<32x32xf32> to vector<32xf32>
    %92 = vector.shape_cast %91 : vector<32xf32> to vector<32x1xf32>
    %93 = vector.broadcast %92 : vector<32x1xf32> to vector<32x32xf32>
    %94 = arith.subf %90, %93 : vector<32x32xf32>
    %95 = math.exp %94 : vector<32x32xf32>
    %cst_29 = arith.constant dense<0.000000e+00> : vector<32xf32>
    %96 = vector.multi_reduction <add>, %95, %cst_29 [1] : vector<32x32xf32> to vector<32xf32>
    %97 = vector.shape_cast %96 : vector<32xf32> to vector<32x1xf32>
    %98 = tpu.reciprocal %97 {approx = true} : vector<32x1xf32> -> vector<32x1xf32>
    %99 = vector.broadcast %98 : vector<32x1xf32> to vector<32x32xf32>
    %100 = arith.mulf %95, %99 : vector<32x32xf32>
    %101 = arith.truncf %100 : vector<32x32xf32> to vector<32x32xbf16>
    %cst_30 = arith.constant dense<0.000000e+00> : vector<32x8xf32>
    %102 = tpu.matmul %101, %86, %cst_30 {dimension_numbers = #tpu.dot_dimension_numbers<[1], [0], [0], [1], [0, 0, 1, 1], [], []>} : vector<32x32xbf16>, vector<32x8xbf16>, vector<32x8xf32> -> vector<32x8xf32>
    %103 = tpu.concatenate %45, %64, %83, %102 in 1 : vector<32x8xf32>, vector<32x8xf32>, vector<32x8xf32>, vector<32x8xf32> -> vector<32x32xf32>
    %c0_31 = arith.constant 0 : index
    %c0_32 = arith.constant 0 : index
    %104 = vector.load %arg4[%c0_31, %c0_32] : memref<32x32xbf16, #tpu.memory_space<vmem>>, vector<32x32xbf16>
    %105 = arith.truncf %103 : vector<32x32xf32> to vector<32x32xbf16>
    %cst_33 = arith.constant dense<0.000000e+00> : vector<32x32xf32>
    %106 = tpu.matmul %105, %104, %cst_33 {dimension_numbers = #tpu.dot_dimension_numbers<[1], [0], [0], [1], [0, 0, 1, 1], [], []>} : vector<32x32xbf16>, vector<32x32xbf16>, vector<32x32xf32> -> vector<32x32xf32>
    %c0_34 = arith.constant 0 : index
    %c0_35 = arith.constant 0 : index
    %107 = vector.load %arg5[%c0_34, %c0_35] : memref<1x32xf32, #tpu.memory_space<vmem>>, vector<1x32xf32>
    %108 = vector.broadcast %107 : vector<1x32xf32> to vector<32x32xf32>
    %109 = arith.addf %106, %108 : vector<32x32xf32>
    %110 = arith.addf %1, %109 : vector<32x32xf32>
    %c0_36 = arith.constant 0 : index
    %c0_37 = arith.constant 0 : index
    %111 = vector.load %arg6[%c0_36, %c0_37] : memref<1x32xf32, #tpu.memory_space<vmem>>, vector<1x32xf32>
    %c0_38 = arith.constant 0 : index
    %c0_39 = arith.constant 0 : index
    %112 = vector.load %arg7[%c0_38, %c0_39] : memref<1x32xf32, #tpu.memory_space<vmem>>, vector<1x32xf32>
    %cst_40 = arith.constant dense<0.000000e+00> : vector<32xf32>
    %113 = vector.multi_reduction <add>, %110, %cst_40 [1] : vector<32x32xf32> to vector<32xf32>
    %114 = vector.shape_cast %113 : vector<32xf32> to vector<32x1xf32>
    %cst_41 = arith.constant 3.200000e+01 : f32
    %115 = vector.broadcast %cst_41 : f32 to vector<32x1xf32>
    %116 = arith.divf %114, %115 : vector<32x1xf32>
    %117 = vector.broadcast %116 : vector<32x1xf32> to vector<32x32xf32>
    %118 = arith.subf %110, %117 : vector<32x32xf32>
    %119 = arith.mulf %118, %118 : vector<32x32xf32>
    %cst_42 = arith.constant dense<0.000000e+00> : vector<32xf32>
    %120 = vector.multi_reduction <add>, %119, %cst_42 [1] : vector<32x32xf32> to vector<32xf32>
    %121 = vector.shape_cast %120 : vector<32xf32> to vector<32x1xf32>
    %cst_43 = arith.constant 3.200000e+01 : f32
    %122 = vector.broadcast %cst_43 : f32 to vector<32x1xf32>
    %123 = arith.divf %121, %122 : vector<32x1xf32>
    %cst_44 = arith.constant 9.99999974E-6 : f32
    %124 = vector.broadcast %cst_44 : f32 to vector<32x1xf32>
    %125 = arith.addf %123, %124 : vector<32x1xf32>
    %126 = math.rsqrt %125 : vector<32x1xf32>
    %127 = vector.broadcast %126 : vector<32x1xf32> to vector<32x32xf32>
    %128 = arith.mulf %118, %127 : vector<32x32xf32>
    %129 = vector.broadcast %111 : vector<1x32xf32> to vector<32x32xf32>
    %130 = arith.mulf %128, %129 : vector<32x32xf32>
    %131 = vector.broadcast %112 : vector<1x32xf32> to vector<32x32xf32>
    %132 = arith.addf %130, %131 : vector<32x32xf32>
    %c0_45 = arith.constant 0 : index
    %c0_46 = arith.constant 0 : index
    %133 = vector.load %arg8[%c0_45, %c0_46] : memref<32x32xbf16, #tpu.memory_space<vmem>>, vector<32x32xbf16>
    %134 = arith.truncf %132 : vector<32x32xf32> to vector<32x32xbf16>
    %cst_47 = arith.constant dense<0.000000e+00> : vector<32x32xf32>
    %135 = tpu.matmul %134, %133, %cst_47 {dimension_numbers = #tpu.dot_dimension_numbers<[1], [0], [0], [1], [0, 0, 1, 1], [], []>} : vector<32x32xbf16>, vector<32x32xbf16>, vector<32x32xf32> -> vector<32x32xf32>
    %c0_48 = arith.constant 0 : index
    %c0_49 = arith.constant 0 : index
    %136 = vector.load %arg9[%c0_48, %c0_49] : memref<1x32xf32, #tpu.memory_space<vmem>>, vector<1x32xf32>
    %137 = vector.broadcast %136 : vector<1x32xf32> to vector<32x32xf32>
    %138 = arith.addf %135, %137 : vector<32x32xf32>
    %cst_50 = arith.constant 0.000000e+00 : f32
    %139 = vector.broadcast %cst_50 : f32 to vector<32x32xf32>
    %140 = arith.maximumf %138, %139 : vector<32x32xf32>
    %c0_51 = arith.constant 0 : index
    %c0_52 = arith.constant 0 : index
    %141 = vector.load %arg10[%c0_51, %c0_52] : memref<32x32xbf16, #tpu.memory_space<vmem>>, vector<32x32xbf16>
    %142 = arith.truncf %140 : vector<32x32xf32> to vector<32x32xbf16>
    %cst_53 = arith.constant dense<0.000000e+00> : vector<32x32xf32>
    %143 = tpu.matmul %142, %141, %cst_53 {dimension_numbers = #tpu.dot_dimension_numbers<[1], [0], [0], [1], [0, 0, 1, 1], [], []>} : vector<32x32xbf16>, vector<32x32xbf16>, vector<32x32xf32> -> vector<32x32xf32>
    %c0_54 = arith.constant 0 : index
    %c0_55 = arith.constant 0 : index
    %144 = vector.load %arg11[%c0_54, %c0_55] : memref<1x32xf32, #tpu.memory_space<vmem>>, vector<1x32xf32>
    %145 = vector.broadcast %144 : vector<1x32xf32> to vector<32x32xf32>
    %146 = arith.addf %143, %145 : vector<32x32xf32>
    %147 = arith.addf %132, %146 : vector<32x32xf32>
    %c0_56 = arith.constant 0 : index
    %c0_57 = arith.constant 0 : index
    %148 = vector.load %arg12[%c0_56, %c0_57] : memref<1x32xf32, #tpu.memory_space<vmem>>, vector<1x32xf32>
    %c0_58 = arith.constant 0 : index
    %c0_59 = arith.constant 0 : index
    %149 = vector.load %arg13[%c0_58, %c0_59] : memref<1x32xf32, #tpu.memory_space<vmem>>, vector<1x32xf32>
    %cst_60 = arith.constant dense<0.000000e+00> : vector<32xf32>
    %150 = vector.multi_reduction <add>, %147, %cst_60 [1] : vector<32x32xf32> to vector<32xf32>
    %151 = vector.shape_cast %150 : vector<32xf32> to vector<32x1xf32>
    %cst_61 = arith.constant 3.200000e+01 : f32
    %152 = vector.broadcast %cst_61 : f32 to vector<32x1xf32>
    %153 = arith.divf %151, %152 : vector<32x1xf32>
    %154 = vector.broadcast %153 : vector<32x1xf32> to vector<32x32xf32>
    %155 = arith.subf %147, %154 : vector<32x32xf32>
    %156 = arith.mulf %155, %155 : vector<32x32xf32>
    %cst_62 = arith.constant dense<0.000000e+00> : vector<32xf32>
    %157 = vector.multi_reduction <add>, %156, %cst_62 [1] : vector<32x32xf32> to vector<32xf32>
    %158 = vector.shape_cast %157 : vector<32xf32> to vector<32x1xf32>
    %cst_63 = arith.constant 3.200000e+01 : f32
    %159 = vector.broadcast %cst_63 : f32 to vector<32x1xf32>
    %160 = arith.divf %158, %159 : vector<32x1xf32>
    %cst_64 = arith.constant 9.99999974E-6 : f32
    %161 = vector.broadcast %cst_64 : f32 to vector<32x1xf32>
    %162 = arith.addf %160, %161 : vector<32x1xf32>
    %163 = math.rsqrt %162 : vector<32x1xf32>
    %164 = vector.broadcast %163 : vector<32x1xf32> to vector<32x32xf32>
    %165 = arith.mulf %155, %164 : vector<32x32xf32>
    %166 = vector.broadcast %148 : vector<1x32xf32> to vector<32x32xf32>
    %167 = arith.mulf %165, %166 : vector<32x32xf32>
    %168 = vector.broadcast %149 : vector<1x32xf32> to vector<32x32xf32>
    %169 = arith.addf %167, %168 : vector<32x32xf32>
    %170 = arith.truncf %169 : vector<32x32xf32> to vector<32x32xbf16>
    %c0_65 = arith.constant 0 : index
    %c0_66 = arith.constant 0 : index
    %171 = vector.load %arg14[%c0_65, %c0_66] : memref<32x32xbf16, #tpu.memory_space<vmem>>, vector<32x32xbf16>
    tpu.vector_store %arg14[%c0_65, %c0_66], %170 {strides = array<i32>} : memref<32x32xbf16, #tpu.memory_space<vmem>>, vector<32x32xbf16>,
    return
  }
  func.func @transform_0(%arg0: i32) -> (i32, i32) {
    %c0_i32 = arith.constant 0 : i32
    %c0_i32_0 = arith.constant 0 : i32
    return %arg0, %c0_i32 : i32, i32
  }
  func.func @transform_1(%arg0: i32) -> (i32, i32) {
    %c0_i32 = arith.constant 0 : i32
    %c0_i32_0 = arith.constant 0 : i32
    %c0_i32_1 = arith.constant 0 : i32
    return %c0_i32, %c0_i32_0 : i32, i32
  }
  func.func @transform_2(%arg0: i32) -> (i32, i32) {
    %c0_i32 = arith.constant 0 : i32
    %c0_i32_0 = arith.constant 0 : i32
    %c0_i32_1 = arith.constant 0 : i32
    return %c0_i32, %c0_i32_0 : i32, i32
  }
  func.func @transform_3(%arg0: i32) -> (i32, i32) {
    %c0_i32 = arith.constant 0 : i32
    %c0_i32_0 = arith.constant 0 : i32
    %c0_i32_1 = arith.constant 0 : i32
    return %c0_i32, %c0_i32_0 : i32, i32
  }
  func.func @transform_4(%arg0: i32) -> (i32, i32) {
    %c0_i32 = arith.constant 0 : i32
    %c0_i32_0 = arith.constant 0 : i32
    %c0_i32_1 = arith.constant 0 : i32
    return %c0_i32, %c0_i32_0 : i32, i32
  }
  func.func @transform_5(%arg0: i32) -> (i32, i32) {
    %c0_i32 = arith.constant 0 : i32
    %c0_i32_0 = arith.constant 0 : i32
    %c0_i32_1 = arith.constant 0 : i32
    return %c0_i32, %c0_i32_0 : i32, i32
  }
  func.func @transform_6(%arg0: i32) -> (i32, i32) {
    %c0_i32 = arith.constant 0 : i32
    %c0_i32_0 = arith.constant 0 : i32
    %c0_i32_1 = arith.constant 0 : i32
    return %c0_i32, %c0_i32_0 : i32, i32
  }
  func.func @transform_7(%arg0: i32) -> (i32, i32) {
    %c0_i32 = arith.constant 0 : i32
    %c0_i32_0 = arith.constant 0 : i32
    %c0_i32_1 = arith.constant 0 : i32
    return %c0_i32, %c0_i32_0 : i32, i32
  }
  func.func @transform_8(%arg0: i32) -> (i32, i32) {
    %c0_i32 = arith.constant 0 : i32
    %c0_i32_0 = arith.constant 0 : i32
    %c0_i32_1 = arith.constant 0 : i32
    return %c0_i32, %c0_i32_0 : i32, i32
  }
  func.func @transform_9(%arg0: i32) -> (i32, i32) {
    %c0_i32 = arith.constant 0 : i32
    %c0_i32_0 = arith.constant 0 : i32
    %c0_i32_1 = arith.constant 0 : i32
    return %c0_i32, %c0_i32_0 : i32, i32
  }
  func.func @transform_10(%arg0: i32) -> (i32, i32) {
    %c0_i32 = arith.constant 0 : i32
    %c0_i32_0 = arith.constant 0 : i32
    %c0_i32_1 = arith.constant 0 : i32
    return %c0_i32, %c0_i32_0 : i32, i32
  }
  func.func @transform_11(%arg0: i32) -> (i32, i32) {
    %c0_i32 = arith.constant 0 : i32
    %c0_i32_0 = arith.constant 0 : i32
    %c0_i32_1 = arith.constant 0 : i32
    return %c0_i32, %c0_i32_0 : i32, i32
  }
  func.func @transform_12(%arg0: i32) -> (i32, i32) {
    %c0_i32 = arith.constant 0 : i32
    %c0_i32_0 = arith.constant 0 : i32
    %c0_i32_1 = arith.constant 0 : i32
    return %c0_i32, %c0_i32_0 : i32, i32
  }
  func.func @transform_13(%arg0: i32) -> (i32, i32) {
    %c0_i32 = arith.constant 0 : i32
    %c0_i32_0 = arith.constant 0 : i32
    return %arg0, %c0_i32 : i32, i32
  }
}

module attributes {stable_mosaic.version = 11 : i64} {
  func.func @_layernorm_kernel(%arg0: i32, %arg1: memref<16x32xbf16, #tpu.memory_space<vmem>>, %arg2: memref<1x32xf32, #tpu.memory_space<vmem>>, %arg3: memref<1x32xf32, #tpu.memory_space<vmem>>, %arg4: memref<16x32xf32, #tpu.memory_space<vmem>>) attributes {dimension_semantics = [#tpu.dimension_semantics<parallel>], iteration_bounds = array<i64: 2>, scalar_prefetch = 0 : i64, scratch_operands = 0 : i64, tpu.core_type = #tpu.core_type<tc>, window_params = [{transform_indices = @transform_0, window_bounds = array<i64: 16, 32>}, {pipeline_mode = #tpu.pipeline_mode<synchronous>, transform_indices = @transform_1, window_bounds = array<i64: 1, 32>}, {pipeline_mode = #tpu.pipeline_mode<synchronous>, transform_indices = @transform_2, window_bounds = array<i64: 1, 32>}, {transform_indices = @transform_3, window_bounds = array<i64: 16, 32>}]} {
    %c0 = arith.constant 0 : index
    %c0_0 = arith.constant 0 : index
    %0 = vector.load %arg1[%c0, %c0_0] : memref<16x32xbf16, #tpu.memory_space<vmem>>, vector<16x32xbf16>
    %1 = arith.extf %0 : vector<16x32xbf16> to vector<16x32xf32>
    %c0_1 = arith.constant 0 : index
    %c0_2 = arith.constant 0 : index
    %2 = vector.load %arg2[%c0_1, %c0_2] : memref<1x32xf32, #tpu.memory_space<vmem>>, vector<1x32xf32>
    %c0_3 = arith.constant 0 : index
    %c0_4 = arith.constant 0 : index
    %3 = vector.load %arg3[%c0_3, %c0_4] : memref<1x32xf32, #tpu.memory_space<vmem>>, vector<1x32xf32>
    %cst = arith.constant dense<0.000000e+00> : vector<16xf32>
    %4 = vector.multi_reduction <add>, %1, %cst [1] : vector<16x32xf32> to vector<16xf32>
    %5 = vector.shape_cast %4 : vector<16xf32> to vector<16x1xf32>
    %cst_5 = arith.constant 3.200000e+01 : f32
    %6 = vector.broadcast %cst_5 : f32 to vector<16x1xf32>
    %7 = arith.divf %5, %6 : vector<16x1xf32>
    %8 = vector.broadcast %7 : vector<16x1xf32> to vector<16x32xf32>
    %9 = arith.subf %1, %8 : vector<16x32xf32>
    %10 = arith.mulf %9, %9 : vector<16x32xf32>
    %cst_6 = arith.constant dense<0.000000e+00> : vector<16xf32>
    %11 = vector.multi_reduction <add>, %10, %cst_6 [1] : vector<16x32xf32> to vector<16xf32>
    %12 = vector.shape_cast %11 : vector<16xf32> to vector<16x1xf32>
    %cst_7 = arith.constant 3.200000e+01 : f32
    %13 = vector.broadcast %cst_7 : f32 to vector<16x1xf32>
    %14 = arith.divf %12, %13 : vector<16x1xf32>
    %cst_8 = arith.constant 9.99999974E-6 : f32
    %15 = vector.broadcast %cst_8 : f32 to vector<16x1xf32>
    %16 = arith.addf %14, %15 : vector<16x1xf32>
    %17 = math.rsqrt %16 : vector<16x1xf32>
    %18 = vector.broadcast %17 : vector<16x1xf32> to vector<16x32xf32>
    %19 = arith.mulf %9, %18 : vector<16x32xf32>
    %20 = vector.broadcast %2 : vector<1x32xf32> to vector<16x32xf32>
    %21 = arith.mulf %19, %20 : vector<16x32xf32>
    %22 = vector.broadcast %3 : vector<1x32xf32> to vector<16x32xf32>
    %23 = arith.addf %21, %22 : vector<16x32xf32>
    %c0_9 = arith.constant 0 : index
    %c0_10 = arith.constant 0 : index
    %24 = vector.load %arg4[%c0_9, %c0_10] : memref<16x32xf32, #tpu.memory_space<vmem>>, vector<16x32xf32>
    tpu.vector_store %arg4[%c0_9, %c0_10], %23 {strides = array<i32>} : memref<16x32xf32, #tpu.memory_space<vmem>>, vector<16x32xf32>,
    return
  }
  func.func @transform_0(%arg0: i32) -> (i32, i32) {
    %c0_i32 = arith.constant 0 : i32
    %c0_i32_0 = arith.constant 0 : i32
    return %arg0, %c0_i32 : i32, i32
  }
  func.func @transform_1(%arg0: i32) -> (i32, i32) {
    %c0_i32 = arith.constant 0 : i32
    %c0_i32_0 = arith.constant 0 : i32
    %c0_i32_1 = arith.constant 0 : i32
    return %c0_i32, %c0_i32_0 : i32, i32
  }
  func.func @transform_2(%arg0: i32) -> (i32, i32) {
    %c0_i32 = arith.constant 0 : i32
    %c0_i32_0 = arith.constant 0 : i32
    %c0_i32_1 = arith.constant 0 : i32
    return %c0_i32, %c0_i32_0 : i32, i32
  }
  func.func @transform_3(%arg0: i32) -> (i32, i32) {
    %c0_i32 = arith.constant 0 : i32
    %c0_i32_0 = arith.constant 0 : i32
    return %arg0, %c0_i32 : i32, i32
  }
}

module attributes {stable_mosaic.version = 11 : i64} {
  func.func @_encoder_layer_kernel(%arg0: i32, %arg1: memref<56x32xf32, #tpu.memory_space<vmem>>, %arg2: memref<32x96xbf16, #tpu.memory_space<vmem>>, %arg3: memref<1x96xf32, #tpu.memory_space<vmem>>, %arg4: memref<32x32xbf16, #tpu.memory_space<vmem>>, %arg5: memref<1x32xf32, #tpu.memory_space<vmem>>, %arg6: memref<1x32xf32, #tpu.memory_space<vmem>>, %arg7: memref<1x32xf32, #tpu.memory_space<vmem>>, %arg8: memref<32x32xbf16, #tpu.memory_space<vmem>>, %arg9: memref<1x32xf32, #tpu.memory_space<vmem>>, %arg10: memref<32x32xbf16, #tpu.memory_space<vmem>>, %arg11: memref<1x32xf32, #tpu.memory_space<vmem>>, %arg12: memref<1x32xf32, #tpu.memory_space<vmem>>, %arg13: memref<1x32xf32, #tpu.memory_space<vmem>>, %arg14: memref<56x32xbf16, #tpu.memory_space<vmem>>) attributes {dimension_semantics = [#tpu.dimension_semantics<parallel>], iteration_bounds = array<i64: 1>, scalar_prefetch = 0 : i64, scratch_operands = 0 : i64, tpu.core_type = #tpu.core_type<tc>, window_params = [{transform_indices = @transform_0, window_bounds = array<i64: 56, 32>}, {pipeline_mode = #tpu.pipeline_mode<synchronous>, transform_indices = @transform_1, window_bounds = array<i64: 32, 96>}, {pipeline_mode = #tpu.pipeline_mode<synchronous>, transform_indices = @transform_2, window_bounds = array<i64: 1, 96>}, {pipeline_mode = #tpu.pipeline_mode<synchronous>, transform_indices = @transform_3, window_bounds = array<i64: 32, 32>}, {pipeline_mode = #tpu.pipeline_mode<synchronous>, transform_indices = @transform_4, window_bounds = array<i64: 1, 32>}, {pipeline_mode = #tpu.pipeline_mode<synchronous>, transform_indices = @transform_5, window_bounds = array<i64: 1, 32>}, {pipeline_mode = #tpu.pipeline_mode<synchronous>, transform_indices = @transform_6, window_bounds = array<i64: 1, 32>}, {pipeline_mode = #tpu.pipeline_mode<synchronous>, transform_indices = @transform_7, window_bounds = array<i64: 32, 32>}, {pipeline_mode = #tpu.pipeline_mode<synchronous>, transform_indices = @transform_8, window_bounds = array<i64: 1, 32>}, {pipeline_mode = #tpu.pipeline_mode<synchronous>, transform_indices = @transform_9, window_bounds = array<i64: 32, 32>}, {pipeline_mode = #tpu.pipeline_mode<synchronous>, transform_indices = @transform_10, window_bounds = array<i64: 1, 32>}, {pipeline_mode = #tpu.pipeline_mode<synchronous>, transform_indices = @transform_11, window_bounds = array<i64: 1, 32>}, {pipeline_mode = #tpu.pipeline_mode<synchronous>, transform_indices = @transform_12, window_bounds = array<i64: 1, 32>}, {transform_indices = @transform_13, window_bounds = array<i64: 56, 32>}]} {
    %c0 = arith.constant 0 : index
    %c0_0 = arith.constant 0 : index
    %0 = vector.load %arg1[%c0, %c0_0] : memref<56x32xf32, #tpu.memory_space<vmem>>, vector<56x32xf32>
    %1 = tpu.iota {dimensions = array<i32: 0>} : vector<56x56xi32>
    %2 = arith.sitofp %1 : vector<56x56xi32> to vector<56x56xf32>
    %3 = tpu.iota {dimensions = array<i32: 1>} : vector<56x56xi32>
    %4 = arith.sitofp %3 : vector<56x56xi32> to vector<56x56xf32>
    %cst = arith.constant 5.000000e-01 : f32
    %5 = vector.broadcast %cst : f32 to vector<56x56xf32>
    %6 = arith.addf %2, %5 : vector<56x56xf32>
    %cst_1 = arith.constant 0.0714285746 : f32
    %7 = vector.broadcast %cst_1 : f32 to vector<56x56xf32>
    %8 = arith.mulf %6, %7 : vector<56x56xf32>
    %9 = math.floor %8 : vector<56x56xf32>
    %cst_2 = arith.constant 5.000000e-01 : f32
    %10 = vector.broadcast %cst_2 : f32 to vector<56x56xf32>
    %11 = arith.addf %4, %10 : vector<56x56xf32>
    %cst_3 = arith.constant 0.0714285746 : f32
    %12 = vector.broadcast %cst_3 : f32 to vector<56x56xf32>
    %13 = arith.mulf %11, %12 : vector<56x56xf32>
    %14 = math.floor %13 : vector<56x56xf32>
    %15 = arith.cmpf oeq, %9, %14 : vector<56x56xf32>
    %cst_4 = arith.constant 0.000000e+00 : f32
    %cst_5 = arith.constant -1.000000e+30 : f32
    %16 = vector.broadcast %cst_4 : f32 to vector<56x56xf32>
    %17 = vector.broadcast %cst_5 : f32 to vector<56x56xf32>
    %18 = arith.select %15, %16, %17 : vector<56x56xi1>, vector<56x56xf32>
    %c0_6 = arith.constant 0 : index
    %c0_7 = arith.constant 0 : index
    %19 = vector.load %arg2[%c0_6, %c0_7] : memref<32x96xbf16, #tpu.memory_space<vmem>>, vector<32x96xbf16>
    %20 = arith.truncf %0 : vector<56x32xf32> to vector<56x32xbf16>
    %cst_8 = arith.constant dense<0.000000e+00> : vector<56x96xf32>
    %21 = tpu.matmul %20, %19, %cst_8 {dimension_numbers = #tpu.dot_dimension_numbers<[1], [0], [0], [1], [0, 0, 1, 1], [], []>} : vector<56x32xbf16>, vector<32x96xbf16>, vector<56x96xf32> -> vector<56x96xf32>
    %c0_9 = arith.constant 0 : index
    %c0_10 = arith.constant 0 : index
    %22 = vector.load %arg3[%c0_9, %c0_10] : memref<1x96xf32, #tpu.memory_space<vmem>>, vector<1x96xf32>
    %23 = vector.broadcast %22 : vector<1x96xf32> to vector<56x96xf32>
    %24 = arith.addf %21, %23 : vector<56x96xf32>
    %25 = arith.truncf %24 : vector<56x96xf32> to vector<56x96xbf16>
    %26 = vector.extract_strided_slice %25 {offsets = [0, 0], sizes = [56, 8], strides = [1, 1]} : vector<56x96xbf16> to vector<56x8xbf16>
    %27 = vector.extract_strided_slice %25 {offsets = [0, 32], sizes = [56, 8], strides = [1, 1]} : vector<56x96xbf16> to vector<56x8xbf16>
    %28 = vector.extract_strided_slice %25 {offsets = [0, 64], sizes = [56, 8], strides = [1, 1]} : vector<56x96xbf16> to vector<56x8xbf16>
    %cst_11 = arith.constant dense<0.000000e+00> : vector<56x56xf32>
    %29 = tpu.matmul %26, %27, %cst_11 {dimension_numbers = #tpu.dot_dimension_numbers<[1], [1], [0], [0], [0, 0, 1, 0], [], []>} : vector<56x8xbf16>, vector<56x8xbf16>, vector<56x56xf32> -> vector<56x56xf32>
    %cst_12 = arith.constant 0.353553385 : f32
    %30 = vector.broadcast %cst_12 : f32 to vector<56x56xf32>
    %31 = arith.mulf %29, %30 : vector<56x56xf32>
    %32 = arith.addf %31, %18 : vector<56x56xf32>
    %cst_13 = arith.constant dense<0xFF800000> : vector<56xf32>
    %33 = vector.multi_reduction <maximumf>, %32, %cst_13 [1] : vector<56x56xf32> to vector<56xf32>
    %34 = vector.shape_cast %33 : vector<56xf32> to vector<56x1xf32>
    %35 = vector.broadcast %34 : vector<56x1xf32> to vector<56x56xf32>
    %36 = arith.subf %32, %35 : vector<56x56xf32>
    %37 = math.exp %36 : vector<56x56xf32>
    %cst_14 = arith.constant dense<0.000000e+00> : vector<56xf32>
    %38 = vector.multi_reduction <add>, %37, %cst_14 [1] : vector<56x56xf32> to vector<56xf32>
    %39 = vector.shape_cast %38 : vector<56xf32> to vector<56x1xf32>
    %40 = tpu.reciprocal %39 {approx = true} : vector<56x1xf32> -> vector<56x1xf32>
    %41 = vector.broadcast %40 : vector<56x1xf32> to vector<56x56xf32>
    %42 = arith.mulf %37, %41 : vector<56x56xf32>
    %43 = arith.truncf %42 : vector<56x56xf32> to vector<56x56xbf16>
    %cst_15 = arith.constant dense<0.000000e+00> : vector<56x8xf32>
    %44 = tpu.matmul %43, %28, %cst_15 {dimension_numbers = #tpu.dot_dimension_numbers<[1], [0], [0], [1], [0, 0, 1, 1], [], []>} : vector<56x56xbf16>, vector<56x8xbf16>, vector<56x8xf32> -> vector<56x8xf32>
    %45 = vector.extract_strided_slice %25 {offsets = [0, 8], sizes = [56, 8], strides = [1, 1]} : vector<56x96xbf16> to vector<56x8xbf16>
    %46 = vector.extract_strided_slice %25 {offsets = [0, 40], sizes = [56, 8], strides = [1, 1]} : vector<56x96xbf16> to vector<56x8xbf16>
    %47 = vector.extract_strided_slice %25 {offsets = [0, 72], sizes = [56, 8], strides = [1, 1]} : vector<56x96xbf16> to vector<56x8xbf16>
    %cst_16 = arith.constant dense<0.000000e+00> : vector<56x56xf32>
    %48 = tpu.matmul %45, %46, %cst_16 {dimension_numbers = #tpu.dot_dimension_numbers<[1], [1], [0], [0], [0, 0, 1, 0], [], []>} : vector<56x8xbf16>, vector<56x8xbf16>, vector<56x56xf32> -> vector<56x56xf32>
    %cst_17 = arith.constant 0.353553385 : f32
    %49 = vector.broadcast %cst_17 : f32 to vector<56x56xf32>
    %50 = arith.mulf %48, %49 : vector<56x56xf32>
    %51 = arith.addf %50, %18 : vector<56x56xf32>
    %cst_18 = arith.constant dense<0xFF800000> : vector<56xf32>
    %52 = vector.multi_reduction <maximumf>, %51, %cst_18 [1] : vector<56x56xf32> to vector<56xf32>
    %53 = vector.shape_cast %52 : vector<56xf32> to vector<56x1xf32>
    %54 = vector.broadcast %53 : vector<56x1xf32> to vector<56x56xf32>
    %55 = arith.subf %51, %54 : vector<56x56xf32>
    %56 = math.exp %55 : vector<56x56xf32>
    %cst_19 = arith.constant dense<0.000000e+00> : vector<56xf32>
    %57 = vector.multi_reduction <add>, %56, %cst_19 [1] : vector<56x56xf32> to vector<56xf32>
    %58 = vector.shape_cast %57 : vector<56xf32> to vector<56x1xf32>
    %59 = tpu.reciprocal %58 {approx = true} : vector<56x1xf32> -> vector<56x1xf32>
    %60 = vector.broadcast %59 : vector<56x1xf32> to vector<56x56xf32>
    %61 = arith.mulf %56, %60 : vector<56x56xf32>
    %62 = arith.truncf %61 : vector<56x56xf32> to vector<56x56xbf16>
    %cst_20 = arith.constant dense<0.000000e+00> : vector<56x8xf32>
    %63 = tpu.matmul %62, %47, %cst_20 {dimension_numbers = #tpu.dot_dimension_numbers<[1], [0], [0], [1], [0, 0, 1, 1], [], []>} : vector<56x56xbf16>, vector<56x8xbf16>, vector<56x8xf32> -> vector<56x8xf32>
    %64 = vector.extract_strided_slice %25 {offsets = [0, 16], sizes = [56, 8], strides = [1, 1]} : vector<56x96xbf16> to vector<56x8xbf16>
    %65 = vector.extract_strided_slice %25 {offsets = [0, 48], sizes = [56, 8], strides = [1, 1]} : vector<56x96xbf16> to vector<56x8xbf16>
    %66 = vector.extract_strided_slice %25 {offsets = [0, 80], sizes = [56, 8], strides = [1, 1]} : vector<56x96xbf16> to vector<56x8xbf16>
    %cst_21 = arith.constant dense<0.000000e+00> : vector<56x56xf32>
    %67 = tpu.matmul %64, %65, %cst_21 {dimension_numbers = #tpu.dot_dimension_numbers<[1], [1], [0], [0], [0, 0, 1, 0], [], []>} : vector<56x8xbf16>, vector<56x8xbf16>, vector<56x56xf32> -> vector<56x56xf32>
    %cst_22 = arith.constant 0.353553385 : f32
    %68 = vector.broadcast %cst_22 : f32 to vector<56x56xf32>
    %69 = arith.mulf %67, %68 : vector<56x56xf32>
    %70 = arith.addf %69, %18 : vector<56x56xf32>
    %cst_23 = arith.constant dense<0xFF800000> : vector<56xf32>
    %71 = vector.multi_reduction <maximumf>, %70, %cst_23 [1] : vector<56x56xf32> to vector<56xf32>
    %72 = vector.shape_cast %71 : vector<56xf32> to vector<56x1xf32>
    %73 = vector.broadcast %72 : vector<56x1xf32> to vector<56x56xf32>
    %74 = arith.subf %70, %73 : vector<56x56xf32>
    %75 = math.exp %74 : vector<56x56xf32>
    %cst_24 = arith.constant dense<0.000000e+00> : vector<56xf32>
    %76 = vector.multi_reduction <add>, %75, %cst_24 [1] : vector<56x56xf32> to vector<56xf32>
    %77 = vector.shape_cast %76 : vector<56xf32> to vector<56x1xf32>
    %78 = tpu.reciprocal %77 {approx = true} : vector<56x1xf32> -> vector<56x1xf32>
    %79 = vector.broadcast %78 : vector<56x1xf32> to vector<56x56xf32>
    %80 = arith.mulf %75, %79 : vector<56x56xf32>
    %81 = arith.truncf %80 : vector<56x56xf32> to vector<56x56xbf16>
    %cst_25 = arith.constant dense<0.000000e+00> : vector<56x8xf32>
    %82 = tpu.matmul %81, %66, %cst_25 {dimension_numbers = #tpu.dot_dimension_numbers<[1], [0], [0], [1], [0, 0, 1, 1], [], []>} : vector<56x56xbf16>, vector<56x8xbf16>, vector<56x8xf32> -> vector<56x8xf32>
    %83 = vector.extract_strided_slice %25 {offsets = [0, 24], sizes = [56, 8], strides = [1, 1]} : vector<56x96xbf16> to vector<56x8xbf16>
    %84 = vector.extract_strided_slice %25 {offsets = [0, 56], sizes = [56, 8], strides = [1, 1]} : vector<56x96xbf16> to vector<56x8xbf16>
    %85 = vector.extract_strided_slice %25 {offsets = [0, 88], sizes = [56, 8], strides = [1, 1]} : vector<56x96xbf16> to vector<56x8xbf16>
    %cst_26 = arith.constant dense<0.000000e+00> : vector<56x56xf32>
    %86 = tpu.matmul %83, %84, %cst_26 {dimension_numbers = #tpu.dot_dimension_numbers<[1], [1], [0], [0], [0, 0, 1, 0], [], []>} : vector<56x8xbf16>, vector<56x8xbf16>, vector<56x56xf32> -> vector<56x56xf32>
    %cst_27 = arith.constant 0.353553385 : f32
    %87 = vector.broadcast %cst_27 : f32 to vector<56x56xf32>
    %88 = arith.mulf %86, %87 : vector<56x56xf32>
    %89 = arith.addf %88, %18 : vector<56x56xf32>
    %cst_28 = arith.constant dense<0xFF800000> : vector<56xf32>
    %90 = vector.multi_reduction <maximumf>, %89, %cst_28 [1] : vector<56x56xf32> to vector<56xf32>
    %91 = vector.shape_cast %90 : vector<56xf32> to vector<56x1xf32>
    %92 = vector.broadcast %91 : vector<56x1xf32> to vector<56x56xf32>
    %93 = arith.subf %89, %92 : vector<56x56xf32>
    %94 = math.exp %93 : vector<56x56xf32>
    %cst_29 = arith.constant dense<0.000000e+00> : vector<56xf32>
    %95 = vector.multi_reduction <add>, %94, %cst_29 [1] : vector<56x56xf32> to vector<56xf32>
    %96 = vector.shape_cast %95 : vector<56xf32> to vector<56x1xf32>
    %97 = tpu.reciprocal %96 {approx = true} : vector<56x1xf32> -> vector<56x1xf32>
    %98 = vector.broadcast %97 : vector<56x1xf32> to vector<56x56xf32>
    %99 = arith.mulf %94, %98 : vector<56x56xf32>
    %100 = arith.truncf %99 : vector<56x56xf32> to vector<56x56xbf16>
    %cst_30 = arith.constant dense<0.000000e+00> : vector<56x8xf32>
    %101 = tpu.matmul %100, %85, %cst_30 {dimension_numbers = #tpu.dot_dimension_numbers<[1], [0], [0], [1], [0, 0, 1, 1], [], []>} : vector<56x56xbf16>, vector<56x8xbf16>, vector<56x8xf32> -> vector<56x8xf32>
    %102 = tpu.concatenate %44, %63, %82, %101 in 1 : vector<56x8xf32>, vector<56x8xf32>, vector<56x8xf32>, vector<56x8xf32> -> vector<56x32xf32>
    %c0_31 = arith.constant 0 : index
    %c0_32 = arith.constant 0 : index
    %103 = vector.load %arg4[%c0_31, %c0_32] : memref<32x32xbf16, #tpu.memory_space<vmem>>, vector<32x32xbf16>
    %104 = arith.truncf %102 : vector<56x32xf32> to vector<56x32xbf16>
    %cst_33 = arith.constant dense<0.000000e+00> : vector<56x32xf32>
    %105 = tpu.matmul %104, %103, %cst_33 {dimension_numbers = #tpu.dot_dimension_numbers<[1], [0], [0], [1], [0, 0, 1, 1], [], []>} : vector<56x32xbf16>, vector<32x32xbf16>, vector<56x32xf32> -> vector<56x32xf32>
    %c0_34 = arith.constant 0 : index
    %c0_35 = arith.constant 0 : index
    %106 = vector.load %arg5[%c0_34, %c0_35] : memref<1x32xf32, #tpu.memory_space<vmem>>, vector<1x32xf32>
    %107 = vector.broadcast %106 : vector<1x32xf32> to vector<56x32xf32>
    %108 = arith.addf %105, %107 : vector<56x32xf32>
    %109 = arith.addf %0, %108 : vector<56x32xf32>
    %c0_36 = arith.constant 0 : index
    %c0_37 = arith.constant 0 : index
    %110 = vector.load %arg6[%c0_36, %c0_37] : memref<1x32xf32, #tpu.memory_space<vmem>>, vector<1x32xf32>
    %c0_38 = arith.constant 0 : index
    %c0_39 = arith.constant 0 : index
    %111 = vector.load %arg7[%c0_38, %c0_39] : memref<1x32xf32, #tpu.memory_space<vmem>>, vector<1x32xf32>
    %cst_40 = arith.constant dense<0.000000e+00> : vector<56xf32>
    %112 = vector.multi_reduction <add>, %109, %cst_40 [1] : vector<56x32xf32> to vector<56xf32>
    %113 = vector.shape_cast %112 : vector<56xf32> to vector<56x1xf32>
    %cst_41 = arith.constant 3.200000e+01 : f32
    %114 = vector.broadcast %cst_41 : f32 to vector<56x1xf32>
    %115 = arith.divf %113, %114 : vector<56x1xf32>
    %116 = vector.broadcast %115 : vector<56x1xf32> to vector<56x32xf32>
    %117 = arith.subf %109, %116 : vector<56x32xf32>
    %118 = arith.mulf %117, %117 : vector<56x32xf32>
    %cst_42 = arith.constant dense<0.000000e+00> : vector<56xf32>
    %119 = vector.multi_reduction <add>, %118, %cst_42 [1] : vector<56x32xf32> to vector<56xf32>
    %120 = vector.shape_cast %119 : vector<56xf32> to vector<56x1xf32>
    %cst_43 = arith.constant 3.200000e+01 : f32
    %121 = vector.broadcast %cst_43 : f32 to vector<56x1xf32>
    %122 = arith.divf %120, %121 : vector<56x1xf32>
    %cst_44 = arith.constant 9.99999974E-6 : f32
    %123 = vector.broadcast %cst_44 : f32 to vector<56x1xf32>
    %124 = arith.addf %122, %123 : vector<56x1xf32>
    %125 = math.rsqrt %124 : vector<56x1xf32>
    %126 = vector.broadcast %125 : vector<56x1xf32> to vector<56x32xf32>
    %127 = arith.mulf %117, %126 : vector<56x32xf32>
    %128 = vector.broadcast %110 : vector<1x32xf32> to vector<56x32xf32>
    %129 = arith.mulf %127, %128 : vector<56x32xf32>
    %130 = vector.broadcast %111 : vector<1x32xf32> to vector<56x32xf32>
    %131 = arith.addf %129, %130 : vector<56x32xf32>
    %c0_45 = arith.constant 0 : index
    %c0_46 = arith.constant 0 : index
    %132 = vector.load %arg8[%c0_45, %c0_46] : memref<32x32xbf16, #tpu.memory_space<vmem>>, vector<32x32xbf16>
    %133 = arith.truncf %131 : vector<56x32xf32> to vector<56x32xbf16>
    %cst_47 = arith.constant dense<0.000000e+00> : vector<56x32xf32>
    %134 = tpu.matmul %133, %132, %cst_47 {dimension_numbers = #tpu.dot_dimension_numbers<[1], [0], [0], [1], [0, 0, 1, 1], [], []>} : vector<56x32xbf16>, vector<32x32xbf16>, vector<56x32xf32> -> vector<56x32xf32>
    %c0_48 = arith.constant 0 : index
    %c0_49 = arith.constant 0 : index
    %135 = vector.load %arg9[%c0_48, %c0_49] : memref<1x32xf32, #tpu.memory_space<vmem>>, vector<1x32xf32>
    %136 = vector.broadcast %135 : vector<1x32xf32> to vector<56x32xf32>
    %137 = arith.addf %134, %136 : vector<56x32xf32>
    %cst_50 = arith.constant 0.000000e+00 : f32
    %138 = vector.broadcast %cst_50 : f32 to vector<56x32xf32>
    %139 = arith.maximumf %137, %138 : vector<56x32xf32>
    %c0_51 = arith.constant 0 : index
    %c0_52 = arith.constant 0 : index
    %140 = vector.load %arg10[%c0_51, %c0_52] : memref<32x32xbf16, #tpu.memory_space<vmem>>, vector<32x32xbf16>
    %141 = arith.truncf %139 : vector<56x32xf32> to vector<56x32xbf16>
    %cst_53 = arith.constant dense<0.000000e+00> : vector<56x32xf32>
    %142 = tpu.matmul %141, %140, %cst_53 {dimension_numbers = #tpu.dot_dimension_numbers<[1], [0], [0], [1], [0, 0, 1, 1], [], []>} : vector<56x32xbf16>, vector<32x32xbf16>, vector<56x32xf32> -> vector<56x32xf32>
    %c0_54 = arith.constant 0 : index
    %c0_55 = arith.constant 0 : index
    %143 = vector.load %arg11[%c0_54, %c0_55] : memref<1x32xf32, #tpu.memory_space<vmem>>, vector<1x32xf32>
    %144 = vector.broadcast %143 : vector<1x32xf32> to vector<56x32xf32>
    %145 = arith.addf %142, %144 : vector<56x32xf32>
    %146 = arith.addf %131, %145 : vector<56x32xf32>
    %c0_56 = arith.constant 0 : index
    %c0_57 = arith.constant 0 : index
    %147 = vector.load %arg12[%c0_56, %c0_57] : memref<1x32xf32, #tpu.memory_space<vmem>>, vector<1x32xf32>
    %c0_58 = arith.constant 0 : index
    %c0_59 = arith.constant 0 : index
    %148 = vector.load %arg13[%c0_58, %c0_59] : memref<1x32xf32, #tpu.memory_space<vmem>>, vector<1x32xf32>
    %cst_60 = arith.constant dense<0.000000e+00> : vector<56xf32>
    %149 = vector.multi_reduction <add>, %146, %cst_60 [1] : vector<56x32xf32> to vector<56xf32>
    %150 = vector.shape_cast %149 : vector<56xf32> to vector<56x1xf32>
    %cst_61 = arith.constant 3.200000e+01 : f32
    %151 = vector.broadcast %cst_61 : f32 to vector<56x1xf32>
    %152 = arith.divf %150, %151 : vector<56x1xf32>
    %153 = vector.broadcast %152 : vector<56x1xf32> to vector<56x32xf32>
    %154 = arith.subf %146, %153 : vector<56x32xf32>
    %155 = arith.mulf %154, %154 : vector<56x32xf32>
    %cst_62 = arith.constant dense<0.000000e+00> : vector<56xf32>
    %156 = vector.multi_reduction <add>, %155, %cst_62 [1] : vector<56x32xf32> to vector<56xf32>
    %157 = vector.shape_cast %156 : vector<56xf32> to vector<56x1xf32>
    %cst_63 = arith.constant 3.200000e+01 : f32
    %158 = vector.broadcast %cst_63 : f32 to vector<56x1xf32>
    %159 = arith.divf %157, %158 : vector<56x1xf32>
    %cst_64 = arith.constant 9.99999974E-6 : f32
    %160 = vector.broadcast %cst_64 : f32 to vector<56x1xf32>
    %161 = arith.addf %159, %160 : vector<56x1xf32>
    %162 = math.rsqrt %161 : vector<56x1xf32>
    %163 = vector.broadcast %162 : vector<56x1xf32> to vector<56x32xf32>
    %164 = arith.mulf %154, %163 : vector<56x32xf32>
    %165 = vector.broadcast %147 : vector<1x32xf32> to vector<56x32xf32>
    %166 = arith.mulf %164, %165 : vector<56x32xf32>
    %167 = vector.broadcast %148 : vector<1x32xf32> to vector<56x32xf32>
    %168 = arith.addf %166, %167 : vector<56x32xf32>
    %169 = arith.truncf %168 : vector<56x32xf32> to vector<56x32xbf16>
    %c0_65 = arith.constant 0 : index
    %c0_66 = arith.constant 0 : index
    %170 = vector.load %arg14[%c0_65, %c0_66] : memref<56x32xbf16, #tpu.memory_space<vmem>>, vector<56x32xbf16>
    tpu.vector_store %arg14[%c0_65, %c0_66], %169 {strides = array<i32>} : memref<56x32xbf16, #tpu.memory_space<vmem>>, vector<56x32xbf16>,
    return
  }
  func.func @transform_0(%arg0: i32) -> (i32, i32) {
    %c0_i32 = arith.constant 0 : i32
    %c0_i32_0 = arith.constant 0 : i32
    return %arg0, %c0_i32 : i32, i32
  }
  func.func @transform_1(%arg0: i32) -> (i32, i32) {
    %c0_i32 = arith.constant 0 : i32
    %c0_i32_0 = arith.constant 0 : i32
    %c0_i32_1 = arith.constant 0 : i32
    return %c0_i32, %c0_i32_0 : i32, i32
  }
  func.func @transform_2(%arg0: i32) -> (i32, i32) {
    %c0_i32 = arith.constant 0 : i32
    %c0_i32_0 = arith.constant 0 : i32
    %c0_i32_1 = arith.constant 0 : i32
    return %c0_i32, %c0_i32_0 : i32, i32
  }
  func.func @transform_3(%arg0: i32) -> (i32, i32) {
    %c0_i32 = arith.constant 0 : i32
    %c0_i32_0 = arith.constant 0 : i32
    %c0_i32_1 = arith.constant 0 : i32
    return %c0_i32, %c0_i32_0 : i32, i32
  }
  func.func @transform_4(%arg0: i32) -> (i32, i32) {
    %c0_i32 = arith.constant 0 : i32
    %c0_i32_0 = arith.constant 0 : i32
    %c0_i32_1 = arith.constant 0 : i32
    return %c0_i32, %c0_i32_0 : i32, i32
  }
  func.func @transform_5(%arg0: i32) -> (i32, i32) {
    %c0_i32 = arith.constant 0 : i32
    %c0_i32_0 = arith.constant 0 : i32
    %c0_i32_1 = arith.constant 0 : i32
    return %c0_i32, %c0_i32_0 : i32, i32
  }
  func.func @transform_6(%arg0: i32) -> (i32, i32) {
    %c0_i32 = arith.constant 0 : i32
    %c0_i32_0 = arith.constant 0 : i32
    %c0_i32_1 = arith.constant 0 : i32
    return %c0_i32, %c0_i32_0 : i32, i32
  }
  func.func @transform_7(%arg0: i32) -> (i32, i32) {
    %c0_i32 = arith.constant 0 : i32
    %c0_i32_0 = arith.constant 0 : i32
    %c0_i32_1 = arith.constant 0 : i32
    return %c0_i32, %c0_i32_0 : i32, i32
  }
  func.func @transform_8(%arg0: i32) -> (i32, i32) {
    %c0_i32 = arith.constant 0 : i32
    %c0_i32_0 = arith.constant 0 : i32
    %c0_i32_1 = arith.constant 0 : i32
    return %c0_i32, %c0_i32_0 : i32, i32
  }
  func.func @transform_9(%arg0: i32) -> (i32, i32) {
    %c0_i32 = arith.constant 0 : i32
    %c0_i32_0 = arith.constant 0 : i32
    %c0_i32_1 = arith.constant 0 : i32
    return %c0_i32, %c0_i32_0 : i32, i32
  }
  func.func @transform_10(%arg0: i32) -> (i32, i32) {
    %c0_i32 = arith.constant 0 : i32
    %c0_i32_0 = arith.constant 0 : i32
    %c0_i32_1 = arith.constant 0 : i32
    return %c0_i32, %c0_i32_0 : i32, i32
  }
  func.func @transform_11(%arg0: i32) -> (i32, i32) {
    %c0_i32 = arith.constant 0 : i32
    %c0_i32_0 = arith.constant 0 : i32
    %c0_i32_1 = arith.constant 0 : i32
    return %c0_i32, %c0_i32_0 : i32, i32
  }
  func.func @transform_12(%arg0: i32) -> (i32, i32) {
    %c0_i32 = arith.constant 0 : i32
    %c0_i32_0 = arith.constant 0 : i32
    %c0_i32_1 = arith.constant 0 : i32
    return %c0_i32, %c0_i32_0 : i32, i32
  }
  func.func @transform_13(%arg0: i32) -> (i32, i32) {
    %c0_i32 = arith.constant 0 : i32
    %c0_i32_0 = arith.constant 0 : i32
    return %arg0, %c0_i32 : i32, i32
  }
}

module attributes {stable_mosaic.version = 11 : i64} {
  func.func @_encoder_layer_kernel(%arg0: i32, %arg1: memref<56x32xbf16, #tpu.memory_space<vmem>>, %arg2: memref<32x96xbf16, #tpu.memory_space<vmem>>, %arg3: memref<1x96xf32, #tpu.memory_space<vmem>>, %arg4: memref<32x32xbf16, #tpu.memory_space<vmem>>, %arg5: memref<1x32xf32, #tpu.memory_space<vmem>>, %arg6: memref<1x32xf32, #tpu.memory_space<vmem>>, %arg7: memref<1x32xf32, #tpu.memory_space<vmem>>, %arg8: memref<32x32xbf16, #tpu.memory_space<vmem>>, %arg9: memref<1x32xf32, #tpu.memory_space<vmem>>, %arg10: memref<32x32xbf16, #tpu.memory_space<vmem>>, %arg11: memref<1x32xf32, #tpu.memory_space<vmem>>, %arg12: memref<1x32xf32, #tpu.memory_space<vmem>>, %arg13: memref<1x32xf32, #tpu.memory_space<vmem>>, %arg14: memref<56x32xbf16, #tpu.memory_space<vmem>>) attributes {dimension_semantics = [#tpu.dimension_semantics<parallel>], iteration_bounds = array<i64: 1>, scalar_prefetch = 0 : i64, scratch_operands = 0 : i64, tpu.core_type = #tpu.core_type<tc>, window_params = [{transform_indices = @transform_0, window_bounds = array<i64: 56, 32>}, {pipeline_mode = #tpu.pipeline_mode<synchronous>, transform_indices = @transform_1, window_bounds = array<i64: 32, 96>}, {pipeline_mode = #tpu.pipeline_mode<synchronous>, transform_indices = @transform_2, window_bounds = array<i64: 1, 96>}, {pipeline_mode = #tpu.pipeline_mode<synchronous>, transform_indices = @transform_3, window_bounds = array<i64: 32, 32>}, {pipeline_mode = #tpu.pipeline_mode<synchronous>, transform_indices = @transform_4, window_bounds = array<i64: 1, 32>}, {pipeline_mode = #tpu.pipeline_mode<synchronous>, transform_indices = @transform_5, window_bounds = array<i64: 1, 32>}, {pipeline_mode = #tpu.pipeline_mode<synchronous>, transform_indices = @transform_6, window_bounds = array<i64: 1, 32>}, {pipeline_mode = #tpu.pipeline_mode<synchronous>, transform_indices = @transform_7, window_bounds = array<i64: 32, 32>}, {pipeline_mode = #tpu.pipeline_mode<synchronous>, transform_indices = @transform_8, window_bounds = array<i64: 1, 32>}, {pipeline_mode = #tpu.pipeline_mode<synchronous>, transform_indices = @transform_9, window_bounds = array<i64: 32, 32>}, {pipeline_mode = #tpu.pipeline_mode<synchronous>, transform_indices = @transform_10, window_bounds = array<i64: 1, 32>}, {pipeline_mode = #tpu.pipeline_mode<synchronous>, transform_indices = @transform_11, window_bounds = array<i64: 1, 32>}, {pipeline_mode = #tpu.pipeline_mode<synchronous>, transform_indices = @transform_12, window_bounds = array<i64: 1, 32>}, {transform_indices = @transform_13, window_bounds = array<i64: 56, 32>}]} {
    %c0 = arith.constant 0 : index
    %c0_0 = arith.constant 0 : index
    %0 = vector.load %arg1[%c0, %c0_0] : memref<56x32xbf16, #tpu.memory_space<vmem>>, vector<56x32xbf16>
    %1 = arith.extf %0 : vector<56x32xbf16> to vector<56x32xf32>
    %2 = tpu.iota {dimensions = array<i32: 0>} : vector<56x56xi32>
    %3 = arith.sitofp %2 : vector<56x56xi32> to vector<56x56xf32>
    %4 = tpu.iota {dimensions = array<i32: 1>} : vector<56x56xi32>
    %5 = arith.sitofp %4 : vector<56x56xi32> to vector<56x56xf32>
    %cst = arith.constant 5.000000e-01 : f32
    %6 = vector.broadcast %cst : f32 to vector<56x56xf32>
    %7 = arith.addf %3, %6 : vector<56x56xf32>
    %cst_1 = arith.constant 0.0714285746 : f32
    %8 = vector.broadcast %cst_1 : f32 to vector<56x56xf32>
    %9 = arith.mulf %7, %8 : vector<56x56xf32>
    %10 = math.floor %9 : vector<56x56xf32>
    %cst_2 = arith.constant 5.000000e-01 : f32
    %11 = vector.broadcast %cst_2 : f32 to vector<56x56xf32>
    %12 = arith.addf %5, %11 : vector<56x56xf32>
    %cst_3 = arith.constant 0.0714285746 : f32
    %13 = vector.broadcast %cst_3 : f32 to vector<56x56xf32>
    %14 = arith.mulf %12, %13 : vector<56x56xf32>
    %15 = math.floor %14 : vector<56x56xf32>
    %16 = arith.cmpf oeq, %10, %15 : vector<56x56xf32>
    %cst_4 = arith.constant 0.000000e+00 : f32
    %cst_5 = arith.constant -1.000000e+30 : f32
    %17 = vector.broadcast %cst_4 : f32 to vector<56x56xf32>
    %18 = vector.broadcast %cst_5 : f32 to vector<56x56xf32>
    %19 = arith.select %16, %17, %18 : vector<56x56xi1>, vector<56x56xf32>
    %c0_6 = arith.constant 0 : index
    %c0_7 = arith.constant 0 : index
    %20 = vector.load %arg2[%c0_6, %c0_7] : memref<32x96xbf16, #tpu.memory_space<vmem>>, vector<32x96xbf16>
    %21 = arith.truncf %1 : vector<56x32xf32> to vector<56x32xbf16>
    %cst_8 = arith.constant dense<0.000000e+00> : vector<56x96xf32>
    %22 = tpu.matmul %21, %20, %cst_8 {dimension_numbers = #tpu.dot_dimension_numbers<[1], [0], [0], [1], [0, 0, 1, 1], [], []>} : vector<56x32xbf16>, vector<32x96xbf16>, vector<56x96xf32> -> vector<56x96xf32>
    %c0_9 = arith.constant 0 : index
    %c0_10 = arith.constant 0 : index
    %23 = vector.load %arg3[%c0_9, %c0_10] : memref<1x96xf32, #tpu.memory_space<vmem>>, vector<1x96xf32>
    %24 = vector.broadcast %23 : vector<1x96xf32> to vector<56x96xf32>
    %25 = arith.addf %22, %24 : vector<56x96xf32>
    %26 = arith.truncf %25 : vector<56x96xf32> to vector<56x96xbf16>
    %27 = vector.extract_strided_slice %26 {offsets = [0, 0], sizes = [56, 8], strides = [1, 1]} : vector<56x96xbf16> to vector<56x8xbf16>
    %28 = vector.extract_strided_slice %26 {offsets = [0, 32], sizes = [56, 8], strides = [1, 1]} : vector<56x96xbf16> to vector<56x8xbf16>
    %29 = vector.extract_strided_slice %26 {offsets = [0, 64], sizes = [56, 8], strides = [1, 1]} : vector<56x96xbf16> to vector<56x8xbf16>
    %cst_11 = arith.constant dense<0.000000e+00> : vector<56x56xf32>
    %30 = tpu.matmul %27, %28, %cst_11 {dimension_numbers = #tpu.dot_dimension_numbers<[1], [1], [0], [0], [0, 0, 1, 0], [], []>} : vector<56x8xbf16>, vector<56x8xbf16>, vector<56x56xf32> -> vector<56x56xf32>
    %cst_12 = arith.constant 0.353553385 : f32
    %31 = vector.broadcast %cst_12 : f32 to vector<56x56xf32>
    %32 = arith.mulf %30, %31 : vector<56x56xf32>
    %33 = arith.addf %32, %19 : vector<56x56xf32>
    %cst_13 = arith.constant dense<0xFF800000> : vector<56xf32>
    %34 = vector.multi_reduction <maximumf>, %33, %cst_13 [1] : vector<56x56xf32> to vector<56xf32>
    %35 = vector.shape_cast %34 : vector<56xf32> to vector<56x1xf32>
    %36 = vector.broadcast %35 : vector<56x1xf32> to vector<56x56xf32>
    %37 = arith.subf %33, %36 : vector<56x56xf32>
    %38 = math.exp %37 : vector<56x56xf32>
    %cst_14 = arith.constant dense<0.000000e+00> : vector<56xf32>
    %39 = vector.multi_reduction <add>, %38, %cst_14 [1] : vector<56x56xf32> to vector<56xf32>
    %40 = vector.shape_cast %39 : vector<56xf32> to vector<56x1xf32>
    %41 = tpu.reciprocal %40 {approx = true} : vector<56x1xf32> -> vector<56x1xf32>
    %42 = vector.broadcast %41 : vector<56x1xf32> to vector<56x56xf32>
    %43 = arith.mulf %38, %42 : vector<56x56xf32>
    %44 = arith.truncf %43 : vector<56x56xf32> to vector<56x56xbf16>
    %cst_15 = arith.constant dense<0.000000e+00> : vector<56x8xf32>
    %45 = tpu.matmul %44, %29, %cst_15 {dimension_numbers = #tpu.dot_dimension_numbers<[1], [0], [0], [1], [0, 0, 1, 1], [], []>} : vector<56x56xbf16>, vector<56x8xbf16>, vector<56x8xf32> -> vector<56x8xf32>
    %46 = vector.extract_strided_slice %26 {offsets = [0, 8], sizes = [56, 8], strides = [1, 1]} : vector<56x96xbf16> to vector<56x8xbf16>
    %47 = vector.extract_strided_slice %26 {offsets = [0, 40], sizes = [56, 8], strides = [1, 1]} : vector<56x96xbf16> to vector<56x8xbf16>
    %48 = vector.extract_strided_slice %26 {offsets = [0, 72], sizes = [56, 8], strides = [1, 1]} : vector<56x96xbf16> to vector<56x8xbf16>
    %cst_16 = arith.constant dense<0.000000e+00> : vector<56x56xf32>
    %49 = tpu.matmul %46, %47, %cst_16 {dimension_numbers = #tpu.dot_dimension_numbers<[1], [1], [0], [0], [0, 0, 1, 0], [], []>} : vector<56x8xbf16>, vector<56x8xbf16>, vector<56x56xf32> -> vector<56x56xf32>
    %cst_17 = arith.constant 0.353553385 : f32
    %50 = vector.broadcast %cst_17 : f32 to vector<56x56xf32>
    %51 = arith.mulf %49, %50 : vector<56x56xf32>
    %52 = arith.addf %51, %19 : vector<56x56xf32>
    %cst_18 = arith.constant dense<0xFF800000> : vector<56xf32>
    %53 = vector.multi_reduction <maximumf>, %52, %cst_18 [1] : vector<56x56xf32> to vector<56xf32>
    %54 = vector.shape_cast %53 : vector<56xf32> to vector<56x1xf32>
    %55 = vector.broadcast %54 : vector<56x1xf32> to vector<56x56xf32>
    %56 = arith.subf %52, %55 : vector<56x56xf32>
    %57 = math.exp %56 : vector<56x56xf32>
    %cst_19 = arith.constant dense<0.000000e+00> : vector<56xf32>
    %58 = vector.multi_reduction <add>, %57, %cst_19 [1] : vector<56x56xf32> to vector<56xf32>
    %59 = vector.shape_cast %58 : vector<56xf32> to vector<56x1xf32>
    %60 = tpu.reciprocal %59 {approx = true} : vector<56x1xf32> -> vector<56x1xf32>
    %61 = vector.broadcast %60 : vector<56x1xf32> to vector<56x56xf32>
    %62 = arith.mulf %57, %61 : vector<56x56xf32>
    %63 = arith.truncf %62 : vector<56x56xf32> to vector<56x56xbf16>
    %cst_20 = arith.constant dense<0.000000e+00> : vector<56x8xf32>
    %64 = tpu.matmul %63, %48, %cst_20 {dimension_numbers = #tpu.dot_dimension_numbers<[1], [0], [0], [1], [0, 0, 1, 1], [], []>} : vector<56x56xbf16>, vector<56x8xbf16>, vector<56x8xf32> -> vector<56x8xf32>
    %65 = vector.extract_strided_slice %26 {offsets = [0, 16], sizes = [56, 8], strides = [1, 1]} : vector<56x96xbf16> to vector<56x8xbf16>
    %66 = vector.extract_strided_slice %26 {offsets = [0, 48], sizes = [56, 8], strides = [1, 1]} : vector<56x96xbf16> to vector<56x8xbf16>
    %67 = vector.extract_strided_slice %26 {offsets = [0, 80], sizes = [56, 8], strides = [1, 1]} : vector<56x96xbf16> to vector<56x8xbf16>
    %cst_21 = arith.constant dense<0.000000e+00> : vector<56x56xf32>
    %68 = tpu.matmul %65, %66, %cst_21 {dimension_numbers = #tpu.dot_dimension_numbers<[1], [1], [0], [0], [0, 0, 1, 0], [], []>} : vector<56x8xbf16>, vector<56x8xbf16>, vector<56x56xf32> -> vector<56x56xf32>
    %cst_22 = arith.constant 0.353553385 : f32
    %69 = vector.broadcast %cst_22 : f32 to vector<56x56xf32>
    %70 = arith.mulf %68, %69 : vector<56x56xf32>
    %71 = arith.addf %70, %19 : vector<56x56xf32>
    %cst_23 = arith.constant dense<0xFF800000> : vector<56xf32>
    %72 = vector.multi_reduction <maximumf>, %71, %cst_23 [1] : vector<56x56xf32> to vector<56xf32>
    %73 = vector.shape_cast %72 : vector<56xf32> to vector<56x1xf32>
    %74 = vector.broadcast %73 : vector<56x1xf32> to vector<56x56xf32>
    %75 = arith.subf %71, %74 : vector<56x56xf32>
    %76 = math.exp %75 : vector<56x56xf32>
    %cst_24 = arith.constant dense<0.000000e+00> : vector<56xf32>
    %77 = vector.multi_reduction <add>, %76, %cst_24 [1] : vector<56x56xf32> to vector<56xf32>
    %78 = vector.shape_cast %77 : vector<56xf32> to vector<56x1xf32>
    %79 = tpu.reciprocal %78 {approx = true} : vector<56x1xf32> -> vector<56x1xf32>
    %80 = vector.broadcast %79 : vector<56x1xf32> to vector<56x56xf32>
    %81 = arith.mulf %76, %80 : vector<56x56xf32>
    %82 = arith.truncf %81 : vector<56x56xf32> to vector<56x56xbf16>
    %cst_25 = arith.constant dense<0.000000e+00> : vector<56x8xf32>
    %83 = tpu.matmul %82, %67, %cst_25 {dimension_numbers = #tpu.dot_dimension_numbers<[1], [0], [0], [1], [0, 0, 1, 1], [], []>} : vector<56x56xbf16>, vector<56x8xbf16>, vector<56x8xf32> -> vector<56x8xf32>
    %84 = vector.extract_strided_slice %26 {offsets = [0, 24], sizes = [56, 8], strides = [1, 1]} : vector<56x96xbf16> to vector<56x8xbf16>
    %85 = vector.extract_strided_slice %26 {offsets = [0, 56], sizes = [56, 8], strides = [1, 1]} : vector<56x96xbf16> to vector<56x8xbf16>
    %86 = vector.extract_strided_slice %26 {offsets = [0, 88], sizes = [56, 8], strides = [1, 1]} : vector<56x96xbf16> to vector<56x8xbf16>
    %cst_26 = arith.constant dense<0.000000e+00> : vector<56x56xf32>
    %87 = tpu.matmul %84, %85, %cst_26 {dimension_numbers = #tpu.dot_dimension_numbers<[1], [1], [0], [0], [0, 0, 1, 0], [], []>} : vector<56x8xbf16>, vector<56x8xbf16>, vector<56x56xf32> -> vector<56x56xf32>
    %cst_27 = arith.constant 0.353553385 : f32
    %88 = vector.broadcast %cst_27 : f32 to vector<56x56xf32>
    %89 = arith.mulf %87, %88 : vector<56x56xf32>
    %90 = arith.addf %89, %19 : vector<56x56xf32>
    %cst_28 = arith.constant dense<0xFF800000> : vector<56xf32>
    %91 = vector.multi_reduction <maximumf>, %90, %cst_28 [1] : vector<56x56xf32> to vector<56xf32>
    %92 = vector.shape_cast %91 : vector<56xf32> to vector<56x1xf32>
    %93 = vector.broadcast %92 : vector<56x1xf32> to vector<56x56xf32>
    %94 = arith.subf %90, %93 : vector<56x56xf32>
    %95 = math.exp %94 : vector<56x56xf32>
    %cst_29 = arith.constant dense<0.000000e+00> : vector<56xf32>
    %96 = vector.multi_reduction <add>, %95, %cst_29 [1] : vector<56x56xf32> to vector<56xf32>
    %97 = vector.shape_cast %96 : vector<56xf32> to vector<56x1xf32>
    %98 = tpu.reciprocal %97 {approx = true} : vector<56x1xf32> -> vector<56x1xf32>
    %99 = vector.broadcast %98 : vector<56x1xf32> to vector<56x56xf32>
    %100 = arith.mulf %95, %99 : vector<56x56xf32>
    %101 = arith.truncf %100 : vector<56x56xf32> to vector<56x56xbf16>
    %cst_30 = arith.constant dense<0.000000e+00> : vector<56x8xf32>
    %102 = tpu.matmul %101, %86, %cst_30 {dimension_numbers = #tpu.dot_dimension_numbers<[1], [0], [0], [1], [0, 0, 1, 1], [], []>} : vector<56x56xbf16>, vector<56x8xbf16>, vector<56x8xf32> -> vector<56x8xf32>
    %103 = tpu.concatenate %45, %64, %83, %102 in 1 : vector<56x8xf32>, vector<56x8xf32>, vector<56x8xf32>, vector<56x8xf32> -> vector<56x32xf32>
    %c0_31 = arith.constant 0 : index
    %c0_32 = arith.constant 0 : index
    %104 = vector.load %arg4[%c0_31, %c0_32] : memref<32x32xbf16, #tpu.memory_space<vmem>>, vector<32x32xbf16>
    %105 = arith.truncf %103 : vector<56x32xf32> to vector<56x32xbf16>
    %cst_33 = arith.constant dense<0.000000e+00> : vector<56x32xf32>
    %106 = tpu.matmul %105, %104, %cst_33 {dimension_numbers = #tpu.dot_dimension_numbers<[1], [0], [0], [1], [0, 0, 1, 1], [], []>} : vector<56x32xbf16>, vector<32x32xbf16>, vector<56x32xf32> -> vector<56x32xf32>
    %c0_34 = arith.constant 0 : index
    %c0_35 = arith.constant 0 : index
    %107 = vector.load %arg5[%c0_34, %c0_35] : memref<1x32xf32, #tpu.memory_space<vmem>>, vector<1x32xf32>
    %108 = vector.broadcast %107 : vector<1x32xf32> to vector<56x32xf32>
    %109 = arith.addf %106, %108 : vector<56x32xf32>
    %110 = arith.addf %1, %109 : vector<56x32xf32>
    %c0_36 = arith.constant 0 : index
    %c0_37 = arith.constant 0 : index
    %111 = vector.load %arg6[%c0_36, %c0_37] : memref<1x32xf32, #tpu.memory_space<vmem>>, vector<1x32xf32>
    %c0_38 = arith.constant 0 : index
    %c0_39 = arith.constant 0 : index
    %112 = vector.load %arg7[%c0_38, %c0_39] : memref<1x32xf32, #tpu.memory_space<vmem>>, vector<1x32xf32>
    %cst_40 = arith.constant dense<0.000000e+00> : vector<56xf32>
    %113 = vector.multi_reduction <add>, %110, %cst_40 [1] : vector<56x32xf32> to vector<56xf32>
    %114 = vector.shape_cast %113 : vector<56xf32> to vector<56x1xf32>
    %cst_41 = arith.constant 3.200000e+01 : f32
    %115 = vector.broadcast %cst_41 : f32 to vector<56x1xf32>
    %116 = arith.divf %114, %115 : vector<56x1xf32>
    %117 = vector.broadcast %116 : vector<56x1xf32> to vector<56x32xf32>
    %118 = arith.subf %110, %117 : vector<56x32xf32>
    %119 = arith.mulf %118, %118 : vector<56x32xf32>
    %cst_42 = arith.constant dense<0.000000e+00> : vector<56xf32>
    %120 = vector.multi_reduction <add>, %119, %cst_42 [1] : vector<56x32xf32> to vector<56xf32>
    %121 = vector.shape_cast %120 : vector<56xf32> to vector<56x1xf32>
    %cst_43 = arith.constant 3.200000e+01 : f32
    %122 = vector.broadcast %cst_43 : f32 to vector<56x1xf32>
    %123 = arith.divf %121, %122 : vector<56x1xf32>
    %cst_44 = arith.constant 9.99999974E-6 : f32
    %124 = vector.broadcast %cst_44 : f32 to vector<56x1xf32>
    %125 = arith.addf %123, %124 : vector<56x1xf32>
    %126 = math.rsqrt %125 : vector<56x1xf32>
    %127 = vector.broadcast %126 : vector<56x1xf32> to vector<56x32xf32>
    %128 = arith.mulf %118, %127 : vector<56x32xf32>
    %129 = vector.broadcast %111 : vector<1x32xf32> to vector<56x32xf32>
    %130 = arith.mulf %128, %129 : vector<56x32xf32>
    %131 = vector.broadcast %112 : vector<1x32xf32> to vector<56x32xf32>
    %132 = arith.addf %130, %131 : vector<56x32xf32>
    %c0_45 = arith.constant 0 : index
    %c0_46 = arith.constant 0 : index
    %133 = vector.load %arg8[%c0_45, %c0_46] : memref<32x32xbf16, #tpu.memory_space<vmem>>, vector<32x32xbf16>
    %134 = arith.truncf %132 : vector<56x32xf32> to vector<56x32xbf16>
    %cst_47 = arith.constant dense<0.000000e+00> : vector<56x32xf32>
    %135 = tpu.matmul %134, %133, %cst_47 {dimension_numbers = #tpu.dot_dimension_numbers<[1], [0], [0], [1], [0, 0, 1, 1], [], []>} : vector<56x32xbf16>, vector<32x32xbf16>, vector<56x32xf32> -> vector<56x32xf32>
    %c0_48 = arith.constant 0 : index
    %c0_49 = arith.constant 0 : index
    %136 = vector.load %arg9[%c0_48, %c0_49] : memref<1x32xf32, #tpu.memory_space<vmem>>, vector<1x32xf32>
    %137 = vector.broadcast %136 : vector<1x32xf32> to vector<56x32xf32>
    %138 = arith.addf %135, %137 : vector<56x32xf32>
    %cst_50 = arith.constant 0.000000e+00 : f32
    %139 = vector.broadcast %cst_50 : f32 to vector<56x32xf32>
    %140 = arith.maximumf %138, %139 : vector<56x32xf32>
    %c0_51 = arith.constant 0 : index
    %c0_52 = arith.constant 0 : index
    %141 = vector.load %arg10[%c0_51, %c0_52] : memref<32x32xbf16, #tpu.memory_space<vmem>>, vector<32x32xbf16>
    %142 = arith.truncf %140 : vector<56x32xf32> to vector<56x32xbf16>
    %cst_53 = arith.constant dense<0.000000e+00> : vector<56x32xf32>
    %143 = tpu.matmul %142, %141, %cst_53 {dimension_numbers = #tpu.dot_dimension_numbers<[1], [0], [0], [1], [0, 0, 1, 1], [], []>} : vector<56x32xbf16>, vector<32x32xbf16>, vector<56x32xf32> -> vector<56x32xf32>
    %c0_54 = arith.constant 0 : index
    %c0_55 = arith.constant 0 : index
    %144 = vector.load %arg11[%c0_54, %c0_55] : memref<1x32xf32, #tpu.memory_space<vmem>>, vector<1x32xf32>
    %145 = vector.broadcast %144 : vector<1x32xf32> to vector<56x32xf32>
    %146 = arith.addf %143, %145 : vector<56x32xf32>
    %147 = arith.addf %132, %146 : vector<56x32xf32>
    %c0_56 = arith.constant 0 : index
    %c0_57 = arith.constant 0 : index
    %148 = vector.load %arg12[%c0_56, %c0_57] : memref<1x32xf32, #tpu.memory_space<vmem>>, vector<1x32xf32>
    %c0_58 = arith.constant 0 : index
    %c0_59 = arith.constant 0 : index
    %149 = vector.load %arg13[%c0_58, %c0_59] : memref<1x32xf32, #tpu.memory_space<vmem>>, vector<1x32xf32>
    %cst_60 = arith.constant dense<0.000000e+00> : vector<56xf32>
    %150 = vector.multi_reduction <add>, %147, %cst_60 [1] : vector<56x32xf32> to vector<56xf32>
    %151 = vector.shape_cast %150 : vector<56xf32> to vector<56x1xf32>
    %cst_61 = arith.constant 3.200000e+01 : f32
    %152 = vector.broadcast %cst_61 : f32 to vector<56x1xf32>
    %153 = arith.divf %151, %152 : vector<56x1xf32>
    %154 = vector.broadcast %153 : vector<56x1xf32> to vector<56x32xf32>
    %155 = arith.subf %147, %154 : vector<56x32xf32>
    %156 = arith.mulf %155, %155 : vector<56x32xf32>
    %cst_62 = arith.constant dense<0.000000e+00> : vector<56xf32>
    %157 = vector.multi_reduction <add>, %156, %cst_62 [1] : vector<56x32xf32> to vector<56xf32>
    %158 = vector.shape_cast %157 : vector<56xf32> to vector<56x1xf32>
    %cst_63 = arith.constant 3.200000e+01 : f32
    %159 = vector.broadcast %cst_63 : f32 to vector<56x1xf32>
    %160 = arith.divf %158, %159 : vector<56x1xf32>
    %cst_64 = arith.constant 9.99999974E-6 : f32
    %161 = vector.broadcast %cst_64 : f32 to vector<56x1xf32>
    %162 = arith.addf %160, %161 : vector<56x1xf32>
    %163 = math.rsqrt %162 : vector<56x1xf32>
    %164 = vector.broadcast %163 : vector<56x1xf32> to vector<56x32xf32>
    %165 = arith.mulf %155, %164 : vector<56x32xf32>
    %166 = vector.broadcast %148 : vector<1x32xf32> to vector<56x32xf32>
    %167 = arith.mulf %165, %166 : vector<56x32xf32>
    %168 = vector.broadcast %149 : vector<1x32xf32> to vector<56x32xf32>
    %169 = arith.addf %167, %168 : vector<56x32xf32>
    %170 = arith.truncf %169 : vector<56x32xf32> to vector<56x32xbf16>
    %c0_65 = arith.constant 0 : index
    %c0_66 = arith.constant 0 : index
    %171 = vector.load %arg14[%c0_65, %c0_66] : memref<56x32xbf16, #tpu.memory_space<vmem>>, vector<56x32xbf16>
    tpu.vector_store %arg14[%c0_65, %c0_66], %170 {strides = array<i32>} : memref<56x32xbf16, #tpu.memory_space<vmem>>, vector<56x32xbf16>,
    return
  }
  func.func @transform_0(%arg0: i32) -> (i32, i32) {
    %c0_i32 = arith.constant 0 : i32
    %c0_i32_0 = arith.constant 0 : i32
    return %arg0, %c0_i32 : i32, i32
  }
  func.func @transform_1(%arg0: i32) -> (i32, i32) {
    %c0_i32 = arith.constant 0 : i32
    %c0_i32_0 = arith.constant 0 : i32
    %c0_i32_1 = arith.constant 0 : i32
    return %c0_i32, %c0_i32_0 : i32, i32
  }
  func.func @transform_2(%arg0: i32) -> (i32, i32) {
    %c0_i32 = arith.constant 0 : i32
    %c0_i32_0 = arith.constant 0 : i32
    %c0_i32_1 = arith.constant 0 : i32
    return %c0_i32, %c0_i32_0 : i32, i32
  }
  func.func @transform_3(%arg0: i32) -> (i32, i32) {
    %c0_i32 = arith.constant 0 : i32
    %c0_i32_0 = arith.constant 0 : i32
    %c0_i32_1 = arith.constant 0 : i32
    return %c0_i32, %c0_i32_0 : i32, i32
  }
  func.func @transform_4(%arg0: i32) -> (i32, i32) {
    %c0_i32 = arith.constant 0 : i32
    %c0_i32_0 = arith.constant 0 : i32
    %c0_i32_1 = arith.constant 0 : i32
    return %c0_i32, %c0_i32_0 : i32, i32
  }
  func.func @transform_5(%arg0: i32) -> (i32, i32) {
    %c0_i32 = arith.constant 0 : i32
    %c0_i32_0 = arith.constant 0 : i32
    %c0_i32_1 = arith.constant 0 : i32
    return %c0_i32, %c0_i32_0 : i32, i32
  }
  func.func @transform_6(%arg0: i32) -> (i32, i32) {
    %c0_i32 = arith.constant 0 : i32
    %c0_i32_0 = arith.constant 0 : i32
    %c0_i32_1 = arith.constant 0 : i32
    return %c0_i32, %c0_i32_0 : i32, i32
  }
  func.func @transform_7(%arg0: i32) -> (i32, i32) {
    %c0_i32 = arith.constant 0 : i32
    %c0_i32_0 = arith.constant 0 : i32
    %c0_i32_1 = arith.constant 0 : i32
    return %c0_i32, %c0_i32_0 : i32, i32
  }
  func.func @transform_8(%arg0: i32) -> (i32, i32) {
    %c0_i32 = arith.constant 0 : i32
    %c0_i32_0 = arith.constant 0 : i32
    %c0_i32_1 = arith.constant 0 : i32
    return %c0_i32, %c0_i32_0 : i32, i32
  }
  func.func @transform_9(%arg0: i32) -> (i32, i32) {
    %c0_i32 = arith.constant 0 : i32
    %c0_i32_0 = arith.constant 0 : i32
    %c0_i32_1 = arith.constant 0 : i32
    return %c0_i32, %c0_i32_0 : i32, i32
  }
  func.func @transform_10(%arg0: i32) -> (i32, i32) {
    %c0_i32 = arith.constant 0 : i32
    %c0_i32_0 = arith.constant 0 : i32
    %c0_i32_1 = arith.constant 0 : i32
    return %c0_i32, %c0_i32_0 : i32, i32
  }
  func.func @transform_11(%arg0: i32) -> (i32, i32) {
    %c0_i32 = arith.constant 0 : i32
    %c0_i32_0 = arith.constant 0 : i32
    %c0_i32_1 = arith.constant 0 : i32
    return %c0_i32, %c0_i32_0 : i32, i32
  }
  func.func @transform_12(%arg0: i32) -> (i32, i32) {
    %c0_i32 = arith.constant 0 : i32
    %c0_i32_0 = arith.constant 0 : i32
    %c0_i32_1 = arith.constant 0 : i32
    return %c0_i32, %c0_i32_0 : i32, i32
  }
  func.func @transform_13(%arg0: i32) -> (i32, i32) {
    %c0_i32 = arith.constant 0 : i32
    %c0_i32_0 = arith.constant 0 : i32
    return %arg0, %c0_i32 : i32, i32
  }
}

module attributes {stable_mosaic.version = 11 : i64} {
  func.func @_layernorm_kernel(%arg0: i32, %arg1: memref<16x32xbf16, #tpu.memory_space<vmem>>, %arg2: memref<1x32xf32, #tpu.memory_space<vmem>>, %arg3: memref<1x32xf32, #tpu.memory_space<vmem>>, %arg4: memref<16x32xf32, #tpu.memory_space<vmem>>) attributes {dimension_semantics = [#tpu.dimension_semantics<parallel>], iteration_bounds = array<i64: 1>, scalar_prefetch = 0 : i64, scratch_operands = 0 : i64, tpu.core_type = #tpu.core_type<tc>, window_params = [{transform_indices = @transform_0, window_bounds = array<i64: 16, 32>}, {pipeline_mode = #tpu.pipeline_mode<synchronous>, transform_indices = @transform_1, window_bounds = array<i64: 1, 32>}, {pipeline_mode = #tpu.pipeline_mode<synchronous>, transform_indices = @transform_2, window_bounds = array<i64: 1, 32>}, {transform_indices = @transform_3, window_bounds = array<i64: 16, 32>}]} {
    %c0 = arith.constant 0 : index
    %c0_0 = arith.constant 0 : index
    %0 = vector.load %arg1[%c0, %c0_0] : memref<16x32xbf16, #tpu.memory_space<vmem>>, vector<16x32xbf16>
    %1 = arith.extf %0 : vector<16x32xbf16> to vector<16x32xf32>
    %c0_1 = arith.constant 0 : index
    %c0_2 = arith.constant 0 : index
    %2 = vector.load %arg2[%c0_1, %c0_2] : memref<1x32xf32, #tpu.memory_space<vmem>>, vector<1x32xf32>
    %c0_3 = arith.constant 0 : index
    %c0_4 = arith.constant 0 : index
    %3 = vector.load %arg3[%c0_3, %c0_4] : memref<1x32xf32, #tpu.memory_space<vmem>>, vector<1x32xf32>
    %cst = arith.constant dense<0.000000e+00> : vector<16xf32>
    %4 = vector.multi_reduction <add>, %1, %cst [1] : vector<16x32xf32> to vector<16xf32>
    %5 = vector.shape_cast %4 : vector<16xf32> to vector<16x1xf32>
    %cst_5 = arith.constant 3.200000e+01 : f32
    %6 = vector.broadcast %cst_5 : f32 to vector<16x1xf32>
    %7 = arith.divf %5, %6 : vector<16x1xf32>
    %8 = vector.broadcast %7 : vector<16x1xf32> to vector<16x32xf32>
    %9 = arith.subf %1, %8 : vector<16x32xf32>
    %10 = arith.mulf %9, %9 : vector<16x32xf32>
    %cst_6 = arith.constant dense<0.000000e+00> : vector<16xf32>
    %11 = vector.multi_reduction <add>, %10, %cst_6 [1] : vector<16x32xf32> to vector<16xf32>
    %12 = vector.shape_cast %11 : vector<16xf32> to vector<16x1xf32>
    %cst_7 = arith.constant 3.200000e+01 : f32
    %13 = vector.broadcast %cst_7 : f32 to vector<16x1xf32>
    %14 = arith.divf %12, %13 : vector<16x1xf32>
    %cst_8 = arith.constant 9.99999974E-6 : f32
    %15 = vector.broadcast %cst_8 : f32 to vector<16x1xf32>
    %16 = arith.addf %14, %15 : vector<16x1xf32>
    %17 = math.rsqrt %16 : vector<16x1xf32>
    %18 = vector.broadcast %17 : vector<16x1xf32> to vector<16x32xf32>
    %19 = arith.mulf %9, %18 : vector<16x32xf32>
    %20 = vector.broadcast %2 : vector<1x32xf32> to vector<16x32xf32>
    %21 = arith.mulf %19, %20 : vector<16x32xf32>
    %22 = vector.broadcast %3 : vector<1x32xf32> to vector<16x32xf32>
    %23 = arith.addf %21, %22 : vector<16x32xf32>
    %c0_9 = arith.constant 0 : index
    %c0_10 = arith.constant 0 : index
    %24 = vector.load %arg4[%c0_9, %c0_10] : memref<16x32xf32, #tpu.memory_space<vmem>>, vector<16x32xf32>
    tpu.vector_store %arg4[%c0_9, %c0_10], %23 {strides = array<i32>} : memref<16x32xf32, #tpu.memory_space<vmem>>, vector<16x32xf32>,
    return
  }
  func.func @transform_0(%arg0: i32) -> (i32, i32) {
    %c0_i32 = arith.constant 0 : i32
    %c0_i32_0 = arith.constant 0 : i32
    return %arg0, %c0_i32 : i32, i32
  }
  func.func @transform_1(%arg0: i32) -> (i32, i32) {
    %c0_i32 = arith.constant 0 : i32
    %c0_i32_0 = arith.constant 0 : i32
    %c0_i32_1 = arith.constant 0 : i32
    return %c0_i32, %c0_i32_0 : i32, i32
  }
  func.func @transform_2(%arg0: i32) -> (i32, i32) {
    %c0_i32 = arith.constant 0 : i32
    %c0_i32_0 = arith.constant 0 : i32
    %c0_i32_1 = arith.constant 0 : i32
    return %c0_i32, %c0_i32_0 : i32, i32
  }
  func.func @transform_3(%arg0: i32) -> (i32, i32) {
    %c0_i32 = arith.constant 0 : i32
    %c0_i32_0 = arith.constant 0 : i32
    return %arg0, %c0_i32 : i32, i32
  }
}

module attributes {stable_mosaic.version = 11 : i64} {
  func.func @_ff_kernel(%arg0: i32, %arg1: memref<8x32xf32, #tpu.memory_space<vmem>>, %arg2: memref<32x32xbf16, #tpu.memory_space<vmem>>, %arg3: memref<1x32xf32, #tpu.memory_space<vmem>>, %arg4: memref<32x128xbf16, #tpu.memory_space<vmem>>, %arg5: memref<1x128xf32, #tpu.memory_space<vmem>>, %arg6: memref<8x128xf32, #tpu.memory_space<vmem>>) attributes {dimension_semantics = [#tpu.dimension_semantics<parallel>], iteration_bounds = array<i64: 1>, scalar_prefetch = 0 : i64, scratch_operands = 0 : i64, tpu.core_type = #tpu.core_type<tc>, window_params = [{transform_indices = @transform_0, window_bounds = array<i64: 8, 32>}, {pipeline_mode = #tpu.pipeline_mode<synchronous>, transform_indices = @transform_1, window_bounds = array<i64: 32, 32>}, {pipeline_mode = #tpu.pipeline_mode<synchronous>, transform_indices = @transform_2, window_bounds = array<i64: 1, 32>}, {pipeline_mode = #tpu.pipeline_mode<synchronous>, transform_indices = @transform_3, window_bounds = array<i64: 32, 128>}, {pipeline_mode = #tpu.pipeline_mode<synchronous>, transform_indices = @transform_4, window_bounds = array<i64: 1, 128>}, {transform_indices = @transform_5, window_bounds = array<i64: 8, 128>}]} {
    %c0 = arith.constant 0 : index
    %c0_0 = arith.constant 0 : index
    %0 = vector.load %arg1[%c0, %c0_0] : memref<8x32xf32, #tpu.memory_space<vmem>>, vector<8x32xf32>
    %c0_1 = arith.constant 0 : index
    %c0_2 = arith.constant 0 : index
    %1 = vector.load %arg2[%c0_1, %c0_2] : memref<32x32xbf16, #tpu.memory_space<vmem>>, vector<32x32xbf16>
    %2 = arith.truncf %0 : vector<8x32xf32> to vector<8x32xbf16>
    %cst = arith.constant dense<0.000000e+00> : vector<8x32xf32>
    %3 = tpu.matmul %2, %1, %cst {dimension_numbers = #tpu.dot_dimension_numbers<[1], [0], [0], [1], [0, 0, 1, 1], [], []>} : vector<8x32xbf16>, vector<32x32xbf16>, vector<8x32xf32> -> vector<8x32xf32>
    %c0_3 = arith.constant 0 : index
    %c0_4 = arith.constant 0 : index
    %4 = vector.load %arg3[%c0_3, %c0_4] : memref<1x32xf32, #tpu.memory_space<vmem>>, vector<1x32xf32>
    %5 = vector.broadcast %4 : vector<1x32xf32> to vector<8x32xf32>
    %6 = arith.addf %3, %5 : vector<8x32xf32>
    %cst_5 = arith.constant 0.000000e+00 : f32
    %7 = vector.broadcast %cst_5 : f32 to vector<8x32xf32>
    %8 = arith.maximumf %6, %7 : vector<8x32xf32>
    %c0_6 = arith.constant 0 : index
    %c0_7 = arith.constant 0 : index
    %9 = vector.load %arg4[%c0_6, %c0_7] : memref<32x128xbf16, #tpu.memory_space<vmem>>, vector<32x128xbf16>
    %10 = arith.truncf %8 : vector<8x32xf32> to vector<8x32xbf16>
    %cst_8 = arith.constant dense<0.000000e+00> : vector<8x128xf32>
    %11 = tpu.matmul %10, %9, %cst_8 {dimension_numbers = #tpu.dot_dimension_numbers<[1], [0], [0], [1], [0, 0, 1, 1], [], []>} : vector<8x32xbf16>, vector<32x128xbf16>, vector<8x128xf32> -> vector<8x128xf32>
    %c0_9 = arith.constant 0 : index
    %c0_10 = arith.constant 0 : index
    %12 = vector.load %arg5[%c0_9, %c0_10] : memref<1x128xf32, #tpu.memory_space<vmem>>, vector<1x128xf32>
    %13 = vector.broadcast %12 : vector<1x128xf32> to vector<8x128xf32>
    %14 = arith.addf %11, %13 : vector<8x128xf32>
    %cst_11 = arith.constant 0.000000e+00 : f32
    %15 = vector.broadcast %cst_11 : f32 to vector<8x128xf32>
    %16 = arith.subf %15, %14 : vector<8x128xf32>
    %17 = math.exp %16 : vector<8x128xf32>
    %cst_12 = arith.constant 1.000000e+00 : f32
    %18 = vector.broadcast %cst_12 : f32 to vector<8x128xf32>
    %19 = arith.addf %18, %17 : vector<8x128xf32>
    %cst_13 = arith.constant 1.000000e+00 : f32
    %20 = vector.broadcast %cst_13 : f32 to vector<8x128xf32>
    %21 = arith.divf %20, %19 : vector<8x128xf32>
    %c0_14 = arith.constant 0 : index
    %c0_15 = arith.constant 0 : index
    %22 = vector.load %arg6[%c0_14, %c0_15] : memref<8x128xf32, #tpu.memory_space<vmem>>, vector<8x128xf32>
    tpu.vector_store %arg6[%c0_14, %c0_15], %21 {strides = array<i32>} : memref<8x128xf32, #tpu.memory_space<vmem>>, vector<8x128xf32>,
    return
  }
  func.func @transform_0(%arg0: i32) -> (i32, i32) {
    %c0_i32 = arith.constant 0 : i32
    %c0_i32_0 = arith.constant 0 : i32
    return %arg0, %c0_i32 : i32, i32
  }
  func.func @transform_1(%arg0: i32) -> (i32, i32) {
    %c0_i32 = arith.constant 0 : i32
    %c0_i32_0 = arith.constant 0 : i32
    %c0_i32_1 = arith.constant 0 : i32
    return %c0_i32, %c0_i32_0 : i32, i32
  }
  func.func @transform_2(%arg0: i32) -> (i32, i32) {
    %c0_i32 = arith.constant 0 : i32
    %c0_i32_0 = arith.constant 0 : i32
    %c0_i32_1 = arith.constant 0 : i32
    return %c0_i32, %c0_i32_0 : i32, i32
  }
  func.func @transform_3(%arg0: i32) -> (i32, i32) {
    %c0_i32 = arith.constant 0 : i32
    %c0_i32_0 = arith.constant 0 : i32
    %c0_i32_1 = arith.constant 0 : i32
    return %c0_i32, %c0_i32_0 : i32, i32
  }
  func.func @transform_4(%arg0: i32) -> (i32, i32) {
    %c0_i32 = arith.constant 0 : i32
    %c0_i32_0 = arith.constant 0 : i32
    %c0_i32_1 = arith.constant 0 : i32
    return %c0_i32, %c0_i32_0 : i32, i32
  }
  func.func @transform_5(%arg0: i32) -> (i32, i32) {
    %c0_i32 = arith.constant 0 : i32
    %c0_i32_0 = arith.constant 0 : i32
    return %arg0, %c0_i32 : i32, i32
  }
}

</mosaic_0001>

<llo_original>
// kernel: spatial_first_transformer_forward.12
$region0: #{spatial_first_transformer_forward.12}
  #allocation0 [shape = 'u32[]', space=smem, size = 0x4, offset = 0x4, fixed_abs, tag = 'smem constant byte address 0x4 - core index']
  #allocation1 [shape = 'u32[144,128]{1,0:T(1,128)}', space=vmem, size = 0x12000, scoped, tag = 'internal scratch']
  %s0 = inlined_call_operand.vmem [shape: f32[16,12], index: 0, kind: input, shape index: {}]
  %s1 = inlined_call_operand.vmem [shape: bf16[12,32], index: 1, kind: input, shape index: {}]
  %s2 = inlined_call_operand.vmem [shape: f32[1,32], index: 2, kind: input, shape index: {}]
  %s3 = inlined_call_operand.vmem [shape: bf16[32,32], index: 3, kind: input, shape index: {}]
  %s4 = inlined_call_operand.vmem [shape: f32[1,32], index: 4, kind: input, shape index: {}]
  %s5 = inlined_call_operand.vmem [shape: f32[16,32], index: 5, kind: output, shape index: {}]
  %s6 = sld [smem:[#allocation0]]
  $region53: #{spatial_first_transformer_forward.12} parent=0
    _
  %s8 = ssub.s32 1, %s6
  %s9 = scalar_select 0, %s8, %s6
  loop: start=0, step=1, limit=4
  $region2: #{spatial_first_transformer_forward.12} parent=0 // loop_pre_header
    _
  $region3: #{spatial_first_transformer_forward.12} parent=0 // loop_header
    %s11 = sphi 0, %s15
    %p12 = scmp.ge.s32.totalorder %s11, 4
    %s21 = sphi 0, %s23
    %s24 = sphi 0, %s21
    %s25 = sphi 0, %s24
    %s41 = sphi 0, %s25
    %s45 = sphi 0, %s45
    %s47 = sphi 0, %s45
    %s48 = sphi 0, %s47
    %s62 = sphi 0, %s48
    %s66 = sphi 0, %s66
    %s68 = sphi 0, %s66
    %s69 = sphi 0, %s68
    %s83 = sphi 0, %s69
    %s87 = sphi 0, %s87
    %s89 = sphi 0, %s87
    %s90 = sphi 0, %s89
    %s104 = sphi 0, %s90
    %s108 = sphi 0, %s108
    %s110 = sphi 0, %s108
    %s111 = sphi 0, %s110
    %s125 = sphi 0, %s111
    %s131 = sphi 0, %s133
    %s134 = sphi 0, %s131
    %s135 = sphi 0, %s134
    %s151 = sphi 0, %s135
  $region4: #{spatial_first_transformer_forward.12} parent=0 // loop_header_branch
    %14 = sbr.rel (%p12) target = $region8
  $region5: #{spatial_first_transformer_forward.12} parent=0 // loop_body
    %s16 = ssub.s32 %s11, 1
    %s17 = ssub.s32 %s11, 2
    %s18 = sadd.s32 %s11, 1
    %s19 = ssub.s32 %s11, %s18
    %p20 = scmp.eq.s32.totalorder %s19, 0
    %s22 = sadd.s32 %s21, 1
    %s23 = scalar_select %p20, %s21, %s22
    %p26 = pneg %p20
    %p27 = scmp.eq.s32.totalorder %s11, 1
    %p28 = por %p26, %p27
    %p29 = scmp.ne.s32.totalorder %s21, %s24
    %p30 = scmp.eq.s32.totalorder %s11, 0
    %p31 = por %p29, %p30
    %p32 = scmp.ne.s32.totalorder %s21, %s24
    %p33 = scmp.eq.s32.totalorder %s16, 1
    %p34 = por %p32, %p33
    %p35 = scmp.ne.s32.totalorder %s24, %s25
    %p36 = scmp.eq.s32.totalorder %s16, 0
    %p37 = por %p35, %p36
    %p38 = scmp.ne.s32.totalorder %s24, %s25
    %p39 = scmp.eq.s32.totalorder %s17, 1
    %p40 = por %p38, %p39
    %p42 = scmp.ne.s32.totalorder %s25, %s41
    %p43 = scmp.eq.s32.totalorder %s17, 0
    %p44 = por %p42, %p43
    %s46 = sadd.s32 %s45, 1
    %p49 = scmp.eq.s32.totalorder %s11, 1
    %p50 = scmp.ne.s32.totalorder %s45, %s47
    %p51 = scmp.eq.s32.totalorder %s11, 0
    %p52 = por %p50, %p51
    %p53 = scmp.ne.s32.totalorder %s45, %s47
    %p54 = scmp.eq.s32.totalorder %s16, 1
    %p55 = por %p53, %p54
    %p56 = scmp.ne.s32.totalorder %s47, %s48
    %p57 = scmp.eq.s32.totalorder %s16, 0
    %p58 = por %p56, %p57
    %p59 = scmp.ne.s32.totalorder %s47, %s48
    %p60 = scmp.eq.s32.totalorder %s17, 1
    %p61 = por %p59, %p60
    %p63 = scmp.ne.s32.totalorder %s48, %s62
    %p64 = scmp.eq.s32.totalorder %s17, 0
    %p65 = por %p63, %p64
    %s67 = sadd.s32 %s66, 1
    %p70 = scmp.eq.s32.totalorder %s11, 1
    %p71 = scmp.ne.s32.totalorder %s66, %s68
    %p72 = scmp.eq.s32.totalorder %s11, 0
    %p73 = por %p71, %p72
    %p74 = scmp.ne.s32.totalorder %s66, %s68
    %p75 = scmp.eq.s32.totalorder %s16, 1
    %p76 = por %p74, %p75
    %p77 = scmp.ne.s32.totalorder %s68, %s69
    %p78 = scmp.eq.s32.totalorder %s16, 0
    %p79 = por %p77, %p78
    %p80 = scmp.ne.s32.totalorder %s68, %s69
    %p81 = scmp.eq.s32.totalorder %s17, 1
    %p82 = por %p80, %p81
    %p84 = scmp.ne.s32.totalorder %s69, %s83
    %p85 = scmp.eq.s32.totalorder %s17, 0
    %p86 = por %p84, %p85
    %s88 = sadd.s32 %s87, 1
    %p91 = scmp.eq.s32.totalorder %s11, 1
    %p92 = scmp.ne.s32.totalorder %s87, %s89
    %p93 = scmp.eq.s32.totalorder %s11, 0
    %p94 = por %p92, %p93
    %p95 = scmp.ne.s32.totalorder %s87, %s89
    %p96 = scmp.eq.s32.totalorder %s16, 1
    %p97 = por %p95, %p96
    %p98 = scmp.ne.s32.totalorder %s89, %s90
    %p99 = scmp.eq.s32.totalorder %s16, 0
    %p100 = por %p98, %p99
    %p101 = scmp.ne.s32.totalorder %s89, %s90
    %p102 = scmp.eq.s32.totalorder %s17, 1
    %p103 = por %p101, %p102
    %p105 = scmp.ne.s32.totalorder %s90, %s104
    %p106 = scmp.eq.s32.totalorder %s17, 0
    %p107 = por %p105, %p106
    %s109 = sadd.s32 %s108, 1
    %p112 = scmp.eq.s32.totalorder %s11, 1
    %p113 = scmp.ne.s32.totalorder %s108, %s110
    %p114 = scmp.eq.s32.totalorder %s11, 0
    %p115 = por %p113, %p114
    %p116 = scmp.ne.s32.totalorder %s108, %s110
    %p117 = scmp.eq.s32.totalorder %s16, 1
    %p118 = por %p116, %p117
    %p119 = scmp.ne.s32.totalorder %s110, %s111
    %p120 = scmp.eq.s32.totalorder %s16, 0
    %p121 = por %p119, %p120
    %p122 = scmp.ne.s32.totalorder %s110, %s111
    %p123 = scmp.eq.s32.totalorder %s17, 1
    %p124 = por %p122, %p123
    %p126 = scmp.ne.s32.totalorder %s111, %s125
    %p127 = scmp.eq.s32.totalorder %s17, 0
    %p128 = por %p126, %p127
    %s129 = ssub.s32 %s11, %s18
    %p130 = scmp.eq.s32.totalorder %s129, 0
    %s132 = sadd.s32 %s131, 1
    %s133 = scalar_select %p130, %s131, %s132
    %p136 = pneg %p130
    %p137 = scmp.eq.s32.totalorder %s11, 1
    %p138 = por %p136, %p137
    %p139 = scmp.ne.s32.totalorder %s131, %s134
    %p140 = scmp.eq.s32.totalorder %s11, 0
    %p141 = por %p139, %p140
    %p142 = scmp.ne.s32.totalorder %s131, %s134
    %p143 = scmp.eq.s32.totalorder %s16, 1
    %p144 = por %p142, %p143
    %p145 = scmp.ne.s32.totalorder %s134, %s135
    %p146 = scmp.eq.s32.totalorder %s16, 0
    %p147 = por %p145, %p146
    %p148 = scmp.ne.s32.totalorder %s134, %s135
    %p149 = scmp.eq.s32.totalorder %s17, 1
    %p150 = por %p148, %p149
    %p152 = scmp.ne.s32.totalorder %s135, %s151
    %p153 = scmp.eq.s32.totalorder %s17, 0
    %p154 = por %p152, %p153
    %p155 = scmp.le.s32.totalorder 1, %s11
    %p156 = scmp.lt.s32.totalorder %s11, 3
    %p157 = pnand %p155, %p156
    %p158 = pneg %p157
    // Predicated region
    $region9: #{spatial_first_transformer_forward.12} parent=5 // pred_check
      _
    $region10: #{spatial_first_transformer_forward.12} parent=5 // pred_check_branch
      %160 = sbr.rel (%p157) target = $region12
    $region11: #{spatial_first_transformer_forward.12} parent=5 // pred_region
      %s161 = ssub.s32 %s11, 1
      // Predicated region
      $region13: #{spatial_first_transformer_forward.12} parent=11 // pred_check
        %p162 = pneg %p58
      $region14: #{spatial_first_transformer_forward.12} parent=11 // pred_check_branch
        %164 = sbr.rel (%p162) target = $region16
      $region15: #{spatial_first_transformer_forward.12} parent=11 // pred_region
        _
      $region16: #{spatial_first_transformer_forward.12} parent=11 // pred_fallthru
        _
      // Predicated region
      $region17: #{spatial_first_transformer_forward.12} parent=11 // pred_check
        %p165 = pneg %p79
      $region18: #{spatial_first_transformer_forward.12} parent=11 // pred_check_branch
        %167 = sbr.rel (%p165) target = $region20
      $region19: #{spatial_first_transformer_forward.12} parent=11 // pred_region
        _
      $region20: #{spatial_first_transformer_forward.12} parent=11 // pred_fallthru
        _
      // Predicated region
      $region21: #{spatial_first_transformer_forward.12} parent=11 // pred_check
        %p168 = pneg %p100
      $region22: #{spatial_first_transformer_forward.12} parent=11 // pred_check_branch
        %170 = sbr.rel (%p168) target = $region24
      $region23: #{spatial_first_transformer_forward.12} parent=11 // pred_region
        _
      $region24: #{spatial_first_transformer_forward.12} parent=11 // pred_fallthru
        _
      // Predicated region
      $region25: #{spatial_first_transformer_forward.12} parent=11 // pred_check
        %p171 = pneg %p121
      $region26: #{spatial_first_transformer_forward.12} parent=11 // pred_check_branch
        %173 = sbr.rel (%p171) target = $region28
      $region27: #{spatial_first_transformer_forward.12} parent=11 // pred_region
        _
      $region28: #{spatial_first_transformer_forward.12} parent=11 // pred_fallthru
        _
    $region12: #{spatial_first_transformer_forward.12} parent=5 // pred_fallthru
      _
    %p174 = scmp.lt.s32.totalorder %s11, 2
    // Predicated region
    $region29: #{spatial_first_transformer_forward.12} parent=5 // pred_check
      %p175 = pneg %p174
    $region30: #{spatial_first_transformer_forward.12} parent=5 // pred_check_branch
      %177 = sbr.rel (%p175) target = $region32
    $region31: #{spatial_first_transformer_forward.12} parent=5 // pred_region
      // Predicated region
      $region33: #{spatial_first_transformer_forward.12} parent=31 // pred_check
        %p178 = pneg %p31
      $region34: #{spatial_first_transformer_forward.12} parent=31 // pred_check_branch
        %180 = sbr.rel (%p178) target = $region36
      $region35: #{spatial_first_transformer_forward.12} parent=31 // pred_region
        %p181 = scmp.lt.s32.totalorder %s11, 1
        %s182 = scalar_select %p181, %s11, 1
        %s183 = smul.addr %s182, 8
        %s184 = scalar_lea.vmem %s0, %s183
      $region36: #{spatial_first_transformer_forward.12} parent=31 // pred_fallthru
        _
    $region32: #{spatial_first_transformer_forward.12} parent=5 // pred_fallthru
      _
    %p185 = scmp.le.s32.totalorder 1, %s11
    %p186 = scmp.lt.s32.totalorder %s11, 3
    %p187 = pnand %p185, %p186
    %p188 = pneg %p187
    // Predicated region
    $region37: #{spatial_first_transformer_forward.12} parent=5 // pred_check
      _
    $region38: #{spatial_first_transformer_forward.12} parent=5 // pred_check_branch
      %190 = sbr.rel (%p187) target = $region40
    $region39: #{spatial_first_transformer_forward.12} parent=5 // pred_region
      %s191 = ssub.s32 %s11, 1
      %p192 = scmp.lt.s32.totalorder %s16, 1
      %s193 = scalar_select %p192, %s16, 1
      %s194 = smul.addr %s193, 8
      %s195 = scalar_lea.vmem %s0, %s194
      %p196 = pneg %p37
      %p197 = pneg %p34
      %p198 = pneg %p58
      %p199 = pneg %p55
      %p200 = pneg %p79
      %p201 = pneg %p76
      %p202 = pneg %p100
      %p203 = pneg %p97
      %p204 = pneg %p121
      %p205 = pneg %p118
      %p206 = pneg %p147
      %p207 = pneg %p144
      %p208 = scmp.lt.s32.totalorder %s16, 1
      %s209 = scalar_select %p208, %s16, 1
      %s210 = smul.addr %s209, 8
      %s211 = scalar_lea.vmem %s5, %s210
      %p212 = scmp.lt.s32.totalorder %s16, 1
      %s213 = scalar_select %p212, %s16, 1
      %s214 = smul.addr %s213, 8
      %s215 = scalar_lea.vmem %s0, %s214
      %p216 = scmp.lt.s32.totalorder %s16, 1
      %s217 = scalar_select %p216, %s16, 1
      %s218 = smul.addr %s217, 8
      %s219 = scalar_lea.vmem %s5, %s218
      %v221 = vld [vmem:[%s215] sm:$0xff]
      %v222 = vld [vmem:[%s1] sm:$0xf]
      %v223 = vld [vmem:[%s1 + $0x4] sm:$0x3]
      %v224 = vpack.c.bf16 %v221, %v221
      %v225 = vld [vmem:[%s2] sm:$0x1]
      %v227 = vlaneseq
      %v228 = vshrl.u32 %v227, 7
      %v229 = vsub.s32 0, %v228
      %v230 = vrot.slane %v225, %v229
      %v234 = vunpack.c.l.b16 %v222
      %v235 = vunpack.c.l.b16 %v223
      %v236 = vpack.c.b16 %v235, %v234
      %vm237 = vcmask 97280
      %v239 = vsel %vm237, %v224, 0
      %vm241 = vcmask 1045504
      %v243 = vsel %vm241, %v236, 0
      %245 = vmatprep.subr.bf16.mxu0 0
      %246 = vmatpush1.bf16.msra.mxu0 %v243
      %247 = vmatprep.subr.bf16.mxu0 0
      %248 = vmatpush1.bf16.msra.mxu0 0
      %249 = vmatprep.subr.bf16.mxu0 0
      %250 = vmatpush1.bf16.msra.mxu0 0
      %251 = vmatprep.subr.bf16.mxu0 0
      %252 = vmatpush1.bf16.msra.mxu0 0
      %253 = vmatprep.subr.bf16.mxu0 0
      %254 = vmatpush1.bf16.msra.mxu0 0
      %255 = vmatprep.subr.bf16.mxu0 0
      %256 = vmatpush1.bf16.msra.mxu0 0
      %257 = vmatprep.subr.bf16.mxu0 0
      %258 = vmatpush1.bf16.msra.mxu0 0
      %259 = vmatprep.subr.bf16.mxu0 0
      %260 = vmatpush1.bf16.msra.mxu0 0
      %261 = vmatprep.subr.bf16.mxu0 0
      %262 = vmatpush1.bf16.msra.mxu0 0
      %263 = vmatprep.subr.bf16.mxu0 0
      %264 = vmatpush1.bf16.msra.mxu0 0
      %265 = vmatprep.subr.bf16.mxu0 0
      %266 = vmatpush1.bf16.msra.mxu0 0
      %267 = vmatprep.subr.bf16.mxu0 0
      %268 = vmatpush1.bf16.msra.mxu0 0
      %269 = vmatprep.subr.bf16.mxu0 0
      %270 = vmatpush1.bf16.msra.mxu0 0
      %271 = vmatprep.subr.bf16.mxu0 0
      %272 = vmatpush1.bf16.msra.mxu0 0
      %273 = vmatprep.subr.bf16.mxu0 0
      %274 = vmatpush1.bf16.msra.mxu0 0
      %275 = vmatprep.subr.bf16.mxu0 0
      %276 = vmatpush1.bf16.msra.mxu0 0
      %277 = vmatprep.mubr.bf16.mxu0 0
      %278 = vmatmul.mubr.bf16.gmra.mrb[0].mxu0 %v239
      %v279 = vpop.f32.mrb[0].mxu0
      %v280 = vadd.f32 %v230, %v279
      %v281 = vpop.f32.mrb[0].mxu0
      %v282 = vpop.f32.mrb[0].mxu0
      %v283 = vpop.f32.mrb[0].mxu0
      %284 = vdwg.mxu0
      %v285 = vmax.f32 %v280, 0.0
      %v286 = vld [vmem:[%s3] sm:$0xf]
      %v287 = vld [vmem:[%s3 + $0x4] sm:$0xf]
      %v288 = vld [vmem:[%s3 + $0x8] sm:$0xf]
      %v289 = vld [vmem:[%s3 + $0xc] sm:$0xf]
      %v290 = vpack.c.bf16 %v285, %v285
      %v291 = vld [vmem:[%s4] sm:$0x1]
      %v293 = vlaneseq
      %v294 = vshrl.u32 %v293, 7
      %v295 = vsub.s32 0, %v294
      %v296 = vrot.slane %v291, %v295
      %v302 = vunpack.c.l.b16 %v286
      %v303 = vunpack.c.l.b16 %v287
      %v304 = vunpack.c.l.b16 %v288
      %v305 = vunpack.c.l.b16 %v289
      %v306 = vpack.c.b16 %v303, %v302
      %v307 = vpack.c.b16 %v305, %v304
      %vm310 = vcmask 261120
      %v312 = vsel %vm310, %v290, 0
      %314 = vmatprep.subr.bf16.mxu0 0
      %315 = vmatpush1.bf16.msra.mxu0 %v306
      %316 = vmatprep.subr.bf16.mxu0 0
      %317 = vmatpush1.bf16.msra.mxu0 %v307
      %318 = vmatprep.subr.bf16.mxu0 0
      %319 = vmatpush1.bf16.msra.mxu0 0
      %320 = vmatprep.subr.bf16.mxu0 0
      %321 = vmatpush1.bf16.msra.mxu0 0
      %322 = vmatprep.subr.bf16.mxu0 0
      %323 = vmatpush1.bf16.msra.mxu0 0
      %324 = vmatprep.subr.bf16.mxu0 0
      %325 = vmatpush1.bf16.msra.mxu0 0
      %326 = vmatprep.subr.bf16.mxu0 0
      %327 = vmatpush1.bf16.msra.mxu0 0
      %328 = vmatprep.subr.bf16.mxu0 0
      %329 = vmatpush1.bf16.msra.mxu0 0
      %330 = vmatprep.subr.bf16.mxu0 0
      %331 = vmatpush1.bf16.msra.mxu0 0
      %332 = vmatprep.subr.bf16.mxu0 0
      %333 = vmatpush1.bf16.msra.mxu0 0
      %334 = vmatprep.subr.bf16.mxu0 0
      %335 = vmatpush1.bf16.msra.mxu0 0
      %336 = vmatprep.subr.bf16.mxu0 0
      %337 = vmatpush1.bf16.msra.mxu0 0
      %338 = vmatprep.subr.bf16.mxu0 0
      %339 = vmatpush1.bf16.msra.mxu0 0
      %340 = vmatprep.subr.bf16.mxu0 0
      %341 = vmatpush1.bf16.msra.mxu0 0
      %342 = vmatprep.subr.bf16.mxu0 0
      %343 = vmatpush1.bf16.msra.mxu0 0
      %344 = vmatprep.subr.bf16.mxu0 0
      %345 = vmatpush1.bf16.msra.mxu0 0
      %346 = vmatprep.mubr.bf16.mxu0 0
      %347 = vmatmul.mubr.bf16.gmra.mrb[0].mxu0 %v312
      %v348 = vpop.f32.mrb[0].mxu0
      %v349 = vadd.f32 %v296, %v348
      %v350 = vpop.f32.mrb[0].mxu0
      %v351 = vpop.f32.mrb[0].mxu0
      %v352 = vpop.f32.mrb[0].mxu0
      %353 = vdwg.mxu0
      %354 = vst.msk [vmem:[%s219] sm:$0xff] %vm310, %v349
      %p355 = scmp.lt.s32.totalorder %s16, 1
      %s356 = scalar_select %p355, %s16, 1
      %s357 = smul.addr %s356, 8
      %s358 = scalar_lea.vmem %s5, %s357
      // Predicated region
      $region41: #{spatial_first_transformer_forward.12} parent=39 // pred_check
        %p359 = pneg %p144
      $region42: #{spatial_first_transformer_forward.12} parent=39 // pred_check_branch
        %361 = sbr.rel (%p359) target = $region44
      $region43: #{spatial_first_transformer_forward.12} parent=39 // pred_region
        _
      $region44: #{spatial_first_transformer_forward.12} parent=39 // pred_fallthru
        _
    $region40: #{spatial_first_transformer_forward.12} parent=5 // pred_fallthru
      _
    %p362 = scmp.le.s32.totalorder 2, %s11
    // Predicated region
    $region45: #{spatial_first_transformer_forward.12} parent=5 // pred_check
      %p363 = pneg %p362
    $region46: #{spatial_first_transformer_forward.12} parent=5 // pred_check_branch
      %365 = sbr.rel (%p363) target = $region48
    $region47: #{spatial_first_transformer_forward.12} parent=5 // pred_region
      %s366 = ssub.s32 %s11, 2
      // Predicated region
      $region49: #{spatial_first_transformer_forward.12} parent=47 // pred_check
        %p367 = pneg %p150
      $region50: #{spatial_first_transformer_forward.12} parent=47 // pred_check_branch
        %369 = sbr.rel (%p367) target = $region52
      $region51: #{spatial_first_transformer_forward.12} parent=47 // pred_region
        %p370 = scmp.lt.s32.totalorder %s17, 1
        %s371 = scalar_select %p370, %s17, 1
        %s372 = smul.addr %s371, 8
        %s373 = scalar_lea.vmem %s5, %s372
      $region52: #{spatial_first_transformer_forward.12} parent=47 // pred_fallthru
        _
    $region48: #{spatial_first_transformer_forward.12} parent=5 // pred_fallthru
      _
  $region6: #{spatial_first_transformer_forward.12} parent=0 // loop_footer
    %s15 = sadd.s32 1, %s11
  $region7: #{spatial_first_transformer_forward.12} parent=0 // loop_footer_branch
    %10 = sbr.rel target = $region3
  $region8: #{spatial_first_transformer_forward.12} parent=0 // loop_exit
    _

// kernel: spatial_first_transformer_forward.11
$region0: #{spatial_first_transformer_forward.11}
  #allocation0 [shape = 'u32[]', space=smem, size = 0x4, offset = 0x4, fixed_abs, tag = 'smem constant byte address 0x4 - core index']
  #allocation1 [shape = 'u32[144,128]{1,0:T(1,128)}', space=vmem, size = 0x12000, scoped, tag = 'internal scratch']
  %s0 = inlined_call_operand.vmem [shape: f32[8,6], index: 0, kind: input, shape index: {}]
  %s1 = inlined_call_operand.vmem [shape: bf16[6,32], index: 1, kind: input, shape index: {}]
  %s2 = inlined_call_operand.vmem [shape: f32[1,32], index: 2, kind: input, shape index: {}]
  %s3 = inlined_call_operand.vmem [shape: bf16[32,32], index: 3, kind: input, shape index: {}]
  %s4 = inlined_call_operand.vmem [shape: f32[1,32], index: 4, kind: input, shape index: {}]
  %s5 = inlined_call_operand.vmem [shape: f32[8,32], index: 5, kind: output, shape index: {}]
  %s6 = sld [smem:[#allocation0]]
  $region30: #{spatial_first_transformer_forward.11} parent=0
    _
  %s8 = ssub.s32 1, %s6
  %s9 = scalar_select 0, %s8, %s6
  // Predicated region
  $region2: #{spatial_first_transformer_forward.11} parent=0 // pred_check
    _
  $region3: #{spatial_first_transformer_forward.11} parent=0 // pred_check_branch
    %11 = sbr.rel (0) target = $region5
  $region4: #{spatial_first_transformer_forward.11} parent=0 // pred_region
    _
  $region5: #{spatial_first_transformer_forward.11} parent=0 // pred_fallthru
    _
  // Predicated region
  $region6: #{spatial_first_transformer_forward.11} parent=0 // pred_check
    _
  $region7: #{spatial_first_transformer_forward.11} parent=0 // pred_check_branch
    %13 = sbr.rel (0) target = $region9
  $region8: #{spatial_first_transformer_forward.11} parent=0 // pred_region
    _
  $region9: #{spatial_first_transformer_forward.11} parent=0 // pred_fallthru
    _
  // Predicated region
  $region10: #{spatial_first_transformer_forward.11} parent=0 // pred_check
    _
  $region11: #{spatial_first_transformer_forward.11} parent=0 // pred_check_branch
    %15 = sbr.rel (0) target = $region13
  $region12: #{spatial_first_transformer_forward.11} parent=0 // pred_region
    _
  $region13: #{spatial_first_transformer_forward.11} parent=0 // pred_fallthru
    _
  // Predicated region
  $region14: #{spatial_first_transformer_forward.11} parent=0 // pred_check
    _
  $region15: #{spatial_first_transformer_forward.11} parent=0 // pred_check_branch
    %17 = sbr.rel (0) target = $region17
  $region16: #{spatial_first_transformer_forward.11} parent=0 // pred_region
    _
  $region17: #{spatial_first_transformer_forward.11} parent=0 // pred_fallthru
    _
  // Predicated region
  $region18: #{spatial_first_transformer_forward.11} parent=0 // pred_check
    _
  $region19: #{spatial_first_transformer_forward.11} parent=0 // pred_check_branch
    %19 = sbr.rel (0) target = $region21
  $region20: #{spatial_first_transformer_forward.11} parent=0 // pred_region
    _
  $region21: #{spatial_first_transformer_forward.11} parent=0 // pred_fallthru
    _
  %v21 = vld [vmem:[%s0] sm:$0xff]
  %v22 = vld [vmem:[%s1] sm:$0x7]
  %v23 = vpack.c.bf16 %v21, %v21
  %v24 = vld [vmem:[%s2] sm:$0x1]
  %v26 = vlaneseq
  %v27 = vshrl.u32 %v26, 7
  %v28 = vsub.s32 0, %v27
  %v29 = vrot.slane %v24, %v28
  %vm31 = vcmask 48128
  %v33 = vsel %vm31, %v23, 0
  %vm35 = vcmask 1042432
  %v37 = vsel %vm35, %v22, 0
  %39 = vmatprep.subr.bf16.mxu0 0
  %40 = vmatpush1.bf16.msra.mxu0 %v37
  %41 = vmatprep.subr.bf16.mxu0 0
  %42 = vmatpush1.bf16.msra.mxu0 0
  %43 = vmatprep.subr.bf16.mxu0 0
  %44 = vmatpush1.bf16.msra.mxu0 0
  %45 = vmatprep.subr.bf16.mxu0 0
  %46 = vmatpush1.bf16.msra.mxu0 0
  %47 = vmatprep.subr.bf16.mxu0 0
  %48 = vmatpush1.bf16.msra.mxu0 0
  %49 = vmatprep.subr.bf16.mxu0 0
  %50 = vmatpush1.bf16.msra.mxu0 0
  %51 = vmatprep.subr.bf16.mxu0 0
  %52 = vmatpush1.bf16.msra.mxu0 0
  %53 = vmatprep.subr.bf16.mxu0 0
  %54 = vmatpush1.bf16.msra.mxu0 0
  %55 = vmatprep.subr.bf16.mxu0 0
  %56 = vmatpush1.bf16.msra.mxu0 0
  %57 = vmatprep.subr.bf16.mxu0 0
  %58 = vmatpush1.bf16.msra.mxu0 0
  %59 = vmatprep.subr.bf16.mxu0 0
  %60 = vmatpush1.bf16.msra.mxu0 0
  %61 = vmatprep.subr.bf16.mxu0 0
  %62 = vmatpush1.bf16.msra.mxu0 0
  %63 = vmatprep.subr.bf16.mxu0 0
  %64 = vmatpush1.bf16.msra.mxu0 0
  %65 = vmatprep.subr.bf16.mxu0 0
  %66 = vmatpush1.bf16.msra.mxu0 0
  %67 = vmatprep.subr.bf16.mxu0 0
  %68 = vmatpush1.bf16.msra.mxu0 0
  %69 = vmatprep.subr.bf16.mxu0 0
  %70 = vmatpush1.bf16.msra.mxu0 0
  %71 = vmatprep.mubr.bf16.mxu0 0
  %72 = vmatmul.mubr.bf16.gmra.mrb[0].mxu0 %v33
  %v73 = vpop.f32.mrb[0].mxu0
  %v74 = vadd.f32 %v29, %v73
  %v75 = vpop.f32.mrb[0].mxu0
  %v76 = vpop.f32.mrb[0].mxu0
  %v77 = vpop.f32.mrb[0].mxu0
  %78 = vdwg.mxu0
  %v79 = vmax.f32 %v74, 0.0
  %v80 = vld [vmem:[%s3] sm:$0xf]
  %v81 = vld [vmem:[%s3 + $0x4] sm:$0xf]
  %v82 = vld [vmem:[%s3 + $0x8] sm:$0xf]
  %v83 = vld [vmem:[%s3 + $0xc] sm:$0xf]
  %v84 = vpack.c.bf16 %v79, %v79
  %v85 = vld [vmem:[%s4] sm:$0x1]
  %v87 = vlaneseq
  %v88 = vshrl.u32 %v87, 7
  %v89 = vsub.s32 0, %v88
  %v90 = vrot.slane %v85, %v89
  %v96 = vunpack.c.l.b16 %v80
  %v97 = vunpack.c.l.b16 %v81
  %v98 = vunpack.c.l.b16 %v82
  %v99 = vunpack.c.l.b16 %v83
  %v100 = vpack.c.b16 %v97, %v96
  %v101 = vpack.c.b16 %v99, %v98
  %vm104 = vcmask 261120
  %v106 = vsel %vm104, %v84, 0
  %108 = vmatprep.subr.bf16.mxu0 0
  %109 = vmatpush1.bf16.msra.mxu0 %v100
  %110 = vmatprep.subr.bf16.mxu0 0
  %111 = vmatpush1.bf16.msra.mxu0 %v101
  %112 = vmatprep.subr.bf16.mxu0 0
  %113 = vmatpush1.bf16.msra.mxu0 0
  %114 = vmatprep.subr.bf16.mxu0 0
  %115 = vmatpush1.bf16.msra.mxu0 0
  %116 = vmatprep.subr.bf16.mxu0 0
  %117 = vmatpush1.bf16.msra.mxu0 0
  %118 = vmatprep.subr.bf16.mxu0 0
  %119 = vmatpush1.bf16.msra.mxu0 0
  %120 = vmatprep.subr.bf16.mxu0 0
  %121 = vmatpush1.bf16.msra.mxu0 0
  %122 = vmatprep.subr.bf16.mxu0 0
  %123 = vmatpush1.bf16.msra.mxu0 0
  %124 = vmatprep.subr.bf16.mxu0 0
  %125 = vmatpush1.bf16.msra.mxu0 0
  %126 = vmatprep.subr.bf16.mxu0 0
  %127 = vmatpush1.bf16.msra.mxu0 0
  %128 = vmatprep.subr.bf16.mxu0 0
  %129 = vmatpush1.bf16.msra.mxu0 0
  %130 = vmatprep.subr.bf16.mxu0 0
  %131 = vmatpush1.bf16.msra.mxu0 0
  %132 = vmatprep.subr.bf16.mxu0 0
  %133 = vmatpush1.bf16.msra.mxu0 0
  %134 = vmatprep.subr.bf16.mxu0 0
  %135 = vmatpush1.bf16.msra.mxu0 0
  %136 = vmatprep.subr.bf16.mxu0 0
  %137 = vmatpush1.bf16.msra.mxu0 0
  %138 = vmatprep.subr.bf16.mxu0 0
  %139 = vmatpush1.bf16.msra.mxu0 0
  %140 = vmatprep.mubr.bf16.mxu0 0
  %141 = vmatmul.mubr.bf16.gmra.mrb[0].mxu0 %v106
  %v142 = vpop.f32.mrb[0].mxu0
  %v143 = vadd.f32 %v90, %v142
  %v144 = vpop.f32.mrb[0].mxu0
  %v145 = vpop.f32.mrb[0].mxu0
  %v146 = vpop.f32.mrb[0].mxu0
  %147 = vdwg.mxu0
  %148 = vst.msk [vmem:[%s5] sm:$0xff] %vm104, %v143
  // Predicated region
  $region22: #{spatial_first_transformer_forward.11} parent=0 // pred_check
    _
  $region23: #{spatial_first_transformer_forward.11} parent=0 // pred_check_branch
    %150 = sbr.rel (0) target = $region25
  $region24: #{spatial_first_transformer_forward.11} parent=0 // pred_region
    _
  $region25: #{spatial_first_transformer_forward.11} parent=0 // pred_fallthru
    _
  // Predicated region
  $region26: #{spatial_first_transformer_forward.11} parent=0 // pred_check
    _
  $region27: #{spatial_first_transformer_forward.11} parent=0 // pred_check_branch
    %152 = sbr.rel (0) target = $region29
  $region28: #{spatial_first_transformer_forward.11} parent=0 // pred_region
    _
  $region29: #{spatial_first_transformer_forward.11} parent=0 // pred_fallthru
    _

// kernel: spatial_first_transformer_forward.10
$region0: #{spatial_first_transformer_forward.10}
  #allocation0 [shape = 'u32[]', space=smem, size = 0x4, offset = 0x4, fixed_abs, tag = 'smem constant byte address 0x4 - core index']
  #allocation1 [shape = 'u32[144,128]{1,0:T(1,128)}', space=vmem, size = 0x12000, scoped, tag = 'internal scratch']
  %s0 = inlined_call_operand.vmem [shape: f32[32,9], index: 0, kind: input, shape index: {}]
  %s1 = inlined_call_operand.vmem [shape: bf16[9,32], index: 1, kind: input, shape index: {}]
  %s2 = inlined_call_operand.vmem [shape: f32[1,32], index: 2, kind: input, shape index: {}]
  %s3 = inlined_call_operand.vmem [shape: bf16[32,32], index: 3, kind: input, shape index: {}]
  %s4 = inlined_call_operand.vmem [shape: f32[1,32], index: 4, kind: input, shape index: {}]
  %s5 = inlined_call_operand.vmem [shape: f32[32,32], index: 5, kind: output, shape index: {}]
  %s6 = sld [smem:[#allocation0]]
  $region53: #{spatial_first_transformer_forward.10} parent=0
    _
  %s8 = ssub.s32 1, %s6
  %s9 = scalar_select 0, %s8, %s6
  loop: start=0, step=1, limit=4
  $region2: #{spatial_first_transformer_forward.10} parent=0 // loop_pre_header
    _
  $region3: #{spatial_first_transformer_forward.10} parent=0 // loop_header
    %s11 = sphi 0, %s15
    %p12 = scmp.ge.s32.totalorder %s11, 4
    %s21 = sphi 0, %s23
    %s24 = sphi 0, %s21
    %s25 = sphi 0, %s24
    %s41 = sphi 0, %s25
    %s45 = sphi 0, %s45
    %s47 = sphi 0, %s45
    %s48 = sphi 0, %s47
    %s62 = sphi 0, %s48
    %s66 = sphi 0, %s66
    %s68 = sphi 0, %s66
    %s69 = sphi 0, %s68
    %s83 = sphi 0, %s69
    %s87 = sphi 0, %s87
    %s89 = sphi 0, %s87
    %s90 = sphi 0, %s89
    %s104 = sphi 0, %s90
    %s108 = sphi 0, %s108
    %s110 = sphi 0, %s108
    %s111 = sphi 0, %s110
    %s125 = sphi 0, %s111
    %s131 = sphi 0, %s133
    %s134 = sphi 0, %s131
    %s135 = sphi 0, %s134
    %s151 = sphi 0, %s135
  $region4: #{spatial_first_transformer_forward.10} parent=0 // loop_header_branch
    %14 = sbr.rel (%p12) target = $region8
  $region5: #{spatial_first_transformer_forward.10} parent=0 // loop_body
    %s16 = ssub.s32 %s11, 1
    %s17 = ssub.s32 %s11, 2
    %s18 = sadd.s32 %s11, 1
    %s19 = ssub.s32 %s11, %s18
    %p20 = scmp.eq.s32.totalorder %s19, 0
    %s22 = sadd.s32 %s21, 1
    %s23 = scalar_select %p20, %s21, %s22
    %p26 = pneg %p20
    %p27 = scmp.eq.s32.totalorder %s11, 1
    %p28 = por %p26, %p27
    %p29 = scmp.ne.s32.totalorder %s21, %s24
    %p30 = scmp.eq.s32.totalorder %s11, 0
    %p31 = por %p29, %p30
    %p32 = scmp.ne.s32.totalorder %s21, %s24
    %p33 = scmp.eq.s32.totalorder %s16, 1
    %p34 = por %p32, %p33
    %p35 = scmp.ne.s32.totalorder %s24, %s25
    %p36 = scmp.eq.s32.totalorder %s16, 0
    %p37 = por %p35, %p36
    %p38 = scmp.ne.s32.totalorder %s24, %s25
    %p39 = scmp.eq.s32.totalorder %s17, 1
    %p40 = por %p38, %p39
    %p42 = scmp.ne.s32.totalorder %s25, %s41
    %p43 = scmp.eq.s32.totalorder %s17, 0
    %p44 = por %p42, %p43
    %s46 = sadd.s32 %s45, 1
    %p49 = scmp.eq.s32.totalorder %s11, 1
    %p50 = scmp.ne.s32.totalorder %s45, %s47
    %p51 = scmp.eq.s32.totalorder %s11, 0
    %p52 = por %p50, %p51
    %p53 = scmp.ne.s32.totalorder %s45, %s47
    %p54 = scmp.eq.s32.totalorder %s16, 1
    %p55 = por %p53, %p54
    %p56 = scmp.ne.s32.totalorder %s47, %s48
    %p57 = scmp.eq.s32.totalorder %s16, 0
    %p58 = por %p56, %p57
    %p59 = scmp.ne.s32.totalorder %s47, %s48
    %p60 = scmp.eq.s32.totalorder %s17, 1
    %p61 = por %p59, %p60
    %p63 = scmp.ne.s32.totalorder %s48, %s62
    %p64 = scmp.eq.s32.totalorder %s17, 0
    %p65 = por %p63, %p64
    %s67 = sadd.s32 %s66, 1
    %p70 = scmp.eq.s32.totalorder %s11, 1
    %p71 = scmp.ne.s32.totalorder %s66, %s68
    %p72 = scmp.eq.s32.totalorder %s11, 0
    %p73 = por %p71, %p72
    %p74 = scmp.ne.s32.totalorder %s66, %s68
    %p75 = scmp.eq.s32.totalorder %s16, 1
    %p76 = por %p74, %p75
    %p77 = scmp.ne.s32.totalorder %s68, %s69
    %p78 = scmp.eq.s32.totalorder %s16, 0
    %p79 = por %p77, %p78
    %p80 = scmp.ne.s32.totalorder %s68, %s69
    %p81 = scmp.eq.s32.totalorder %s17, 1
    %p82 = por %p80, %p81
    %p84 = scmp.ne.s32.totalorder %s69, %s83
    %p85 = scmp.eq.s32.totalorder %s17, 0
    %p86 = por %p84, %p85
    %s88 = sadd.s32 %s87, 1
    %p91 = scmp.eq.s32.totalorder %s11, 1
    %p92 = scmp.ne.s32.totalorder %s87, %s89
    %p93 = scmp.eq.s32.totalorder %s11, 0
    %p94 = por %p92, %p93
    %p95 = scmp.ne.s32.totalorder %s87, %s89
    %p96 = scmp.eq.s32.totalorder %s16, 1
    %p97 = por %p95, %p96
    %p98 = scmp.ne.s32.totalorder %s89, %s90
    %p99 = scmp.eq.s32.totalorder %s16, 0
    %p100 = por %p98, %p99
    %p101 = scmp.ne.s32.totalorder %s89, %s90
    %p102 = scmp.eq.s32.totalorder %s17, 1
    %p103 = por %p101, %p102
    %p105 = scmp.ne.s32.totalorder %s90, %s104
    %p106 = scmp.eq.s32.totalorder %s17, 0
    %p107 = por %p105, %p106
    %s109 = sadd.s32 %s108, 1
    %p112 = scmp.eq.s32.totalorder %s11, 1
    %p113 = scmp.ne.s32.totalorder %s108, %s110
    %p114 = scmp.eq.s32.totalorder %s11, 0
    %p115 = por %p113, %p114
    %p116 = scmp.ne.s32.totalorder %s108, %s110
    %p117 = scmp.eq.s32.totalorder %s16, 1
    %p118 = por %p116, %p117
    %p119 = scmp.ne.s32.totalorder %s110, %s111
    %p120 = scmp.eq.s32.totalorder %s16, 0
    %p121 = por %p119, %p120
    %p122 = scmp.ne.s32.totalorder %s110, %s111
    %p123 = scmp.eq.s32.totalorder %s17, 1
    %p124 = por %p122, %p123
    %p126 = scmp.ne.s32.totalorder %s111, %s125
    %p127 = scmp.eq.s32.totalorder %s17, 0
    %p128 = por %p126, %p127
    %s129 = ssub.s32 %s11, %s18
    %p130 = scmp.eq.s32.totalorder %s129, 0
    %s132 = sadd.s32 %s131, 1
    %s133 = scalar_select %p130, %s131, %s132
    %p136 = pneg %p130
    %p137 = scmp.eq.s32.totalorder %s11, 1
    %p138 = por %p136, %p137
    %p139 = scmp.ne.s32.totalorder %s131, %s134
    %p140 = scmp.eq.s32.totalorder %s11, 0
    %p141 = por %p139, %p140
    %p142 = scmp.ne.s32.totalorder %s131, %s134
    %p143 = scmp.eq.s32.totalorder %s16, 1
    %p144 = por %p142, %p143
    %p145 = scmp.ne.s32.totalorder %s134, %s135
    %p146 = scmp.eq.s32.totalorder %s16, 0
    %p147 = por %p145, %p146
    %p148 = scmp.ne.s32.totalorder %s134, %s135
    %p149 = scmp.eq.s32.totalorder %s17, 1
    %p150 = por %p148, %p149
    %p152 = scmp.ne.s32.totalorder %s135, %s151
    %p153 = scmp.eq.s32.totalorder %s17, 0
    %p154 = por %p152, %p153
    %p155 = scmp.le.s32.totalorder 1, %s11
    %p156 = scmp.lt.s32.totalorder %s11, 3
    %p157 = pnand %p155, %p156
    %p158 = pneg %p157
    // Predicated region
    $region9: #{spatial_first_transformer_forward.10} parent=5 // pred_check
      _
    $region10: #{spatial_first_transformer_forward.10} parent=5 // pred_check_branch
      %160 = sbr.rel (%p157) target = $region12
    $region11: #{spatial_first_transformer_forward.10} parent=5 // pred_region
      %s161 = ssub.s32 %s11, 1
      // Predicated region
      $region13: #{spatial_first_transformer_forward.10} parent=11 // pred_check
        %p162 = pneg %p58
      $region14: #{spatial_first_transformer_forward.10} parent=11 // pred_check_branch
        %164 = sbr.rel (%p162) target = $region16
      $region15: #{spatial_first_transformer_forward.10} parent=11 // pred_region
        _
      $region16: #{spatial_first_transformer_forward.10} parent=11 // pred_fallthru
        _
      // Predicated region
      $region17: #{spatial_first_transformer_forward.10} parent=11 // pred_check
        %p165 = pneg %p79
      $region18: #{spatial_first_transformer_forward.10} parent=11 // pred_check_branch
        %167 = sbr.rel (%p165) target = $region20
      $region19: #{spatial_first_transformer_forward.10} parent=11 // pred_region
        _
      $region20: #{spatial_first_transformer_forward.10} parent=11 // pred_fallthru
        _
      // Predicated region
      $region21: #{spatial_first_transformer_forward.10} parent=11 // pred_check
        %p168 = pneg %p100
      $region22: #{spatial_first_transformer_forward.10} parent=11 // pred_check_branch
        %170 = sbr.rel (%p168) target = $region24
      $region23: #{spatial_first_transformer_forward.10} parent=11 // pred_region
        _
      $region24: #{spatial_first_transformer_forward.10} parent=11 // pred_fallthru
        _
      // Predicated region
      $region25: #{spatial_first_transformer_forward.10} parent=11 // pred_check
        %p171 = pneg %p121
      $region26: #{spatial_first_transformer_forward.10} parent=11 // pred_check_branch
        %173 = sbr.rel (%p171) target = $region28
      $region27: #{spatial_first_transformer_forward.10} parent=11 // pred_region
        _
      $region28: #{spatial_first_transformer_forward.10} parent=11 // pred_fallthru
        _
    $region12: #{spatial_first_transformer_forward.10} parent=5 // pred_fallthru
      _
    %p174 = scmp.lt.s32.totalorder %s11, 2
    // Predicated region
    $region29: #{spatial_first_transformer_forward.10} parent=5 // pred_check
      %p175 = pneg %p174
    $region30: #{spatial_first_transformer_forward.10} parent=5 // pred_check_branch
      %177 = sbr.rel (%p175) target = $region32
    $region31: #{spatial_first_transformer_forward.10} parent=5 // pred_region
      // Predicated region
      $region33: #{spatial_first_transformer_forward.10} parent=31 // pred_check
        %p178 = pneg %p31
      $region34: #{spatial_first_transformer_forward.10} parent=31 // pred_check_branch
        %180 = sbr.rel (%p178) target = $region36
      $region35: #{spatial_first_transformer_forward.10} parent=31 // pred_region
        %s181 = smul.u32 2, %s11
        %p182 = scmp.lt.s32.totalorder %s181, 3
        %s183 = scalar_select %p182, %s181, 3
        %s184 = smul.addr %s183, 8
        %s185 = scalar_lea.vmem %s0, %s184
        %s186 = smul.u32 2, %s11
      $region36: #{spatial_first_transformer_forward.10} parent=31 // pred_fallthru
        _
    $region32: #{spatial_first_transformer_forward.10} parent=5 // pred_fallthru
      _
    %p187 = scmp.le.s32.totalorder 1, %s11
    %p188 = scmp.lt.s32.totalorder %s11, 3
    %p189 = pnand %p187, %p188
    %p190 = pneg %p189
    // Predicated region
    $region37: #{spatial_first_transformer_forward.10} parent=5 // pred_check
      _
    $region38: #{spatial_first_transformer_forward.10} parent=5 // pred_check_branch
      %192 = sbr.rel (%p189) target = $region40
    $region39: #{spatial_first_transformer_forward.10} parent=5 // pred_region
      %s193 = ssub.s32 %s11, 1
      %s194 = smul.u32 2, %s16
      %p195 = scmp.lt.s32.totalorder %s194, 3
      %s196 = scalar_select %p195, %s194, 3
      %s197 = smul.addr %s196, 8
      %s198 = scalar_lea.vmem %s0, %s197
      %p199 = pneg %p37
      %p200 = pneg %p34
      %p201 = pneg %p58
      %p202 = pneg %p55
      %p203 = pneg %p79
      %p204 = pneg %p76
      %p205 = pneg %p100
      %p206 = pneg %p97
      %p207 = pneg %p121
      %p208 = pneg %p118
      %p209 = pneg %p147
      %p210 = pneg %p144
      %s211 = smul.u32 2, %s16
      %p212 = scmp.lt.s32.totalorder %s211, 3
      %s213 = scalar_select %p212, %s211, 3
      %s214 = smul.addr %s213, 8
      %s215 = scalar_lea.vmem %s5, %s214
      %s216 = smul.u32 2, %s16
      %p217 = scmp.lt.s32.totalorder %s216, 3
      %s218 = scalar_select %p217, %s216, 3
      %s219 = smul.addr %s218, 8
      %s220 = scalar_lea.vmem %s0, %s219
      %s221 = smul.u32 2, %s16
      %s222 = smul.u32 2, %s16
      %p223 = scmp.lt.s32.totalorder %s222, 3
      %s224 = scalar_select %p223, %s222, 3
      %s225 = smul.addr %s224, 8
      %s226 = scalar_lea.vmem %s5, %s225
      %s227 = smul.u32 2, %s16
      %v229 = vld [vmem:[%s220] sm:$0xff]
      %v230 = vld [vmem:[%s220 + $0x8] sm:$0xff]
      %v231 = vld [vmem:[%s1] sm:$0xf]
      %v232 = vld [vmem:[%s1 + $0x4] sm:$0x1]
      %v233 = vpack.c.bf16 %v230, %v229
      %v234 = vld [vmem:[%s2] sm:$0x1]
      %v236 = vlaneseq
      %v237 = vshrl.u32 %v236, 7
      %v238 = vsub.s32 0, %v237
      %v239 = vrot.slane %v234, %v238
      %v243 = vunpack.c.l.b16 %v231
      %v244 = vunpack.c.l.b16 %v232
      %v245 = vpack.c.b16 %v244, %v243
      %vm246 = vcmask 72704
      %v248 = vsel %vm246, %v233, 0
      %vm250 = vcmask 1043456
      %vm251 = vcmask 1044480
      %v252 = vsel %vm250, 4294967295, 65535
      %v253 = vsel %vm251, %v252, 0
      %v255 = vand.u32 %v245, %v253
      %257 = vmatprep.subr.bf16.mxu0 0
      %258 = vmatpush1.bf16.msra.mxu0 %v255
      %259 = vmatprep.subr.bf16.mxu0 0
      %260 = vmatpush1.bf16.msra.mxu0 0
      %261 = vmatprep.subr.bf16.mxu0 0
      %262 = vmatpush1.bf16.msra.mxu0 0
      %263 = vmatprep.subr.bf16.mxu0 0
      %264 = vmatpush1.bf16.msra.mxu0 0
      %265 = vmatprep.subr.bf16.mxu0 0
      %266 = vmatpush1.bf16.msra.mxu0 0
      %267 = vmatprep.subr.bf16.mxu0 0
      %268 = vmatpush1.bf16.msra.mxu0 0
      %269 = vmatprep.subr.bf16.mxu0 0
      %270 = vmatpush1.bf16.msra.mxu0 0
      %271 = vmatprep.subr.bf16.mxu0 0
      %272 = vmatpush1.bf16.msra.mxu0 0
      %273 = vmatprep.subr.bf16.mxu0 0
      %274 = vmatpush1.bf16.msra.mxu0 0
      %275 = vmatprep.subr.bf16.mxu0 0
      %276 = vmatpush1.bf16.msra.mxu0 0
      %277 = vmatprep.subr.bf16.mxu0 0
      %278 = vmatpush1.bf16.msra.mxu0 0
      %279 = vmatprep.subr.bf16.mxu0 0
      %280 = vmatpush1.bf16.msra.mxu0 0
      %281 = vmatprep.subr.bf16.mxu0 0
      %282 = vmatpush1.bf16.msra.mxu0 0
      %283 = vmatprep.subr.bf16.mxu0 0
      %284 = vmatpush1.bf16.msra.mxu0 0
      %285 = vmatprep.subr.bf16.mxu0 0
      %286 = vmatpush1.bf16.msra.mxu0 0
      %287 = vmatprep.subr.bf16.mxu0 0
      %288 = vmatpush1.bf16.msra.mxu0 0
      %289 = vmatprep.mubr.bf16.mxu0 0
      %290 = vmatmul.mubr.bf16.gmra.mrb[0].mxu0 %v248
      %v291 = vpop.f32.mrb[0].mxu0
      %v292 = vadd.f32 %v239, %v291
      %v293 = vpop.f32.mrb[0].mxu0
      %v294 = vpop.f32.mrb[0].mxu0
      %v295 = vadd.f32 %v239, %v294
      %v296 = vpop.f32.mrb[0].mxu0
      %297 = vdwg.mxu0
      %v298 = vmax.f32 %v292, 0.0
      %v299 = vmax.f32 %v295, 0.0
      %v300 = vld [vmem:[%s3] sm:$0xf]
      %v301 = vld [vmem:[%s3 + $0x4] sm:$0xf]
      %v302 = vld [vmem:[%s3 + $0x8] sm:$0xf]
      %v303 = vld [vmem:[%s3 + $0xc] sm:$0xf]
      %v304 = vpack.c.bf16 %v299, %v298
      %v305 = vld [vmem:[%s4] sm:$0x1]
      %v307 = vlaneseq
      %v308 = vshrl.u32 %v307, 7
      %v309 = vsub.s32 0, %v308
      %v310 = vrot.slane %v305, %v309
      %v316 = vunpack.c.l.b16 %v300
      %v317 = vunpack.c.l.b16 %v301
      %v318 = vunpack.c.l.b16 %v302
      %v319 = vunpack.c.l.b16 %v303
      %v320 = vpack.c.b16 %v317, %v316
      %v321 = vpack.c.b16 %v319, %v318
      %vm324 = vcmask 261120
      %v326 = vsel %vm324, %v304, 0
      %328 = vmatprep.subr.bf16.mxu0 0
      %329 = vmatpush1.bf16.msra.mxu0 %v320
      %330 = vmatprep.subr.bf16.mxu0 0
      %331 = vmatpush1.bf16.msra.mxu0 %v321
      %332 = vmatprep.subr.bf16.mxu0 0
      %333 = vmatpush1.bf16.msra.mxu0 0
      %334 = vmatprep.subr.bf16.mxu0 0
      %335 = vmatpush1.bf16.msra.mxu0 0
      %336 = vmatprep.subr.bf16.mxu0 0
      %337 = vmatpush1.bf16.msra.mxu0 0
      %338 = vmatprep.subr.bf16.mxu0 0
      %339 = vmatpush1.bf16.msra.mxu0 0
      %340 = vmatprep.subr.bf16.mxu0 0
      %341 = vmatpush1.bf16.msra.mxu0 0
      %342 = vmatprep.subr.bf16.mxu0 0
      %343 = vmatpush1.bf16.msra.mxu0 0
      %344 = vmatprep.subr.bf16.mxu0 0
      %345 = vmatpush1.bf16.msra.mxu0 0
      %346 = vmatprep.subr.bf16.mxu0 0
      %347 = vmatpush1.bf16.msra.mxu0 0
      %348 = vmatprep.subr.bf16.mxu0 0
      %349 = vmatpush1.bf16.msra.mxu0 0
      %350 = vmatprep.subr.bf16.mxu0 0
      %351 = vmatpush1.bf16.msra.mxu0 0
      %352 = vmatprep.subr.bf16.mxu0 0
      %353 = vmatpush1.bf16.msra.mxu0 0
      %354 = vmatprep.subr.bf16.mxu0 0
      %355 = vmatpush1.bf16.msra.mxu0 0
      %356 = vmatprep.subr.bf16.mxu0 0
      %357 = vmatpush1.bf16.msra.mxu0 0
      %358 = vmatprep.subr.bf16.mxu0 0
      %359 = vmatpush1.bf16.msra.mxu0 0
      %360 = vmatprep.mubr.bf16.mxu0 0
      %361 = vmatmul.mubr.bf16.gmra.mrb[0].mxu0 %v326
      %v362 = vpop.f32.mrb[0].mxu0
      %v363 = vadd.f32 %v310, %v362
      %v364 = vpop.f32.mrb[0].mxu0
      %v365 = vpop.f32.mrb[0].mxu0
      %v366 = vadd.f32 %v310, %v365
      %v367 = vpop.f32.mrb[0].mxu0
      %368 = vdwg.mxu0
      %369 = vst.msk [vmem:[%s226] sm:$0xff] %vm324, %v363
      %370 = vst.msk [vmem:[%s226 + $0x8] sm:$0xff] %vm324, %v366
      %s371 = smul.u32 2, %s16
      %p372 = scmp.lt.s32.totalorder %s371, 3
      %s373 = scalar_select %p372, %s371, 3
      %s374 = smul.addr %s373, 8
      %s375 = scalar_lea.vmem %s5, %s374
      // Predicated region
      $region41: #{spatial_first_transformer_forward.10} parent=39 // pred_check
        %p376 = pneg %p144
      $region42: #{spatial_first_transformer_forward.10} parent=39 // pred_check_branch
        %378 = sbr.rel (%p376) target = $region44
      $region43: #{spatial_first_transformer_forward.10} parent=39 // pred_region
        %s379 = smul.u32 2, %s16
      $region44: #{spatial_first_transformer_forward.10} parent=39 // pred_fallthru
        _
    $region40: #{spatial_first_transformer_forward.10} parent=5 // pred_fallthru
      _
    %p380 = scmp.le.s32.totalorder 2, %s11
    // Predicated region
    $region45: #{spatial_first_transformer_forward.10} parent=5 // pred_check
      %p381 = pneg %p380
    $region46: #{spatial_first_transformer_forward.10} parent=5 // pred_check_branch
      %383 = sbr.rel (%p381) target = $region48
    $region47: #{spatial_first_transformer_forward.10} parent=5 // pred_region
      %s384 = ssub.s32 %s11, 2
      // Predicated region
      $region49: #{spatial_first_transformer_forward.10} parent=47 // pred_check
        %p385 = pneg %p150
      $region50: #{spatial_first_transformer_forward.10} parent=47 // pred_check_branch
        %387 = sbr.rel (%p385) target = $region52
      $region51: #{spatial_first_transformer_forward.10} parent=47 // pred_region
        %s388 = smul.u32 2, %s17
        %p389 = scmp.lt.s32.totalorder %s388, 3
        %s390 = scalar_select %p389, %s388, 3
        %s391 = smul.addr %s390, 8
        %s392 = scalar_lea.vmem %s5, %s391
      $region52: #{spatial_first_transformer_forward.10} parent=47 // pred_fallthru
        _
    $region48: #{spatial_first_transformer_forward.10} parent=5 // pred_fallthru
      _
  $region6: #{spatial_first_transformer_forward.10} parent=0 // loop_footer
    %s15 = sadd.s32 1, %s11
  $region7: #{spatial_first_transformer_forward.10} parent=0 // loop_footer_branch
    %10 = sbr.rel target = $region3
  $region8: #{spatial_first_transformer_forward.10} parent=0 // loop_exit
    _

// kernel: spatial_first_transformer_forward.15
$region0: #{spatial_first_transformer_forward.15}
  #allocation0 [shape = 'u32[]', space=smem, size = 0x4, offset = 0x4, fixed_abs, tag = 'smem constant byte address 0x4 - core index']
  #allocation1 [shape = 'u32[144,128]{1,0:T(1,128)}', space=vmem, size = 0x12000, scoped, tag = 'internal scratch']
  %s0 = inlined_call_operand.vmem [shape: bf16[32,32], index: 0, kind: input, shape index: {}]
  %s1 = inlined_call_operand.vmem [shape: f32[1,32], index: 1, kind: input, shape index: {}]
  %s2 = inlined_call_operand.vmem [shape: f32[1,32], index: 2, kind: input, shape index: {}]
  %s3 = inlined_call_operand.vmem [shape: f32[32,32], index: 3, kind: output, shape index: {}]
  %s4 = sld [smem:[#allocation0]]
  $region45: #{spatial_first_transformer_forward.15} parent=0
    _
  %s6 = ssub.s32 1, %s4
  %s7 = scalar_select 0, %s6, %s4
  loop: start=0, step=1, limit=4
  $region2: #{spatial_first_transformer_forward.15} parent=0 // loop_pre_header
    _
  $region3: #{spatial_first_transformer_forward.15} parent=0 // loop_header
    %s9 = sphi 0, %s13
    %p10 = scmp.ge.s32.totalorder %s9, 4
    %s19 = sphi 0, %s21
    %s22 = sphi 0, %s19
    %s23 = sphi 0, %s22
    %s39 = sphi 0, %s23
    %s43 = sphi 0, %s43
    %s45 = sphi 0, %s43
    %s46 = sphi 0, %s45
    %s60 = sphi 0, %s46
    %s64 = sphi 0, %s64
    %s66 = sphi 0, %s64
    %s67 = sphi 0, %s66
    %s81 = sphi 0, %s67
    %s87 = sphi 0, %s89
    %s90 = sphi 0, %s87
    %s91 = sphi 0, %s90
    %s107 = sphi 0, %s91
  $region4: #{spatial_first_transformer_forward.15} parent=0 // loop_header_branch
    %12 = sbr.rel (%p10) target = $region8
  $region5: #{spatial_first_transformer_forward.15} parent=0 // loop_body
    %s14 = ssub.s32 %s9, 1
    %s15 = ssub.s32 %s9, 2
    %s16 = sadd.s32 %s9, 1
    %s17 = ssub.s32 %s9, %s16
    %p18 = scmp.eq.s32.totalorder %s17, 0
    %s20 = sadd.s32 %s19, 1
    %s21 = scalar_select %p18, %s19, %s20
    %p24 = pneg %p18
    %p25 = scmp.eq.s32.totalorder %s9, 1
    %p26 = por %p24, %p25
    %p27 = scmp.ne.s32.totalorder %s19, %s22
    %p28 = scmp.eq.s32.totalorder %s9, 0
    %p29 = por %p27, %p28
    %p30 = scmp.ne.s32.totalorder %s19, %s22
    %p31 = scmp.eq.s32.totalorder %s14, 1
    %p32 = por %p30, %p31
    %p33 = scmp.ne.s32.totalorder %s22, %s23
    %p34 = scmp.eq.s32.totalorder %s14, 0
    %p35 = por %p33, %p34
    %p36 = scmp.ne.s32.totalorder %s22, %s23
    %p37 = scmp.eq.s32.totalorder %s15, 1
    %p38 = por %p36, %p37
    %p40 = scmp.ne.s32.totalorder %s23, %s39
    %p41 = scmp.eq.s32.totalorder %s15, 0
    %p42 = por %p40, %p41
    %s44 = sadd.s32 %s43, 1
    %p47 = scmp.eq.s32.totalorder %s9, 1
    %p48 = scmp.ne.s32.totalorder %s43, %s45
    %p49 = scmp.eq.s32.totalorder %s9, 0
    %p50 = por %p48, %p49
    %p51 = scmp.ne.s32.totalorder %s43, %s45
    %p52 = scmp.eq.s32.totalorder %s14, 1
    %p53 = por %p51, %p52
    %p54 = scmp.ne.s32.totalorder %s45, %s46
    %p55 = scmp.eq.s32.totalorder %s14, 0
    %p56 = por %p54, %p55
    %p57 = scmp.ne.s32.totalorder %s45, %s46
    %p58 = scmp.eq.s32.totalorder %s15, 1
    %p59 = por %p57, %p58
    %p61 = scmp.ne.s32.totalorder %s46, %s60
    %p62 = scmp.eq.s32.totalorder %s15, 0
    %p63 = por %p61, %p62
    %s65 = sadd.s32 %s64, 1
    %p68 = scmp.eq.s32.totalorder %s9, 1
    %p69 = scmp.ne.s32.totalorder %s64, %s66
    %p70 = scmp.eq.s32.totalorder %s9, 0
    %p71 = por %p69, %p70
    %p72 = scmp.ne.s32.totalorder %s64, %s66
    %p73 = scmp.eq.s32.totalorder %s14, 1
    %p74 = por %p72, %p73
    %p75 = scmp.ne.s32.totalorder %s66, %s67
    %p76 = scmp.eq.s32.totalorder %s14, 0
    %p77 = por %p75, %p76
    %p78 = scmp.ne.s32.totalorder %s66, %s67
    %p79 = scmp.eq.s32.totalorder %s15, 1
    %p80 = por %p78, %p79
    %p82 = scmp.ne.s32.totalorder %s67, %s81
    %p83 = scmp.eq.s32.totalorder %s15, 0
    %p84 = por %p82, %p83
    %s85 = ssub.s32 %s9, %s16
    %p86 = scmp.eq.s32.totalorder %s85, 0
    %s88 = sadd.s32 %s87, 1
    %s89 = scalar_select %p86, %s87, %s88
    %p92 = pneg %p86
    %p93 = scmp.eq.s32.totalorder %s9, 1
    %p94 = por %p92, %p93
    %p95 = scmp.ne.s32.totalorder %s87, %s90
    %p96 = scmp.eq.s32.totalorder %s9, 0
    %p97 = por %p95, %p96
    %p98 = scmp.ne.s32.totalorder %s87, %s90
    %p99 = scmp.eq.s32.totalorder %s14, 1
    %p100 = por %p98, %p99
    %p101 = scmp.ne.s32.totalorder %s90, %s91
    %p102 = scmp.eq.s32.totalorder %s14, 0
    %p103 = por %p101, %p102
    %p104 = scmp.ne.s32.totalorder %s90, %s91
    %p105 = scmp.eq.s32.totalorder %s15, 1
    %p106 = por %p104, %p105
    %p108 = scmp.ne.s32.totalorder %s91, %s107
    %p109 = scmp.eq.s32.totalorder %s15, 0
    %p110 = por %p108, %p109
    %p111 = scmp.le.s32.totalorder 1, %s9
    %p112 = scmp.lt.s32.totalorder %s9, 3
    %p113 = pnand %p111, %p112
    %p114 = pneg %p113
    // Predicated region
    $region9: #{spatial_first_transformer_forward.15} parent=5 // pred_check
      _
    $region10: #{spatial_first_transformer_forward.15} parent=5 // pred_check_branch
      %116 = sbr.rel (%p113) target = $region12
    $region11: #{spatial_first_transformer_forward.15} parent=5 // pred_region
      %s117 = ssub.s32 %s9, 1
      // Predicated region
      $region13: #{spatial_first_transformer_forward.15} parent=11 // pred_check
        %p118 = pneg %p56
      $region14: #{spatial_first_transformer_forward.15} parent=11 // pred_check_branch
        %120 = sbr.rel (%p118) target = $region16
      $region15: #{spatial_first_transformer_forward.15} parent=11 // pred_region
        _
      $region16: #{spatial_first_transformer_forward.15} parent=11 // pred_fallthru
        _
      // Predicated region
      $region17: #{spatial_first_transformer_forward.15} parent=11 // pred_check
        %p121 = pneg %p77
      $region18: #{spatial_first_transformer_forward.15} parent=11 // pred_check_branch
        %123 = sbr.rel (%p121) target = $region20
      $region19: #{spatial_first_transformer_forward.15} parent=11 // pred_region
        _
      $region20: #{spatial_first_transformer_forward.15} parent=11 // pred_fallthru
        _
    $region12: #{spatial_first_transformer_forward.15} parent=5 // pred_fallthru
      _
    %p124 = scmp.lt.s32.totalorder %s9, 2
    // Predicated region
    $region21: #{spatial_first_transformer_forward.15} parent=5 // pred_check
      %p125 = pneg %p124
    $region22: #{spatial_first_transformer_forward.15} parent=5 // pred_check_branch
      %127 = sbr.rel (%p125) target = $region24
    $region23: #{spatial_first_transformer_forward.15} parent=5 // pred_region
      // Predicated region
      $region25: #{spatial_first_transformer_forward.15} parent=23 // pred_check
        %p128 = pneg %p29
      $region26: #{spatial_first_transformer_forward.15} parent=23 // pred_check_branch
        %130 = sbr.rel (%p128) target = $region28
      $region27: #{spatial_first_transformer_forward.15} parent=23 // pred_region
        %s131 = smul.u32 2, %s9
        %p132 = scmp.lt.s32.totalorder %s131, 3
        %s133 = scalar_select %p132, %s131, 3
        %s134 = smul.addr %s133, 4
        %s135 = scalar_lea.vmem %s0, %s134
        %s136 = smul.u32 2, %s9
      $region28: #{spatial_first_transformer_forward.15} parent=23 // pred_fallthru
        _
    $region24: #{spatial_first_transformer_forward.15} parent=5 // pred_fallthru
      _
    %p137 = scmp.le.s32.totalorder 1, %s9
    %p138 = scmp.lt.s32.totalorder %s9, 3
    %p139 = pnand %p137, %p138
    %p140 = pneg %p139
    // Predicated region
    $region29: #{spatial_first_transformer_forward.15} parent=5 // pred_check
      _
    $region30: #{spatial_first_transformer_forward.15} parent=5 // pred_check_branch
      %142 = sbr.rel (%p139) target = $region32
    $region31: #{spatial_first_transformer_forward.15} parent=5 // pred_region
      %s143 = ssub.s32 %s9, 1
      %s144 = smul.u32 2, %s14
      %p145 = scmp.lt.s32.totalorder %s144, 3
      %s146 = scalar_select %p145, %s144, 3
      %s147 = smul.addr %s146, 4
      %s148 = scalar_lea.vmem %s0, %s147
      %p149 = pneg %p35
      %p150 = pneg %p32
      %p151 = pneg %p56
      %p152 = pneg %p53
      %p153 = pneg %p77
      %p154 = pneg %p74
      %p155 = pneg %p103
      %p156 = pneg %p100
      %s157 = smul.u32 2, %s14
      %p158 = scmp.lt.s32.totalorder %s157, 3
      %s159 = scalar_select %p158, %s157, 3
      %s160 = smul.addr %s159, 8
      %s161 = scalar_lea.vmem %s3, %s160
      %s162 = smul.u32 2, %s14
      %p163 = scmp.lt.s32.totalorder %s162, 3
      %s164 = scalar_select %p163, %s162, 3
      %s165 = smul.addr %s164, 4
      %s166 = scalar_lea.vmem %s0, %s165
      %s167 = smul.u32 2, %s14
      %s168 = smul.u32 2, %s14
      %p169 = scmp.lt.s32.totalorder %s168, 3
      %s170 = scalar_select %p169, %s168, 3
      %s171 = smul.addr %s170, 8
      %s172 = scalar_lea.vmem %s3, %s171
      %s173 = smul.u32 2, %s14
      %v174 = vld [vmem:[%s166] sm:$0xf]
      %v175 = vld [vmem:[%s166 + $0x4] sm:$0xf]
      %v176 = vunpack.c.l.bf16 %v174
      %v177 = vunpack.c.l.bf16 %v175
      %v178 = vld [vmem:[%s1] sm:$0x1]
      %v179 = vld [vmem:[%s2] sm:$0x1]
      %vm180 = vcmask 261120
      %v181 = vsel %vm180, %v176, 0.0
      %182 = vadd.xlane.f32.xlu0 %v181
      %v183 = vpop.xlane.xlu0 %182
      %v184 = vsel %vm180, %v177, 0.0
      %185 = vadd.xlane.f32.xlu0 %v184
      %v186 = vpop.xlane.xlu0 %185
      %v187 = vrcp.pop 32.0
      %v188 = vmul.f32 %v183, %v187
      %v189 = vmul.f32 %v186, %v187
      %v190 = vsub.f32 %v176, %v188
      %v191 = vsub.f32 %v177, %v189
      %v192 = vmul.f32 %v190, %v190
      %v193 = vmul.f32 %v191, %v191
      %v194 = vsel %vm180, %v192, 0.0
      %195 = vadd.xlane.f32.xlu0 %v194
      %v196 = vpop.xlane.xlu0 %195
      %v197 = vsel %vm180, %v193, 0.0
      %198 = vadd.xlane.f32.xlu0 %v197
      %v199 = vpop.xlane.xlu0 %198
      %v200 = vmul.f32 %v196, %v187
      %v201 = vmul.f32 %v199, %v187
      %v202 = vadd.f32 %v200, 1e-05
      %v203 = vadd.f32 %v201, 1e-05
      %v204 = vrsqrt.pop %v202
      %v205 = vrsqrt.pop %v203
      %v206 = vmul.f32 %v190, %v204
      %v207 = vmul.f32 %v191, %v205
      %v209 = vlaneseq
      %v210 = vshrl.u32 %v209, 7
      %v211 = vsub.s32 0, %v210
      %v212 = vrot.slane %v178, %v211
      %v214 = vmul.f32 %v206, %v212
      %v215 = vmul.f32 %v207, %v212
      %v217 = vlaneseq
      %v218 = vshrl.u32 %v217, 7
      %v219 = vsub.s32 0, %v218
      %v220 = vrot.slane %v179, %v219
      %v222 = vadd.f32 %v214, %v220
      %v223 = vadd.f32 %v215, %v220
      %224 = vst.msk [vmem:[%s172] sm:$0xff] %vm180, %v222
      %225 = vst.msk [vmem:[%s172 + $0x8] sm:$0xff] %vm180, %v223
      %s226 = smul.u32 2, %s14
      %p227 = scmp.lt.s32.totalorder %s226, 3
      %s228 = scalar_select %p227, %s226, 3
      %s229 = smul.addr %s228, 8
      %s230 = scalar_lea.vmem %s3, %s229
      // Predicated region
      $region33: #{spatial_first_transformer_forward.15} parent=31 // pred_check
        %p231 = pneg %p100
      $region34: #{spatial_first_transformer_forward.15} parent=31 // pred_check_branch
        %233 = sbr.rel (%p231) target = $region36
      $region35: #{spatial_first_transformer_forward.15} parent=31 // pred_region
        %s234 = smul.u32 2, %s14
      $region36: #{spatial_first_transformer_forward.15} parent=31 // pred_fallthru
        _
    $region32: #{spatial_first_transformer_forward.15} parent=5 // pred_fallthru
      _
    %p235 = scmp.le.s32.totalorder 2, %s9
    // Predicated region
    $region37: #{spatial_first_transformer_forward.15} parent=5 // pred_check
      %p236 = pneg %p235
    $region38: #{spatial_first_transformer_forward.15} parent=5 // pred_check_branch
      %238 = sbr.rel (%p236) target = $region40
    $region39: #{spatial_first_transformer_forward.15} parent=5 // pred_region
      %s239 = ssub.s32 %s9, 2
      // Predicated region
      $region41: #{spatial_first_transformer_forward.15} parent=39 // pred_check
        %p240 = pneg %p106
      $region42: #{spatial_first_transformer_forward.15} parent=39 // pred_check_branch
        %242 = sbr.rel (%p240) target = $region44
      $region43: #{spatial_first_transformer_forward.15} parent=39 // pred_region
        %s243 = smul.u32 2, %s15
        %p244 = scmp.lt.s32.totalorder %s243, 3
        %s245 = scalar_select %p244, %s243, 3
        %s246 = smul.addr %s245, 8
        %s247 = scalar_lea.vmem %s3, %s246
      $region44: #{spatial_first_transformer_forward.15} parent=39 // pred_fallthru
        _
    $region40: #{spatial_first_transformer_forward.15} parent=5 // pred_fallthru
      _
  $region6: #{spatial_first_transformer_forward.15} parent=0 // loop_footer
    %s13 = sadd.s32 1, %s9
  $region7: #{spatial_first_transformer_forward.15} parent=0 // loop_footer_branch
    %8 = sbr.rel target = $region3
  $region8: #{spatial_first_transformer_forward.15} parent=0 // loop_exit
    _

// kernel: spatial_first_transformer_forward.13
$region0: #{spatial_first_transformer_forward.13}
  #allocation0 [shape = 'u32[]', space=smem, size = 0x4, offset = 0x4, fixed_abs, tag = 'smem constant byte address 0x4 - core index']
  #allocation1 [shape = 'u32[144,128]{1,0:T(1,128)}', space=vmem, size = 0x12000, scoped, tag = 'internal scratch']
  %s0 = inlined_call_operand.vmem [shape: f32[128,32], index: 0, kind: input, shape index: {}]
  %s1 = inlined_call_operand.vmem [shape: bf16[32,96], index: 1, kind: input, shape index: {}]
  %s2 = inlined_call_operand.vmem [shape: f32[1,96], index: 2, kind: input, shape index: {}]
  %s3 = inlined_call_operand.vmem [shape: bf16[32,32], index: 3, kind: input, shape index: {}]
  %s4 = inlined_call_operand.vmem [shape: f32[1,32], index: 4, kind: input, shape index: {}]
  %s5 = inlined_call_operand.vmem [shape: f32[1,32], index: 5, kind: input, shape index: {}]
  %s6 = inlined_call_operand.vmem [shape: f32[1,32], index: 6, kind: input, shape index: {}]
  %s7 = inlined_call_operand.vmem [shape: bf16[32,32], index: 7, kind: input, shape index: {}]
  %s8 = inlined_call_operand.vmem [shape: f32[1,32], index: 8, kind: input, shape index: {}]
  %s9 = inlined_call_operand.vmem [shape: bf16[32,32], index: 9, kind: input, shape index: {}]
  %s10 = inlined_call_operand.vmem [shape: f32[1,32], index: 10, kind: input, shape index: {}]
  %s11 = inlined_call_operand.vmem [shape: f32[1,32], index: 11, kind: input, shape index: {}]
  %s12 = inlined_call_operand.vmem [shape: f32[1,32], index: 12, kind: input, shape index: {}]
  %s13 = inlined_call_operand.vmem [shape: bf16[128,32], index: 13, kind: output, shape index: {}]
  %s14 = sld [smem:[#allocation0]]
  $region85: #{spatial_first_transformer_forward.13} parent=0
    _
  %s16 = ssub.s32 1, %s14
  %s17 = scalar_select 0, %s16, %s14
  loop: start=0, step=1, limit=6
  $region2: #{spatial_first_transformer_forward.13} parent=0 // loop_pre_header
    _
  $region3: #{spatial_first_transformer_forward.13} parent=0 // loop_header
    %s19 = sphi 0, %s23
    %p20 = scmp.ge.s32.totalorder %s19, 6
    %s29 = sphi 0, %s31
    %s32 = sphi 0, %s29
    %s33 = sphi 0, %s32
    %s49 = sphi 0, %s33
    %s53 = sphi 0, %s53
    %s55 = sphi 0, %s53
    %s56 = sphi 0, %s55
    %s70 = sphi 0, %s56
    %s74 = sphi 0, %s74
    %s76 = sphi 0, %s74
    %s77 = sphi 0, %s76
    %s91 = sphi 0, %s77
    %s95 = sphi 0, %s95
    %s97 = sphi 0, %s95
    %s98 = sphi 0, %s97
    %s112 = sphi 0, %s98
    %s116 = sphi 0, %s116
    %s118 = sphi 0, %s116
    %s119 = sphi 0, %s118
    %s133 = sphi 0, %s119
    %s137 = sphi 0, %s137
    %s139 = sphi 0, %s137
    %s140 = sphi 0, %s139
    %s154 = sphi 0, %s140
    %s158 = sphi 0, %s158
    %s160 = sphi 0, %s158
    %s161 = sphi 0, %s160
    %s175 = sphi 0, %s161
    %s179 = sphi 0, %s179
    %s181 = sphi 0, %s179
    %s182 = sphi 0, %s181
    %s196 = sphi 0, %s182
    %s200 = sphi 0, %s200
    %s202 = sphi 0, %s200
    %s203 = sphi 0, %s202
    %s217 = sphi 0, %s203
    %s221 = sphi 0, %s221
    %s223 = sphi 0, %s221
    %s224 = sphi 0, %s223
    %s238 = sphi 0, %s224
    %s242 = sphi 0, %s242
    %s244 = sphi 0, %s242
    %s245 = sphi 0, %s244
    %s259 = sphi 0, %s245
    %s263 = sphi 0, %s263
    %s265 = sphi 0, %s263
    %s266 = sphi 0, %s265
    %s280 = sphi 0, %s266
    %s284 = sphi 0, %s284
    %s286 = sphi 0, %s284
    %s287 = sphi 0, %s286
    %s301 = sphi 0, %s287
    %s307 = sphi 0, %s309
    %s310 = sphi 0, %s307
    %s311 = sphi 0, %s310
    %s327 = sphi 0, %s311
  $region4: #{spatial_first_transformer_forward.13} parent=0 // loop_header_branch
    %22 = sbr.rel (%p20) target = $region8
  $region5: #{spatial_first_transformer_forward.13} parent=0 // loop_body
    %s24 = ssub.s32 %s19, 1
    %s25 = ssub.s32 %s19, 2
    %s26 = sadd.s32 %s19, 1
    %s27 = ssub.s32 %s19, %s26
    %p28 = scmp.eq.s32.totalorder %s27, 0
    %s30 = sadd.s32 %s29, 1
    %s31 = scalar_select %p28, %s29, %s30
    %p34 = pneg %p28
    %p35 = scmp.eq.s32.totalorder %s19, 3
    %p36 = por %p34, %p35
    %p37 = scmp.ne.s32.totalorder %s29, %s32
    %p38 = scmp.eq.s32.totalorder %s19, 0
    %p39 = por %p37, %p38
    %p40 = scmp.ne.s32.totalorder %s29, %s32
    %p41 = scmp.eq.s32.totalorder %s24, 3
    %p42 = por %p40, %p41
    %p43 = scmp.ne.s32.totalorder %s32, %s33
    %p44 = scmp.eq.s32.totalorder %s24, 0
    %p45 = por %p43, %p44
    %p46 = scmp.ne.s32.totalorder %s32, %s33
    %p47 = scmp.eq.s32.totalorder %s25, 3
    %p48 = por %p46, %p47
    %p50 = scmp.ne.s32.totalorder %s33, %s49
    %p51 = scmp.eq.s32.totalorder %s25, 0
    %p52 = por %p50, %p51
    %s54 = sadd.s32 %s53, 1
    %p57 = scmp.eq.s32.totalorder %s19, 3
    %p58 = scmp.ne.s32.totalorder %s53, %s55
    %p59 = scmp.eq.s32.totalorder %s19, 0
    %p60 = por %p58, %p59
    %p61 = scmp.ne.s32.totalorder %s53, %s55
    %p62 = scmp.eq.s32.totalorder %s24, 3
    %p63 = por %p61, %p62
    %p64 = scmp.ne.s32.totalorder %s55, %s56
    %p65 = scmp.eq.s32.totalorder %s24, 0
    %p66 = por %p64, %p65
    %p67 = scmp.ne.s32.totalorder %s55, %s56
    %p68 = scmp.eq.s32.totalorder %s25, 3
    %p69 = por %p67, %p68
    %p71 = scmp.ne.s32.totalorder %s56, %s70
    %p72 = scmp.eq.s32.totalorder %s25, 0
    %p73 = por %p71, %p72
    %s75 = sadd.s32 %s74, 1
    %p78 = scmp.eq.s32.totalorder %s19, 3
    %p79 = scmp.ne.s32.totalorder %s74, %s76
    %p80 = scmp.eq.s32.totalorder %s19, 0
    %p81 = por %p79, %p80
    %p82 = scmp.ne.s32.totalorder %s74, %s76
    %p83 = scmp.eq.s32.totalorder %s24, 3
    %p84 = por %p82, %p83
    %p85 = scmp.ne.s32.totalorder %s76, %s77
    %p86 = scmp.eq.s32.totalorder %s24, 0
    %p87 = por %p85, %p86
    %p88 = scmp.ne.s32.totalorder %s76, %s77
    %p89 = scmp.eq.s32.totalorder %s25, 3
    %p90 = por %p88, %p89
    %p92 = scmp.ne.s32.totalorder %s77, %s91
    %p93 = scmp.eq.s32.totalorder %s25, 0
    %p94 = por %p92, %p93
    %s96 = sadd.s32 %s95, 1
    %p99 = scmp.eq.s32.totalorder %s19, 3
    %p100 = scmp.ne.s32.totalorder %s95, %s97
    %p101 = scmp.eq.s32.totalorder %s19, 0
    %p102 = por %p100, %p101
    %p103 = scmp.ne.s32.totalorder %s95, %s97
    %p104 = scmp.eq.s32.totalorder %s24, 3
    %p105 = por %p103, %p104
    %p106 = scmp.ne.s32.totalorder %s97, %s98
    %p107 = scmp.eq.s32.totalorder %s24, 0
    %p108 = por %p106, %p107
    %p109 = scmp.ne.s32.totalorder %s97, %s98
    %p110 = scmp.eq.s32.totalorder %s25, 3
    %p111 = por %p109, %p110
    %p113 = scmp.ne.s32.totalorder %s98, %s112
    %p114 = scmp.eq.s32.totalorder %s25, 0
    %p115 = por %p113, %p114
    %s117 = sadd.s32 %s116, 1
    %p120 = scmp.eq.s32.totalorder %s19, 3
    %p121 = scmp.ne.s32.totalorder %s116, %s118
    %p122 = scmp.eq.s32.totalorder %s19, 0
    %p123 = por %p121, %p122
    %p124 = scmp.ne.s32.totalorder %s116, %s118
    %p125 = scmp.eq.s32.totalorder %s24, 3
    %p126 = por %p124, %p125
    %p127 = scmp.ne.s32.totalorder %s118, %s119
    %p128 = scmp.eq.s32.totalorder %s24, 0
    %p129 = por %p127, %p128
    %p130 = scmp.ne.s32.totalorder %s118, %s119
    %p131 = scmp.eq.s32.totalorder %s25, 3
    %p132 = por %p130, %p131
    %p134 = scmp.ne.s32.totalorder %s119, %s133
    %p135 = scmp.eq.s32.totalorder %s25, 0
    %p136 = por %p134, %p135
    %s138 = sadd.s32 %s137, 1
    %p141 = scmp.eq.s32.totalorder %s19, 3
    %p142 = scmp.ne.s32.totalorder %s137, %s139
    %p143 = scmp.eq.s32.totalorder %s19, 0
    %p144 = por %p142, %p143
    %p145 = scmp.ne.s32.totalorder %s137, %s139
    %p146 = scmp.eq.s32.totalorder %s24, 3
    %p147 = por %p145, %p146
    %p148 = scmp.ne.s32.totalorder %s139, %s140
    %p149 = scmp.eq.s32.totalorder %s24, 0
    %p150 = por %p148, %p149
    %p151 = scmp.ne.s32.totalorder %s139, %s140
    %p152 = scmp.eq.s32.totalorder %s25, 3
    %p153 = por %p151, %p152
    %p155 = scmp.ne.s32.totalorder %s140, %s154
    %p156 = scmp.eq.s32.totalorder %s25, 0
    %p157 = por %p155, %p156
    %s159 = sadd.s32 %s158, 1
    %p162 = scmp.eq.s32.totalorder %s19, 3
    %p163 = scmp.ne.s32.totalorder %s158, %s160
    %p164 = scmp.eq.s32.totalorder %s19, 0
    %p165 = por %p163, %p164
    %p166 = scmp.ne.s32.totalorder %s158, %s160
    %p167 = scmp.eq.s32.totalorder %s24, 3
    %p168 = por %p166, %p167
    %p169 = scmp.ne.s32.totalorder %s160, %s161
    %p170 = scmp.eq.s32.totalorder %s24, 0
    %p171 = por %p169, %p170
    %p172 = scmp.ne.s32.totalorder %s160, %s161
    %p173 = scmp.eq.s32.totalorder %s25, 3
    %p174 = por %p172, %p173
    %p176 = scmp.ne.s32.totalorder %s161, %s175
    %p177 = scmp.eq.s32.totalorder %s25, 0
    %p178 = por %p176, %p177
    %s180 = sadd.s32 %s179, 1
    %p183 = scmp.eq.s32.totalorder %s19, 3
    %p184 = scmp.ne.s32.totalorder %s179, %s181
    %p185 = scmp.eq.s32.totalorder %s19, 0
    %p186 = por %p184, %p185
    %p187 = scmp.ne.s32.totalorder %s179, %s181
    %p188 = scmp.eq.s32.totalorder %s24, 3
    %p189 = por %p187, %p188
    %p190 = scmp.ne.s32.totalorder %s181, %s182
    %p191 = scmp.eq.s32.totalorder %s24, 0
    %p192 = por %p190, %p191
    %p193 = scmp.ne.s32.totalorder %s181, %s182
    %p194 = scmp.eq.s32.totalorder %s25, 3
    %p195 = por %p193, %p194
    %p197 = scmp.ne.s32.totalorder %s182, %s196
    %p198 = scmp.eq.s32.totalorder %s25, 0
    %p199 = por %p197, %p198
    %s201 = sadd.s32 %s200, 1
    %p204 = scmp.eq.s32.totalorder %s19, 3
    %p205 = scmp.ne.s32.totalorder %s200, %s202
    %p206 = scmp.eq.s32.totalorder %s19, 0
    %p207 = por %p205, %p206
    %p208 = scmp.ne.s32.totalorder %s200, %s202
    %p209 = scmp.eq.s32.totalorder %s24, 3
    %p210 = por %p208, %p209
    %p211 = scmp.ne.s32.totalorder %s202, %s203
    %p212 = scmp.eq.s32.totalorder %s24, 0
    %p213 = por %p211, %p212
    %p214 = scmp.ne.s32.totalorder %s202, %s203
    %p215 = scmp.eq.s32.totalorder %s25, 3
    %p216 = por %p214, %p215
    %p218 = scmp.ne.s32.totalorder %s203, %s217
    %p219 = scmp.eq.s32.totalorder %s25, 0
    %p220 = por %p218, %p219
    %s222 = sadd.s32 %s221, 1
    %p225 = scmp.eq.s32.totalorder %s19, 3
    %p226 = scmp.ne.s32.totalorder %s221, %s223
    %p227 = scmp.eq.s32.totalorder %s19, 0
    %p228 = por %p226, %p227
    %p229 = scmp.ne.s32.totalorder %s221, %s223
    %p230 = scmp.eq.s32.totalorder %s24, 3
    %p231 = por %p229, %p230
    %p232 = scmp.ne.s32.totalorder %s223, %s224
    %p233 = scmp.eq.s32.totalorder %s24, 0
    %p234 = por %p232, %p233
    %p235 = scmp.ne.s32.totalorder %s223, %s224
    %p236 = scmp.eq.s32.totalorder %s25, 3
    %p237 = por %p235, %p236
    %p239 = scmp.ne.s32.totalorder %s224, %s238
    %p240 = scmp.eq.s32.totalorder %s25, 0
    %p241 = por %p239, %p240
    %s243 = sadd.s32 %s242, 1
    %p246 = scmp.eq.s32.totalorder %s19, 3
    %p247 = scmp.ne.s32.totalorder %s242, %s244
    %p248 = scmp.eq.s32.totalorder %s19, 0
    %p249 = por %p247, %p248
    %p250 = scmp.ne.s32.totalorder %s242, %s244
    %p251 = scmp.eq.s32.totalorder %s24, 3
    %p252 = por %p250, %p251
    %p253 = scmp.ne.s32.totalorder %s244, %s245
    %p254 = scmp.eq.s32.totalorder %s24, 0
    %p255 = por %p253, %p254
    %p256 = scmp.ne.s32.totalorder %s244, %s245
    %p257 = scmp.eq.s32.totalorder %s25, 3
    %p258 = por %p256, %p257
    %p260 = scmp.ne.s32.totalorder %s245, %s259
    %p261 = scmp.eq.s32.totalorder %s25, 0
    %p262 = por %p260, %p261
    %s264 = sadd.s32 %s263, 1
    %p267 = scmp.eq.s32.totalorder %s19, 3
    %p268 = scmp.ne.s32.totalorder %s263, %s265
    %p269 = scmp.eq.s32.totalorder %s19, 0
    %p270 = por %p268, %p269
    %p271 = scmp.ne.s32.totalorder %s263, %s265
    %p272 = scmp.eq.s32.totalorder %s24, 3
    %p273 = por %p271, %p272
    %p274 = scmp.ne.s32.totalorder %s265, %s266
    %p275 = scmp.eq.s32.totalorder %s24, 0
    %p276 = por %p274, %p275
    %p277 = scmp.ne.s32.totalorder %s265, %s266
    %p278 = scmp.eq.s32.totalorder %s25, 3
    %p279 = por %p277, %p278
    %p281 = scmp.ne.s32.totalorder %s266, %s280
    %p282 = scmp.eq.s32.totalorder %s25, 0
    %p283 = por %p281, %p282
    %s285 = sadd.s32 %s284, 1
    %p288 = scmp.eq.s32.totalorder %s19, 3
    %p289 = scmp.ne.s32.totalorder %s284, %s286
    %p290 = scmp.eq.s32.totalorder %s19, 0
    %p291 = por %p289, %p290
    %p292 = scmp.ne.s32.totalorder %s284, %s286
    %p293 = scmp.eq.s32.totalorder %s24, 3
    %p294 = por %p292, %p293
    %p295 = scmp.ne.s32.totalorder %s286, %s287
    %p296 = scmp.eq.s32.totalorder %s24, 0
    %p297 = por %p295, %p296
    %p298 = scmp.ne.s32.totalorder %s286, %s287
    %p299 = scmp.eq.s32.totalorder %s25, 3
    %p300 = por %p298, %p299
    %p302 = scmp.ne.s32.totalorder %s287, %s301
    %p303 = scmp.eq.s32.totalorder %s25, 0
    %p304 = por %p302, %p303
    %s305 = ssub.s32 %s19, %s26
    %p306 = scmp.eq.s32.totalorder %s305, 0
    %s308 = sadd.s32 %s307, 1
    %s309 = scalar_select %p306, %s307, %s308
    %p312 = pneg %p306
    %p313 = scmp.eq.s32.totalorder %s19, 3
    %p314 = por %p312, %p313
    %p315 = scmp.ne.s32.totalorder %s307, %s310
    %p316 = scmp.eq.s32.totalorder %s19, 0
    %p317 = por %p315, %p316
    %p318 = scmp.ne.s32.totalorder %s307, %s310
    %p319 = scmp.eq.s32.totalorder %s24, 3
    %p320 = por %p318, %p319
    %p321 = scmp.ne.s32.totalorder %s310, %s311
    %p322 = scmp.eq.s32.totalorder %s24, 0
    %p323 = por %p321, %p322
    %p324 = scmp.ne.s32.totalorder %s310, %s311
    %p325 = scmp.eq.s32.totalorder %s25, 3
    %p326 = por %p324, %p325
    %p328 = scmp.ne.s32.totalorder %s311, %s327
    %p329 = scmp.eq.s32.totalorder %s25, 0
    %p330 = por %p328, %p329
    %p331 = scmp.le.s32.totalorder 1, %s19
    %p332 = scmp.lt.s32.totalorder %s19, 5
    %p333 = pnand %p331, %p332
    %p334 = pneg %p333
    // Predicated region
    $region9: #{spatial_first_transformer_forward.13} parent=5 // pred_check
      _
    $region10: #{spatial_first_transformer_forward.13} parent=5 // pred_check_branch
      %336 = sbr.rel (%p333) target = $region12
    $region11: #{spatial_first_transformer_forward.13} parent=5 // pred_region
      %s337 = ssub.s32 %s19, 1
      // Predicated region
      $region13: #{spatial_first_transformer_forward.13} parent=11 // pred_check
        %p338 = pneg %p66
      $region14: #{spatial_first_transformer_forward.13} parent=11 // pred_check_branch
        %340 = sbr.rel (%p338) target = $region16
      $region15: #{spatial_first_transformer_forward.13} parent=11 // pred_region
        _
      $region16: #{spatial_first_transformer_forward.13} parent=11 // pred_fallthru
        _
      // Predicated region
      $region17: #{spatial_first_transformer_forward.13} parent=11 // pred_check
        %p341 = pneg %p87
      $region18: #{spatial_first_transformer_forward.13} parent=11 // pred_check_branch
        %343 = sbr.rel (%p341) target = $region20
      $region19: #{spatial_first_transformer_forward.13} parent=11 // pred_region
        _
      $region20: #{spatial_first_transformer_forward.13} parent=11 // pred_fallthru
        _
      // Predicated region
      $region21: #{spatial_first_transformer_forward.13} parent=11 // pred_check
        %p344 = pneg %p108
      $region22: #{spatial_first_transformer_forward.13} parent=11 // pred_check_branch
        %346 = sbr.rel (%p344) target = $region24
      $region23: #{spatial_first_transformer_forward.13} parent=11 // pred_region
        _
      $region24: #{spatial_first_transformer_forward.13} parent=11 // pred_fallthru
        _
      // Predicated region
      $region25: #{spatial_first_transformer_forward.13} parent=11 // pred_check
        %p347 = pneg %p129
      $region26: #{spatial_first_transformer_forward.13} parent=11 // pred_check_branch
        %349 = sbr.rel (%p347) target = $region28
      $region27: #{spatial_first_transformer_forward.13} parent=11 // pred_region
        _
      $region28: #{spatial_first_transformer_forward.13} parent=11 // pred_fallthru
        _
      // Predicated region
      $region29: #{spatial_first_transformer_forward.13} parent=11 // pred_check
        %p350 = pneg %p150
      $region30: #{spatial_first_transformer_forward.13} parent=11 // pred_check_branch
        %352 = sbr.rel (%p350) target = $region32
      $region31: #{spatial_first_transformer_forward.13} parent=11 // pred_region
        _
      $region32: #{spatial_first_transformer_forward.13} parent=11 // pred_fallthru
        _
      // Predicated region
      $region33: #{spatial_first_transformer_forward.13} parent=11 // pred_check
        %p353 = pneg %p171
      $region34: #{spatial_first_transformer_forward.13} parent=11 // pred_check_branch
        %355 = sbr.rel (%p353) target = $region36
      $region35: #{spatial_first_transformer_forward.13} parent=11 // pred_region
        _
      $region36: #{spatial_first_transformer_forward.13} parent=11 // pred_fallthru
        _
      // Predicated region
      $region37: #{spatial_first_transformer_forward.13} parent=11 // pred_check
        %p356 = pneg %p192
      $region38: #{spatial_first_transformer_forward.13} parent=11 // pred_check_branch
        %358 = sbr.rel (%p356) target = $region40
      $region39: #{spatial_first_transformer_forward.13} parent=11 // pred_region
        _
      $region40: #{spatial_first_transformer_forward.13} parent=11 // pred_fallthru
        _
      // Predicated region
      $region41: #{spatial_first_transformer_forward.13} parent=11 // pred_check
        %p359 = pneg %p213
      $region42: #{spatial_first_transformer_forward.13} parent=11 // pred_check_branch
        %361 = sbr.rel (%p359) target = $region44
      $region43: #{spatial_first_transformer_forward.13} parent=11 // pred_region
        _
      $region44: #{spatial_first_transformer_forward.13} parent=11 // pred_fallthru
        _
      // Predicated region
      $region45: #{spatial_first_transformer_forward.13} parent=11 // pred_check
        %p362 = pneg %p234
      $region46: #{spatial_first_transformer_forward.13} parent=11 // pred_check_branch
        %364 = sbr.rel (%p362) target = $region48
      $region47: #{spatial_first_transformer_forward.13} parent=11 // pred_region
        _
      $region48: #{spatial_first_transformer_forward.13} parent=11 // pred_fallthru
        _
      // Predicated region
      $region49: #{spatial_first_transformer_forward.13} parent=11 // pred_check
        %p365 = pneg %p255
      $region50: #{spatial_first_transformer_forward.13} parent=11 // pred_check_branch
        %367 = sbr.rel (%p365) target = $region52
      $region51: #{spatial_first_transformer_forward.13} parent=11 // pred_region
        _
      $region52: #{spatial_first_transformer_forward.13} parent=11 // pred_fallthru
        _
      // Predicated region
      $region53: #{spatial_first_transformer_forward.13} parent=11 // pred_check
        %p368 = pneg %p276
      $region54: #{spatial_first_transformer_forward.13} parent=11 // pred_check_branch
        %370 = sbr.rel (%p368) target = $region56
      $region55: #{spatial_first_transformer_forward.13} parent=11 // pred_region
        _
      $region56: #{spatial_first_transformer_forward.13} parent=11 // pred_fallthru
        _
      // Predicated region
      $region57: #{spatial_first_transformer_forward.13} parent=11 // pred_check
        %p371 = pneg %p297
      $region58: #{spatial_first_transformer_forward.13} parent=11 // pred_check_branch
        %373 = sbr.rel (%p371) target = $region60
      $region59: #{spatial_first_transformer_forward.13} parent=11 // pred_region
        _
      $region60: #{spatial_first_transformer_forward.13} parent=11 // pred_fallthru
        _
    $region12: #{spatial_first_transformer_forward.13} parent=5 // pred_fallthru
      _
    %p374 = scmp.lt.s32.totalorder %s19, 4
    // Predicated region
    $region61: #{spatial_first_transformer_forward.13} parent=5 // pred_check
      %p375 = pneg %p374
    $region62: #{spatial_first_transformer_forward.13} parent=5 // pred_check_branch
      %377 = sbr.rel (%p375) target = $region64
    $region63: #{spatial_first_transformer_forward.13} parent=5 // pred_region
      // Predicated region
      $region65: #{spatial_first_transformer_forward.13} parent=63 // pred_check
        %p378 = pneg %p39
      $region66: #{spatial_first_transformer_forward.13} parent=63 // pred_check_branch
        %380 = sbr.rel (%p378) target = $region68
      $region67: #{spatial_first_transformer_forward.13} parent=63 // pred_region
        %s381 = smul.u32 4, %s19
        %p382 = scmp.lt.s32.totalorder %s381, 15
        %s383 = scalar_select %p382, %s381, 15
        %s384 = smul.addr %s383, 8
        %s385 = scalar_lea.vmem %s0, %s384
        %s386 = smul.u32 4, %s19
      $region68: #{spatial_first_transformer_forward.13} parent=63 // pred_fallthru
        _
    $region64: #{spatial_first_transformer_forward.13} parent=5 // pred_fallthru
      _
    %p387 = scmp.le.s32.totalorder 1, %s19
    %p388 = scmp.lt.s32.totalorder %s19, 5
    %p389 = pnand %p387, %p388
    %p390 = pneg %p389
    // Predicated region
    $region69: #{spatial_first_transformer_forward.13} parent=5 // pred_check
      _
    $region70: #{spatial_first_transformer_forward.13} parent=5 // pred_check_branch
      %392 = sbr.rel (%p389) target = $region72
    $region71: #{spatial_first_transformer_forward.13} parent=5 // pred_region
      %s393 = ssub.s32 %s19, 1
      %s394 = smul.u32 4, %s24
      %p395 = scmp.lt.s32.totalorder %s394, 15
      %s396 = scalar_select %p395, %s394, 15
      %s397 = smul.addr %s396, 8
      %s398 = scalar_lea.vmem %s0, %s397
      %p399 = pneg %p45
      %p400 = pneg %p42
      %p401 = pneg %p66
      %p402 = pneg %p63
      %p403 = pneg %p87
      %p404 = pneg %p84
      %p405 = pneg %p108
      %p406 = pneg %p105
      %p407 = pneg %p129
      %p408 = pneg %p126
      %p409 = pneg %p150
      %p410 = pneg %p147
      %p411 = pneg %p171
      %p412 = pneg %p168
      %p413 = pneg %p192
      %p414 = pneg %p189
      %p415 = pneg %p213
      %p416 = pneg %p210
      %p417 = pneg %p234
      %p418 = pneg %p231
      %p419 = pneg %p255
      %p420 = pneg %p252
      %p421 = pneg %p276
      %p422 = pneg %p273
      %p423 = pneg %p297
      %p424 = pneg %p294
      %p425 = pneg %p323
      %p426 = pneg %p320
      %s427 = smul.u32 4, %s24
      %p428 = scmp.lt.s32.totalorder %s427, 15
      %s429 = scalar_select %p428, %s427, 15
      %s430 = smul.addr %s429, 4
      %s431 = scalar_lea.vmem %s13, %s430
      %s432 = smul.u32 4, %s24
      %p433 = scmp.lt.s32.totalorder %s432, 15
      %s434 = scalar_select %p433, %s432, 15
      %s435 = smul.addr %s434, 8
      %s436 = scalar_lea.vmem %s0, %s435
      %s437 = smul.u32 4, %s24
      %s438 = smul.u32 4, %s24
      %p439 = scmp.lt.s32.totalorder %s438, 15
      %s440 = scalar_select %p439, %s438, 15
      %s441 = smul.addr %s440, 4
      %s442 = scalar_lea.vmem %s13, %s441
      %s443 = smul.u32 4, %s24
      %v445 = vld [vmem:[%s436] sm:$0xff]
      %v446 = vld [vmem:[%s436 + $0x8] sm:$0xff]
      %v447 = vld [vmem:[%s436 + $0x10] sm:$0xff]
      %v448 = vld [vmem:[%s436 + $0x18] sm:$0xff]
      %v449 = vlaneseq
      %v450 = vshrl.u32 %v449, 7
      %v451 = vadd.s32 %v450, 8
      %v452 = vadd.s32 %v450, 16
      %v453 = vadd.s32 %v450, 24
      %v454 = vcvt.s32.f32 %v450
      %v455 = vcvt.s32.f32 %v451
      %v456 = vcvt.s32.f32 %v452
      %v457 = vcvt.s32.f32 %v453
      %v458 = vlaneseq
      %v459 = vand.u32 %v458, 127
      %v460 = vcvt.s32.f32 %v459
      %v461 = vadd.f32 %v454, 0.5
      %v462 = vadd.f32 %v455, 0.5
      %v463 = vadd.f32 %v456, 0.5
      %v464 = vadd.f32 %v457, 0.5
      %v465 = vmul.f32 %v461, 0.25
      %v466 = vmul.f32 %v462, 0.25
      %v467 = vmul.f32 %v463, 0.25
      %v468 = vmul.f32 %v464, 0.25
      %v469 = vfloor.f32 %v465
      %v470 = vfloor.f32 %v466
      %v471 = vfloor.f32 %v467
      %v472 = vfloor.f32 %v468
      %v473 = vadd.f32 %v460, 0.5
      %v474 = vmul.f32 %v473, 0.25
      %v475 = vfloor.f32 %v474
      %vm476 = vcmp.eq.f32.partialorder %v469, %v475
      %vm477 = vcmp.eq.f32.partialorder %v470, %v475
      %vm478 = vcmp.eq.f32.partialorder %v471, %v475
      %vm479 = vcmp.eq.f32.partialorder %v472, %v475
      %v480 = vsel %vm476, 0.0, -1e+30
      %v481 = vsel %vm477, 0.0, -1e+30
      %v482 = vsel %vm478, 0.0, -1e+30
      %v483 = vsel %vm479, 0.0, -1e+30
      %v484 = vld [vmem:[%s1] sm:$0xf]
      %v485 = vld [vmem:[%s1 + $0x4] sm:$0xf]
      %v486 = vld [vmem:[%s1 + $0x8] sm:$0xf]
      %v487 = vld [vmem:[%s1 + $0xc] sm:$0xf]
      %v488 = vpack.c.bf16 %v446, %v445
      %v489 = vpack.c.bf16 %v448, %v447
      %v490 = vld [vmem:[%s2] sm:$0x1]
      %v492 = vlaneseq
      %v493 = vshrl.u32 %v492, 7
      %v494 = vsub.s32 0, %v493
      %v495 = vrot.slane %v490, %v494
      %v501 = vunpack.c.l.b16 %v484
      %v502 = vunpack.c.l.b16 %v485
      %v503 = vunpack.c.l.b16 %v486
      %v504 = vunpack.c.l.b16 %v487
      %v505 = vpack.c.b16 %v502, %v501
      %v506 = vpack.c.b16 %v504, %v503
      %vm509 = vcmask 261120
      %v511 = vsel %vm509, %v488, 0
      %v514 = vsel %vm509, %v489, 0
      %516 = vmatprep.subr.bf16.mxu0 0
      %517 = vmatpush1.bf16.msra.mxu0 %v505
      %518 = vmatprep.subr.bf16.mxu0 0
      %519 = vmatpush1.bf16.msra.mxu0 %v506
      %520 = vmatprep.subr.bf16.mxu0 0
      %521 = vmatpush1.bf16.msra.mxu0 0
      %522 = vmatprep.subr.bf16.mxu0 0
      %523 = vmatpush1.bf16.msra.mxu0 0
      %524 = vmatprep.subr.bf16.mxu0 0
      %525 = vmatpush1.bf16.msra.mxu0 0
      %526 = vmatprep.subr.bf16.mxu0 0
      %527 = vmatpush1.bf16.msra.mxu0 0
      %528 = vmatprep.subr.bf16.mxu0 0
      %529 = vmatpush1.bf16.msra.mxu0 0
      %530 = vmatprep.subr.bf16.mxu0 0
      %531 = vmatpush1.bf16.msra.mxu0 0
      %532 = vmatprep.subr.bf16.mxu0 0
      %533 = vmatpush1.bf16.msra.mxu0 0
      %534 = vmatprep.subr.bf16.mxu0 0
      %535 = vmatpush1.bf16.msra.mxu0 0
      %536 = vmatprep.subr.bf16.mxu0 0
      %537 = vmatpush1.bf16.msra.mxu0 0
      %538 = vmatprep.subr.bf16.mxu0 0
      %539 = vmatpush1.bf16.msra.mxu0 0
      %540 = vmatprep.subr.bf16.mxu0 0
      %541 = vmatpush1.bf16.msra.mxu0 0
      %542 = vmatprep.subr.bf16.mxu0 0
      %543 = vmatpush1.bf16.msra.mxu0 0
      %544 = vmatprep.subr.bf16.mxu0 0
      %545 = vmatpush1.bf16.msra.mxu0 0
      %546 = vmatprep.subr.bf16.mxu0 0
      %547 = vmatpush1.bf16.msra.mxu0 0
      %548 = vmatprep.mubr.bf16.mxu0 0
      %549 = vmatmul.mubr.bf16.gmra.mrb[0].mxu0 %v511
      %v550 = vpop.f32.mrb[0].mxu0
      %v551 = vadd.f32 %v495, %v550
      %v552 = vpop.f32.mrb[0].mxu0
      %v553 = vpop.f32.mrb[0].mxu0
      %v554 = vadd.f32 %v495, %v553
      %v555 = vpop.f32.mrb[0].mxu0
      %556 = vmatprep.mubr.bf16.mxu0 0
      %557 = vmatmul.mubr.bf16.gmra.mrb[0].mxu0 %v514
      %v558 = vpop.f32.mrb[0].mxu0
      %v559 = vadd.f32 %v495, %v558
      %v560 = vpop.f32.mrb[0].mxu0
      %v561 = vpop.f32.mrb[0].mxu0
      %v562 = vadd.f32 %v495, %v561
      %v563 = vpop.f32.mrb[0].mxu0
      %564 = vdwg.mxu0
      %v565 = vpack.c.bf16 %v554, %v551
      %v566 = vpack.c.bf16 %v562, %v559
      %569 = vrot.lane.b32.xlu0 %v565, 96
      %v570 = vpop.permute.xlu0 %569
      %571 = vrot.lane.b32.xlu0 %v566, 96
      %v572 = vpop.permute.xlu0 %571
      %vm573 = vcmask 64512
      %v575 = vsel %vm573, %v565, 0
      %v578 = vsel %vm573, %v566, 0
      %v581 = vsel %vm573, %v570, 0
      %v584 = vsel %vm573, %v572, 0
      %586 = vmatprep.subr.bf16.mxu0 0
      %587 = vmatpush1.bf16.xpose.msra.mxu0 %v581
      %588 = vmatprep.subr.bf16.mxu0 0
      %589 = vmatpush1.bf16.xpose.msra.mxu0 %v584
      %590 = vmatprep.subr.bf16.mxu0 0
      %591 = vmatpush1.bf16.xpose.msra.mxu0 0
      %592 = vmatprep.subr.bf16.mxu0 0
      %593 = vmatpush1.bf16.xpose.msra.mxu0 0
      %594 = vmatprep.subr.bf16.mxu0 0
      %595 = vmatpush1.bf16.xpose.msra.mxu0 0
      %596 = vmatprep.subr.bf16.mxu0 0
      %597 = vmatpush1.bf16.xpose.msra.mxu0 0
      %598 = vmatprep.subr.bf16.mxu0 0
      %599 = vmatpush1.bf16.xpose.msra.mxu0 0
      %600 = vmatprep.subr.bf16.mxu0 0
      %601 = vmatpush1.bf16.xpose.msra.mxu0 0
      %602 = vmatprep.subr.bf16.mxu0 0
      %603 = vmatpush1.bf16.xpose.msra.mxu0 0
      %604 = vmatprep.subr.bf16.mxu0 0
      %605 = vmatpush1.bf16.xpose.msra.mxu0 0
      %606 = vmatprep.subr.bf16.mxu0 0
      %607 = vmatpush1.bf16.xpose.msra.mxu0 0
      %608 = vmatprep.subr.bf16.mxu0 0
      %609 = vmatpush1.bf16.xpose.msra.mxu0 0
      %610 = vmatprep.subr.bf16.mxu0 0
      %611 = vmatpush1.bf16.xpose.msra.mxu0 0
      %612 = vmatprep.subr.bf16.mxu0 0
      %613 = vmatpush1.bf16.xpose.msra.mxu0 0
      %614 = vmatprep.subr.bf16.mxu0 0
      %615 = vmatpush1.bf16.xpose.msra.mxu0 0
      %616 = vmatprep.subr.bf16.mxu0 0
      %617 = vmatpush1.bf16.xpose.msra.mxu0 0
      %618 = vmatprep.mubr.bf16.mxu0 0
      %619 = vmatmul.mubr.bf16.gmra.mrb[0].mxu0 %v575
      %v620 = vpop.f32.mrb[0].mxu0
      %v621 = vadd.f32 0.0, %v620
      %v622 = vpop.f32.mrb[0].mxu0
      %v623 = vpop.f32.mrb[0].mxu0
      %v624 = vadd.f32 0.0, %v623
      %v625 = vpop.f32.mrb[0].mxu0
      %626 = vmatprep.mubr.bf16.mxu0 0
      %627 = vmatmul.mubr.bf16.gmra.mrb[0].mxu0 %v578
      %v628 = vpop.f32.mrb[0].mxu0
      %v629 = vadd.f32 0.0, %v628
      %v630 = vpop.f32.mrb[0].mxu0
      %v631 = vpop.f32.mrb[0].mxu0
      %v632 = vadd.f32 0.0, %v631
      %v633 = vpop.f32.mrb[0].mxu0
      %634 = vdwg.mxu0
      %v635 = vmul.f32 %v621, 0.35355338
      %v636 = vmul.f32 %v624, 0.35355338
      %v637 = vmul.f32 %v629, 0.35355338
      %v638 = vmul.f32 %v632, 0.35355338
      %v639 = vadd.f32 %v635, %v480
      %v640 = vadd.f32 %v636, %v481
      %v641 = vadd.f32 %v637, %v482
      %v642 = vadd.f32 %v638, %v483
      %v643 = vsel %vm509, %v639, -inf
      %644 = vmax.xlane.f32.xlu0 %v643
      %v645 = vpop.xlane.xlu0 %644
      %v646 = vsel %vm509, %v640, -inf
      %647 = vmax.xlane.f32.xlu0 %v646
      %v648 = vpop.xlane.xlu0 %647
      %v649 = vsel %vm509, %v641, -inf
      %650 = vmax.xlane.f32.xlu0 %v649
      %v651 = vpop.xlane.xlu0 %650
      %v652 = vsel %vm509, %v642, -inf
      %653 = vmax.xlane.f32.xlu0 %v652
      %v654 = vpop.xlane.xlu0 %653
      %v655 = vsub.f32 %v639, %v645
      %v656 = vsub.f32 %v640, %v648
      %v657 = vsub.f32 %v641, %v651
      %v658 = vsub.f32 %v642, %v654
      %v659 = vmul.f32 %v655, 1.442695
      %v660 = vpow.pop %v659
      %v661 = vmul.f32 %v656, 1.442695
      %v662 = vpow.pop %v661
      %v663 = vmul.f32 %v657, 1.442695
      %v664 = vpow.pop %v663
      %v665 = vmul.f32 %v658, 1.442695
      %v666 = vpow.pop %v665
      %v667 = vsel %vm509, %v660, 0.0
      %668 = vadd.xlane.f32.xlu0 %v667
      %v669 = vpop.xlane.xlu0 %668
      %v670 = vsel %vm509, %v662, 0.0
      %671 = vadd.xlane.f32.xlu0 %v670
      %v672 = vpop.xlane.xlu0 %671
      %v673 = vsel %vm509, %v664, 0.0
      %674 = vadd.xlane.f32.xlu0 %v673
      %v675 = vpop.xlane.xlu0 %674
      %v676 = vsel %vm509, %v666, 0.0
      %677 = vadd.xlane.f32.xlu0 %v676
      %v678 = vpop.xlane.xlu0 %677
      %v679 = vrcp.pop %v669
      %v680 = vrcp.pop %v672
      %v681 = vrcp.pop %v675
      %v682 = vrcp.pop %v678
      %v683 = vmul.f32 %v660, %v679
      %v684 = vmul.f32 %v662, %v680
      %v685 = vmul.f32 %v664, %v681
      %v686 = vmul.f32 %v666, %v682
      %v687 = vpack.c.bf16 %v684, %v683
      %v688 = vpack.c.bf16 %v686, %v685
      %689 = vrot.lane.b32.xlu0 %v565, 64
      %v690 = vpop.permute.xlu0 %689
      %691 = vrot.lane.b32.xlu0 %v566, 64
      %v692 = vpop.permute.xlu0 %691
      %v696 = vsel %vm509, %v687, 0
      %v699 = vsel %vm509, %v688, 0
      %701 = vmatprep.subr.bf16.mxu0 0
      %702 = vmatpush1.bf16.msra.mxu0 %v690
      %703 = vmatprep.subr.bf16.mxu0 0
      %704 = vmatpush1.bf16.msra.mxu0 %v692
      %705 = vmatprep.subr.bf16.mxu0 0
      %706 = vmatpush1.bf16.msra.mxu0 0
      %707 = vmatprep.subr.bf16.mxu0 0
      %708 = vmatpush1.bf16.msra.mxu0 0
      %709 = vmatprep.subr.bf16.mxu0 0
      %710 = vmatpush1.bf16.msra.mxu0 0
      %711 = vmatprep.subr.bf16.mxu0 0
      %712 = vmatpush1.bf16.msra.mxu0 0
      %713 = vmatprep.subr.bf16.mxu0 0
      %714 = vmatpush1.bf16.msra.mxu0 0
      %715 = vmatprep.subr.bf16.mxu0 0
      %716 = vmatpush1.bf16.msra.mxu0 0
      %717 = vmatprep.subr.bf16.mxu0 0
      %718 = vmatpush1.bf16.msra.mxu0 0
      %719 = vmatprep.subr.bf16.mxu0 0
      %720 = vmatpush1.bf16.msra.mxu0 0
      %721 = vmatprep.subr.bf16.mxu0 0
      %722 = vmatpush1.bf16.msra.mxu0 0
      %723 = vmatprep.subr.bf16.mxu0 0
      %724 = vmatpush1.bf16.msra.mxu0 0
      %725 = vmatprep.subr.bf16.mxu0 0
      %726 = vmatpush1.bf16.msra.mxu0 0
      %727 = vmatprep.subr.bf16.mxu0 0
      %728 = vmatpush1.bf16.msra.mxu0 0
      %729 = vmatprep.subr.bf16.mxu0 0
      %730 = vmatpush1.bf16.msra.mxu0 0
      %731 = vmatprep.subr.bf16.mxu0 0
      %732 = vmatpush1.bf16.msra.mxu0 0
      %733 = vmatprep.mubr.bf16.mxu0 0
      %734 = vmatmul.mubr.bf16.gmra.mrb[0].mxu0 %v696
      %v735 = vpop.f32.mrb[0].mxu0
      %v736 = vadd.f32 0.0, %v735
      %v737 = vpop.f32.mrb[0].mxu0
      %v738 = vpop.f32.mrb[0].mxu0
      %v739 = vadd.f32 0.0, %v738
      %v740 = vpop.f32.mrb[0].mxu0
      %741 = vmatprep.mubr.bf16.mxu0 0
      %742 = vmatmul.mubr.bf16.gmra.mrb[0].mxu0 %v699
      %v743 = vpop.f32.mrb[0].mxu0
      %v744 = vadd.f32 0.0, %v743
      %v745 = vpop.f32.mrb[0].mxu0
      %v746 = vpop.f32.mrb[0].mxu0
      %v747 = vadd.f32 0.0, %v746
      %v748 = vpop.f32.mrb[0].mxu0
      %749 = vdwg.mxu0
      %750 = vrot.lane.b32.xlu0 %v565, 120
      %v751 = vpop.permute.xlu0 %750
      %752 = vrot.lane.b32.xlu0 %v566, 120
      %v753 = vpop.permute.xlu0 %752
      %754 = vrot.lane.b32.xlu0 %v565, 88
      %v755 = vpop.permute.xlu0 %754
      %756 = vrot.lane.b32.xlu0 %v566, 88
      %v757 = vpop.permute.xlu0 %756
      %v759 = vsel %vm573, %v751, 0
      %v762 = vsel %vm573, %v753, 0
      %v765 = vsel %vm573, %v755, 0
      %v768 = vsel %vm573, %v757, 0
      %770 = vmatprep.subr.bf16.mxu0 0
      %771 = vmatpush1.bf16.xpose.msra.mxu0 %v765
      %772 = vmatprep.subr.bf16.mxu0 0
      %773 = vmatpush1.bf16.xpose.msra.mxu0 %v768
      %774 = vmatprep.subr.bf16.mxu0 0
      %775 = vmatpush1.bf16.xpose.msra.mxu0 0
      %776 = vmatprep.subr.bf16.mxu0 0
      %777 = vmatpush1.bf16.xpose.msra.mxu0 0
      %778 = vmatprep.subr.bf16.mxu0 0
      %779 = vmatpush1.bf16.xpose.msra.mxu0 0
      %780 = vmatprep.subr.bf16.mxu0 0
      %781 = vmatpush1.bf16.xpose.msra.mxu0 0
      %782 = vmatprep.subr.bf16.mxu0 0
      %783 = vmatpush1.bf16.xpose.msra.mxu0 0
      %784 = vmatprep.subr.bf16.mxu0 0
      %785 = vmatpush1.bf16.xpose.msra.mxu0 0
      %786 = vmatprep.subr.bf16.mxu0 0
      %787 = vmatpush1.bf16.xpose.msra.mxu0 0
      %788 = vmatprep.subr.bf16.mxu0 0
      %789 = vmatpush1.bf16.xpose.msra.mxu0 0
      %790 = vmatprep.subr.bf16.mxu0 0
      %791 = vmatpush1.bf16.xpose.msra.mxu0 0
      %792 = vmatprep.subr.bf16.mxu0 0
      %793 = vmatpush1.bf16.xpose.msra.mxu0 0
      %794 = vmatprep.subr.bf16.mxu0 0
      %795 = vmatpush1.bf16.xpose.msra.mxu0 0
      %796 = vmatprep.subr.bf16.mxu0 0
      %797 = vmatpush1.bf16.xpose.msra.mxu0 0
      %798 = vmatprep.subr.bf16.mxu0 0
      %799 = vmatpush1.bf16.xpose.msra.mxu0 0
      %800 = vmatprep.subr.bf16.mxu0 0
      %801 = vmatpush1.bf16.xpose.msra.mxu0 0
      %802 = vmatprep.mubr.bf16.mxu0 0
      %803 = vmatmul.mubr.bf16.gmra.mrb[0].mxu0 %v759
      %v804 = vpop.f32.mrb[0].mxu0
      %v805 = vadd.f32 0.0, %v804
      %v806 = vpop.f32.mrb[0].mxu0
      %v807 = vpop.f32.mrb[0].mxu0
      %v808 = vadd.f32 0.0, %v807
      %v809 = vpop.f32.mrb[0].mxu0
      %810 = vmatprep.mubr.bf16.mxu0 0
      %811 = vmatmul.mubr.bf16.gmra.mrb[0].mxu0 %v762
      %v812 = vpop.f32.mrb[0].mxu0
      %v813 = vadd.f32 0.0, %v812
      %v814 = vpop.f32.mrb[0].mxu0
      %v815 = vpop.f32.mrb[0].mxu0
      %v816 = vadd.f32 0.0, %v815
      %v817 = vpop.f32.mrb[0].mxu0
      %818 = vdwg.mxu0
      %v819 = vmul.f32 %v805, 0.35355338
      %v820 = vmul.f32 %v808, 0.35355338
      %v821 = vmul.f32 %v813, 0.35355338
      %v822 = vmul.f32 %v816, 0.35355338
      %v823 = vadd.f32 %v819, %v480
      %v824 = vadd.f32 %v820, %v481
      %v825 = vadd.f32 %v821, %v482
      %v826 = vadd.f32 %v822, %v483
      %v827 = vsel %vm509, %v823, -inf
      %828 = vmax.xlane.f32.xlu0 %v827
      %v829 = vpop.xlane.xlu0 %828
      %v830 = vsel %vm509, %v824, -inf
      %831 = vmax.xlane.f32.xlu0 %v830
      %v832 = vpop.xlane.xlu0 %831
      %v833 = vsel %vm509, %v825, -inf
      %834 = vmax.xlane.f32.xlu0 %v833
      %v835 = vpop.xlane.xlu0 %834
      %v836 = vsel %vm509, %v826, -inf
      %837 = vmax.xlane.f32.xlu0 %v836
      %v838 = vpop.xlane.xlu0 %837
      %v839 = vsub.f32 %v823, %v829
      %v840 = vsub.f32 %v824, %v832
      %v841 = vsub.f32 %v825, %v835
      %v842 = vsub.f32 %v826, %v838
      %v843 = vmul.f32 %v839, 1.442695
      %v844 = vpow.pop %v843
      %v845 = vmul.f32 %v840, 1.442695
      %v846 = vpow.pop %v845
      %v847 = vmul.f32 %v841, 1.442695
      %v848 = vpow.pop %v847
      %v849 = vmul.f32 %v842, 1.442695
      %v850 = vpow.pop %v849
      %v851 = vsel %vm509, %v844, 0.0
      %852 = vadd.xlane.f32.xlu0 %v851
      %v853 = vpop.xlane.xlu0 %852
      %v854 = vsel %vm509, %v846, 0.0
      %855 = vadd.xlane.f32.xlu0 %v854
      %v856 = vpop.xlane.xlu0 %855
      %v857 = vsel %vm509, %v848, 0.0
      %858 = vadd.xlane.f32.xlu0 %v857
      %v859 = vpop.xlane.xlu0 %858
      %v860 = vsel %vm509, %v850, 0.0
      %861 = vadd.xlane.f32.xlu0 %v860
      %v862 = vpop.xlane.xlu0 %861
      %v863 = vrcp.pop %v853
      %v864 = vrcp.pop %v856
      %v865 = vrcp.pop %v859
      %v866 = vrcp.pop %v862
      %v867 = vmul.f32 %v844, %v863
      %v868 = vmul.f32 %v846, %v864
      %v869 = vmul.f32 %v848, %v865
      %v870 = vmul.f32 %v850, %v866
      %v871 = vpack.c.bf16 %v868, %v867
      %v872 = vpack.c.bf16 %v870, %v869
      %873 = vrot.lane.b32.xlu0 %v565, 56
      %v874 = vpop.permute.xlu0 %873
      %875 = vrot.lane.b32.xlu0 %v566, 56
      %v876 = vpop.permute.xlu0 %875
      %v880 = vsel %vm509, %v871, 0
      %v883 = vsel %vm509, %v872, 0
      %885 = vmatprep.subr.bf16.mxu0 0
      %886 = vmatpush1.bf16.msra.mxu0 %v874
      %887 = vmatprep.subr.bf16.mxu0 0
      %888 = vmatpush1.bf16.msra.mxu0 %v876
      %889 = vmatprep.subr.bf16.mxu0 0
      %890 = vmatpush1.bf16.msra.mxu0 0
      %891 = vmatprep.subr.bf16.mxu0 0
      %892 = vmatpush1.bf16.msra.mxu0 0
      %893 = vmatprep.subr.bf16.mxu0 0
      %894 = vmatpush1.bf16.msra.mxu0 0
      %895 = vmatprep.subr.bf16.mxu0 0
      %896 = vmatpush1.bf16.msra.mxu0 0
      %897 = vmatprep.subr.bf16.mxu0 0
      %898 = vmatpush1.bf16.msra.mxu0 0
      %899 = vmatprep.subr.bf16.mxu0 0
      %900 = vmatpush1.bf16.msra.mxu0 0
      %901 = vmatprep.subr.bf16.mxu0 0
      %902 = vmatpush1.bf16.msra.mxu0 0
      %903 = vmatprep.subr.bf16.mxu0 0
      %904 = vmatpush1.bf16.msra.mxu0 0
      %905 = vmatprep.subr.bf16.mxu0 0
      %906 = vmatpush1.bf16.msra.mxu0 0
      %907 = vmatprep.subr.bf16.mxu0 0
      %908 = vmatpush1.bf16.msra.mxu0 0
      %909 = vmatprep.subr.bf16.mxu0 0
      %910 = vmatpush1.bf16.msra.mxu0 0
      %911 = vmatprep.subr.bf16.mxu0 0
      %912 = vmatpush1.bf16.msra.mxu0 0
      %913 = vmatprep.subr.bf16.mxu0 0
      %914 = vmatpush1.bf16.msra.mxu0 0
      %915 = vmatprep.subr.bf16.mxu0 0
      %916 = vmatpush1.bf16.msra.mxu0 0
      %917 = vmatprep.mubr.bf16.mxu0 0
      %918 = vmatmul.mubr.bf16.gmra.mrb[0].mxu0 %v880
      %v919 = vpop.f32.mrb[0].mxu0
      %v920 = vadd.f32 0.0, %v919
      %v921 = vpop.f32.mrb[0].mxu0
      %v922 = vpop.f32.mrb[0].mxu0
      %v923 = vadd.f32 0.0, %v922
      %v924 = vpop.f32.mrb[0].mxu0
      %925 = vmatprep.mubr.bf16.mxu0 0
      %926 = vmatmul.mubr.bf16.gmra.mrb[0].mxu0 %v883
      %v927 = vpop.f32.mrb[0].mxu0
      %v928 = vadd.f32 0.0, %v927
      %v929 = vpop.f32.mrb[0].mxu0
      %v930 = vpop.f32.mrb[0].mxu0
      %v931 = vadd.f32 0.0, %v930
      %v932 = vpop.f32.mrb[0].mxu0
      %933 = vdwg.mxu0
      %934 = vrot.lane.b32.xlu0 %v565, 112
      %v935 = vpop.permute.xlu0 %934
      %936 = vrot.lane.b32.xlu0 %v566, 112
      %v937 = vpop.permute.xlu0 %936
      %938 = vrot.lane.b32.xlu0 %v565, 80
      %v939 = vpop.permute.xlu0 %938
      %940 = vrot.lane.b32.xlu0 %v566, 80
      %v941 = vpop.permute.xlu0 %940
      %v943 = vsel %vm573, %v935, 0
      %v946 = vsel %vm573, %v937, 0
      %v949 = vsel %vm573, %v939, 0
      %v952 = vsel %vm573, %v941, 0
      %954 = vmatprep.subr.bf16.mxu0 0
      %955 = vmatpush1.bf16.xpose.msra.mxu0 %v949
      %956 = vmatprep.subr.bf16.mxu0 0
      %957 = vmatpush1.bf16.xpose.msra.mxu0 %v952
      %958 = vmatprep.subr.bf16.mxu0 0
      %959 = vmatpush1.bf16.xpose.msra.mxu0 0
      %960 = vmatprep.subr.bf16.mxu0 0
      %961 = vmatpush1.bf16.xpose.msra.mxu0 0
      %962 = vmatprep.subr.bf16.mxu0 0
      %963 = vmatpush1.bf16.xpose.msra.mxu0 0
      %964 = vmatprep.subr.bf16.mxu0 0
      %965 = vmatpush1.bf16.xpose.msra.mxu0 0
      %966 = vmatprep.subr.bf16.mxu0 0
      %967 = vmatpush1.bf16.xpose.msra.mxu0 0
      %968 = vmatprep.subr.bf16.mxu0 0
      %969 = vmatpush1.bf16.xpose.msra.mxu0 0
      %970 = vmatprep.subr.bf16.mxu0 0
      %971 = vmatpush1.bf16.xpose.msra.mxu0 0
      %972 = vmatprep.subr.bf16.mxu0 0
      %973 = vmatpush1.bf16.xpose.msra.mxu0 0
      %974 = vmatprep.subr.bf16.mxu0 0
      %975 = vmatpush1.bf16.xpose.msra.mxu0 0
      %976 = vmatprep.subr.bf16.mxu0 0
      %977 = vmatpush1.bf16.xpose.msra.mxu0 0
      %978 = vmatprep.subr.bf16.mxu0 0
      %979 = vmatpush1.bf16.xpose.msra.mxu0 0
      %980 = vmatprep.subr.bf16.mxu0 0
      %981 = vmatpush1.bf16.xpose.msra.mxu0 0
      %982 = vmatprep.subr.bf16.mxu0 0
      %983 = vmatpush1.bf16.xpose.msra.mxu0 0
      %984 = vmatprep.subr.bf16.mxu0 0
      %985 = vmatpush1.bf16.xpose.msra.mxu0 0
      %986 = vmatprep.mubr.bf16.mxu0 0
      %987 = vmatmul.mubr.bf16.gmra.mrb[0].mxu0 %v943
      %v988 = vpop.f32.mrb[0].mxu0
      %v989 = vadd.f32 0.0, %v988
      %v990 = vpop.f32.mrb[0].mxu0
      %v991 = vpop.f32.mrb[0].mxu0
      %v992 = vadd.f32 0.0, %v991
      %v993 = vpop.f32.mrb[0].mxu0
      %994 = vmatprep.mubr.bf16.mxu0 0
      %995 = vmatmul.mubr.bf16.gmra.mrb[0].mxu0 %v946
      %v996 = vpop.f32.mrb[0].mxu0
      %v997 = vadd.f32 0.0, %v996
      %v998 = vpop.f32.mrb[0].mxu0
      %v999 = vpop.f32.mrb[0].mxu0
      %v1000 = vadd.f32 0.0, %v999
      %v1001 = vpop.f32.mrb[0].mxu0
      %1002 = vdwg.mxu0
      %v1003 = vmul.f32 %v989, 0.35355338
      %v1004 = vmul.f32 %v992, 0.35355338
      %v1005 = vmul.f32 %v997, 0.35355338
      %v1006 = vmul.f32 %v1000, 0.35355338
      %v1007 = vadd.f32 %v1003, %v480
      %v1008 = vadd.f32 %v1004, %v481
      %v1009 = vadd.f32 %v1005, %v482
      %v1010 = vadd.f32 %v1006, %v483
      %v1011 = vsel %vm509, %v1007, -inf
      %1012 = vmax.xlane.f32.xlu0 %v1011
      %v1013 = vpop.xlane.xlu0 %1012
      %v1014 = vsel %vm509, %v1008, -inf
      %1015 = vmax.xlane.f32.xlu0 %v1014
      %v1016 = vpop.xlane.xlu0 %1015
      %v1017 = vsel %vm509, %v1009, -inf
      %1018 = vmax.xlane.f32.xlu0 %v1017
      %v1019 = vpop.xlane.xlu0 %1018
      %v1020 = vsel %vm509, %v1010, -inf
      %1021 = vmax.xlane.f32.xlu0 %v1020
      %v1022 = vpop.xlane.xlu0 %1021
      %v1023 = vsub.f32 %v1007, %v1013
      %v1024 = vsub.f32 %v1008, %v1016
      %v1025 = vsub.f32 %v1009, %v1019
      %v1026 = vsub.f32 %v1010, %v1022
      %v1027 = vmul.f32 %v1023, 1.442695
      %v1028 = vpow.pop %v1027
      %v1029 = vmul.f32 %v1024, 1.442695
      %v1030 = vpow.pop %v1029
      %v1031 = vmul.f32 %v1025, 1.442695
      %v1032 = vpow.pop %v1031
      %v1033 = vmul.f32 %v1026, 1.442695
      %v1034 = vpow.pop %v1033
      %v1035 = vsel %vm509, %v1028, 0.0
      %1036 = vadd.xlane.f32.xlu0 %v1035
      %v1037 = vpop.xlane.xlu0 %1036
      %v1038 = vsel %vm509, %v1030, 0.0
      %1039 = vadd.xlane.f32.xlu0 %v1038
      %v1040 = vpop.xlane.xlu0 %1039
      %v1041 = vsel %vm509, %v1032, 0.0
      %1042 = vadd.xlane.f32.xlu0 %v1041
      %v1043 = vpop.xlane.xlu0 %1042
      %v1044 = vsel %vm509, %v1034, 0.0
      %1045 = vadd.xlane.f32.xlu0 %v1044
      %v1046 = vpop.xlane.xlu0 %1045
      %v1047 = vrcp.pop %v1037
      %v1048 = vrcp.pop %v1040
      %v1049 = vrcp.pop %v1043
      %v1050 = vrcp.pop %v1046
      %v1051 = vmul.f32 %v1028, %v1047
      %v1052 = vmul.f32 %v1030, %v1048
      %v1053 = vmul.f32 %v1032, %v1049
      %v1054 = vmul.f32 %v1034, %v1050
      %v1055 = vpack.c.bf16 %v1052, %v1051
      %v1056 = vpack.c.bf16 %v1054, %v1053
      %1057 = vrot.lane.b32.xlu0 %v565, 48
      %v1058 = vpop.permute.xlu0 %1057
      %1059 = vrot.lane.b32.xlu0 %v566, 48
      %v1060 = vpop.permute.xlu0 %1059
      %v1064 = vsel %vm509, %v1055, 0
      %v1067 = vsel %vm509, %v1056, 0
      %1069 = vmatprep.subr.bf16.mxu0 0
      %1070 = vmatpush1.bf16.msra.mxu0 %v1058
      %1071 = vmatprep.subr.bf16.mxu0 0
      %1072 = vmatpush1.bf16.msra.mxu0 %v1060
      %1073 = vmatprep.subr.bf16.mxu0 0
      %1074 = vmatpush1.bf16.msra.mxu0 0
      %1075 = vmatprep.subr.bf16.mxu0 0
      %1076 = vmatpush1.bf16.msra.mxu0 0
      %1077 = vmatprep.subr.bf16.mxu0 0
      %1078 = vmatpush1.bf16.msra.mxu0 0
      %1079 = vmatprep.subr.bf16.mxu0 0
      %1080 = vmatpush1.bf16.msra.mxu0 0
      %1081 = vmatprep.subr.bf16.mxu0 0
      %1082 = vmatpush1.bf16.msra.mxu0 0
      %1083 = vmatprep.subr.bf16.mxu0 0
      %1084 = vmatpush1.bf16.msra.mxu0 0
      %1085 = vmatprep.subr.bf16.mxu0 0
      %1086 = vmatpush1.bf16.msra.mxu0 0
      %1087 = vmatprep.subr.bf16.mxu0 0
      %1088 = vmatpush1.bf16.msra.mxu0 0
      %1089 = vmatprep.subr.bf16.mxu0 0
      %1090 = vmatpush1.bf16.msra.mxu0 0
      %1091 = vmatprep.subr.bf16.mxu0 0
      %1092 = vmatpush1.bf16.msra.mxu0 0
      %1093 = vmatprep.subr.bf16.mxu0 0
      %1094 = vmatpush1.bf16.msra.mxu0 0
      %1095 = vmatprep.subr.bf16.mxu0 0
      %1096 = vmatpush1.bf16.msra.mxu0 0
      %1097 = vmatprep.subr.bf16.mxu0 0
      %1098 = vmatpush1.bf16.msra.mxu0 0
      %1099 = vmatprep.subr.bf16.mxu0 0
      %1100 = vmatpush1.bf16.msra.mxu0 0
      %1101 = vmatprep.mubr.bf16.mxu0 0
      %1102 = vmatmul.mubr.bf16.gmra.mrb[0].mxu0 %v1064
      %v1103 = vpop.f32.mrb[0].mxu0
      %v1104 = vadd.f32 0.0, %v1103
      %v1105 = vpop.f32.mrb[0].mxu0
      %v1106 = vpop.f32.mrb[0].mxu0
      %v1107 = vadd.f32 0.0, %v1106
      %v1108 = vpop.f32.mrb[0].mxu0
      %1109 = vmatprep.mubr.bf16.mxu0 0
      %1110 = vmatmul.mubr.bf16.gmra.mrb[0].mxu0 %v1067
      %v1111 = vpop.f32.mrb[0].mxu0
      %v1112 = vadd.f32 0.0, %v1111
      %v1113 = vpop.f32.mrb[0].mxu0
      %v1114 = vpop.f32.mrb[0].mxu0
      %v1115 = vadd.f32 0.0, %v1114
      %v1116 = vpop.f32.mrb[0].mxu0
      %1117 = vdwg.mxu0
      %1118 = vrot.lane.b32.xlu0 %v565, 104
      %v1119 = vpop.permute.xlu0 %1118
      %1120 = vrot.lane.b32.xlu0 %v566, 104
      %v1121 = vpop.permute.xlu0 %1120
      %1122 = vrot.lane.b32.xlu0 %v565, 72
      %v1123 = vpop.permute.xlu0 %1122
      %1124 = vrot.lane.b32.xlu0 %v566, 72
      %v1125 = vpop.permute.xlu0 %1124
      %v1127 = vsel %vm573, %v1119, 0
      %v1130 = vsel %vm573, %v1121, 0
      %v1133 = vsel %vm573, %v1123, 0
      %v1136 = vsel %vm573, %v1125, 0
      %1138 = vmatprep.subr.bf16.mxu0 0
      %1139 = vmatpush1.bf16.xpose.msra.mxu0 %v1133
      %1140 = vmatprep.subr.bf16.mxu0 0
      %1141 = vmatpush1.bf16.xpose.msra.mxu0 %v1136
      %1142 = vmatprep.subr.bf16.mxu0 0
      %1143 = vmatpush1.bf16.xpose.msra.mxu0 0
      %1144 = vmatprep.subr.bf16.mxu0 0
      %1145 = vmatpush1.bf16.xpose.msra.mxu0 0
      %1146 = vmatprep.subr.bf16.mxu0 0
      %1147 = vmatpush1.bf16.xpose.msra.mxu0 0
      %1148 = vmatprep.subr.bf16.mxu0 0
      %1149 = vmatpush1.bf16.xpose.msra.mxu0 0
      %1150 = vmatprep.subr.bf16.mxu0 0
      %1151 = vmatpush1.bf16.xpose.msra.mxu0 0
      %1152 = vmatprep.subr.bf16.mxu0 0
      %1153 = vmatpush1.bf16.xpose.msra.mxu0 0
      %1154 = vmatprep.subr.bf16.mxu0 0
      %1155 = vmatpush1.bf16.xpose.msra.mxu0 0
      %1156 = vmatprep.subr.bf16.mxu0 0
      %1157 = vmatpush1.bf16.xpose.msra.mxu0 0
      %1158 = vmatprep.subr.bf16.mxu0 0
      %1159 = vmatpush1.bf16.xpose.msra.mxu0 0
      %1160 = vmatprep.subr.bf16.mxu0 0
      %1161 = vmatpush1.bf16.xpose.msra.mxu0 0
      %1162 = vmatprep.subr.bf16.mxu0 0
      %1163 = vmatpush1.bf16.xpose.msra.mxu0 0
      %1164 = vmatprep.subr.bf16.mxu0 0
      %1165 = vmatpush1.bf16.xpose.msra.mxu0 0
      %1166 = vmatprep.subr.bf16.mxu0 0
      %1167 = vmatpush1.bf16.xpose.msra.mxu0 0
      %1168 = vmatprep.subr.bf16.mxu0 0
      %1169 = vmatpush1.bf16.xpose.msra.mxu0 0
      %1170 = vmatprep.mubr.bf16.mxu0 0
      %1171 = vmatmul.mubr.bf16.gmra.mrb[0].mxu0 %v1127
      %v1172 = vpop.f32.mrb[0].mxu0
      %v1173 = vadd.f32 0.0, %v1172
      %v1174 = vpop.f32.mrb[0].mxu0
      %v1175 = vpop.f32.mrb[0].mxu0
      %v1176 = vadd.f32 0.0, %v1175
      %v1177 = vpop.f32.mrb[0].mxu0
      %1178 = vmatprep.mubr.bf16.mxu0 0
      %1179 = vmatmul.mubr.bf16.gmra.mrb[0].mxu0 %v1130
      %v1180 = vpop.f32.mrb[0].mxu0
      %v1181 = vadd.f32 0.0, %v1180
      %v1182 = vpop.f32.mrb[0].mxu0
      %v1183 = vpop.f32.mrb[0].mxu0
      %v1184 = vadd.f32 0.0, %v1183
      %v1185 = vpop.f32.mrb[0].mxu0
      %1186 = vdwg.mxu0
      %v1187 = vmul.f32 %v1173, 0.35355338
      %v1188 = vmul.f32 %v1176, 0.35355338
      %v1189 = vmul.f32 %v1181, 0.35355338
      %v1190 = vmul.f32 %v1184, 0.35355338
      %v1191 = vadd.f32 %v1187, %v480
      %v1192 = vadd.f32 %v1188, %v481
      %v1193 = vadd.f32 %v1189, %v482
      %v1194 = vadd.f32 %v1190, %v483
      %v1195 = vsel %vm509, %v1191, -inf
      %1196 = vmax.xlane.f32.xlu0 %v1195
      %v1197 = vpop.xlane.xlu0 %1196
      %v1198 = vsel %vm509, %v1192, -inf
      %1199 = vmax.xlane.f32.xlu0 %v1198
      %v1200 = vpop.xlane.xlu0 %1199
      %v1201 = vsel %vm509, %v1193, -inf
      %1202 = vmax.xlane.f32.xlu0 %v1201
      %v1203 = vpop.xlane.xlu0 %1202
      %v1204 = vsel %vm509, %v1194, -inf
      %1205 = vmax.xlane.f32.xlu0 %v1204
      %v1206 = vpop.xlane.xlu0 %1205
      %v1207 = vsub.f32 %v1191, %v1197
      %v1208 = vsub.f32 %v1192, %v1200
      %v1209 = vsub.f32 %v1193, %v1203
      %v1210 = vsub.f32 %v1194, %v1206
      %v1211 = vmul.f32 %v1207, 1.442695
      %v1212 = vpow.pop %v1211
      %v1213 = vmul.f32 %v1208, 1.442695
      %v1214 = vpow.pop %v1213
      %v1215 = vmul.f32 %v1209, 1.442695
      %v1216 = vpow.pop %v1215
      %v1217 = vmul.f32 %v1210, 1.442695
      %v1218 = vpow.pop %v1217
      %v1219 = vsel %vm509, %v1212, 0.0
      %1220 = vadd.xlane.f32.xlu0 %v1219
      %v1221 = vpop.xlane.xlu0 %1220
      %v1222 = vsel %vm509, %v1214, 0.0
      %1223 = vadd.xlane.f32.xlu0 %v1222
      %v1224 = vpop.xlane.xlu0 %1223
      %v1225 = vsel %vm509, %v1216, 0.0
      %1226 = vadd.xlane.f32.xlu0 %v1225
      %v1227 = vpop.xlane.xlu0 %1226
      %v1228 = vsel %vm509, %v1218, 0.0
      %1229 = vadd.xlane.f32.xlu0 %v1228
      %v1230 = vpop.xlane.xlu0 %1229
      %v1231 = vrcp.pop %v1221
      %v1232 = vrcp.pop %v1224
      %v1233 = vrcp.pop %v1227
      %v1234 = vrcp.pop %v1230
      %v1235 = vmul.f32 %v1212, %v1231
      %v1236 = vmul.f32 %v1214, %v1232
      %v1237 = vmul.f32 %v1216, %v1233
      %v1238 = vmul.f32 %v1218, %v1234
      %v1239 = vpack.c.bf16 %v1236, %v1235
      %v1240 = vpack.c.bf16 %v1238, %v1237
      %1241 = vrot.lane.b32.xlu0 %v565, 40
      %v1242 = vpop.permute.xlu0 %1241
      %1243 = vrot.lane.b32.xlu0 %v566, 40
      %v1244 = vpop.permute.xlu0 %1243
      %v1248 = vsel %vm509, %v1239, 0
      %v1251 = vsel %vm509, %v1240, 0
      %1253 = vmatprep.subr.bf16.mxu0 0
      %1254 = vmatpush1.bf16.msra.mxu0 %v1242
      %1255 = vmatprep.subr.bf16.mxu0 0
      %1256 = vmatpush1.bf16.msra.mxu0 %v1244
      %1257 = vmatprep.subr.bf16.mxu0 0
      %1258 = vmatpush1.bf16.msra.mxu0 0
      %1259 = vmatprep.subr.bf16.mxu0 0
      %1260 = vmatpush1.bf16.msra.mxu0 0
      %1261 = vmatprep.subr.bf16.mxu0 0
      %1262 = vmatpush1.bf16.msra.mxu0 0
      %1263 = vmatprep.subr.bf16.mxu0 0
      %1264 = vmatpush1.bf16.msra.mxu0 0
      %1265 = vmatprep.subr.bf16.mxu0 0
      %1266 = vmatpush1.bf16.msra.mxu0 0
      %1267 = vmatprep.subr.bf16.mxu0 0
      %1268 = vmatpush1.bf16.msra.mxu0 0
      %1269 = vmatprep.subr.bf16.mxu0 0
      %1270 = vmatpush1.bf16.msra.mxu0 0
      %1271 = vmatprep.subr.bf16.mxu0 0
      %1272 = vmatpush1.bf16.msra.mxu0 0
      %1273 = vmatprep.subr.bf16.mxu0 0
      %1274 = vmatpush1.bf16.msra.mxu0 0
      %1275 = vmatprep.subr.bf16.mxu0 0
      %1276 = vmatpush1.bf16.msra.mxu0 0
      %1277 = vmatprep.subr.bf16.mxu0 0
      %1278 = vmatpush1.bf16.msra.mxu0 0
      %1279 = vmatprep.subr.bf16.mxu0 0
      %1280 = vmatpush1.bf16.msra.mxu0 0
      %1281 = vmatprep.subr.bf16.mxu0 0
      %1282 = vmatpush1.bf16.msra.mxu0 0
      %1283 = vmatprep.subr.bf16.mxu0 0
      %1284 = vmatpush1.bf16.msra.mxu0 0
      %1285 = vmatprep.mubr.bf16.mxu0 0
      %1286 = vmatmul.mubr.bf16.gmra.mrb[0].mxu0 %v1248
      %v1287 = vpop.f32.mrb[0].mxu0
      %v1288 = vadd.f32 0.0, %v1287
      %v1289 = vpop.f32.mrb[0].mxu0
      %v1290 = vpop.f32.mrb[0].mxu0
      %v1291 = vadd.f32 0.0, %v1290
      %v1292 = vpop.f32.mrb[0].mxu0
      %1293 = vmatprep.mubr.bf16.mxu0 0
      %1294 = vmatmul.mubr.bf16.gmra.mrb[0].mxu0 %v1251
      %v1295 = vpop.f32.mrb[0].mxu0
      %v1296 = vadd.f32 0.0, %v1295
      %v1297 = vpop.f32.mrb[0].mxu0
      %v1298 = vpop.f32.mrb[0].mxu0
      %v1299 = vadd.f32 0.0, %v1298
      %v1300 = vpop.f32.mrb[0].mxu0
      %1301 = vdwg.mxu0
      %1306 = vrot.lane.b32.xlu0 %v920, 8
      %v1307 = vpop.permute.xlu0 %1306
      %1308 = vrot.lane.b32.xlu0 %v923, 8
      %v1309 = vpop.permute.xlu0 %1308
      %1310 = vrot.lane.b32.xlu0 %v928, 8
      %v1311 = vpop.permute.xlu0 %1310
      %1312 = vrot.lane.b32.xlu0 %v931, 8
      %v1313 = vpop.permute.xlu0 %1312
      %1322 = vrot.lane.b32.xlu0 %v1104, 16
      %v1323 = vpop.permute.xlu0 %1322
      %1324 = vrot.lane.b32.xlu0 %v1107, 16
      %v1325 = vpop.permute.xlu0 %1324
      %1326 = vrot.lane.b32.xlu0 %v1112, 16
      %v1327 = vpop.permute.xlu0 %1326
      %1328 = vrot.lane.b32.xlu0 %v1115, 16
      %v1329 = vpop.permute.xlu0 %1328
      %1338 = vrot.lane.b32.xlu0 %v1288, 24
      %v1339 = vpop.permute.xlu0 %1338
      %1340 = vrot.lane.b32.xlu0 %v1291, 24
      %v1341 = vpop.permute.xlu0 %1340
      %1342 = vrot.lane.b32.xlu0 %v1296, 24
      %v1343 = vpop.permute.xlu0 %1342
      %1344 = vrot.lane.b32.xlu0 %v1299, 24
      %v1345 = vpop.permute.xlu0 %1344
      %v1350 = vsel %vm573, %v736, %v1307
      %v1351 = vsel %vm573, %v739, %v1309
      %v1352 = vsel %vm573, %v744, %v1311
      %v1353 = vsel %vm573, %v747, %v1313
      %vm1354 = vcmask 130048
      %v1355 = vsel %vm1354, %v1350, %v1323
      %v1356 = vsel %vm1354, %v1351, %v1325
      %v1357 = vsel %vm1354, %v1352, %v1327
      %v1358 = vsel %vm1354, %v1353, %v1329
      %vm1359 = vcmask 195584
      %v1360 = vsel %vm1359, %v1355, %v1339
      %v1361 = vsel %vm1359, %v1356, %v1341
      %v1362 = vsel %vm1359, %v1357, %v1343
      %v1363 = vsel %vm1359, %v1358, %v1345
      %v1364 = vld [vmem:[%s3] sm:$0xf]
      %v1365 = vld [vmem:[%s3 + $0x4] sm:$0xf]
      %v1366 = vld [vmem:[%s3 + $0x8] sm:$0xf]
      %v1367 = vld [vmem:[%s3 + $0xc] sm:$0xf]
      %v1368 = vpack.c.bf16 %v1361, %v1360
      %v1369 = vpack.c.bf16 %v1363, %v1362
      %v1370 = vld [vmem:[%s4] sm:$0x1]
      %v1372 = vlaneseq
      %v1373 = vshrl.u32 %v1372, 7
      %v1374 = vsub.s32 0, %v1373
      %v1375 = vrot.slane %v1370, %v1374
      %v1381 = vunpack.c.l.b16 %v1364
      %v1382 = vunpack.c.l.b16 %v1365
      %v1383 = vunpack.c.l.b16 %v1366
      %v1384 = vunpack.c.l.b16 %v1367
      %v1385 = vpack.c.b16 %v1382, %v1381
      %v1386 = vpack.c.b16 %v1384, %v1383
      %v1390 = vsel %vm509, %v1368, 0
      %v1393 = vsel %vm509, %v1369, 0
      %1395 = vmatprep.subr.bf16.mxu0 0
      %1396 = vmatpush1.bf16.msra.mxu0 %v1385
      %1397 = vmatprep.subr.bf16.mxu0 0
      %1398 = vmatpush1.bf16.msra.mxu0 %v1386
      %1399 = vmatprep.subr.bf16.mxu0 0
      %1400 = vmatpush1.bf16.msra.mxu0 0
      %1401 = vmatprep.subr.bf16.mxu0 0
      %1402 = vmatpush1.bf16.msra.mxu0 0
      %1403 = vmatprep.subr.bf16.mxu0 0
      %1404 = vmatpush1.bf16.msra.mxu0 0
      %1405 = vmatprep.subr.bf16.mxu0 0
      %1406 = vmatpush1.bf16.msra.mxu0 0
      %1407 = vmatprep.subr.bf16.mxu0 0
      %1408 = vmatpush1.bf16.msra.mxu0 0
      %1409 = vmatprep.subr.bf16.mxu0 0
      %1410 = vmatpush1.bf16.msra.mxu0 0
      %1411 = vmatprep.subr.bf16.mxu0 0
      %1412 = vmatpush1.bf16.msra.mxu0 0
      %1413 = vmatprep.subr.bf16.mxu0 0
      %1414 = vmatpush1.bf16.msra.mxu0 0
      %1415 = vmatprep.subr.bf16.mxu0 0
      %1416 = vmatpush1.bf16.msra.mxu0 0
      %1417 = vmatprep.subr.bf16.mxu0 0
      %1418 = vmatpush1.bf16.msra.mxu0 0
      %1419 = vmatprep.subr.bf16.mxu0 0
      %1420 = vmatpush1.bf16.msra.mxu0 0
      %1421 = vmatprep.subr.bf16.mxu0 0
      %1422 = vmatpush1.bf16.msra.mxu0 0
      %1423 = vmatprep.subr.bf16.mxu0 0
      %1424 = vmatpush1.bf16.msra.mxu0 0
      %1425 = vmatprep.subr.bf16.mxu0 0
      %1426 = vmatpush1.bf16.msra.mxu0 0
      %1427 = vmatprep.mubr.bf16.mxu0 0
      %1428 = vmatmul.mubr.bf16.gmra.mrb[0].mxu0 %v1390
      %v1429 = vpop.f32.mrb[0].mxu0
      %v1430 = vadd.f32 %v1375, %v1429
      %v1431 = vpop.f32.mrb[0].mxu0
      %v1432 = vpop.f32.mrb[0].mxu0
      %v1433 = vadd.f32 %v1375, %v1432
      %v1434 = vpop.f32.mrb[0].mxu0
      %1435 = vmatprep.mubr.bf16.mxu0 0
      %1436 = vmatmul.mubr.bf16.gmra.mrb[0].mxu0 %v1393
      %v1437 = vpop.f32.mrb[0].mxu0
      %v1438 = vadd.f32 %v1375, %v1437
      %v1439 = vpop.f32.mrb[0].mxu0
      %v1440 = vpop.f32.mrb[0].mxu0
      %v1441 = vadd.f32 %v1375, %v1440
      %v1442 = vpop.f32.mrb[0].mxu0
      %1443 = vdwg.mxu0
      %v1444 = vadd.f32 %v445, %v1430
      %v1445 = vadd.f32 %v446, %v1433
      %v1446 = vadd.f32 %v447, %v1438
      %v1447 = vadd.f32 %v448, %v1441
      %v1448 = vld [vmem:[%s5] sm:$0x1]
      %v1449 = vld [vmem:[%s6] sm:$0x1]
      %v1450 = vsel %vm509, %v1444, 0.0
      %1451 = vadd.xlane.f32.xlu0 %v1450
      %v1452 = vpop.xlane.xlu0 %1451
      %v1453 = vsel %vm509, %v1445, 0.0
      %1454 = vadd.xlane.f32.xlu0 %v1453
      %v1455 = vpop.xlane.xlu0 %1454
      %v1456 = vsel %vm509, %v1446, 0.0
      %1457 = vadd.xlane.f32.xlu0 %v1456
      %v1458 = vpop.xlane.xlu0 %1457
      %v1459 = vsel %vm509, %v1447, 0.0
      %1460 = vadd.xlane.f32.xlu0 %v1459
      %v1461 = vpop.xlane.xlu0 %1460
      %v1462 = vrcp.pop 32.0
      %v1463 = vmul.f32 %v1452, %v1462
      %v1464 = vmul.f32 %v1455, %v1462
      %v1465 = vmul.f32 %v1458, %v1462
      %v1466 = vmul.f32 %v1461, %v1462
      %v1467 = vsub.f32 %v1444, %v1463
      %v1468 = vsub.f32 %v1445, %v1464
      %v1469 = vsub.f32 %v1446, %v1465
      %v1470 = vsub.f32 %v1447, %v1466
      %v1471 = vmul.f32 %v1467, %v1467
      %v1472 = vmul.f32 %v1468, %v1468
      %v1473 = vmul.f32 %v1469, %v1469
      %v1474 = vmul.f32 %v1470, %v1470
      %v1475 = vsel %vm509, %v1471, 0.0
      %1476 = vadd.xlane.f32.xlu0 %v1475
      %v1477 = vpop.xlane.xlu0 %1476
      %v1478 = vsel %vm509, %v1472, 0.0
      %1479 = vadd.xlane.f32.xlu0 %v1478
      %v1480 = vpop.xlane.xlu0 %1479
      %v1481 = vsel %vm509, %v1473, 0.0
      %1482 = vadd.xlane.f32.xlu0 %v1481
      %v1483 = vpop.xlane.xlu0 %1482
      %v1484 = vsel %vm509, %v1474, 0.0
      %1485 = vadd.xlane.f32.xlu0 %v1484
      %v1486 = vpop.xlane.xlu0 %1485
      %v1487 = vmul.f32 %v1477, %v1462
      %v1488 = vmul.f32 %v1480, %v1462
      %v1489 = vmul.f32 %v1483, %v1462
      %v1490 = vmul.f32 %v1486, %v1462
      %v1491 = vadd.f32 %v1487, 1e-05
      %v1492 = vadd.f32 %v1488, 1e-05
      %v1493 = vadd.f32 %v1489, 1e-05
      %v1494 = vadd.f32 %v1490, 1e-05
      %v1495 = vrsqrt.pop %v1491
      %v1496 = vrsqrt.pop %v1492
      %v1497 = vrsqrt.pop %v1493
      %v1498 = vrsqrt.pop %v1494
      %v1499 = vmul.f32 %v1467, %v1495
      %v1500 = vmul.f32 %v1468, %v1496
      %v1501 = vmul.f32 %v1469, %v1497
      %v1502 = vmul.f32 %v1470, %v1498
      %v1504 = vlaneseq
      %v1505 = vshrl.u32 %v1504, 7
      %v1506 = vsub.s32 0, %v1505
      %v1507 = vrot.slane %v1448, %v1506
      %v1509 = vmul.f32 %v1499, %v1507
      %v1510 = vmul.f32 %v1500, %v1507
      %v1511 = vmul.f32 %v1501, %v1507
      %v1512 = vmul.f32 %v1502, %v1507
      %v1514 = vlaneseq
      %v1515 = vshrl.u32 %v1514, 7
      %v1516 = vsub.s32 0, %v1515
      %v1517 = vrot.slane %v1449, %v1516
      %v1519 = vadd.f32 %v1509, %v1517
      %v1520 = vadd.f32 %v1510, %v1517
      %v1521 = vadd.f32 %v1511, %v1517
      %v1522 = vadd.f32 %v1512, %v1517
      %v1523 = vld [vmem:[%s7] sm:$0xf]
      %v1524 = vld [vmem:[%s7 + $0x4] sm:$0xf]
      %v1525 = vld [vmem:[%s7 + $0x8] sm:$0xf]
      %v1526 = vld [vmem:[%s7 + $0xc] sm:$0xf]
      %v1527 = vpack.c.bf16 %v1520, %v1519
      %v1528 = vpack.c.bf16 %v1522, %v1521
      %v1529 = vld [vmem:[%s8] sm:$0x1]
      %v1531 = vlaneseq
      %v1532 = vshrl.u32 %v1531, 7
      %v1533 = vsub.s32 0, %v1532
      %v1534 = vrot.slane %v1529, %v1533
      %v1540 = vunpack.c.l.b16 %v1523
      %v1541 = vunpack.c.l.b16 %v1524
      %v1542 = vunpack.c.l.b16 %v1525
      %v1543 = vunpack.c.l.b16 %v1526
      %v1544 = vpack.c.b16 %v1541, %v1540
      %v1545 = vpack.c.b16 %v1543, %v1542
      %v1549 = vsel %vm509, %v1527, 0
      %v1552 = vsel %vm509, %v1528, 0
      %1554 = vmatprep.subr.bf16.mxu0 0
      %1555 = vmatpush1.bf16.msra.mxu0 %v1544
      %1556 = vmatprep.subr.bf16.mxu0 0
      %1557 = vmatpush1.bf16.msra.mxu0 %v1545
      %1558 = vmatprep.subr.bf16.mxu0 0
      %1559 = vmatpush1.bf16.msra.mxu0 0
      %1560 = vmatprep.subr.bf16.mxu0 0
      %1561 = vmatpush1.bf16.msra.mxu0 0
      %1562 = vmatprep.subr.bf16.mxu0 0
      %1563 = vmatpush1.bf16.msra.mxu0 0
      %1564 = vmatprep.subr.bf16.mxu0 0
      %1565 = vmatpush1.bf16.msra.mxu0 0
      %1566 = vmatprep.subr.bf16.mxu0 0
      %1567 = vmatpush1.bf16.msra.mxu0 0
      %1568 = vmatprep.subr.bf16.mxu0 0
      %1569 = vmatpush1.bf16.msra.mxu0 0
      %1570 = vmatprep.subr.bf16.mxu0 0
      %1571 = vmatpush1.bf16.msra.mxu0 0
      %1572 = vmatprep.subr.bf16.mxu0 0
      %1573 = vmatpush1.bf16.msra.mxu0 0
      %1574 = vmatprep.subr.bf16.mxu0 0
      %1575 = vmatpush1.bf16.msra.mxu0 0
      %1576 = vmatprep.subr.bf16.mxu0 0
      %1577 = vmatpush1.bf16.msra.mxu0 0
      %1578 = vmatprep.subr.bf16.mxu0 0
      %1579 = vmatpush1.bf16.msra.mxu0 0
      %1580 = vmatprep.subr.bf16.mxu0 0
      %1581 = vmatpush1.bf16.msra.mxu0 0
      %1582 = vmatprep.subr.bf16.mxu0 0
      %1583 = vmatpush1.bf16.msra.mxu0 0
      %1584 = vmatprep.subr.bf16.mxu0 0
      %1585 = vmatpush1.bf16.msra.mxu0 0
      %1586 = vmatprep.mubr.bf16.mxu0 0
      %1587 = vmatmul.mubr.bf16.gmra.mrb[0].mxu0 %v1549
      %v1588 = vpop.f32.mrb[0].mxu0
      %v1589 = vadd.f32 %v1534, %v1588
      %v1590 = vpop.f32.mrb[0].mxu0
      %v1591 = vpop.f32.mrb[0].mxu0
      %v1592 = vadd.f32 %v1534, %v1591
      %v1593 = vpop.f32.mrb[0].mxu0
      %1594 = vmatprep.mubr.bf16.mxu0 0
      %1595 = vmatmul.mubr.bf16.gmra.mrb[0].mxu0 %v1552
      %v1596 = vpop.f32.mrb[0].mxu0
      %v1597 = vadd.f32 %v1534, %v1596
      %v1598 = vpop.f32.mrb[0].mxu0
      %v1599 = vpop.f32.mrb[0].mxu0
      %v1600 = vadd.f32 %v1534, %v1599
      %v1601 = vpop.f32.mrb[0].mxu0
      %1602 = vdwg.mxu0
      %v1603 = vmax.f32 %v1589, 0.0
      %v1604 = vmax.f32 %v1592, 0.0
      %v1605 = vmax.f32 %v1597, 0.0
      %v1606 = vmax.f32 %v1600, 0.0
      %v1607 = vld [vmem:[%s9] sm:$0xf]
      %v1608 = vld [vmem:[%s9 + $0x4] sm:$0xf]
      %v1609 = vld [vmem:[%s9 + $0x8] sm:$0xf]
      %v1610 = vld [vmem:[%s9 + $0xc] sm:$0xf]
      %v1611 = vpack.c.bf16 %v1604, %v1603
      %v1612 = vpack.c.bf16 %v1606, %v1605
      %v1613 = vld [vmem:[%s10] sm:$0x1]
      %v1615 = vlaneseq
      %v1616 = vshrl.u32 %v1615, 7
      %v1617 = vsub.s32 0, %v1616
      %v1618 = vrot.slane %v1613, %v1617
      %v1624 = vunpack.c.l.b16 %v1607
      %v1625 = vunpack.c.l.b16 %v1608
      %v1626 = vunpack.c.l.b16 %v1609
      %v1627 = vunpack.c.l.b16 %v1610
      %v1628 = vpack.c.b16 %v1625, %v1624
      %v1629 = vpack.c.b16 %v1627, %v1626
      %v1633 = vsel %vm509, %v1611, 0
      %v1636 = vsel %vm509, %v1612, 0
      %1638 = vmatprep.subr.bf16.mxu0 0
      %1639 = vmatpush1.bf16.msra.mxu0 %v1628
      %1640 = vmatprep.subr.bf16.mxu0 0
      %1641 = vmatpush1.bf16.msra.mxu0 %v1629
      %1642 = vmatprep.subr.bf16.mxu0 0
      %1643 = vmatpush1.bf16.msra.mxu0 0
      %1644 = vmatprep.subr.bf16.mxu0 0
      %1645 = vmatpush1.bf16.msra.mxu0 0
      %1646 = vmatprep.subr.bf16.mxu0 0
      %1647 = vmatpush1.bf16.msra.mxu0 0
      %1648 = vmatprep.subr.bf16.mxu0 0
      %1649 = vmatpush1.bf16.msra.mxu0 0
      %1650 = vmatprep.subr.bf16.mxu0 0
      %1651 = vmatpush1.bf16.msra.mxu0 0
      %1652 = vmatprep.subr.bf16.mxu0 0
      %1653 = vmatpush1.bf16.msra.mxu0 0
      %1654 = vmatprep.subr.bf16.mxu0 0
      %1655 = vmatpush1.bf16.msra.mxu0 0
      %1656 = vmatprep.subr.bf16.mxu0 0
      %1657 = vmatpush1.bf16.msra.mxu0 0
      %1658 = vmatprep.subr.bf16.mxu0 0
      %1659 = vmatpush1.bf16.msra.mxu0 0
      %1660 = vmatprep.subr.bf16.mxu0 0
      %1661 = vmatpush1.bf16.msra.mxu0 0
      %1662 = vmatprep.subr.bf16.mxu0 0
      %1663 = vmatpush1.bf16.msra.mxu0 0
      %1664 = vmatprep.subr.bf16.mxu0 0
      %1665 = vmatpush1.bf16.msra.mxu0 0
      %1666 = vmatprep.subr.bf16.mxu0 0
      %1667 = vmatpush1.bf16.msra.mxu0 0
      %1668 = vmatprep.subr.bf16.mxu0 0
      %1669 = vmatpush1.bf16.msra.mxu0 0
      %1670 = vmatprep.mubr.bf16.mxu0 0
      %1671 = vmatmul.mubr.bf16.gmra.mrb[0].mxu0 %v1633
      %v1672 = vpop.f32.mrb[0].mxu0
      %v1673 = vadd.f32 %v1618, %v1672
      %v1674 = vpop.f32.mrb[0].mxu0
      %v1675 = vpop.f32.mrb[0].mxu0
      %v1676 = vadd.f32 %v1618, %v1675
      %v1677 = vpop.f32.mrb[0].mxu0
      %1678 = vmatprep.mubr.bf16.mxu0 0
      %1679 = vmatmul.mubr.bf16.gmra.mrb[0].mxu0 %v1636
      %v1680 = vpop.f32.mrb[0].mxu0
      %v1681 = vadd.f32 %v1618, %v1680
      %v1682 = vpop.f32.mrb[0].mxu0
      %v1683 = vpop.f32.mrb[0].mxu0
      %v1684 = vadd.f32 %v1618, %v1683
      %v1685 = vpop.f32.mrb[0].mxu0
      %1686 = vdwg.mxu0
      %v1687 = vadd.f32 %v1519, %v1673
      %v1688 = vadd.f32 %v1520, %v1676
      %v1689 = vadd.f32 %v1521, %v1681
      %v1690 = vadd.f32 %v1522, %v1684
      %v1691 = vld [vmem:[%s11] sm:$0x1]
      %v1692 = vld [vmem:[%s12] sm:$0x1]
      %v1693 = vsel %vm509, %v1687, 0.0
      %1694 = vadd.xlane.f32.xlu0 %v1693
      %v1695 = vpop.xlane.xlu0 %1694
      %v1696 = vsel %vm509, %v1688, 0.0
      %1697 = vadd.xlane.f32.xlu0 %v1696
      %v1698 = vpop.xlane.xlu0 %1697
      %v1699 = vsel %vm509, %v1689, 0.0
      %1700 = vadd.xlane.f32.xlu0 %v1699
      %v1701 = vpop.xlane.xlu0 %1700
      %v1702 = vsel %vm509, %v1690, 0.0
      %1703 = vadd.xlane.f32.xlu0 %v1702
      %v1704 = vpop.xlane.xlu0 %1703
      %v1705 = vmul.f32 %v1695, %v1462
      %v1706 = vmul.f32 %v1698, %v1462
      %v1707 = vmul.f32 %v1701, %v1462
      %v1708 = vmul.f32 %v1704, %v1462
      %v1709 = vsub.f32 %v1687, %v1705
      %v1710 = vsub.f32 %v1688, %v1706
      %v1711 = vsub.f32 %v1689, %v1707
      %v1712 = vsub.f32 %v1690, %v1708
      %v1713 = vmul.f32 %v1709, %v1709
      %v1714 = vmul.f32 %v1710, %v1710
      %v1715 = vmul.f32 %v1711, %v1711
      %v1716 = vmul.f32 %v1712, %v1712
      %v1717 = vsel %vm509, %v1713, 0.0
      %1718 = vadd.xlane.f32.xlu0 %v1717
      %v1719 = vpop.xlane.xlu0 %1718
      %v1720 = vsel %vm509, %v1714, 0.0
      %1721 = vadd.xlane.f32.xlu0 %v1720
      %v1722 = vpop.xlane.xlu0 %1721
      %v1723 = vsel %vm509, %v1715, 0.0
      %1724 = vadd.xlane.f32.xlu0 %v1723
      %v1725 = vpop.xlane.xlu0 %1724
      %v1726 = vsel %vm509, %v1716, 0.0
      %1727 = vadd.xlane.f32.xlu0 %v1726
      %v1728 = vpop.xlane.xlu0 %1727
      %v1729 = vmul.f32 %v1719, %v1462
      %v1730 = vmul.f32 %v1722, %v1462
      %v1731 = vmul.f32 %v1725, %v1462
      %v1732 = vmul.f32 %v1728, %v1462
      %v1733 = vadd.f32 %v1729, 1e-05
      %v1734 = vadd.f32 %v1730, 1e-05
      %v1735 = vadd.f32 %v1731, 1e-05
      %v1736 = vadd.f32 %v1732, 1e-05
      %v1737 = vrsqrt.pop %v1733
      %v1738 = vrsqrt.pop %v1734
      %v1739 = vrsqrt.pop %v1735
      %v1740 = vrsqrt.pop %v1736
      %v1741 = vmul.f32 %v1709, %v1737
      %v1742 = vmul.f32 %v1710, %v1738
      %v1743 = vmul.f32 %v1711, %v1739
      %v1744 = vmul.f32 %v1712, %v1740
      %v1746 = vlaneseq
      %v1747 = vshrl.u32 %v1746, 7
      %v1748 = vsub.s32 0, %v1747
      %v1749 = vrot.slane %v1691, %v1748
      %v1751 = vmul.f32 %v1741, %v1749
      %v1752 = vmul.f32 %v1742, %v1749
      %v1753 = vmul.f32 %v1743, %v1749
      %v1754 = vmul.f32 %v1744, %v1749
      %v1756 = vlaneseq
      %v1757 = vshrl.u32 %v1756, 7
      %v1758 = vsub.s32 0, %v1757
      %v1759 = vrot.slane %v1692, %v1758
      %v1761 = vadd.f32 %v1751, %v1759
      %v1762 = vadd.f32 %v1752, %v1759
      %v1763 = vadd.f32 %v1753, %v1759
      %v1764 = vadd.f32 %v1754, %v1759
      %v1765 = vpack.c.bf16 %v1762, %v1761
      %v1766 = vpack.c.bf16 %v1764, %v1763
      %v1769 = vunpack.c.l.b16 %v1765
      %v1770 = vunpack.c.h.b16 %v1765
      %v1771 = vunpack.c.l.b16 %v1766
      %v1772 = vunpack.c.h.b16 %v1766
      %v1773 = vpack.c.b16 %v1769, %v1769
      %v1774 = vpack.c.b16 %v1770, %v1770
      %v1775 = vpack.c.b16 %v1771, %v1771
      %v1776 = vpack.c.b16 %v1772, %v1772
      %vm1781 = vcmask 257024
      %1782 = vst.msk [vmem:[%s442] sm:$0xf] %vm1781, %v1773
      %1783 = vst.msk [vmem:[%s442 + $0x4] sm:$0xf] %vm1781, %v1774
      %1784 = vst.msk [vmem:[%s442 + $0x8] sm:$0xf] %vm1781, %v1775
      %1785 = vst.msk [vmem:[%s442 + $0xc] sm:$0xf] %vm1781, %v1776
      %s1786 = smul.u32 4, %s24
      %p1787 = scmp.lt.s32.totalorder %s1786, 15
      %s1788 = scalar_select %p1787, %s1786, 15
      %s1789 = smul.addr %s1788, 4
      %s1790 = scalar_lea.vmem %s13, %s1789
      // Predicated region
      $region73: #{spatial_first_transformer_forward.13} parent=71 // pred_check
        %p1791 = pneg %p320
      $region74: #{spatial_first_transformer_forward.13} parent=71 // pred_check_branch
        %1793 = sbr.rel (%p1791) target = $region76
      $region75: #{spatial_first_transformer_forward.13} parent=71 // pred_region
        %s1794 = smul.u32 4, %s24
      $region76: #{spatial_first_transformer_forward.13} parent=71 // pred_fallthru
        _
    $region72: #{spatial_first_transformer_forward.13} parent=5 // pred_fallthru
      _
    %p1795 = scmp.le.s32.totalorder 2, %s19
    // Predicated region
    $region77: #{spatial_first_transformer_forward.13} parent=5 // pred_check
      %p1796 = pneg %p1795
    $region78: #{spatial_first_transformer_forward.13} parent=5 // pred_check_branch
      %1798 = sbr.rel (%p1796) target = $region80
    $region79: #{spatial_first_transformer_forward.13} parent=5 // pred_region
      %s1799 = ssub.s32 %s19, 2
      // Predicated region
      $region81: #{spatial_first_transformer_forward.13} parent=79 // pred_check
        %p1800 = pneg %p326
      $region82: #{spatial_first_transformer_forward.13} parent=79 // pred_check_branch
        %1802 = sbr.rel (%p1800) target = $region84
      $region83: #{spatial_first_transformer_forward.13} parent=79 // pred_region
        %s1803 = smul.u32 4, %s25
        %p1804 = scmp.lt.s32.totalorder %s1803, 15
        %s1805 = scalar_select %p1804, %s1803, 15
        %s1806 = smul.addr %s1805, 4
        %s1807 = scalar_lea.vmem %s13, %s1806
      $region84: #{spatial_first_transformer_forward.13} parent=79 // pred_fallthru
        _
    $region80: #{spatial_first_transformer_forward.13} parent=5 // pred_fallthru
      _
  $region6: #{spatial_first_transformer_forward.13} parent=0 // loop_footer
    %s23 = sadd.s32 1, %s19
  $region7: #{spatial_first_transformer_forward.13} parent=0 // loop_footer_branch
    %18 = sbr.rel target = $region3
  $region8: #{spatial_first_transformer_forward.13} parent=0 // loop_exit
    _

// kernel: spatial_first_transformer_forward.14
$region0: #{spatial_first_transformer_forward.14}
  #allocation0 [shape = 'u32[]', space=smem, size = 0x4, offset = 0x4, fixed_abs, tag = 'smem constant byte address 0x4 - core index']
  #allocation1 [shape = 'u32[144,128]{1,0:T(1,128)}', space=vmem, size = 0x12000, scoped, tag = 'internal scratch']
  %s0 = inlined_call_operand.vmem [shape: bf16[128,32], index: 0, kind: input, shape index: {}]
  %s1 = inlined_call_operand.vmem [shape: bf16[32,96], index: 1, kind: input, shape index: {}]
  %s2 = inlined_call_operand.vmem [shape: f32[1,96], index: 2, kind: input, shape index: {}]
  %s3 = inlined_call_operand.vmem [shape: bf16[32,32], index: 3, kind: input, shape index: {}]
  %s4 = inlined_call_operand.vmem [shape: f32[1,32], index: 4, kind: input, shape index: {}]
  %s5 = inlined_call_operand.vmem [shape: f32[1,32], index: 5, kind: input, shape index: {}]
  %s6 = inlined_call_operand.vmem [shape: f32[1,32], index: 6, kind: input, shape index: {}]
  %s7 = inlined_call_operand.vmem [shape: bf16[32,32], index: 7, kind: input, shape index: {}]
  %s8 = inlined_call_operand.vmem [shape: f32[1,32], index: 8, kind: input, shape index: {}]
  %s9 = inlined_call_operand.vmem [shape: bf16[32,32], index: 9, kind: input, shape index: {}]
  %s10 = inlined_call_operand.vmem [shape: f32[1,32], index: 10, kind: input, shape index: {}]
  %s11 = inlined_call_operand.vmem [shape: f32[1,32], index: 11, kind: input, shape index: {}]
  %s12 = inlined_call_operand.vmem [shape: f32[1,32], index: 12, kind: input, shape index: {}]
  %s13 = inlined_call_operand.vmem [shape: bf16[128,32], index: 13, kind: output, shape index: {}]
  %s14 = sld [smem:[#allocation0]]
  $region85: #{spatial_first_transformer_forward.14} parent=0
    _
  %s16 = ssub.s32 1, %s14
  %s17 = scalar_select 0, %s16, %s14
  loop: start=0, step=1, limit=6
  $region2: #{spatial_first_transformer_forward.14} parent=0 // loop_pre_header
    _
  $region3: #{spatial_first_transformer_forward.14} parent=0 // loop_header
    %s19 = sphi 0, %s23
    %p20 = scmp.ge.s32.totalorder %s19, 6
    %s29 = sphi 0, %s31
    %s32 = sphi 0, %s29
    %s33 = sphi 0, %s32
    %s49 = sphi 0, %s33
    %s53 = sphi 0, %s53
    %s55 = sphi 0, %s53
    %s56 = sphi 0, %s55
    %s70 = sphi 0, %s56
    %s74 = sphi 0, %s74
    %s76 = sphi 0, %s74
    %s77 = sphi 0, %s76
    %s91 = sphi 0, %s77
    %s95 = sphi 0, %s95
    %s97 = sphi 0, %s95
    %s98 = sphi 0, %s97
    %s112 = sphi 0, %s98
    %s116 = sphi 0, %s116
    %s118 = sphi 0, %s116
    %s119 = sphi 0, %s118
    %s133 = sphi 0, %s119
    %s137 = sphi 0, %s137
    %s139 = sphi 0, %s137
    %s140 = sphi 0, %s139
    %s154 = sphi 0, %s140
    %s158 = sphi 0, %s158
    %s160 = sphi 0, %s158
    %s161 = sphi 0, %s160
    %s175 = sphi 0, %s161
    %s179 = sphi 0, %s179
    %s181 = sphi 0, %s179
    %s182 = sphi 0, %s181
    %s196 = sphi 0, %s182
    %s200 = sphi 0, %s200
    %s202 = sphi 0, %s200
    %s203 = sphi 0, %s202
    %s217 = sphi 0, %s203
    %s221 = sphi 0, %s221
    %s223 = sphi 0, %s221
    %s224 = sphi 0, %s223
    %s238 = sphi 0, %s224
    %s242 = sphi 0, %s242
    %s244 = sphi 0, %s242
    %s245 = sphi 0, %s244
    %s259 = sphi 0, %s245
    %s263 = sphi 0, %s263
    %s265 = sphi 0, %s263
    %s266 = sphi 0, %s265
    %s280 = sphi 0, %s266
    %s284 = sphi 0, %s284
    %s286 = sphi 0, %s284
    %s287 = sphi 0, %s286
    %s301 = sphi 0, %s287
    %s307 = sphi 0, %s309
    %s310 = sphi 0, %s307
    %s311 = sphi 0, %s310
    %s327 = sphi 0, %s311
  $region4: #{spatial_first_transformer_forward.14} parent=0 // loop_header_branch
    %22 = sbr.rel (%p20) target = $region8
  $region5: #{spatial_first_transformer_forward.14} parent=0 // loop_body
    %s24 = ssub.s32 %s19, 1
    %s25 = ssub.s32 %s19, 2
    %s26 = sadd.s32 %s19, 1
    %s27 = ssub.s32 %s19, %s26
    %p28 = scmp.eq.s32.totalorder %s27, 0
    %s30 = sadd.s32 %s29, 1
    %s31 = scalar_select %p28, %s29, %s30
    %p34 = pneg %p28
    %p35 = scmp.eq.s32.totalorder %s19, 3
    %p36 = por %p34, %p35
    %p37 = scmp.ne.s32.totalorder %s29, %s32
    %p38 = scmp.eq.s32.totalorder %s19, 0
    %p39 = por %p37, %p38
    %p40 = scmp.ne.s32.totalorder %s29, %s32
    %p41 = scmp.eq.s32.totalorder %s24, 3
    %p42 = por %p40, %p41
    %p43 = scmp.ne.s32.totalorder %s32, %s33
    %p44 = scmp.eq.s32.totalorder %s24, 0
    %p45 = por %p43, %p44
    %p46 = scmp.ne.s32.totalorder %s32, %s33
    %p47 = scmp.eq.s32.totalorder %s25, 3
    %p48 = por %p46, %p47
    %p50 = scmp.ne.s32.totalorder %s33, %s49
    %p51 = scmp.eq.s32.totalorder %s25, 0
    %p52 = por %p50, %p51
    %s54 = sadd.s32 %s53, 1
    %p57 = scmp.eq.s32.totalorder %s19, 3
    %p58 = scmp.ne.s32.totalorder %s53, %s55
    %p59 = scmp.eq.s32.totalorder %s19, 0
    %p60 = por %p58, %p59
    %p61 = scmp.ne.s32.totalorder %s53, %s55
    %p62 = scmp.eq.s32.totalorder %s24, 3
    %p63 = por %p61, %p62
    %p64 = scmp.ne.s32.totalorder %s55, %s56
    %p65 = scmp.eq.s32.totalorder %s24, 0
    %p66 = por %p64, %p65
    %p67 = scmp.ne.s32.totalorder %s55, %s56
    %p68 = scmp.eq.s32.totalorder %s25, 3
    %p69 = por %p67, %p68
    %p71 = scmp.ne.s32.totalorder %s56, %s70
    %p72 = scmp.eq.s32.totalorder %s25, 0
    %p73 = por %p71, %p72
    %s75 = sadd.s32 %s74, 1
    %p78 = scmp.eq.s32.totalorder %s19, 3
    %p79 = scmp.ne.s32.totalorder %s74, %s76
    %p80 = scmp.eq.s32.totalorder %s19, 0
    %p81 = por %p79, %p80
    %p82 = scmp.ne.s32.totalorder %s74, %s76
    %p83 = scmp.eq.s32.totalorder %s24, 3
    %p84 = por %p82, %p83
    %p85 = scmp.ne.s32.totalorder %s76, %s77
    %p86 = scmp.eq.s32.totalorder %s24, 0
    %p87 = por %p85, %p86
    %p88 = scmp.ne.s32.totalorder %s76, %s77
    %p89 = scmp.eq.s32.totalorder %s25, 3
    %p90 = por %p88, %p89
    %p92 = scmp.ne.s32.totalorder %s77, %s91
    %p93 = scmp.eq.s32.totalorder %s25, 0
    %p94 = por %p92, %p93
    %s96 = sadd.s32 %s95, 1
    %p99 = scmp.eq.s32.totalorder %s19, 3
    %p100 = scmp.ne.s32.totalorder %s95, %s97
    %p101 = scmp.eq.s32.totalorder %s19, 0
    %p102 = por %p100, %p101
    %p103 = scmp.ne.s32.totalorder %s95, %s97
    %p104 = scmp.eq.s32.totalorder %s24, 3
    %p105 = por %p103, %p104
    %p106 = scmp.ne.s32.totalorder %s97, %s98
    %p107 = scmp.eq.s32.totalorder %s24, 0
    %p108 = por %p106, %p107
    %p109 = scmp.ne.s32.totalorder %s97, %s98
    %p110 = scmp.eq.s32.totalorder %s25, 3
    %p111 = por %p109, %p110
    %p113 = scmp.ne.s32.totalorder %s98, %s112
    %p114 = scmp.eq.s32.totalorder %s25, 0
    %p115 = por %p113, %p114
    %s117 = sadd.s32 %s116, 1
    %p120 = scmp.eq.s32.totalorder %s19, 3
    %p121 = scmp.ne.s32.totalorder %s116, %s118
    %p122 = scmp.eq.s32.totalorder %s19, 0
    %p123 = por %p121, %p122
    %p124 = scmp.ne.s32.totalorder %s116, %s118
    %p125 = scmp.eq.s32.totalorder %s24, 3
    %p126 = por %p124, %p125
    %p127 = scmp.ne.s32.totalorder %s118, %s119
    %p128 = scmp.eq.s32.totalorder %s24, 0
    %p129 = por %p127, %p128
    %p130 = scmp.ne.s32.totalorder %s118, %s119
    %p131 = scmp.eq.s32.totalorder %s25, 3
    %p132 = por %p130, %p131
    %p134 = scmp.ne.s32.totalorder %s119, %s133
    %p135 = scmp.eq.s32.totalorder %s25, 0
    %p136 = por %p134, %p135
    %s138 = sadd.s32 %s137, 1
    %p141 = scmp.eq.s32.totalorder %s19, 3
    %p142 = scmp.ne.s32.totalorder %s137, %s139
    %p143 = scmp.eq.s32.totalorder %s19, 0
    %p144 = por %p142, %p143
    %p145 = scmp.ne.s32.totalorder %s137, %s139
    %p146 = scmp.eq.s32.totalorder %s24, 3
    %p147 = por %p145, %p146
    %p148 = scmp.ne.s32.totalorder %s139, %s140
    %p149 = scmp.eq.s32.totalorder %s24, 0
    %p150 = por %p148, %p149
    %p151 = scmp.ne.s32.totalorder %s139, %s140
    %p152 = scmp.eq.s32.totalorder %s25, 3
    %p153 = por %p151, %p152
    %p155 = scmp.ne.s32.totalorder %s140, %s154
    %p156 = scmp.eq.s32.totalorder %s25, 0
    %p157 = por %p155, %p156
    %s159 = sadd.s32 %s158, 1
    %p162 = scmp.eq.s32.totalorder %s19, 3
    %p163 = scmp.ne.s32.totalorder %s158, %s160
    %p164 = scmp.eq.s32.totalorder %s19, 0
    %p165 = por %p163, %p164
    %p166 = scmp.ne.s32.totalorder %s158, %s160
    %p167 = scmp.eq.s32.totalorder %s24, 3
    %p168 = por %p166, %p167
    %p169 = scmp.ne.s32.totalorder %s160, %s161
    %p170 = scmp.eq.s32.totalorder %s24, 0
    %p171 = por %p169, %p170
    %p172 = scmp.ne.s32.totalorder %s160, %s161
    %p173 = scmp.eq.s32.totalorder %s25, 3
    %p174 = por %p172, %p173
    %p176 = scmp.ne.s32.totalorder %s161, %s175
    %p177 = scmp.eq.s32.totalorder %s25, 0
    %p178 = por %p176, %p177
    %s180 = sadd.s32 %s179, 1
    %p183 = scmp.eq.s32.totalorder %s19, 3
    %p184 = scmp.ne.s32.totalorder %s179, %s181
    %p185 = scmp.eq.s32.totalorder %s19, 0
    %p186 = por %p184, %p185
    %p187 = scmp.ne.s32.totalorder %s179, %s181
    %p188 = scmp.eq.s32.totalorder %s24, 3
    %p189 = por %p187, %p188
    %p190 = scmp.ne.s32.totalorder %s181, %s182
    %p191 = scmp.eq.s32.totalorder %s24, 0
    %p192 = por %p190, %p191
    %p193 = scmp.ne.s32.totalorder %s181, %s182
    %p194 = scmp.eq.s32.totalorder %s25, 3
    %p195 = por %p193, %p194
    %p197 = scmp.ne.s32.totalorder %s182, %s196
    %p198 = scmp.eq.s32.totalorder %s25, 0
    %p199 = por %p197, %p198
    %s201 = sadd.s32 %s200, 1
    %p204 = scmp.eq.s32.totalorder %s19, 3
    %p205 = scmp.ne.s32.totalorder %s200, %s202
    %p206 = scmp.eq.s32.totalorder %s19, 0
    %p207 = por %p205, %p206
    %p208 = scmp.ne.s32.totalorder %s200, %s202
    %p209 = scmp.eq.s32.totalorder %s24, 3
    %p210 = por %p208, %p209
    %p211 = scmp.ne.s32.totalorder %s202, %s203
    %p212 = scmp.eq.s32.totalorder %s24, 0
    %p213 = por %p211, %p212
    %p214 = scmp.ne.s32.totalorder %s202, %s203
    %p215 = scmp.eq.s32.totalorder %s25, 3
    %p216 = por %p214, %p215
    %p218 = scmp.ne.s32.totalorder %s203, %s217
    %p219 = scmp.eq.s32.totalorder %s25, 0
    %p220 = por %p218, %p219
    %s222 = sadd.s32 %s221, 1
    %p225 = scmp.eq.s32.totalorder %s19, 3
    %p226 = scmp.ne.s32.totalorder %s221, %s223
    %p227 = scmp.eq.s32.totalorder %s19, 0
    %p228 = por %p226, %p227
    %p229 = scmp.ne.s32.totalorder %s221, %s223
    %p230 = scmp.eq.s32.totalorder %s24, 3
    %p231 = por %p229, %p230
    %p232 = scmp.ne.s32.totalorder %s223, %s224
    %p233 = scmp.eq.s32.totalorder %s24, 0
    %p234 = por %p232, %p233
    %p235 = scmp.ne.s32.totalorder %s223, %s224
    %p236 = scmp.eq.s32.totalorder %s25, 3
    %p237 = por %p235, %p236
    %p239 = scmp.ne.s32.totalorder %s224, %s238
    %p240 = scmp.eq.s32.totalorder %s25, 0
    %p241 = por %p239, %p240
    %s243 = sadd.s32 %s242, 1
    %p246 = scmp.eq.s32.totalorder %s19, 3
    %p247 = scmp.ne.s32.totalorder %s242, %s244
    %p248 = scmp.eq.s32.totalorder %s19, 0
    %p249 = por %p247, %p248
    %p250 = scmp.ne.s32.totalorder %s242, %s244
    %p251 = scmp.eq.s32.totalorder %s24, 3
    %p252 = por %p250, %p251
    %p253 = scmp.ne.s32.totalorder %s244, %s245
    %p254 = scmp.eq.s32.totalorder %s24, 0
    %p255 = por %p253, %p254
    %p256 = scmp.ne.s32.totalorder %s244, %s245
    %p257 = scmp.eq.s32.totalorder %s25, 3
    %p258 = por %p256, %p257
    %p260 = scmp.ne.s32.totalorder %s245, %s259
    %p261 = scmp.eq.s32.totalorder %s25, 0
    %p262 = por %p260, %p261
    %s264 = sadd.s32 %s263, 1
    %p267 = scmp.eq.s32.totalorder %s19, 3
    %p268 = scmp.ne.s32.totalorder %s263, %s265
    %p269 = scmp.eq.s32.totalorder %s19, 0
    %p270 = por %p268, %p269
    %p271 = scmp.ne.s32.totalorder %s263, %s265
    %p272 = scmp.eq.s32.totalorder %s24, 3
    %p273 = por %p271, %p272
    %p274 = scmp.ne.s32.totalorder %s265, %s266
    %p275 = scmp.eq.s32.totalorder %s24, 0
    %p276 = por %p274, %p275
    %p277 = scmp.ne.s32.totalorder %s265, %s266
    %p278 = scmp.eq.s32.totalorder %s25, 3
    %p279 = por %p277, %p278
    %p281 = scmp.ne.s32.totalorder %s266, %s280
    %p282 = scmp.eq.s32.totalorder %s25, 0
    %p283 = por %p281, %p282
    %s285 = sadd.s32 %s284, 1
    %p288 = scmp.eq.s32.totalorder %s19, 3
    %p289 = scmp.ne.s32.totalorder %s284, %s286
    %p290 = scmp.eq.s32.totalorder %s19, 0
    %p291 = por %p289, %p290
    %p292 = scmp.ne.s32.totalorder %s284, %s286
    %p293 = scmp.eq.s32.totalorder %s24, 3
    %p294 = por %p292, %p293
    %p295 = scmp.ne.s32.totalorder %s286, %s287
    %p296 = scmp.eq.s32.totalorder %s24, 0
    %p297 = por %p295, %p296
    %p298 = scmp.ne.s32.totalorder %s286, %s287
    %p299 = scmp.eq.s32.totalorder %s25, 3
    %p300 = por %p298, %p299
    %p302 = scmp.ne.s32.totalorder %s287, %s301
    %p303 = scmp.eq.s32.totalorder %s25, 0
    %p304 = por %p302, %p303
    %s305 = ssub.s32 %s19, %s26
    %p306 = scmp.eq.s32.totalorder %s305, 0
    %s308 = sadd.s32 %s307, 1
    %s309 = scalar_select %p306, %s307, %s308
    %p312 = pneg %p306
    %p313 = scmp.eq.s32.totalorder %s19, 3
    %p314 = por %p312, %p313
    %p315 = scmp.ne.s32.totalorder %s307, %s310
    %p316 = scmp.eq.s32.totalorder %s19, 0
    %p317 = por %p315, %p316
    %p318 = scmp.ne.s32.totalorder %s307, %s310
    %p319 = scmp.eq.s32.totalorder %s24, 3
    %p320 = por %p318, %p319
    %p321 = scmp.ne.s32.totalorder %s310, %s311
    %p322 = scmp.eq.s32.totalorder %s24, 0
    %p323 = por %p321, %p322
    %p324 = scmp.ne.s32.totalorder %s310, %s311
    %p325 = scmp.eq.s32.totalorder %s25, 3
    %p326 = por %p324, %p325
    %p328 = scmp.ne.s32.totalorder %s311, %s327
    %p329 = scmp.eq.s32.totalorder %s25, 0
    %p330 = por %p328, %p329
    %p331 = scmp.le.s32.totalorder 1, %s19
    %p332 = scmp.lt.s32.totalorder %s19, 5
    %p333 = pnand %p331, %p332
    %p334 = pneg %p333
    // Predicated region
    $region9: #{spatial_first_transformer_forward.14} parent=5 // pred_check
      _
    $region10: #{spatial_first_transformer_forward.14} parent=5 // pred_check_branch
      %336 = sbr.rel (%p333) target = $region12
    $region11: #{spatial_first_transformer_forward.14} parent=5 // pred_region
      %s337 = ssub.s32 %s19, 1
      // Predicated region
      $region13: #{spatial_first_transformer_forward.14} parent=11 // pred_check
        %p338 = pneg %p66
      $region14: #{spatial_first_transformer_forward.14} parent=11 // pred_check_branch
        %340 = sbr.rel (%p338) target = $region16
      $region15: #{spatial_first_transformer_forward.14} parent=11 // pred_region
        _
      $region16: #{spatial_first_transformer_forward.14} parent=11 // pred_fallthru
        _
      // Predicated region
      $region17: #{spatial_first_transformer_forward.14} parent=11 // pred_check
        %p341 = pneg %p87
      $region18: #{spatial_first_transformer_forward.14} parent=11 // pred_check_branch
        %343 = sbr.rel (%p341) target = $region20
      $region19: #{spatial_first_transformer_forward.14} parent=11 // pred_region
        _
      $region20: #{spatial_first_transformer_forward.14} parent=11 // pred_fallthru
        _
      // Predicated region
      $region21: #{spatial_first_transformer_forward.14} parent=11 // pred_check
        %p344 = pneg %p108
      $region22: #{spatial_first_transformer_forward.14} parent=11 // pred_check_branch
        %346 = sbr.rel (%p344) target = $region24
      $region23: #{spatial_first_transformer_forward.14} parent=11 // pred_region
        _
      $region24: #{spatial_first_transformer_forward.14} parent=11 // pred_fallthru
        _
      // Predicated region
      $region25: #{spatial_first_transformer_forward.14} parent=11 // pred_check
        %p347 = pneg %p129
      $region26: #{spatial_first_transformer_forward.14} parent=11 // pred_check_branch
        %349 = sbr.rel (%p347) target = $region28
      $region27: #{spatial_first_transformer_forward.14} parent=11 // pred_region
        _
      $region28: #{spatial_first_transformer_forward.14} parent=11 // pred_fallthru
        _
      // Predicated region
      $region29: #{spatial_first_transformer_forward.14} parent=11 // pred_check
        %p350 = pneg %p150
      $region30: #{spatial_first_transformer_forward.14} parent=11 // pred_check_branch
        %352 = sbr.rel (%p350) target = $region32
      $region31: #{spatial_first_transformer_forward.14} parent=11 // pred_region
        _
      $region32: #{spatial_first_transformer_forward.14} parent=11 // pred_fallthru
        _
      // Predicated region
      $region33: #{spatial_first_transformer_forward.14} parent=11 // pred_check
        %p353 = pneg %p171
      $region34: #{spatial_first_transformer_forward.14} parent=11 // pred_check_branch
        %355 = sbr.rel (%p353) target = $region36
      $region35: #{spatial_first_transformer_forward.14} parent=11 // pred_region
        _
      $region36: #{spatial_first_transformer_forward.14} parent=11 // pred_fallthru
        _
      // Predicated region
      $region37: #{spatial_first_transformer_forward.14} parent=11 // pred_check
        %p356 = pneg %p192
      $region38: #{spatial_first_transformer_forward.14} parent=11 // pred_check_branch
        %358 = sbr.rel (%p356) target = $region40
      $region39: #{spatial_first_transformer_forward.14} parent=11 // pred_region
        _
      $region40: #{spatial_first_transformer_forward.14} parent=11 // pred_fallthru
        _
      // Predicated region
      $region41: #{spatial_first_transformer_forward.14} parent=11 // pred_check
        %p359 = pneg %p213
      $region42: #{spatial_first_transformer_forward.14} parent=11 // pred_check_branch
        %361 = sbr.rel (%p359) target = $region44
      $region43: #{spatial_first_transformer_forward.14} parent=11 // pred_region
        _
      $region44: #{spatial_first_transformer_forward.14} parent=11 // pred_fallthru
        _
      // Predicated region
      $region45: #{spatial_first_transformer_forward.14} parent=11 // pred_check
        %p362 = pneg %p234
      $region46: #{spatial_first_transformer_forward.14} parent=11 // pred_check_branch
        %364 = sbr.rel (%p362) target = $region48
      $region47: #{spatial_first_transformer_forward.14} parent=11 // pred_region
        _
      $region48: #{spatial_first_transformer_forward.14} parent=11 // pred_fallthru
        _
      // Predicated region
      $region49: #{spatial_first_transformer_forward.14} parent=11 // pred_check
        %p365 = pneg %p255
      $region50: #{spatial_first_transformer_forward.14} parent=11 // pred_check_branch
        %367 = sbr.rel (%p365) target = $region52
      $region51: #{spatial_first_transformer_forward.14} parent=11 // pred_region
        _
      $region52: #{spatial_first_transformer_forward.14} parent=11 // pred_fallthru
        _
      // Predicated region
      $region53: #{spatial_first_transformer_forward.14} parent=11 // pred_check
        %p368 = pneg %p276
      $region54: #{spatial_first_transformer_forward.14} parent=11 // pred_check_branch
        %370 = sbr.rel (%p368) target = $region56
      $region55: #{spatial_first_transformer_forward.14} parent=11 // pred_region
        _
      $region56: #{spatial_first_transformer_forward.14} parent=11 // pred_fallthru
        _
      // Predicated region
      $region57: #{spatial_first_transformer_forward.14} parent=11 // pred_check
        %p371 = pneg %p297
      $region58: #{spatial_first_transformer_forward.14} parent=11 // pred_check_branch
        %373 = sbr.rel (%p371) target = $region60
      $region59: #{spatial_first_transformer_forward.14} parent=11 // pred_region
        _
      $region60: #{spatial_first_transformer_forward.14} parent=11 // pred_fallthru
        _
    $region12: #{spatial_first_transformer_forward.14} parent=5 // pred_fallthru
      _
    %p374 = scmp.lt.s32.totalorder %s19, 4
    // Predicated region
    $region61: #{spatial_first_transformer_forward.14} parent=5 // pred_check
      %p375 = pneg %p374
    $region62: #{spatial_first_transformer_forward.14} parent=5 // pred_check_branch
      %377 = sbr.rel (%p375) target = $region64
    $region63: #{spatial_first_transformer_forward.14} parent=5 // pred_region
      // Predicated region
      $region65: #{spatial_first_transformer_forward.14} parent=63 // pred_check
        %p378 = pneg %p39
      $region66: #{spatial_first_transformer_forward.14} parent=63 // pred_check_branch
        %380 = sbr.rel (%p378) target = $region68
      $region67: #{spatial_first_transformer_forward.14} parent=63 // pred_region
        %s381 = smul.u32 4, %s19
        %p382 = scmp.lt.s32.totalorder %s381, 15
        %s383 = scalar_select %p382, %s381, 15
        %s384 = smul.addr %s383, 4
        %s385 = scalar_lea.vmem %s0, %s384
        %s386 = smul.u32 4, %s19
      $region68: #{spatial_first_transformer_forward.14} parent=63 // pred_fallthru
        _
    $region64: #{spatial_first_transformer_forward.14} parent=5 // pred_fallthru
      _
    %p387 = scmp.le.s32.totalorder 1, %s19
    %p388 = scmp.lt.s32.totalorder %s19, 5
    %p389 = pnand %p387, %p388
    %p390 = pneg %p389
    // Predicated region
    $region69: #{spatial_first_transformer_forward.14} parent=5 // pred_check
      _
    $region70: #{spatial_first_transformer_forward.14} parent=5 // pred_check_branch
      %392 = sbr.rel (%p389) target = $region72
    $region71: #{spatial_first_transformer_forward.14} parent=5 // pred_region
      %s393 = ssub.s32 %s19, 1
      %s394 = smul.u32 4, %s24
      %p395 = scmp.lt.s32.totalorder %s394, 15
      %s396 = scalar_select %p395, %s394, 15
      %s397 = smul.addr %s396, 4
      %s398 = scalar_lea.vmem %s0, %s397
      %p399 = pneg %p45
      %p400 = pneg %p42
      %p401 = pneg %p66
      %p402 = pneg %p63
      %p403 = pneg %p87
      %p404 = pneg %p84
      %p405 = pneg %p108
      %p406 = pneg %p105
      %p407 = pneg %p129
      %p408 = pneg %p126
      %p409 = pneg %p150
      %p410 = pneg %p147
      %p411 = pneg %p171
      %p412 = pneg %p168
      %p413 = pneg %p192
      %p414 = pneg %p189
      %p415 = pneg %p213
      %p416 = pneg %p210
      %p417 = pneg %p234
      %p418 = pneg %p231
      %p419 = pneg %p255
      %p420 = pneg %p252
      %p421 = pneg %p276
      %p422 = pneg %p273
      %p423 = pneg %p297
      %p424 = pneg %p294
      %p425 = pneg %p323
      %p426 = pneg %p320
      %s427 = smul.u32 4, %s24
      %p428 = scmp.lt.s32.totalorder %s427, 15
      %s429 = scalar_select %p428, %s427, 15
      %s430 = smul.addr %s429, 4
      %s431 = scalar_lea.vmem %s13, %s430
      %s432 = smul.u32 4, %s24
      %p433 = scmp.lt.s32.totalorder %s432, 15
      %s434 = scalar_select %p433, %s432, 15
      %s435 = smul.addr %s434, 4
      %s436 = scalar_lea.vmem %s0, %s435
      %s437 = smul.u32 4, %s24
      %s438 = smul.u32 4, %s24
      %p439 = scmp.lt.s32.totalorder %s438, 15
      %s440 = scalar_select %p439, %s438, 15
      %s441 = smul.addr %s440, 4
      %s442 = scalar_lea.vmem %s13, %s441
      %s443 = smul.u32 4, %s24
      %v445 = vld [vmem:[%s436] sm:$0xf]
      %v446 = vld [vmem:[%s436 + $0x4] sm:$0xf]
      %v447 = vld [vmem:[%s436 + $0x8] sm:$0xf]
      %v448 = vld [vmem:[%s436 + $0xc] sm:$0xf]
      %v449 = vunpack.c.l.bf16 %v445
      %v450 = vunpack.c.l.bf16 %v446
      %v451 = vunpack.c.l.bf16 %v447
      %v452 = vunpack.c.l.bf16 %v448
      %v453 = vlaneseq
      %v454 = vshrl.u32 %v453, 7
      %v455 = vadd.s32 %v454, 8
      %v456 = vadd.s32 %v454, 16
      %v457 = vadd.s32 %v454, 24
      %v458 = vcvt.s32.f32 %v454
      %v459 = vcvt.s32.f32 %v455
      %v460 = vcvt.s32.f32 %v456
      %v461 = vcvt.s32.f32 %v457
      %v462 = vlaneseq
      %v463 = vand.u32 %v462, 127
      %v464 = vcvt.s32.f32 %v463
      %v465 = vadd.f32 %v458, 0.5
      %v466 = vadd.f32 %v459, 0.5
      %v467 = vadd.f32 %v460, 0.5
      %v468 = vadd.f32 %v461, 0.5
      %v469 = vmul.f32 %v465, 0.25
      %v470 = vmul.f32 %v466, 0.25
      %v471 = vmul.f32 %v467, 0.25
      %v472 = vmul.f32 %v468, 0.25
      %v473 = vfloor.f32 %v469
      %v474 = vfloor.f32 %v470
      %v475 = vfloor.f32 %v471
      %v476 = vfloor.f32 %v472
      %v477 = vadd.f32 %v464, 0.5
      %v478 = vmul.f32 %v477, 0.25
      %v479 = vfloor.f32 %v478
      %vm480 = vcmp.eq.f32.partialorder %v473, %v479
      %vm481 = vcmp.eq.f32.partialorder %v474, %v479
      %vm482 = vcmp.eq.f32.partialorder %v475, %v479
      %vm483 = vcmp.eq.f32.partialorder %v476, %v479
      %v484 = vsel %vm480, 0.0, -1e+30
      %v485 = vsel %vm481, 0.0, -1e+30
      %v486 = vsel %vm482, 0.0, -1e+30
      %v487 = vsel %vm483, 0.0, -1e+30
      %v488 = vld [vmem:[%s1] sm:$0xf]
      %v489 = vld [vmem:[%s1 + $0x4] sm:$0xf]
      %v490 = vld [vmem:[%s1 + $0x8] sm:$0xf]
      %v491 = vld [vmem:[%s1 + $0xc] sm:$0xf]
      %v492 = vld [vmem:[%s2] sm:$0x1]
      %v494 = vlaneseq
      %v495 = vshrl.u32 %v494, 7
      %v496 = vsub.s32 0, %v495
      %v497 = vrot.slane %v492, %v496
      %v503 = vunpack.c.l.b16 %v445
      %v504 = vunpack.c.l.b16 %v446
      %v505 = vunpack.c.l.b16 %v447
      %v506 = vunpack.c.l.b16 %v448
      %v507 = vpack.c.b16 %v504, %v503
      %v508 = vpack.c.b16 %v506, %v505
      %v513 = vunpack.c.l.b16 %v488
      %v514 = vunpack.c.l.b16 %v489
      %v515 = vunpack.c.l.b16 %v490
      %v516 = vunpack.c.l.b16 %v491
      %v517 = vpack.c.b16 %v514, %v513
      %v518 = vpack.c.b16 %v516, %v515
      %vm521 = vcmask 261120
      %v523 = vsel %vm521, %v507, 0
      %v526 = vsel %vm521, %v508, 0
      %528 = vmatprep.subr.bf16.mxu0 0
      %529 = vmatpush1.bf16.msra.mxu0 %v517
      %530 = vmatprep.subr.bf16.mxu0 0
      %531 = vmatpush1.bf16.msra.mxu0 %v518
      %532 = vmatprep.subr.bf16.mxu0 0
      %533 = vmatpush1.bf16.msra.mxu0 0
      %534 = vmatprep.subr.bf16.mxu0 0
      %535 = vmatpush1.bf16.msra.mxu0 0
      %536 = vmatprep.subr.bf16.mxu0 0
      %537 = vmatpush1.bf16.msra.mxu0 0
      %538 = vmatprep.subr.bf16.mxu0 0
      %539 = vmatpush1.bf16.msra.mxu0 0
      %540 = vmatprep.subr.bf16.mxu0 0
      %541 = vmatpush1.bf16.msra.mxu0 0
      %542 = vmatprep.subr.bf16.mxu0 0
      %543 = vmatpush1.bf16.msra.mxu0 0
      %544 = vmatprep.subr.bf16.mxu0 0
      %545 = vmatpush1.bf16.msra.mxu0 0
      %546 = vmatprep.subr.bf16.mxu0 0
      %547 = vmatpush1.bf16.msra.mxu0 0
      %548 = vmatprep.subr.bf16.mxu0 0
      %549 = vmatpush1.bf16.msra.mxu0 0
      %550 = vmatprep.subr.bf16.mxu0 0
      %551 = vmatpush1.bf16.msra.mxu0 0
      %552 = vmatprep.subr.bf16.mxu0 0
      %553 = vmatpush1.bf16.msra.mxu0 0
      %554 = vmatprep.subr.bf16.mxu0 0
      %555 = vmatpush1.bf16.msra.mxu0 0
      %556 = vmatprep.subr.bf16.mxu0 0
      %557 = vmatpush1.bf16.msra.mxu0 0
      %558 = vmatprep.subr.bf16.mxu0 0
      %559 = vmatpush1.bf16.msra.mxu0 0
      %560 = vmatprep.mubr.bf16.mxu0 0
      %561 = vmatmul.mubr.bf16.gmra.mrb[0].mxu0 %v523
      %v562 = vpop.f32.mrb[0].mxu0
      %v563 = vadd.f32 %v497, %v562
      %v564 = vpop.f32.mrb[0].mxu0
      %v565 = vpop.f32.mrb[0].mxu0
      %v566 = vadd.f32 %v497, %v565
      %v567 = vpop.f32.mrb[0].mxu0
      %568 = vmatprep.mubr.bf16.mxu0 0
      %569 = vmatmul.mubr.bf16.gmra.mrb[0].mxu0 %v526
      %v570 = vpop.f32.mrb[0].mxu0
      %v571 = vadd.f32 %v497, %v570
      %v572 = vpop.f32.mrb[0].mxu0
      %v573 = vpop.f32.mrb[0].mxu0
      %v574 = vadd.f32 %v497, %v573
      %v575 = vpop.f32.mrb[0].mxu0
      %576 = vdwg.mxu0
      %v577 = vpack.c.bf16 %v566, %v563
      %v578 = vpack.c.bf16 %v574, %v571
      %581 = vrot.lane.b32.xlu0 %v577, 96
      %v582 = vpop.permute.xlu0 %581
      %583 = vrot.lane.b32.xlu0 %v578, 96
      %v584 = vpop.permute.xlu0 %583
      %vm585 = vcmask 64512
      %v587 = vsel %vm585, %v577, 0
      %v590 = vsel %vm585, %v578, 0
      %v593 = vsel %vm585, %v582, 0
      %v596 = vsel %vm585, %v584, 0
      %598 = vmatprep.subr.bf16.mxu0 0
      %599 = vmatpush1.bf16.xpose.msra.mxu0 %v593
      %600 = vmatprep.subr.bf16.mxu0 0
      %601 = vmatpush1.bf16.xpose.msra.mxu0 %v596
      %602 = vmatprep.subr.bf16.mxu0 0
      %603 = vmatpush1.bf16.xpose.msra.mxu0 0
      %604 = vmatprep.subr.bf16.mxu0 0
      %605 = vmatpush1.bf16.xpose.msra.mxu0 0
      %606 = vmatprep.subr.bf16.mxu0 0
      %607 = vmatpush1.bf16.xpose.msra.mxu0 0
      %608 = vmatprep.subr.bf16.mxu0 0
      %609 = vmatpush1.bf16.xpose.msra.mxu0 0
      %610 = vmatprep.subr.bf16.mxu0 0
      %611 = vmatpush1.bf16.xpose.msra.mxu0 0
      %612 = vmatprep.subr.bf16.mxu0 0
      %613 = vmatpush1.bf16.xpose.msra.mxu0 0
      %614 = vmatprep.subr.bf16.mxu0 0
      %615 = vmatpush1.bf16.xpose.msra.mxu0 0
      %616 = vmatprep.subr.bf16.mxu0 0
      %617 = vmatpush1.bf16.xpose.msra.mxu0 0
      %618 = vmatprep.subr.bf16.mxu0 0
      %619 = vmatpush1.bf16.xpose.msra.mxu0 0
      %620 = vmatprep.subr.bf16.mxu0 0
      %621 = vmatpush1.bf16.xpose.msra.mxu0 0
      %622 = vmatprep.subr.bf16.mxu0 0
      %623 = vmatpush1.bf16.xpose.msra.mxu0 0
      %624 = vmatprep.subr.bf16.mxu0 0
      %625 = vmatpush1.bf16.xpose.msra.mxu0 0
      %626 = vmatprep.subr.bf16.mxu0 0
      %627 = vmatpush1.bf16.xpose.msra.mxu0 0
      %628 = vmatprep.subr.bf16.mxu0 0
      %629 = vmatpush1.bf16.xpose.msra.mxu0 0
      %630 = vmatprep.mubr.bf16.mxu0 0
      %631 = vmatmul.mubr.bf16.gmra.mrb[0].mxu0 %v587
      %v632 = vpop.f32.mrb[0].mxu0
      %v633 = vadd.f32 0.0, %v632
      %v634 = vpop.f32.mrb[0].mxu0
      %v635 = vpop.f32.mrb[0].mxu0
      %v636 = vadd.f32 0.0, %v635
      %v637 = vpop.f32.mrb[0].mxu0
      %638 = vmatprep.mubr.bf16.mxu0 0
      %639 = vmatmul.mubr.bf16.gmra.mrb[0].mxu0 %v590
      %v640 = vpop.f32.mrb[0].mxu0
      %v641 = vadd.f32 0.0, %v640
      %v642 = vpop.f32.mrb[0].mxu0
      %v643 = vpop.f32.mrb[0].mxu0
      %v644 = vadd.f32 0.0, %v643
      %v645 = vpop.f32.mrb[0].mxu0
      %646 = vdwg.mxu0
      %v647 = vmul.f32 %v633, 0.35355338
      %v648 = vmul.f32 %v636, 0.35355338
      %v649 = vmul.f32 %v641, 0.35355338
      %v650 = vmul.f32 %v644, 0.35355338
      %v651 = vadd.f32 %v647, %v484
      %v652 = vadd.f32 %v648, %v485
      %v653 = vadd.f32 %v649, %v486
      %v654 = vadd.f32 %v650, %v487
      %v655 = vsel %vm521, %v651, -inf
      %656 = vmax.xlane.f32.xlu0 %v655
      %v657 = vpop.xlane.xlu0 %656
      %v658 = vsel %vm521, %v652, -inf
      %659 = vmax.xlane.f32.xlu0 %v658
      %v660 = vpop.xlane.xlu0 %659
      %v661 = vsel %vm521, %v653, -inf
      %662 = vmax.xlane.f32.xlu0 %v661
      %v663 = vpop.xlane.xlu0 %662
      %v664 = vsel %vm521, %v654, -inf
      %665 = vmax.xlane.f32.xlu0 %v664
      %v666 = vpop.xlane.xlu0 %665
      %v667 = vsub.f32 %v651, %v657
      %v668 = vsub.f32 %v652, %v660
      %v669 = vsub.f32 %v653, %v663
      %v670 = vsub.f32 %v654, %v666
      %v671 = vmul.f32 %v667, 1.442695
      %v672 = vpow.pop %v671
      %v673 = vmul.f32 %v668, 1.442695
      %v674 = vpow.pop %v673
      %v675 = vmul.f32 %v669, 1.442695
      %v676 = vpow.pop %v675
      %v677 = vmul.f32 %v670, 1.442695
      %v678 = vpow.pop %v677
      %v679 = vsel %vm521, %v672, 0.0
      %680 = vadd.xlane.f32.xlu0 %v679
      %v681 = vpop.xlane.xlu0 %680
      %v682 = vsel %vm521, %v674, 0.0
      %683 = vadd.xlane.f32.xlu0 %v682
      %v684 = vpop.xlane.xlu0 %683
      %v685 = vsel %vm521, %v676, 0.0
      %686 = vadd.xlane.f32.xlu0 %v685
      %v687 = vpop.xlane.xlu0 %686
      %v688 = vsel %vm521, %v678, 0.0
      %689 = vadd.xlane.f32.xlu0 %v688
      %v690 = vpop.xlane.xlu0 %689
      %v691 = vrcp.pop %v681
      %v692 = vrcp.pop %v684
      %v693 = vrcp.pop %v687
      %v694 = vrcp.pop %v690
      %v695 = vmul.f32 %v672, %v691
      %v696 = vmul.f32 %v674, %v692
      %v697 = vmul.f32 %v676, %v693
      %v698 = vmul.f32 %v678, %v694
      %v699 = vpack.c.bf16 %v696, %v695
      %v700 = vpack.c.bf16 %v698, %v697
      %701 = vrot.lane.b32.xlu0 %v577, 64
      %v702 = vpop.permute.xlu0 %701
      %703 = vrot.lane.b32.xlu0 %v578, 64
      %v704 = vpop.permute.xlu0 %703
      %v708 = vsel %vm521, %v699, 0
      %v711 = vsel %vm521, %v700, 0
      %713 = vmatprep.subr.bf16.mxu0 0
      %714 = vmatpush1.bf16.msra.mxu0 %v702
      %715 = vmatprep.subr.bf16.mxu0 0
      %716 = vmatpush1.bf16.msra.mxu0 %v704
      %717 = vmatprep.subr.bf16.mxu0 0
      %718 = vmatpush1.bf16.msra.mxu0 0
      %719 = vmatprep.subr.bf16.mxu0 0
      %720 = vmatpush1.bf16.msra.mxu0 0
      %721 = vmatprep.subr.bf16.mxu0 0
      %722 = vmatpush1.bf16.msra.mxu0 0
      %723 = vmatprep.subr.bf16.mxu0 0
      %724 = vmatpush1.bf16.msra.mxu0 0
      %725 = vmatprep.subr.bf16.mxu0 0
      %726 = vmatpush1.bf16.msra.mxu0 0
      %727 = vmatprep.subr.bf16.mxu0 0
      %728 = vmatpush1.bf16.msra.mxu0 0
      %729 = vmatprep.subr.bf16.mxu0 0
      %730 = vmatpush1.bf16.msra.mxu0 0
      %731 = vmatprep.subr.bf16.mxu0 0
      %732 = vmatpush1.bf16.msra.mxu0 0
      %733 = vmatprep.subr.bf16.mxu0 0
      %734 = vmatpush1.bf16.msra.mxu0 0
      %735 = vmatprep.subr.bf16.mxu0 0
      %736 = vmatpush1.bf16.msra.mxu0 0
      %737 = vmatprep.subr.bf16.mxu0 0
      %738 = vmatpush1.bf16.msra.mxu0 0
      %739 = vmatprep.subr.bf16.mxu0 0
      %740 = vmatpush1.bf16.msra.mxu0 0
      %741 = vmatprep.subr.bf16.mxu0 0
      %742 = vmatpush1.bf16.msra.mxu0 0
      %743 = vmatprep.subr.bf16.mxu0 0
      %744 = vmatpush1.bf16.msra.mxu0 0
      %745 = vmatprep.mubr.bf16.mxu0 0
      %746 = vmatmul.mubr.bf16.gmra.mrb[0].mxu0 %v708
      %v747 = vpop.f32.mrb[0].mxu0
      %v748 = vadd.f32 0.0, %v747
      %v749 = vpop.f32.mrb[0].mxu0
      %v750 = vpop.f32.mrb[0].mxu0
      %v751 = vadd.f32 0.0, %v750
      %v752 = vpop.f32.mrb[0].mxu0
      %753 = vmatprep.mubr.bf16.mxu0 0
      %754 = vmatmul.mubr.bf16.gmra.mrb[0].mxu0 %v711
      %v755 = vpop.f32.mrb[0].mxu0
      %v756 = vadd.f32 0.0, %v755
      %v757 = vpop.f32.mrb[0].mxu0
      %v758 = vpop.f32.mrb[0].mxu0
      %v759 = vadd.f32 0.0, %v758
      %v760 = vpop.f32.mrb[0].mxu0
      %761 = vdwg.mxu0
      %762 = vrot.lane.b32.xlu0 %v577, 120
      %v763 = vpop.permute.xlu0 %762
      %764 = vrot.lane.b32.xlu0 %v578, 120
      %v765 = vpop.permute.xlu0 %764
      %766 = vrot.lane.b32.xlu0 %v577, 88
      %v767 = vpop.permute.xlu0 %766
      %768 = vrot.lane.b32.xlu0 %v578, 88
      %v769 = vpop.permute.xlu0 %768
      %v771 = vsel %vm585, %v763, 0
      %v774 = vsel %vm585, %v765, 0
      %v777 = vsel %vm585, %v767, 0
      %v780 = vsel %vm585, %v769, 0
      %782 = vmatprep.subr.bf16.mxu0 0
      %783 = vmatpush1.bf16.xpose.msra.mxu0 %v777
      %784 = vmatprep.subr.bf16.mxu0 0
      %785 = vmatpush1.bf16.xpose.msra.mxu0 %v780
      %786 = vmatprep.subr.bf16.mxu0 0
      %787 = vmatpush1.bf16.xpose.msra.mxu0 0
      %788 = vmatprep.subr.bf16.mxu0 0
      %789 = vmatpush1.bf16.xpose.msra.mxu0 0
      %790 = vmatprep.subr.bf16.mxu0 0
      %791 = vmatpush1.bf16.xpose.msra.mxu0 0
      %792 = vmatprep.subr.bf16.mxu0 0
      %793 = vmatpush1.bf16.xpose.msra.mxu0 0
      %794 = vmatprep.subr.bf16.mxu0 0
      %795 = vmatpush1.bf16.xpose.msra.mxu0 0
      %796 = vmatprep.subr.bf16.mxu0 0
      %797 = vmatpush1.bf16.xpose.msra.mxu0 0
      %798 = vmatprep.subr.bf16.mxu0 0
      %799 = vmatpush1.bf16.xpose.msra.mxu0 0
      %800 = vmatprep.subr.bf16.mxu0 0
      %801 = vmatpush1.bf16.xpose.msra.mxu0 0
      %802 = vmatprep.subr.bf16.mxu0 0
      %803 = vmatpush1.bf16.xpose.msra.mxu0 0
      %804 = vmatprep.subr.bf16.mxu0 0
      %805 = vmatpush1.bf16.xpose.msra.mxu0 0
      %806 = vmatprep.subr.bf16.mxu0 0
      %807 = vmatpush1.bf16.xpose.msra.mxu0 0
      %808 = vmatprep.subr.bf16.mxu0 0
      %809 = vmatpush1.bf16.xpose.msra.mxu0 0
      %810 = vmatprep.subr.bf16.mxu0 0
      %811 = vmatpush1.bf16.xpose.msra.mxu0 0
      %812 = vmatprep.subr.bf16.mxu0 0
      %813 = vmatpush1.bf16.xpose.msra.mxu0 0
      %814 = vmatprep.mubr.bf16.mxu0 0
      %815 = vmatmul.mubr.bf16.gmra.mrb[0].mxu0 %v771
      %v816 = vpop.f32.mrb[0].mxu0
      %v817 = vadd.f32 0.0, %v816
      %v818 = vpop.f32.mrb[0].mxu0
      %v819 = vpop.f32.mrb[0].mxu0
      %v820 = vadd.f32 0.0, %v819
      %v821 = vpop.f32.mrb[0].mxu0
      %822 = vmatprep.mubr.bf16.mxu0 0
      %823 = vmatmul.mubr.bf16.gmra.mrb[0].mxu0 %v774
      %v824 = vpop.f32.mrb[0].mxu0
      %v825 = vadd.f32 0.0, %v824
      %v826 = vpop.f32.mrb[0].mxu0
      %v827 = vpop.f32.mrb[0].mxu0
      %v828 = vadd.f32 0.0, %v827
      %v829 = vpop.f32.mrb[0].mxu0
      %830 = vdwg.mxu0
      %v831 = vmul.f32 %v817, 0.35355338
      %v832 = vmul.f32 %v820, 0.35355338
      %v833 = vmul.f32 %v825, 0.35355338
      %v834 = vmul.f32 %v828, 0.35355338
      %v835 = vadd.f32 %v831, %v484
      %v836 = vadd.f32 %v832, %v485
      %v837 = vadd.f32 %v833, %v486
      %v838 = vadd.f32 %v834, %v487
      %v839 = vsel %vm521, %v835, -inf
      %840 = vmax.xlane.f32.xlu0 %v839
      %v841 = vpop.xlane.xlu0 %840
      %v842 = vsel %vm521, %v836, -inf
      %843 = vmax.xlane.f32.xlu0 %v842
      %v844 = vpop.xlane.xlu0 %843
      %v845 = vsel %vm521, %v837, -inf
      %846 = vmax.xlane.f32.xlu0 %v845
      %v847 = vpop.xlane.xlu0 %846
      %v848 = vsel %vm521, %v838, -inf
      %849 = vmax.xlane.f32.xlu0 %v848
      %v850 = vpop.xlane.xlu0 %849
      %v851 = vsub.f32 %v835, %v841
      %v852 = vsub.f32 %v836, %v844
      %v853 = vsub.f32 %v837, %v847
      %v854 = vsub.f32 %v838, %v850
      %v855 = vmul.f32 %v851, 1.442695
      %v856 = vpow.pop %v855
      %v857 = vmul.f32 %v852, 1.442695
      %v858 = vpow.pop %v857
      %v859 = vmul.f32 %v853, 1.442695
      %v860 = vpow.pop %v859
      %v861 = vmul.f32 %v854, 1.442695
      %v862 = vpow.pop %v861
      %v863 = vsel %vm521, %v856, 0.0
      %864 = vadd.xlane.f32.xlu0 %v863
      %v865 = vpop.xlane.xlu0 %864
      %v866 = vsel %vm521, %v858, 0.0
      %867 = vadd.xlane.f32.xlu0 %v866
      %v868 = vpop.xlane.xlu0 %867
      %v869 = vsel %vm521, %v860, 0.0
      %870 = vadd.xlane.f32.xlu0 %v869
      %v871 = vpop.xlane.xlu0 %870
      %v872 = vsel %vm521, %v862, 0.0
      %873 = vadd.xlane.f32.xlu0 %v872
      %v874 = vpop.xlane.xlu0 %873
      %v875 = vrcp.pop %v865
      %v876 = vrcp.pop %v868
      %v877 = vrcp.pop %v871
      %v878 = vrcp.pop %v874
      %v879 = vmul.f32 %v856, %v875
      %v880 = vmul.f32 %v858, %v876
      %v881 = vmul.f32 %v860, %v877
      %v882 = vmul.f32 %v862, %v878
      %v883 = vpack.c.bf16 %v880, %v879
      %v884 = vpack.c.bf16 %v882, %v881
      %885 = vrot.lane.b32.xlu0 %v577, 56
      %v886 = vpop.permute.xlu0 %885
      %887 = vrot.lane.b32.xlu0 %v578, 56
      %v888 = vpop.permute.xlu0 %887
      %v892 = vsel %vm521, %v883, 0
      %v895 = vsel %vm521, %v884, 0
      %897 = vmatprep.subr.bf16.mxu0 0
      %898 = vmatpush1.bf16.msra.mxu0 %v886
      %899 = vmatprep.subr.bf16.mxu0 0
      %900 = vmatpush1.bf16.msra.mxu0 %v888
      %901 = vmatprep.subr.bf16.mxu0 0
      %902 = vmatpush1.bf16.msra.mxu0 0
      %903 = vmatprep.subr.bf16.mxu0 0
      %904 = vmatpush1.bf16.msra.mxu0 0
      %905 = vmatprep.subr.bf16.mxu0 0
      %906 = vmatpush1.bf16.msra.mxu0 0
      %907 = vmatprep.subr.bf16.mxu0 0
      %908 = vmatpush1.bf16.msra.mxu0 0
      %909 = vmatprep.subr.bf16.mxu0 0
      %910 = vmatpush1.bf16.msra.mxu0 0
      %911 = vmatprep.subr.bf16.mxu0 0
      %912 = vmatpush1.bf16.msra.mxu0 0
      %913 = vmatprep.subr.bf16.mxu0 0
      %914 = vmatpush1.bf16.msra.mxu0 0
      %915 = vmatprep.subr.bf16.mxu0 0
      %916 = vmatpush1.bf16.msra.mxu0 0
      %917 = vmatprep.subr.bf16.mxu0 0
      %918 = vmatpush1.bf16.msra.mxu0 0
      %919 = vmatprep.subr.bf16.mxu0 0
      %920 = vmatpush1.bf16.msra.mxu0 0
      %921 = vmatprep.subr.bf16.mxu0 0
      %922 = vmatpush1.bf16.msra.mxu0 0
      %923 = vmatprep.subr.bf16.mxu0 0
      %924 = vmatpush1.bf16.msra.mxu0 0
      %925 = vmatprep.subr.bf16.mxu0 0
      %926 = vmatpush1.bf16.msra.mxu0 0
      %927 = vmatprep.subr.bf16.mxu0 0
      %928 = vmatpush1.bf16.msra.mxu0 0
      %929 = vmatprep.mubr.bf16.mxu0 0
      %930 = vmatmul.mubr.bf16.gmra.mrb[0].mxu0 %v892
      %v931 = vpop.f32.mrb[0].mxu0
      %v932 = vadd.f32 0.0, %v931
      %v933 = vpop.f32.mrb[0].mxu0
      %v934 = vpop.f32.mrb[0].mxu0
      %v935 = vadd.f32 0.0, %v934
      %v936 = vpop.f32.mrb[0].mxu0
      %937 = vmatprep.mubr.bf16.mxu0 0
      %938 = vmatmul.mubr.bf16.gmra.mrb[0].mxu0 %v895
      %v939 = vpop.f32.mrb[0].mxu0
      %v940 = vadd.f32 0.0, %v939
      %v941 = vpop.f32.mrb[0].mxu0
      %v942 = vpop.f32.mrb[0].mxu0
      %v943 = vadd.f32 0.0, %v942
      %v944 = vpop.f32.mrb[0].mxu0
      %945 = vdwg.mxu0
      %946 = vrot.lane.b32.xlu0 %v577, 112
      %v947 = vpop.permute.xlu0 %946
      %948 = vrot.lane.b32.xlu0 %v578, 112
      %v949 = vpop.permute.xlu0 %948
      %950 = vrot.lane.b32.xlu0 %v577, 80
      %v951 = vpop.permute.xlu0 %950
      %952 = vrot.lane.b32.xlu0 %v578, 80
      %v953 = vpop.permute.xlu0 %952
      %v955 = vsel %vm585, %v947, 0
      %v958 = vsel %vm585, %v949, 0
      %v961 = vsel %vm585, %v951, 0
      %v964 = vsel %vm585, %v953, 0
      %966 = vmatprep.subr.bf16.mxu0 0
      %967 = vmatpush1.bf16.xpose.msra.mxu0 %v961
      %968 = vmatprep.subr.bf16.mxu0 0
      %969 = vmatpush1.bf16.xpose.msra.mxu0 %v964
      %970 = vmatprep.subr.bf16.mxu0 0
      %971 = vmatpush1.bf16.xpose.msra.mxu0 0
      %972 = vmatprep.subr.bf16.mxu0 0
      %973 = vmatpush1.bf16.xpose.msra.mxu0 0
      %974 = vmatprep.subr.bf16.mxu0 0
      %975 = vmatpush1.bf16.xpose.msra.mxu0 0
      %976 = vmatprep.subr.bf16.mxu0 0
      %977 = vmatpush1.bf16.xpose.msra.mxu0 0
      %978 = vmatprep.subr.bf16.mxu0 0
      %979 = vmatpush1.bf16.xpose.msra.mxu0 0
      %980 = vmatprep.subr.bf16.mxu0 0
      %981 = vmatpush1.bf16.xpose.msra.mxu0 0
      %982 = vmatprep.subr.bf16.mxu0 0
      %983 = vmatpush1.bf16.xpose.msra.mxu0 0
      %984 = vmatprep.subr.bf16.mxu0 0
      %985 = vmatpush1.bf16.xpose.msra.mxu0 0
      %986 = vmatprep.subr.bf16.mxu0 0
      %987 = vmatpush1.bf16.xpose.msra.mxu0 0
      %988 = vmatprep.subr.bf16.mxu0 0
      %989 = vmatpush1.bf16.xpose.msra.mxu0 0
      %990 = vmatprep.subr.bf16.mxu0 0
      %991 = vmatpush1.bf16.xpose.msra.mxu0 0
      %992 = vmatprep.subr.bf16.mxu0 0
      %993 = vmatpush1.bf16.xpose.msra.mxu0 0
      %994 = vmatprep.subr.bf16.mxu0 0
      %995 = vmatpush1.bf16.xpose.msra.mxu0 0
      %996 = vmatprep.subr.bf16.mxu0 0
      %997 = vmatpush1.bf16.xpose.msra.mxu0 0
      %998 = vmatprep.mubr.bf16.mxu0 0
      %999 = vmatmul.mubr.bf16.gmra.mrb[0].mxu0 %v955
      %v1000 = vpop.f32.mrb[0].mxu0
      %v1001 = vadd.f32 0.0, %v1000
      %v1002 = vpop.f32.mrb[0].mxu0
      %v1003 = vpop.f32.mrb[0].mxu0
      %v1004 = vadd.f32 0.0, %v1003
      %v1005 = vpop.f32.mrb[0].mxu0
      %1006 = vmatprep.mubr.bf16.mxu0 0
      %1007 = vmatmul.mubr.bf16.gmra.mrb[0].mxu0 %v958
      %v1008 = vpop.f32.mrb[0].mxu0
      %v1009 = vadd.f32 0.0, %v1008
      %v1010 = vpop.f32.mrb[0].mxu0
      %v1011 = vpop.f32.mrb[0].mxu0
      %v1012 = vadd.f32 0.0, %v1011
      %v1013 = vpop.f32.mrb[0].mxu0
      %1014 = vdwg.mxu0
      %v1015 = vmul.f32 %v1001, 0.35355338
      %v1016 = vmul.f32 %v1004, 0.35355338
      %v1017 = vmul.f32 %v1009, 0.35355338
      %v1018 = vmul.f32 %v1012, 0.35355338
      %v1019 = vadd.f32 %v1015, %v484
      %v1020 = vadd.f32 %v1016, %v485
      %v1021 = vadd.f32 %v1017, %v486
      %v1022 = vadd.f32 %v1018, %v487
      %v1023 = vsel %vm521, %v1019, -inf
      %1024 = vmax.xlane.f32.xlu0 %v1023
      %v1025 = vpop.xlane.xlu0 %1024
      %v1026 = vsel %vm521, %v1020, -inf
      %1027 = vmax.xlane.f32.xlu0 %v1026
      %v1028 = vpop.xlane.xlu0 %1027
      %v1029 = vsel %vm521, %v1021, -inf
      %1030 = vmax.xlane.f32.xlu0 %v1029
      %v1031 = vpop.xlane.xlu0 %1030
      %v1032 = vsel %vm521, %v1022, -inf
      %1033 = vmax.xlane.f32.xlu0 %v1032
      %v1034 = vpop.xlane.xlu0 %1033
      %v1035 = vsub.f32 %v1019, %v1025
      %v1036 = vsub.f32 %v1020, %v1028
      %v1037 = vsub.f32 %v1021, %v1031
      %v1038 = vsub.f32 %v1022, %v1034
      %v1039 = vmul.f32 %v1035, 1.442695
      %v1040 = vpow.pop %v1039
      %v1041 = vmul.f32 %v1036, 1.442695
      %v1042 = vpow.pop %v1041
      %v1043 = vmul.f32 %v1037, 1.442695
      %v1044 = vpow.pop %v1043
      %v1045 = vmul.f32 %v1038, 1.442695
      %v1046 = vpow.pop %v1045
      %v1047 = vsel %vm521, %v1040, 0.0
      %1048 = vadd.xlane.f32.xlu0 %v1047
      %v1049 = vpop.xlane.xlu0 %1048
      %v1050 = vsel %vm521, %v1042, 0.0
      %1051 = vadd.xlane.f32.xlu0 %v1050
      %v1052 = vpop.xlane.xlu0 %1051
      %v1053 = vsel %vm521, %v1044, 0.0
      %1054 = vadd.xlane.f32.xlu0 %v1053
      %v1055 = vpop.xlane.xlu0 %1054
      %v1056 = vsel %vm521, %v1046, 0.0
      %1057 = vadd.xlane.f32.xlu0 %v1056
      %v1058 = vpop.xlane.xlu0 %1057
      %v1059 = vrcp.pop %v1049
      %v1060 = vrcp.pop %v1052
      %v1061 = vrcp.pop %v1055
      %v1062 = vrcp.pop %v1058
      %v1063 = vmul.f32 %v1040, %v1059
      %v1064 = vmul.f32 %v1042, %v1060
      %v1065 = vmul.f32 %v1044, %v1061
      %v1066 = vmul.f32 %v1046, %v1062
      %v1067 = vpack.c.bf16 %v1064, %v1063
      %v1068 = vpack.c.bf16 %v1066, %v1065
      %1069 = vrot.lane.b32.xlu0 %v577, 48
      %v1070 = vpop.permute.xlu0 %1069
      %1071 = vrot.lane.b32.xlu0 %v578, 48
      %v1072 = vpop.permute.xlu0 %1071
      %v1076 = vsel %vm521, %v1067, 0
      %v1079 = vsel %vm521, %v1068, 0
      %1081 = vmatprep.subr.bf16.mxu0 0
      %1082 = vmatpush1.bf16.msra.mxu0 %v1070
      %1083 = vmatprep.subr.bf16.mxu0 0
      %1084 = vmatpush1.bf16.msra.mxu0 %v1072
      %1085 = vmatprep.subr.bf16.mxu0 0
      %1086 = vmatpush1.bf16.msra.mxu0 0
      %1087 = vmatprep.subr.bf16.mxu0 0
      %1088 = vmatpush1.bf16.msra.mxu0 0
      %1089 = vmatprep.subr.bf16.mxu0 0
      %1090 = vmatpush1.bf16.msra.mxu0 0
      %1091 = vmatprep.subr.bf16.mxu0 0
      %1092 = vmatpush1.bf16.msra.mxu0 0
      %1093 = vmatprep.subr.bf16.mxu0 0
      %1094 = vmatpush1.bf16.msra.mxu0 0
      %1095 = vmatprep.subr.bf16.mxu0 0
      %1096 = vmatpush1.bf16.msra.mxu0 0
      %1097 = vmatprep.subr.bf16.mxu0 0
      %1098 = vmatpush1.bf16.msra.mxu0 0
      %1099 = vmatprep.subr.bf16.mxu0 0
      %1100 = vmatpush1.bf16.msra.mxu0 0
      %1101 = vmatprep.subr.bf16.mxu0 0
      %1102 = vmatpush1.bf16.msra.mxu0 0
      %1103 = vmatprep.subr.bf16.mxu0 0
      %1104 = vmatpush1.bf16.msra.mxu0 0
      %1105 = vmatprep.subr.bf16.mxu0 0
      %1106 = vmatpush1.bf16.msra.mxu0 0
      %1107 = vmatprep.subr.bf16.mxu0 0
      %1108 = vmatpush1.bf16.msra.mxu0 0
      %1109 = vmatprep.subr.bf16.mxu0 0
      %1110 = vmatpush1.bf16.msra.mxu0 0
      %1111 = vmatprep.subr.bf16.mxu0 0
      %1112 = vmatpush1.bf16.msra.mxu0 0
      %1113 = vmatprep.mubr.bf16.mxu0 0
      %1114 = vmatmul.mubr.bf16.gmra.mrb[0].mxu0 %v1076
      %v1115 = vpop.f32.mrb[0].mxu0
      %v1116 = vadd.f32 0.0, %v1115
      %v1117 = vpop.f32.mrb[0].mxu0
      %v1118 = vpop.f32.mrb[0].mxu0
      %v1119 = vadd.f32 0.0, %v1118
      %v1120 = vpop.f32.mrb[0].mxu0
      %1121 = vmatprep.mubr.bf16.mxu0 0
      %1122 = vmatmul.mubr.bf16.gmra.mrb[0].mxu0 %v1079
      %v1123 = vpop.f32.mrb[0].mxu0
      %v1124 = vadd.f32 0.0, %v1123
      %v1125 = vpop.f32.mrb[0].mxu0
      %v1126 = vpop.f32.mrb[0].mxu0
      %v1127 = vadd.f32 0.0, %v1126
      %v1128 = vpop.f32.mrb[0].mxu0
      %1129 = vdwg.mxu0
      %1130 = vrot.lane.b32.xlu0 %v577, 104
      %v1131 = vpop.permute.xlu0 %1130
      %1132 = vrot.lane.b32.xlu0 %v578, 104
      %v1133 = vpop.permute.xlu0 %1132
      %1134 = vrot.lane.b32.xlu0 %v577, 72
      %v1135 = vpop.permute.xlu0 %1134
      %1136 = vrot.lane.b32.xlu0 %v578, 72
      %v1137 = vpop.permute.xlu0 %1136
      %v1139 = vsel %vm585, %v1131, 0
      %v1142 = vsel %vm585, %v1133, 0
      %v1145 = vsel %vm585, %v1135, 0
      %v1148 = vsel %vm585, %v1137, 0
      %1150 = vmatprep.subr.bf16.mxu0 0
      %1151 = vmatpush1.bf16.xpose.msra.mxu0 %v1145
      %1152 = vmatprep.subr.bf16.mxu0 0
      %1153 = vmatpush1.bf16.xpose.msra.mxu0 %v1148
      %1154 = vmatprep.subr.bf16.mxu0 0
      %1155 = vmatpush1.bf16.xpose.msra.mxu0 0
      %1156 = vmatprep.subr.bf16.mxu0 0
      %1157 = vmatpush1.bf16.xpose.msra.mxu0 0
      %1158 = vmatprep.subr.bf16.mxu0 0
      %1159 = vmatpush1.bf16.xpose.msra.mxu0 0
      %1160 = vmatprep.subr.bf16.mxu0 0
      %1161 = vmatpush1.bf16.xpose.msra.mxu0 0
      %1162 = vmatprep.subr.bf16.mxu0 0
      %1163 = vmatpush1.bf16.xpose.msra.mxu0 0
      %1164 = vmatprep.subr.bf16.mxu0 0
      %1165 = vmatpush1.bf16.xpose.msra.mxu0 0
      %1166 = vmatprep.subr.bf16.mxu0 0
      %1167 = vmatpush1.bf16.xpose.msra.mxu0 0
      %1168 = vmatprep.subr.bf16.mxu0 0
      %1169 = vmatpush1.bf16.xpose.msra.mxu0 0
      %1170 = vmatprep.subr.bf16.mxu0 0
      %1171 = vmatpush1.bf16.xpose.msra.mxu0 0
      %1172 = vmatprep.subr.bf16.mxu0 0
      %1173 = vmatpush1.bf16.xpose.msra.mxu0 0
      %1174 = vmatprep.subr.bf16.mxu0 0
      %1175 = vmatpush1.bf16.xpose.msra.mxu0 0
      %1176 = vmatprep.subr.bf16.mxu0 0
      %1177 = vmatpush1.bf16.xpose.msra.mxu0 0
      %1178 = vmatprep.subr.bf16.mxu0 0
      %1179 = vmatpush1.bf16.xpose.msra.mxu0 0
      %1180 = vmatprep.subr.bf16.mxu0 0
      %1181 = vmatpush1.bf16.xpose.msra.mxu0 0
      %1182 = vmatprep.mubr.bf16.mxu0 0
      %1183 = vmatmul.mubr.bf16.gmra.mrb[0].mxu0 %v1139
      %v1184 = vpop.f32.mrb[0].mxu0
      %v1185 = vadd.f32 0.0, %v1184
      %v1186 = vpop.f32.mrb[0].mxu0
      %v1187 = vpop.f32.mrb[0].mxu0
      %v1188 = vadd.f32 0.0, %v1187
      %v1189 = vpop.f32.mrb[0].mxu0
      %1190 = vmatprep.mubr.bf16.mxu0 0
      %1191 = vmatmul.mubr.bf16.gmra.mrb[0].mxu0 %v1142
      %v1192 = vpop.f32.mrb[0].mxu0
      %v1193 = vadd.f32 0.0, %v1192
      %v1194 = vpop.f32.mrb[0].mxu0
      %v1195 = vpop.f32.mrb[0].mxu0
      %v1196 = vadd.f32 0.0, %v1195
      %v1197 = vpop.f32.mrb[0].mxu0
      %1198 = vdwg.mxu0
      %v1199 = vmul.f32 %v1185, 0.35355338
      %v1200 = vmul.f32 %v1188, 0.35355338
      %v1201 = vmul.f32 %v1193, 0.35355338
      %v1202 = vmul.f32 %v1196, 0.35355338
      %v1203 = vadd.f32 %v1199, %v484
      %v1204 = vadd.f32 %v1200, %v485
      %v1205 = vadd.f32 %v1201, %v486
      %v1206 = vadd.f32 %v1202, %v487
      %v1207 = vsel %vm521, %v1203, -inf
      %1208 = vmax.xlane.f32.xlu0 %v1207
      %v1209 = vpop.xlane.xlu0 %1208
      %v1210 = vsel %vm521, %v1204, -inf
      %1211 = vmax.xlane.f32.xlu0 %v1210
      %v1212 = vpop.xlane.xlu0 %1211
      %v1213 = vsel %vm521, %v1205, -inf
      %1214 = vmax.xlane.f32.xlu0 %v1213
      %v1215 = vpop.xlane.xlu0 %1214
      %v1216 = vsel %vm521, %v1206, -inf
      %1217 = vmax.xlane.f32.xlu0 %v1216
      %v1218 = vpop.xlane.xlu0 %1217
      %v1219 = vsub.f32 %v1203, %v1209
      %v1220 = vsub.f32 %v1204, %v1212
      %v1221 = vsub.f32 %v1205, %v1215
      %v1222 = vsub.f32 %v1206, %v1218
      %v1223 = vmul.f32 %v1219, 1.442695
      %v1224 = vpow.pop %v1223
      %v1225 = vmul.f32 %v1220, 1.442695
      %v1226 = vpow.pop %v1225
      %v1227 = vmul.f32 %v1221, 1.442695
      %v1228 = vpow.pop %v1227
      %v1229 = vmul.f32 %v1222, 1.442695
      %v1230 = vpow.pop %v1229
      %v1231 = vsel %vm521, %v1224, 0.0
      %1232 = vadd.xlane.f32.xlu0 %v1231
      %v1233 = vpop.xlane.xlu0 %1232
      %v1234 = vsel %vm521, %v1226, 0.0
      %1235 = vadd.xlane.f32.xlu0 %v1234
      %v1236 = vpop.xlane.xlu0 %1235
      %v1237 = vsel %vm521, %v1228, 0.0
      %1238 = vadd.xlane.f32.xlu0 %v1237
      %v1239 = vpop.xlane.xlu0 %1238
      %v1240 = vsel %vm521, %v1230, 0.0
      %1241 = vadd.xlane.f32.xlu0 %v1240
      %v1242 = vpop.xlane.xlu0 %1241
      %v1243 = vrcp.pop %v1233
      %v1244 = vrcp.pop %v1236
      %v1245 = vrcp.pop %v1239
      %v1246 = vrcp.pop %v1242
      %v1247 = vmul.f32 %v1224, %v1243
      %v1248 = vmul.f32 %v1226, %v1244
      %v1249 = vmul.f32 %v1228, %v1245
      %v1250 = vmul.f32 %v1230, %v1246
      %v1251 = vpack.c.bf16 %v1248, %v1247
      %v1252 = vpack.c.bf16 %v1250, %v1249
      %1253 = vrot.lane.b32.xlu0 %v577, 40
      %v1254 = vpop.permute.xlu0 %1253
      %1255 = vrot.lane.b32.xlu0 %v578, 40
      %v1256 = vpop.permute.xlu0 %1255
      %v1260 = vsel %vm521, %v1251, 0
      %v1263 = vsel %vm521, %v1252, 0
      %1265 = vmatprep.subr.bf16.mxu0 0
      %1266 = vmatpush1.bf16.msra.mxu0 %v1254
      %1267 = vmatprep.subr.bf16.mxu0 0
      %1268 = vmatpush1.bf16.msra.mxu0 %v1256
      %1269 = vmatprep.subr.bf16.mxu0 0
      %1270 = vmatpush1.bf16.msra.mxu0 0
      %1271 = vmatprep.subr.bf16.mxu0 0
      %1272 = vmatpush1.bf16.msra.mxu0 0
      %1273 = vmatprep.subr.bf16.mxu0 0
      %1274 = vmatpush1.bf16.msra.mxu0 0
      %1275 = vmatprep.subr.bf16.mxu0 0
      %1276 = vmatpush1.bf16.msra.mxu0 0
      %1277 = vmatprep.subr.bf16.mxu0 0
      %1278 = vmatpush1.bf16.msra.mxu0 0
      %1279 = vmatprep.subr.bf16.mxu0 0
      %1280 = vmatpush1.bf16.msra.mxu0 0
      %1281 = vmatprep.subr.bf16.mxu0 0
      %1282 = vmatpush1.bf16.msra.mxu0 0
      %1283 = vmatprep.subr.bf16.mxu0 0
      %1284 = vmatpush1.bf16.msra.mxu0 0
      %1285 = vmatprep.subr.bf16.mxu0 0
      %1286 = vmatpush1.bf16.msra.mxu0 0
      %1287 = vmatprep.subr.bf16.mxu0 0
      %1288 = vmatpush1.bf16.msra.mxu0 0
      %1289 = vmatprep.subr.bf16.mxu0 0
      %1290 = vmatpush1.bf16.msra.mxu0 0
      %1291 = vmatprep.subr.bf16.mxu0 0
      %1292 = vmatpush1.bf16.msra.mxu0 0
      %1293 = vmatprep.subr.bf16.mxu0 0
      %1294 = vmatpush1.bf16.msra.mxu0 0
      %1295 = vmatprep.subr.bf16.mxu0 0
      %1296 = vmatpush1.bf16.msra.mxu0 0
      %1297 = vmatprep.mubr.bf16.mxu0 0
      %1298 = vmatmul.mubr.bf16.gmra.mrb[0].mxu0 %v1260
      %v1299 = vpop.f32.mrb[0].mxu0
      %v1300 = vadd.f32 0.0, %v1299
      %v1301 = vpop.f32.mrb[0].mxu0
      %v1302 = vpop.f32.mrb[0].mxu0
      %v1303 = vadd.f32 0.0, %v1302
      %v1304 = vpop.f32.mrb[0].mxu0
      %1305 = vmatprep.mubr.bf16.mxu0 0
      %1306 = vmatmul.mubr.bf16.gmra.mrb[0].mxu0 %v1263
      %v1307 = vpop.f32.mrb[0].mxu0
      %v1308 = vadd.f32 0.0, %v1307
      %v1309 = vpop.f32.mrb[0].mxu0
      %v1310 = vpop.f32.mrb[0].mxu0
      %v1311 = vadd.f32 0.0, %v1310
      %v1312 = vpop.f32.mrb[0].mxu0
      %1313 = vdwg.mxu0
      %1318 = vrot.lane.b32.xlu0 %v932, 8
      %v1319 = vpop.permute.xlu0 %1318
      %1320 = vrot.lane.b32.xlu0 %v935, 8
      %v1321 = vpop.permute.xlu0 %1320
      %1322 = vrot.lane.b32.xlu0 %v940, 8
      %v1323 = vpop.permute.xlu0 %1322
      %1324 = vrot.lane.b32.xlu0 %v943, 8
      %v1325 = vpop.permute.xlu0 %1324
      %1334 = vrot.lane.b32.xlu0 %v1116, 16
      %v1335 = vpop.permute.xlu0 %1334
      %1336 = vrot.lane.b32.xlu0 %v1119, 16
      %v1337 = vpop.permute.xlu0 %1336
      %1338 = vrot.lane.b32.xlu0 %v1124, 16
      %v1339 = vpop.permute.xlu0 %1338
      %1340 = vrot.lane.b32.xlu0 %v1127, 16
      %v1341 = vpop.permute.xlu0 %1340
      %1350 = vrot.lane.b32.xlu0 %v1300, 24
      %v1351 = vpop.permute.xlu0 %1350
      %1352 = vrot.lane.b32.xlu0 %v1303, 24
      %v1353 = vpop.permute.xlu0 %1352
      %1354 = vrot.lane.b32.xlu0 %v1308, 24
      %v1355 = vpop.permute.xlu0 %1354
      %1356 = vrot.lane.b32.xlu0 %v1311, 24
      %v1357 = vpop.permute.xlu0 %1356
      %v1362 = vsel %vm585, %v748, %v1319
      %v1363 = vsel %vm585, %v751, %v1321
      %v1364 = vsel %vm585, %v756, %v1323
      %v1365 = vsel %vm585, %v759, %v1325
      %vm1366 = vcmask 130048
      %v1367 = vsel %vm1366, %v1362, %v1335
      %v1368 = vsel %vm1366, %v1363, %v1337
      %v1369 = vsel %vm1366, %v1364, %v1339
      %v1370 = vsel %vm1366, %v1365, %v1341
      %vm1371 = vcmask 195584
      %v1372 = vsel %vm1371, %v1367, %v1351
      %v1373 = vsel %vm1371, %v1368, %v1353
      %v1374 = vsel %vm1371, %v1369, %v1355
      %v1375 = vsel %vm1371, %v1370, %v1357
      %v1376 = vld [vmem:[%s3] sm:$0xf]
      %v1377 = vld [vmem:[%s3 + $0x4] sm:$0xf]
      %v1378 = vld [vmem:[%s3 + $0x8] sm:$0xf]
      %v1379 = vld [vmem:[%s3 + $0xc] sm:$0xf]
      %v1380 = vpack.c.bf16 %v1373, %v1372
      %v1381 = vpack.c.bf16 %v1375, %v1374
      %v1382 = vld [vmem:[%s4] sm:$0x1]
      %v1384 = vlaneseq
      %v1385 = vshrl.u32 %v1384, 7
      %v1386 = vsub.s32 0, %v1385
      %v1387 = vrot.slane %v1382, %v1386
      %v1393 = vunpack.c.l.b16 %v1376
      %v1394 = vunpack.c.l.b16 %v1377
      %v1395 = vunpack.c.l.b16 %v1378
      %v1396 = vunpack.c.l.b16 %v1379
      %v1397 = vpack.c.b16 %v1394, %v1393
      %v1398 = vpack.c.b16 %v1396, %v1395
      %v1402 = vsel %vm521, %v1380, 0
      %v1405 = vsel %vm521, %v1381, 0
      %1407 = vmatprep.subr.bf16.mxu0 0
      %1408 = vmatpush1.bf16.msra.mxu0 %v1397
      %1409 = vmatprep.subr.bf16.mxu0 0
      %1410 = vmatpush1.bf16.msra.mxu0 %v1398
      %1411 = vmatprep.subr.bf16.mxu0 0
      %1412 = vmatpush1.bf16.msra.mxu0 0
      %1413 = vmatprep.subr.bf16.mxu0 0
      %1414 = vmatpush1.bf16.msra.mxu0 0
      %1415 = vmatprep.subr.bf16.mxu0 0
      %1416 = vmatpush1.bf16.msra.mxu0 0
      %1417 = vmatprep.subr.bf16.mxu0 0
      %1418 = vmatpush1.bf16.msra.mxu0 0
      %1419 = vmatprep.subr.bf16.mxu0 0
      %1420 = vmatpush1.bf16.msra.mxu0 0
      %1421 = vmatprep.subr.bf16.mxu0 0
      %1422 = vmatpush1.bf16.msra.mxu0 0
      %1423 = vmatprep.subr.bf16.mxu0 0
      %1424 = vmatpush1.bf16.msra.mxu0 0
      %1425 = vmatprep.subr.bf16.mxu0 0
      %1426 = vmatpush1.bf16.msra.mxu0 0
      %1427 = vmatprep.subr.bf16.mxu0 0
      %1428 = vmatpush1.bf16.msra.mxu0 0
      %1429 = vmatprep.subr.bf16.mxu0 0
      %1430 = vmatpush1.bf16.msra.mxu0 0
      %1431 = vmatprep.subr.bf16.mxu0 0
      %1432 = vmatpush1.bf16.msra.mxu0 0
      %1433 = vmatprep.subr.bf16.mxu0 0
      %1434 = vmatpush1.bf16.msra.mxu0 0
      %1435 = vmatprep.subr.bf16.mxu0 0
      %1436 = vmatpush1.bf16.msra.mxu0 0
      %1437 = vmatprep.subr.bf16.mxu0 0
      %1438 = vmatpush1.bf16.msra.mxu0 0
      %1439 = vmatprep.mubr.bf16.mxu0 0
      %1440 = vmatmul.mubr.bf16.gmra.mrb[0].mxu0 %v1402
      %v1441 = vpop.f32.mrb[0].mxu0
      %v1442 = vadd.f32 %v1387, %v1441
      %v1443 = vpop.f32.mrb[0].mxu0
      %v1444 = vpop.f32.mrb[0].mxu0
      %v1445 = vadd.f32 %v1387, %v1444
      %v1446 = vpop.f32.mrb[0].mxu0
      %1447 = vmatprep.mubr.bf16.mxu0 0
      %1448 = vmatmul.mubr.bf16.gmra.mrb[0].mxu0 %v1405
      %v1449 = vpop.f32.mrb[0].mxu0
      %v1450 = vadd.f32 %v1387, %v1449
      %v1451 = vpop.f32.mrb[0].mxu0
      %v1452 = vpop.f32.mrb[0].mxu0
      %v1453 = vadd.f32 %v1387, %v1452
      %v1454 = vpop.f32.mrb[0].mxu0
      %1455 = vdwg.mxu0
      %v1456 = vadd.f32 %v449, %v1442
      %v1457 = vadd.f32 %v450, %v1445
      %v1458 = vadd.f32 %v451, %v1450
      %v1459 = vadd.f32 %v452, %v1453
      %v1460 = vld [vmem:[%s5] sm:$0x1]
      %v1461 = vld [vmem:[%s6] sm:$0x1]
      %v1462 = vsel %vm521, %v1456, 0.0
      %1463 = vadd.xlane.f32.xlu0 %v1462
      %v1464 = vpop.xlane.xlu0 %1463
      %v1465 = vsel %vm521, %v1457, 0.0
      %1466 = vadd.xlane.f32.xlu0 %v1465
      %v1467 = vpop.xlane.xlu0 %1466
      %v1468 = vsel %vm521, %v1458, 0.0
      %1469 = vadd.xlane.f32.xlu0 %v1468
      %v1470 = vpop.xlane.xlu0 %1469
      %v1471 = vsel %vm521, %v1459, 0.0
      %1472 = vadd.xlane.f32.xlu0 %v1471
      %v1473 = vpop.xlane.xlu0 %1472
      %v1474 = vrcp.pop 32.0
      %v1475 = vmul.f32 %v1464, %v1474
      %v1476 = vmul.f32 %v1467, %v1474
      %v1477 = vmul.f32 %v1470, %v1474
      %v1478 = vmul.f32 %v1473, %v1474
      %v1479 = vsub.f32 %v1456, %v1475
      %v1480 = vsub.f32 %v1457, %v1476
      %v1481 = vsub.f32 %v1458, %v1477
      %v1482 = vsub.f32 %v1459, %v1478
      %v1483 = vmul.f32 %v1479, %v1479
      %v1484 = vmul.f32 %v1480, %v1480
      %v1485 = vmul.f32 %v1481, %v1481
      %v1486 = vmul.f32 %v1482, %v1482
      %v1487 = vsel %vm521, %v1483, 0.0
      %1488 = vadd.xlane.f32.xlu0 %v1487
      %v1489 = vpop.xlane.xlu0 %1488
      %v1490 = vsel %vm521, %v1484, 0.0
      %1491 = vadd.xlane.f32.xlu0 %v1490
      %v1492 = vpop.xlane.xlu0 %1491
      %v1493 = vsel %vm521, %v1485, 0.0
      %1494 = vadd.xlane.f32.xlu0 %v1493
      %v1495 = vpop.xlane.xlu0 %1494
      %v1496 = vsel %vm521, %v1486, 0.0
      %1497 = vadd.xlane.f32.xlu0 %v1496
      %v1498 = vpop.xlane.xlu0 %1497
      %v1499 = vmul.f32 %v1489, %v1474
      %v1500 = vmul.f32 %v1492, %v1474
      %v1501 = vmul.f32 %v1495, %v1474
      %v1502 = vmul.f32 %v1498, %v1474
      %v1503 = vadd.f32 %v1499, 1e-05
      %v1504 = vadd.f32 %v1500, 1e-05
      %v1505 = vadd.f32 %v1501, 1e-05
      %v1506 = vadd.f32 %v1502, 1e-05
      %v1507 = vrsqrt.pop %v1503
      %v1508 = vrsqrt.pop %v1504
      %v1509 = vrsqrt.pop %v1505
      %v1510 = vrsqrt.pop %v1506
      %v1511 = vmul.f32 %v1479, %v1507
      %v1512 = vmul.f32 %v1480, %v1508
      %v1513 = vmul.f32 %v1481, %v1509
      %v1514 = vmul.f32 %v1482, %v1510
      %v1516 = vlaneseq
      %v1517 = vshrl.u32 %v1516, 7
      %v1518 = vsub.s32 0, %v1517
      %v1519 = vrot.slane %v1460, %v1518
      %v1521 = vmul.f32 %v1511, %v1519
      %v1522 = vmul.f32 %v1512, %v1519
      %v1523 = vmul.f32 %v1513, %v1519
      %v1524 = vmul.f32 %v1514, %v1519
      %v1526 = vlaneseq
      %v1527 = vshrl.u32 %v1526, 7
      %v1528 = vsub.s32 0, %v1527
      %v1529 = vrot.slane %v1461, %v1528
      %v1531 = vadd.f32 %v1521, %v1529
      %v1532 = vadd.f32 %v1522, %v1529
      %v1533 = vadd.f32 %v1523, %v1529
      %v1534 = vadd.f32 %v1524, %v1529
      %v1535 = vld [vmem:[%s7] sm:$0xf]
      %v1536 = vld [vmem:[%s7 + $0x4] sm:$0xf]
      %v1537 = vld [vmem:[%s7 + $0x8] sm:$0xf]
      %v1538 = vld [vmem:[%s7 + $0xc] sm:$0xf]
      %v1539 = vpack.c.bf16 %v1532, %v1531
      %v1540 = vpack.c.bf16 %v1534, %v1533
      %v1541 = vld [vmem:[%s8] sm:$0x1]
      %v1543 = vlaneseq
      %v1544 = vshrl.u32 %v1543, 7
      %v1545 = vsub.s32 0, %v1544
      %v1546 = vrot.slane %v1541, %v1545
      %v1552 = vunpack.c.l.b16 %v1535
      %v1553 = vunpack.c.l.b16 %v1536
      %v1554 = vunpack.c.l.b16 %v1537
      %v1555 = vunpack.c.l.b16 %v1538
      %v1556 = vpack.c.b16 %v1553, %v1552
      %v1557 = vpack.c.b16 %v1555, %v1554
      %v1561 = vsel %vm521, %v1539, 0
      %v1564 = vsel %vm521, %v1540, 0
      %1566 = vmatprep.subr.bf16.mxu0 0
      %1567 = vmatpush1.bf16.msra.mxu0 %v1556
      %1568 = vmatprep.subr.bf16.mxu0 0
      %1569 = vmatpush1.bf16.msra.mxu0 %v1557
      %1570 = vmatprep.subr.bf16.mxu0 0
      %1571 = vmatpush1.bf16.msra.mxu0 0
      %1572 = vmatprep.subr.bf16.mxu0 0
      %1573 = vmatpush1.bf16.msra.mxu0 0
      %1574 = vmatprep.subr.bf16.mxu0 0
      %1575 = vmatpush1.bf16.msra.mxu0 0
      %1576 = vmatprep.subr.bf16.mxu0 0
      %1577 = vmatpush1.bf16.msra.mxu0 0
      %1578 = vmatprep.subr.bf16.mxu0 0
      %1579 = vmatpush1.bf16.msra.mxu0 0
      %1580 = vmatprep.subr.bf16.mxu0 0
      %1581 = vmatpush1.bf16.msra.mxu0 0
      %1582 = vmatprep.subr.bf16.mxu0 0
      %1583 = vmatpush1.bf16.msra.mxu0 0
      %1584 = vmatprep.subr.bf16.mxu0 0
      %1585 = vmatpush1.bf16.msra.mxu0 0
      %1586 = vmatprep.subr.bf16.mxu0 0
      %1587 = vmatpush1.bf16.msra.mxu0 0
      %1588 = vmatprep.subr.bf16.mxu0 0
      %1589 = vmatpush1.bf16.msra.mxu0 0
      %1590 = vmatprep.subr.bf16.mxu0 0
      %1591 = vmatpush1.bf16.msra.mxu0 0
      %1592 = vmatprep.subr.bf16.mxu0 0
      %1593 = vmatpush1.bf16.msra.mxu0 0
      %1594 = vmatprep.subr.bf16.mxu0 0
      %1595 = vmatpush1.bf16.msra.mxu0 0
      %1596 = vmatprep.subr.bf16.mxu0 0
      %1597 = vmatpush1.bf16.msra.mxu0 0
      %1598 = vmatprep.mubr.bf16.mxu0 0
      %1599 = vmatmul.mubr.bf16.gmra.mrb[0].mxu0 %v1561
      %v1600 = vpop.f32.mrb[0].mxu0
      %v1601 = vadd.f32 %v1546, %v1600
      %v1602 = vpop.f32.mrb[0].mxu0
      %v1603 = vpop.f32.mrb[0].mxu0
      %v1604 = vadd.f32 %v1546, %v1603
      %v1605 = vpop.f32.mrb[0].mxu0
      %1606 = vmatprep.mubr.bf16.mxu0 0
      %1607 = vmatmul.mubr.bf16.gmra.mrb[0].mxu0 %v1564
      %v1608 = vpop.f32.mrb[0].mxu0
      %v1609 = vadd.f32 %v1546, %v1608
      %v1610 = vpop.f32.mrb[0].mxu0
      %v1611 = vpop.f32.mrb[0].mxu0
      %v1612 = vadd.f32 %v1546, %v1611
      %v1613 = vpop.f32.mrb[0].mxu0
      %1614 = vdwg.mxu0
      %v1615 = vmax.f32 %v1601, 0.0
      %v1616 = vmax.f32 %v1604, 0.0
      %v1617 = vmax.f32 %v1609, 0.0
      %v1618 = vmax.f32 %v1612, 0.0
      %v1619 = vld [vmem:[%s9] sm:$0xf]
      %v1620 = vld [vmem:[%s9 + $0x4] sm:$0xf]
      %v1621 = vld [vmem:[%s9 + $0x8] sm:$0xf]
      %v1622 = vld [vmem:[%s9 + $0xc] sm:$0xf]
      %v1623 = vpack.c.bf16 %v1616, %v1615
      %v1624 = vpack.c.bf16 %v1618, %v1617
      %v1625 = vld [vmem:[%s10] sm:$0x1]
      %v1627 = vlaneseq
      %v1628 = vshrl.u32 %v1627, 7
      %v1629 = vsub.s32 0, %v1628
      %v1630 = vrot.slane %v1625, %v1629
      %v1636 = vunpack.c.l.b16 %v1619
      %v1637 = vunpack.c.l.b16 %v1620
      %v1638 = vunpack.c.l.b16 %v1621
      %v1639 = vunpack.c.l.b16 %v1622
      %v1640 = vpack.c.b16 %v1637, %v1636
      %v1641 = vpack.c.b16 %v1639, %v1638
      %v1645 = vsel %vm521, %v1623, 0
      %v1648 = vsel %vm521, %v1624, 0
      %1650 = vmatprep.subr.bf16.mxu0 0
      %1651 = vmatpush1.bf16.msra.mxu0 %v1640
      %1652 = vmatprep.subr.bf16.mxu0 0
      %1653 = vmatpush1.bf16.msra.mxu0 %v1641
      %1654 = vmatprep.subr.bf16.mxu0 0
      %1655 = vmatpush1.bf16.msra.mxu0 0
      %1656 = vmatprep.subr.bf16.mxu0 0
      %1657 = vmatpush1.bf16.msra.mxu0 0
      %1658 = vmatprep.subr.bf16.mxu0 0
      %1659 = vmatpush1.bf16.msra.mxu0 0
      %1660 = vmatprep.subr.bf16.mxu0 0
      %1661 = vmatpush1.bf16.msra.mxu0 0
      %1662 = vmatprep.subr.bf16.mxu0 0
      %1663 = vmatpush1.bf16.msra.mxu0 0
      %1664 = vmatprep.subr.bf16.mxu0 0
      %1665 = vmatpush1.bf16.msra.mxu0 0
      %1666 = vmatprep.subr.bf16.mxu0 0
      %1667 = vmatpush1.bf16.msra.mxu0 0
      %1668 = vmatprep.subr.bf16.mxu0 0
      %1669 = vmatpush1.bf16.msra.mxu0 0
      %1670 = vmatprep.subr.bf16.mxu0 0
      %1671 = vmatpush1.bf16.msra.mxu0 0
      %1672 = vmatprep.subr.bf16.mxu0 0
      %1673 = vmatpush1.bf16.msra.mxu0 0
      %1674 = vmatprep.subr.bf16.mxu0 0
      %1675 = vmatpush1.bf16.msra.mxu0 0
      %1676 = vmatprep.subr.bf16.mxu0 0
      %1677 = vmatpush1.bf16.msra.mxu0 0
      %1678 = vmatprep.subr.bf16.mxu0 0
      %1679 = vmatpush1.bf16.msra.mxu0 0
      %1680 = vmatprep.subr.bf16.mxu0 0
      %1681 = vmatpush1.bf16.msra.mxu0 0
      %1682 = vmatprep.mubr.bf16.mxu0 0
      %1683 = vmatmul.mubr.bf16.gmra.mrb[0].mxu0 %v1645
      %v1684 = vpop.f32.mrb[0].mxu0
      %v1685 = vadd.f32 %v1630, %v1684
      %v1686 = vpop.f32.mrb[0].mxu0
      %v1687 = vpop.f32.mrb[0].mxu0
      %v1688 = vadd.f32 %v1630, %v1687
      %v1689 = vpop.f32.mrb[0].mxu0
      %1690 = vmatprep.mubr.bf16.mxu0 0
      %1691 = vmatmul.mubr.bf16.gmra.mrb[0].mxu0 %v1648
      %v1692 = vpop.f32.mrb[0].mxu0
      %v1693 = vadd.f32 %v1630, %v1692
      %v1694 = vpop.f32.mrb[0].mxu0
      %v1695 = vpop.f32.mrb[0].mxu0
      %v1696 = vadd.f32 %v1630, %v1695
      %v1697 = vpop.f32.mrb[0].mxu0
      %1698 = vdwg.mxu0
      %v1699 = vadd.f32 %v1531, %v1685
      %v1700 = vadd.f32 %v1532, %v1688
      %v1701 = vadd.f32 %v1533, %v1693
      %v1702 = vadd.f32 %v1534, %v1696
      %v1703 = vld [vmem:[%s11] sm:$0x1]
      %v1704 = vld [vmem:[%s12] sm:$0x1]
      %v1705 = vsel %vm521, %v1699, 0.0
      %1706 = vadd.xlane.f32.xlu0 %v1705
      %v1707 = vpop.xlane.xlu0 %1706
      %v1708 = vsel %vm521, %v1700, 0.0
      %1709 = vadd.xlane.f32.xlu0 %v1708
      %v1710 = vpop.xlane.xlu0 %1709
      %v1711 = vsel %vm521, %v1701, 0.0
      %1712 = vadd.xlane.f32.xlu0 %v1711
      %v1713 = vpop.xlane.xlu0 %1712
      %v1714 = vsel %vm521, %v1702, 0.0
      %1715 = vadd.xlane.f32.xlu0 %v1714
      %v1716 = vpop.xlane.xlu0 %1715
      %v1717 = vmul.f32 %v1707, %v1474
      %v1718 = vmul.f32 %v1710, %v1474
      %v1719 = vmul.f32 %v1713, %v1474
      %v1720 = vmul.f32 %v1716, %v1474
      %v1721 = vsub.f32 %v1699, %v1717
      %v1722 = vsub.f32 %v1700, %v1718
      %v1723 = vsub.f32 %v1701, %v1719
      %v1724 = vsub.f32 %v1702, %v1720
      %v1725 = vmul.f32 %v1721, %v1721
      %v1726 = vmul.f32 %v1722, %v1722
      %v1727 = vmul.f32 %v1723, %v1723
      %v1728 = vmul.f32 %v1724, %v1724
      %v1729 = vsel %vm521, %v1725, 0.0
      %1730 = vadd.xlane.f32.xlu0 %v1729
      %v1731 = vpop.xlane.xlu0 %1730
      %v1732 = vsel %vm521, %v1726, 0.0
      %1733 = vadd.xlane.f32.xlu0 %v1732
      %v1734 = vpop.xlane.xlu0 %1733
      %v1735 = vsel %vm521, %v1727, 0.0
      %1736 = vadd.xlane.f32.xlu0 %v1735
      %v1737 = vpop.xlane.xlu0 %1736
      %v1738 = vsel %vm521, %v1728, 0.0
      %1739 = vadd.xlane.f32.xlu0 %v1738
      %v1740 = vpop.xlane.xlu0 %1739
      %v1741 = vmul.f32 %v1731, %v1474
      %v1742 = vmul.f32 %v1734, %v1474
      %v1743 = vmul.f32 %v1737, %v1474
      %v1744 = vmul.f32 %v1740, %v1474
      %v1745 = vadd.f32 %v1741, 1e-05
      %v1746 = vadd.f32 %v1742, 1e-05
      %v1747 = vadd.f32 %v1743, 1e-05
      %v1748 = vadd.f32 %v1744, 1e-05
      %v1749 = vrsqrt.pop %v1745
      %v1750 = vrsqrt.pop %v1746
      %v1751 = vrsqrt.pop %v1747
      %v1752 = vrsqrt.pop %v1748
      %v1753 = vmul.f32 %v1721, %v1749
      %v1754 = vmul.f32 %v1722, %v1750
      %v1755 = vmul.f32 %v1723, %v1751
      %v1756 = vmul.f32 %v1724, %v1752
      %v1758 = vlaneseq
      %v1759 = vshrl.u32 %v1758, 7
      %v1760 = vsub.s32 0, %v1759
      %v1761 = vrot.slane %v1703, %v1760
      %v1763 = vmul.f32 %v1753, %v1761
      %v1764 = vmul.f32 %v1754, %v1761
      %v1765 = vmul.f32 %v1755, %v1761
      %v1766 = vmul.f32 %v1756, %v1761
      %v1768 = vlaneseq
      %v1769 = vshrl.u32 %v1768, 7
      %v1770 = vsub.s32 0, %v1769
      %v1771 = vrot.slane %v1704, %v1770
      %v1773 = vadd.f32 %v1763, %v1771
      %v1774 = vadd.f32 %v1764, %v1771
      %v1775 = vadd.f32 %v1765, %v1771
      %v1776 = vadd.f32 %v1766, %v1771
      %v1777 = vpack.c.bf16 %v1774, %v1773
      %v1778 = vpack.c.bf16 %v1776, %v1775
      %v1781 = vunpack.c.l.b16 %v1777
      %v1782 = vunpack.c.h.b16 %v1777
      %v1783 = vunpack.c.l.b16 %v1778
      %v1784 = vunpack.c.h.b16 %v1778
      %v1785 = vpack.c.b16 %v1781, %v1781
      %v1786 = vpack.c.b16 %v1782, %v1782
      %v1787 = vpack.c.b16 %v1783, %v1783
      %v1788 = vpack.c.b16 %v1784, %v1784
      %vm1793 = vcmask 257024
      %1794 = vst.msk [vmem:[%s442] sm:$0xf] %vm1793, %v1785
      %1795 = vst.msk [vmem:[%s442 + $0x4] sm:$0xf] %vm1793, %v1786
      %1796 = vst.msk [vmem:[%s442 + $0x8] sm:$0xf] %vm1793, %v1787
      %1797 = vst.msk [vmem:[%s442 + $0xc] sm:$0xf] %vm1793, %v1788
      %s1798 = smul.u32 4, %s24
      %p1799 = scmp.lt.s32.totalorder %s1798, 15
      %s1800 = scalar_select %p1799, %s1798, 15
      %s1801 = smul.addr %s1800, 4
      %s1802 = scalar_lea.vmem %s13, %s1801
      // Predicated region
      $region73: #{spatial_first_transformer_forward.14} parent=71 // pred_check
        %p1803 = pneg %p320
      $region74: #{spatial_first_transformer_forward.14} parent=71 // pred_check_branch
        %1805 = sbr.rel (%p1803) target = $region76
      $region75: #{spatial_first_transformer_forward.14} parent=71 // pred_region
        %s1806 = smul.u32 4, %s24
      $region76: #{spatial_first_transformer_forward.14} parent=71 // pred_fallthru
        _
    $region72: #{spatial_first_transformer_forward.14} parent=5 // pred_fallthru
      _
    %p1807 = scmp.le.s32.totalorder 2, %s19
    // Predicated region
    $region77: #{spatial_first_transformer_forward.14} parent=5 // pred_check
      %p1808 = pneg %p1807
    $region78: #{spatial_first_transformer_forward.14} parent=5 // pred_check_branch
      %1810 = sbr.rel (%p1808) target = $region80
    $region79: #{spatial_first_transformer_forward.14} parent=5 // pred_region
      %s1811 = ssub.s32 %s19, 2
      // Predicated region
      $region81: #{spatial_first_transformer_forward.14} parent=79 // pred_check
        %p1812 = pneg %p326
      $region82: #{spatial_first_transformer_forward.14} parent=79 // pred_check_branch
        %1814 = sbr.rel (%p1812) target = $region84
      $region83: #{spatial_first_transformer_forward.14} parent=79 // pred_region
        %s1815 = smul.u32 4, %s25
        %p1816 = scmp.lt.s32.totalorder %s1815, 15
        %s1817 = scalar_select %p1816, %s1815, 15
        %s1818 = smul.addr %s1817, 4
        %s1819 = scalar_lea.vmem %s13, %s1818
      $region84: #{spatial_first_transformer_forward.14} parent=79 // pred_fallthru
        _
    $region80: #{spatial_first_transformer_forward.14} parent=5 // pred_fallthru
      _
  $region6: #{spatial_first_transformer_forward.14} parent=0 // loop_footer
    %s23 = sadd.s32 1, %s19
  $region7: #{spatial_first_transformer_forward.14} parent=0 // loop_footer_branch
    %18 = sbr.rel target = $region3
  $region8: #{spatial_first_transformer_forward.14} parent=0 // loop_exit
    _

// kernel: spatial_first_transformer_forward.16
$region0: #{spatial_first_transformer_forward.16}
  #allocation0 [shape = 'u32[]', space=smem, size = 0x4, offset = 0x4, fixed_abs, tag = 'smem constant byte address 0x4 - core index']
  #allocation1 [shape = 'u32[144,128]{1,0:T(1,128)}', space=vmem, size = 0x12000, scoped, tag = 'internal scratch']
  %s0 = inlined_call_operand.vmem [shape: f32[56,32], index: 0, kind: input, shape index: {}]
  %s1 = inlined_call_operand.vmem [shape: bf16[32,96], index: 1, kind: input, shape index: {}]
  %s2 = inlined_call_operand.vmem [shape: f32[1,96], index: 2, kind: input, shape index: {}]
  %s3 = inlined_call_operand.vmem [shape: bf16[32,32], index: 3, kind: input, shape index: {}]
  %s4 = inlined_call_operand.vmem [shape: f32[1,32], index: 4, kind: input, shape index: {}]
  %s5 = inlined_call_operand.vmem [shape: f32[1,32], index: 5, kind: input, shape index: {}]
  %s6 = inlined_call_operand.vmem [shape: f32[1,32], index: 6, kind: input, shape index: {}]
  %s7 = inlined_call_operand.vmem [shape: bf16[32,32], index: 7, kind: input, shape index: {}]
  %s8 = inlined_call_operand.vmem [shape: f32[1,32], index: 8, kind: input, shape index: {}]
  %s9 = inlined_call_operand.vmem [shape: bf16[32,32], index: 9, kind: input, shape index: {}]
  %s10 = inlined_call_operand.vmem [shape: f32[1,32], index: 10, kind: input, shape index: {}]
  %s11 = inlined_call_operand.vmem [shape: f32[1,32], index: 11, kind: input, shape index: {}]
  %s12 = inlined_call_operand.vmem [shape: f32[1,32], index: 12, kind: input, shape index: {}]
  %s13 = inlined_call_operand.vmem [shape: bf16[56,32], index: 13, kind: output, shape index: {}]
  %s14 = sld [smem:[#allocation0]]
  $region62: #{spatial_first_transformer_forward.16} parent=0
    _
  %s16 = ssub.s32 1, %s14
  %s17 = scalar_select 0, %s16, %s14
  // Predicated region
  $region2: #{spatial_first_transformer_forward.16} parent=0 // pred_check
    _
  $region3: #{spatial_first_transformer_forward.16} parent=0 // pred_check_branch
    %19 = sbr.rel (0) target = $region5
  $region4: #{spatial_first_transformer_forward.16} parent=0 // pred_region
    _
  $region5: #{spatial_first_transformer_forward.16} parent=0 // pred_fallthru
    _
  // Predicated region
  $region6: #{spatial_first_transformer_forward.16} parent=0 // pred_check
    _
  $region7: #{spatial_first_transformer_forward.16} parent=0 // pred_check_branch
    %21 = sbr.rel (0) target = $region9
  $region8: #{spatial_first_transformer_forward.16} parent=0 // pred_region
    _
  $region9: #{spatial_first_transformer_forward.16} parent=0 // pred_fallthru
    _
  // Predicated region
  $region10: #{spatial_first_transformer_forward.16} parent=0 // pred_check
    _
  $region11: #{spatial_first_transformer_forward.16} parent=0 // pred_check_branch
    %23 = sbr.rel (0) target = $region13
  $region12: #{spatial_first_transformer_forward.16} parent=0 // pred_region
    _
  $region13: #{spatial_first_transformer_forward.16} parent=0 // pred_fallthru
    _
  // Predicated region
  $region14: #{spatial_first_transformer_forward.16} parent=0 // pred_check
    _
  $region15: #{spatial_first_transformer_forward.16} parent=0 // pred_check_branch
    %25 = sbr.rel (0) target = $region17
  $region16: #{spatial_first_transformer_forward.16} parent=0 // pred_region
    _
  $region17: #{spatial_first_transformer_forward.16} parent=0 // pred_fallthru
    _
  // Predicated region
  $region18: #{spatial_first_transformer_forward.16} parent=0 // pred_check
    _
  $region19: #{spatial_first_transformer_forward.16} parent=0 // pred_check_branch
    %27 = sbr.rel (0) target = $region21
  $region20: #{spatial_first_transformer_forward.16} parent=0 // pred_region
    _
  $region21: #{spatial_first_transformer_forward.16} parent=0 // pred_fallthru
    _
  // Predicated region
  $region22: #{spatial_first_transformer_forward.16} parent=0 // pred_check
    _
  $region23: #{spatial_first_transformer_forward.16} parent=0 // pred_check_branch
    %29 = sbr.rel (0) target = $region25
  $region24: #{spatial_first_transformer_forward.16} parent=0 // pred_region
    _
  $region25: #{spatial_first_transformer_forward.16} parent=0 // pred_fallthru
    _
  // Predicated region
  $region26: #{spatial_first_transformer_forward.16} parent=0 // pred_check
    _
  $region27: #{spatial_first_transformer_forward.16} parent=0 // pred_check_branch
    %31 = sbr.rel (0) target = $region29
  $region28: #{spatial_first_transformer_forward.16} parent=0 // pred_region
    _
  $region29: #{spatial_first_transformer_forward.16} parent=0 // pred_fallthru
    _
  // Predicated region
  $region30: #{spatial_first_transformer_forward.16} parent=0 // pred_check
    _
  $region31: #{spatial_first_transformer_forward.16} parent=0 // pred_check_branch
    %33 = sbr.rel (0) target = $region33
  $region32: #{spatial_first_transformer_forward.16} parent=0 // pred_region
    _
  $region33: #{spatial_first_transformer_forward.16} parent=0 // pred_fallthru
    _
  // Predicated region
  $region34: #{spatial_first_transformer_forward.16} parent=0 // pred_check
    _
  $region35: #{spatial_first_transformer_forward.16} parent=0 // pred_check_branch
    %35 = sbr.rel (0) target = $region37
  $region36: #{spatial_first_transformer_forward.16} parent=0 // pred_region
    _
  $region37: #{spatial_first_transformer_forward.16} parent=0 // pred_fallthru
    _
  // Predicated region
  $region38: #{spatial_first_transformer_forward.16} parent=0 // pred_check
    _
  $region39: #{spatial_first_transformer_forward.16} parent=0 // pred_check_branch
    %37 = sbr.rel (0) target = $region41
  $region40: #{spatial_first_transformer_forward.16} parent=0 // pred_region
    _
  $region41: #{spatial_first_transformer_forward.16} parent=0 // pred_fallthru
    _
  // Predicated region
  $region42: #{spatial_first_transformer_forward.16} parent=0 // pred_check
    _
  $region43: #{spatial_first_transformer_forward.16} parent=0 // pred_check_branch
    %39 = sbr.rel (0) target = $region45
  $region44: #{spatial_first_transformer_forward.16} parent=0 // pred_region
    _
  $region45: #{spatial_first_transformer_forward.16} parent=0 // pred_fallthru
    _
  // Predicated region
  $region46: #{spatial_first_transformer_forward.16} parent=0 // pred_check
    _
  $region47: #{spatial_first_transformer_forward.16} parent=0 // pred_check_branch
    %41 = sbr.rel (0) target = $region49
  $region48: #{spatial_first_transformer_forward.16} parent=0 // pred_region
    _
  $region49: #{spatial_first_transformer_forward.16} parent=0 // pred_fallthru
    _
  // Predicated region
  $region50: #{spatial_first_transformer_forward.16} parent=0 // pred_check
    _
  $region51: #{spatial_first_transformer_forward.16} parent=0 // pred_check_branch
    %43 = sbr.rel (0) target = $region53
  $region52: #{spatial_first_transformer_forward.16} parent=0 // pred_region
    _
  $region53: #{spatial_first_transformer_forward.16} parent=0 // pred_fallthru
    _
  %v45 = vld [vmem:[%s0] sm:$0xff]
  %v46 = vld [vmem:[%s0 + $0x8] sm:$0xff]
  %v47 = vld [vmem:[%s0 + $0x10] sm:$0xff]
  %v48 = vld [vmem:[%s0 + $0x18] sm:$0xff]
  %v49 = vld [vmem:[%s0 + $0x20] sm:$0xff]
  %v50 = vld [vmem:[%s0 + $0x28] sm:$0xff]
  %v51 = vld [vmem:[%s0 + $0x30] sm:$0xff]
  %v52 = vlaneseq
  %v53 = vshrl.u32 %v52, 7
  %v54 = vadd.s32 %v53, 8
  %v55 = vadd.s32 %v53, 16
  %v56 = vadd.s32 %v53, 24
  %v57 = vadd.s32 %v53, 32
  %v58 = vadd.s32 %v53, 40
  %v59 = vadd.s32 %v53, 48
  %v60 = vcvt.s32.f32 %v53
  %v61 = vcvt.s32.f32 %v54
  %v62 = vcvt.s32.f32 %v55
  %v63 = vcvt.s32.f32 %v56
  %v64 = vcvt.s32.f32 %v57
  %v65 = vcvt.s32.f32 %v58
  %v66 = vcvt.s32.f32 %v59
  %v67 = vlaneseq
  %v68 = vand.u32 %v67, 127
  %v69 = vcvt.s32.f32 %v68
  %v70 = vadd.f32 %v60, 0.5
  %v71 = vadd.f32 %v61, 0.5
  %v72 = vadd.f32 %v62, 0.5
  %v73 = vadd.f32 %v63, 0.5
  %v74 = vadd.f32 %v64, 0.5
  %v75 = vadd.f32 %v65, 0.5
  %v76 = vadd.f32 %v66, 0.5
  %v77 = vmul.f32 %v70, 0.071428575
  %v78 = vmul.f32 %v71, 0.071428575
  %v79 = vmul.f32 %v72, 0.071428575
  %v80 = vmul.f32 %v73, 0.071428575
  %v81 = vmul.f32 %v74, 0.071428575
  %v82 = vmul.f32 %v75, 0.071428575
  %v83 = vmul.f32 %v76, 0.071428575
  %v84 = vfloor.f32 %v77
  %v85 = vfloor.f32 %v78
  %v86 = vfloor.f32 %v79
  %v87 = vfloor.f32 %v80
  %v88 = vfloor.f32 %v81
  %v89 = vfloor.f32 %v82
  %v90 = vfloor.f32 %v83
  %v91 = vadd.f32 %v69, 0.5
  %v92 = vmul.f32 %v91, 0.071428575
  %v93 = vfloor.f32 %v92
  %vm94 = vcmp.eq.f32.partialorder %v84, %v93
  %vm95 = vcmp.eq.f32.partialorder %v85, %v93
  %vm96 = vcmp.eq.f32.partialorder %v86, %v93
  %vm97 = vcmp.eq.f32.partialorder %v87, %v93
  %vm98 = vcmp.eq.f32.partialorder %v88, %v93
  %vm99 = vcmp.eq.f32.partialorder %v89, %v93
  %vm100 = vcmp.eq.f32.partialorder %v90, %v93
  %v101 = vsel %vm94, 0.0, -1e+30
  %v102 = vsel %vm95, 0.0, -1e+30
  %v103 = vsel %vm96, 0.0, -1e+30
  %v104 = vsel %vm97, 0.0, -1e+30
  %v105 = vsel %vm98, 0.0, -1e+30
  %v106 = vsel %vm99, 0.0, -1e+30
  %v107 = vsel %vm100, 0.0, -1e+30
  %v108 = vld [vmem:[%s1] sm:$0xf]
  %v109 = vld [vmem:[%s1 + $0x4] sm:$0xf]
  %v110 = vld [vmem:[%s1 + $0x8] sm:$0xf]
  %v111 = vld [vmem:[%s1 + $0xc] sm:$0xf]
  %v112 = vpack.c.bf16 %v46, %v45
  %v113 = vpack.c.bf16 %v48, %v47
  %v114 = vpack.c.bf16 %v50, %v49
  %v115 = vpack.c.bf16 %v51, %v51
  %v116 = vld [vmem:[%s2] sm:$0x1]
  %v118 = vlaneseq
  %v119 = vshrl.u32 %v118, 7
  %v120 = vsub.s32 0, %v119
  %v121 = vrot.slane %v116, %v120
  %v127 = vunpack.c.l.b16 %v108
  %v128 = vunpack.c.l.b16 %v109
  %v129 = vunpack.c.l.b16 %v110
  %v130 = vunpack.c.l.b16 %v111
  %v131 = vpack.c.b16 %v128, %v127
  %v132 = vpack.c.b16 %v130, %v129
  %vm135 = vcmask 261120
  %v137 = vsel %vm135, %v112, 0
  %v140 = vsel %vm135, %v113, 0
  %v143 = vsel %vm135, %v114, 0
  %v146 = vsel %vm135, %v115, 0
  %148 = vmatprep.subr.bf16.mxu0 0
  %149 = vmatpush1.bf16.msra.mxu0 %v131
  %150 = vmatprep.subr.bf16.mxu0 0
  %151 = vmatpush1.bf16.msra.mxu0 %v132
  %152 = vmatprep.subr.bf16.mxu0 0
  %153 = vmatpush1.bf16.msra.mxu0 0
  %154 = vmatprep.subr.bf16.mxu0 0
  %155 = vmatpush1.bf16.msra.mxu0 0
  %156 = vmatprep.subr.bf16.mxu0 0
  %157 = vmatpush1.bf16.msra.mxu0 0
  %158 = vmatprep.subr.bf16.mxu0 0
  %159 = vmatpush1.bf16.msra.mxu0 0
  %160 = vmatprep.subr.bf16.mxu0 0
  %161 = vmatpush1.bf16.msra.mxu0 0
  %162 = vmatprep.subr.bf16.mxu0 0
  %163 = vmatpush1.bf16.msra.mxu0 0
  %164 = vmatprep.subr.bf16.mxu0 0
  %165 = vmatpush1.bf16.msra.mxu0 0
  %166 = vmatprep.subr.bf16.mxu0 0
  %167 = vmatpush1.bf16.msra.mxu0 0
  %168 = vmatprep.subr.bf16.mxu0 0
  %169 = vmatpush1.bf16.msra.mxu0 0
  %170 = vmatprep.subr.bf16.mxu0 0
  %171 = vmatpush1.bf16.msra.mxu0 0
  %172 = vmatprep.subr.bf16.mxu0 0
  %173 = vmatpush1.bf16.msra.mxu0 0
  %174 = vmatprep.subr.bf16.mxu0 0
  %175 = vmatpush1.bf16.msra.mxu0 0
  %176 = vmatprep.subr.bf16.mxu0 0
  %177 = vmatpush1.bf16.msra.mxu0 0
  %178 = vmatprep.subr.bf16.mxu0 0
  %179 = vmatpush1.bf16.msra.mxu0 0
  %180 = vmatprep.mubr.bf16.mxu0 0
  %181 = vmatmul.mubr.bf16.gmra.mrb[0].mxu0 %v137
  %v182 = vpop.f32.mrb[0].mxu0
  %v183 = vadd.f32 %v121, %v182
  %v184 = vpop.f32.mrb[0].mxu0
  %v185 = vpop.f32.mrb[0].mxu0
  %v186 = vadd.f32 %v121, %v185
  %v187 = vpop.f32.mrb[0].mxu0
  %188 = vmatprep.mubr.bf16.mxu0 0
  %189 = vmatmul.mubr.bf16.gmra.mrb[0].mxu0 %v140
  %v190 = vpop.f32.mrb[0].mxu0
  %v191 = vadd.f32 %v121, %v190
  %v192 = vpop.f32.mrb[0].mxu0
  %v193 = vpop.f32.mrb[0].mxu0
  %v194 = vadd.f32 %v121, %v193
  %v195 = vpop.f32.mrb[0].mxu0
  %196 = vmatprep.mubr.bf16.mxu0 0
  %197 = vmatmul.mubr.bf16.gmra.mrb[0].mxu0 %v143
  %v198 = vpop.f32.mrb[0].mxu0
  %v199 = vadd.f32 %v121, %v198
  %v200 = vpop.f32.mrb[0].mxu0
  %v201 = vpop.f32.mrb[0].mxu0
  %v202 = vadd.f32 %v121, %v201
  %v203 = vpop.f32.mrb[0].mxu0
  %204 = vmatprep.mubr.bf16.mxu0 0
  %205 = vmatmul.mubr.bf16.gmra.mrb[0].mxu0 %v146
  %v206 = vpop.f32.mrb[0].mxu0
  %v207 = vadd.f32 %v121, %v206
  %v208 = vpop.f32.mrb[0].mxu0
  %v209 = vpop.f32.mrb[0].mxu0
  %v210 = vpop.f32.mrb[0].mxu0
  %211 = vdwg.mxu0
  %v212 = vpack.c.bf16 %v186, %v183
  %v213 = vpack.c.bf16 %v194, %v191
  %v214 = vpack.c.bf16 %v202, %v199
  %v215 = vpack.c.bf16 %v207, %v207
  %220 = vrot.lane.b32.xlu0 %v212, 96
  %v221 = vpop.permute.xlu0 %220
  %222 = vrot.lane.b32.xlu0 %v213, 96
  %v223 = vpop.permute.xlu0 %222
  %224 = vrot.lane.b32.xlu0 %v214, 96
  %v225 = vpop.permute.xlu0 %224
  %226 = vrot.lane.b32.xlu0 %v215, 96
  %v227 = vpop.permute.xlu0 %226
  %vm228 = vcmask 64512
  %v230 = vsel %vm228, %v212, 0
  %v233 = vsel %vm228, %v213, 0
  %v236 = vsel %vm228, %v214, 0
  %v239 = vsel %vm228, %v215, 0
  %v242 = vsel %vm228, %v221, 0
  %v245 = vsel %vm228, %v223, 0
  %v248 = vsel %vm228, %v225, 0
  %v251 = vsel %vm228, %v227, 0
  %253 = vmatprep.subr.bf16.mxu0 0
  %254 = vmatpush1.bf16.xpose.msra.mxu0 %v242
  %255 = vmatprep.subr.bf16.mxu0 0
  %256 = vmatpush1.bf16.xpose.msra.mxu0 %v245
  %257 = vmatprep.subr.bf16.mxu0 0
  %258 = vmatpush1.bf16.xpose.msra.mxu0 %v248
  %259 = vmatprep.subr.bf16.mxu0 0
  %260 = vmatpush1.bf16.xpose.msra.mxu0 %v251
  %261 = vmatprep.subr.bf16.mxu0 0
  %262 = vmatpush1.bf16.xpose.msra.mxu0 0
  %263 = vmatprep.subr.bf16.mxu0 0
  %264 = vmatpush1.bf16.xpose.msra.mxu0 0
  %265 = vmatprep.subr.bf16.mxu0 0
  %266 = vmatpush1.bf16.xpose.msra.mxu0 0
  %267 = vmatprep.subr.bf16.mxu0 0
  %268 = vmatpush1.bf16.xpose.msra.mxu0 0
  %269 = vmatprep.subr.bf16.mxu0 0
  %270 = vmatpush1.bf16.xpose.msra.mxu0 0
  %271 = vmatprep.subr.bf16.mxu0 0
  %272 = vmatpush1.bf16.xpose.msra.mxu0 0
  %273 = vmatprep.subr.bf16.mxu0 0
  %274 = vmatpush1.bf16.xpose.msra.mxu0 0
  %275 = vmatprep.subr.bf16.mxu0 0
  %276 = vmatpush1.bf16.xpose.msra.mxu0 0
  %277 = vmatprep.subr.bf16.mxu0 0
  %278 = vmatpush1.bf16.xpose.msra.mxu0 0
  %279 = vmatprep.subr.bf16.mxu0 0
  %280 = vmatpush1.bf16.xpose.msra.mxu0 0
  %281 = vmatprep.subr.bf16.mxu0 0
  %282 = vmatpush1.bf16.xpose.msra.mxu0 0
  %283 = vmatprep.subr.bf16.mxu0 0
  %284 = vmatpush1.bf16.xpose.msra.mxu0 0
  %285 = vmatprep.mubr.bf16.mxu0 0
  %286 = vmatmul.mubr.bf16.gmra.mrb[0].mxu0 %v230
  %v287 = vpop.f32.mrb[0].mxu0
  %v288 = vadd.f32 0.0, %v287
  %v289 = vpop.f32.mrb[0].mxu0
  %v290 = vpop.f32.mrb[0].mxu0
  %v291 = vadd.f32 0.0, %v290
  %v292 = vpop.f32.mrb[0].mxu0
  %293 = vmatprep.mubr.bf16.mxu0 0
  %294 = vmatmul.mubr.bf16.gmra.mrb[0].mxu0 %v233
  %v295 = vpop.f32.mrb[0].mxu0
  %v296 = vadd.f32 0.0, %v295
  %v297 = vpop.f32.mrb[0].mxu0
  %v298 = vpop.f32.mrb[0].mxu0
  %v299 = vadd.f32 0.0, %v298
  %v300 = vpop.f32.mrb[0].mxu0
  %301 = vmatprep.mubr.bf16.mxu0 0
  %302 = vmatmul.mubr.bf16.gmra.mrb[0].mxu0 %v236
  %v303 = vpop.f32.mrb[0].mxu0
  %v304 = vadd.f32 0.0, %v303
  %v305 = vpop.f32.mrb[0].mxu0
  %v306 = vpop.f32.mrb[0].mxu0
  %v307 = vadd.f32 0.0, %v306
  %v308 = vpop.f32.mrb[0].mxu0
  %309 = vmatprep.mubr.bf16.mxu0 0
  %310 = vmatmul.mubr.bf16.gmra.mrb[0].mxu0 %v239
  %v311 = vpop.f32.mrb[0].mxu0
  %v312 = vadd.f32 0.0, %v311
  %v313 = vpop.f32.mrb[0].mxu0
  %v314 = vpop.f32.mrb[0].mxu0
  %v315 = vpop.f32.mrb[0].mxu0
  %316 = vdwg.mxu0
  %v317 = vmul.f32 %v288, 0.35355338
  %v318 = vmul.f32 %v291, 0.35355338
  %v319 = vmul.f32 %v296, 0.35355338
  %v320 = vmul.f32 %v299, 0.35355338
  %v321 = vmul.f32 %v304, 0.35355338
  %v322 = vmul.f32 %v307, 0.35355338
  %v323 = vmul.f32 %v312, 0.35355338
  %v324 = vadd.f32 %v317, %v101
  %v325 = vadd.f32 %v318, %v102
  %v326 = vadd.f32 %v319, %v103
  %v327 = vadd.f32 %v320, %v104
  %v328 = vadd.f32 %v321, %v105
  %v329 = vadd.f32 %v322, %v106
  %v330 = vadd.f32 %v323, %v107
  %vm331 = vcmask 457728
  %v332 = vsel %vm331, %v324, -inf
  %333 = vmax.xlane.f32.xlu0 %v332
  %v334 = vpop.xlane.xlu0 %333
  %v335 = vsel %vm331, %v325, -inf
  %336 = vmax.xlane.f32.xlu0 %v335
  %v337 = vpop.xlane.xlu0 %336
  %v338 = vsel %vm331, %v326, -inf
  %339 = vmax.xlane.f32.xlu0 %v338
  %v340 = vpop.xlane.xlu0 %339
  %v341 = vsel %vm331, %v327, -inf
  %342 = vmax.xlane.f32.xlu0 %v341
  %v343 = vpop.xlane.xlu0 %342
  %v344 = vsel %vm331, %v328, -inf
  %345 = vmax.xlane.f32.xlu0 %v344
  %v346 = vpop.xlane.xlu0 %345
  %v347 = vsel %vm331, %v329, -inf
  %348 = vmax.xlane.f32.xlu0 %v347
  %v349 = vpop.xlane.xlu0 %348
  %v350 = vsel %vm331, %v330, -inf
  %351 = vmax.xlane.f32.xlu0 %v350
  %v352 = vpop.xlane.xlu0 %351
  %v353 = vsub.f32 %v324, %v334
  %v354 = vsub.f32 %v325, %v337
  %v355 = vsub.f32 %v326, %v340
  %v356 = vsub.f32 %v327, %v343
  %v357 = vsub.f32 %v328, %v346
  %v358 = vsub.f32 %v329, %v349
  %v359 = vsub.f32 %v330, %v352
  %v360 = vmul.f32 %v353, 1.442695
  %v361 = vpow.pop %v360
  %v362 = vmul.f32 %v354, 1.442695
  %v363 = vpow.pop %v362
  %v364 = vmul.f32 %v355, 1.442695
  %v365 = vpow.pop %v364
  %v366 = vmul.f32 %v356, 1.442695
  %v367 = vpow.pop %v366
  %v368 = vmul.f32 %v357, 1.442695
  %v369 = vpow.pop %v368
  %v370 = vmul.f32 %v358, 1.442695
  %v371 = vpow.pop %v370
  %v372 = vmul.f32 %v359, 1.442695
  %v373 = vpow.pop %v372
  %v374 = vsel %vm331, %v361, 0.0
  %375 = vadd.xlane.f32.xlu0 %v374
  %v376 = vpop.xlane.xlu0 %375
  %v377 = vsel %vm331, %v363, 0.0
  %378 = vadd.xlane.f32.xlu0 %v377
  %v379 = vpop.xlane.xlu0 %378
  %v380 = vsel %vm331, %v365, 0.0
  %381 = vadd.xlane.f32.xlu0 %v380
  %v382 = vpop.xlane.xlu0 %381
  %v383 = vsel %vm331, %v367, 0.0
  %384 = vadd.xlane.f32.xlu0 %v383
  %v385 = vpop.xlane.xlu0 %384
  %v386 = vsel %vm331, %v369, 0.0
  %387 = vadd.xlane.f32.xlu0 %v386
  %v388 = vpop.xlane.xlu0 %387
  %v389 = vsel %vm331, %v371, 0.0
  %390 = vadd.xlane.f32.xlu0 %v389
  %v391 = vpop.xlane.xlu0 %390
  %v392 = vsel %vm331, %v373, 0.0
  %393 = vadd.xlane.f32.xlu0 %v392
  %v394 = vpop.xlane.xlu0 %393
  %v395 = vrcp.pop %v376
  %v396 = vrcp.pop %v379
  %v397 = vrcp.pop %v382
  %v398 = vrcp.pop %v385
  %v399 = vrcp.pop %v388
  %v400 = vrcp.pop %v391
  %v401 = vrcp.pop %v394
  %v402 = vmul.f32 %v361, %v395
  %v403 = vmul.f32 %v363, %v396
  %v404 = vmul.f32 %v365, %v397
  %v405 = vmul.f32 %v367, %v398
  %v406 = vmul.f32 %v369, %v399
  %v407 = vmul.f32 %v371, %v400
  %v408 = vmul.f32 %v373, %v401
  %v409 = vpack.c.bf16 %v403, %v402
  %v410 = vpack.c.bf16 %v405, %v404
  %v411 = vpack.c.bf16 %v407, %v406
  %v412 = vpack.c.bf16 %v408, %v408
  %413 = vrot.lane.b32.xlu0 %v212, 64
  %v414 = vpop.permute.xlu0 %413
  %415 = vrot.lane.b32.xlu0 %v213, 64
  %v416 = vpop.permute.xlu0 %415
  %417 = vrot.lane.b32.xlu0 %v214, 64
  %v418 = vpop.permute.xlu0 %417
  %419 = vrot.lane.b32.xlu0 %v215, 64
  %v420 = vpop.permute.xlu0 %419
  %v425 = vsel %vm331, %v409, 0
  %v428 = vsel %vm331, %v410, 0
  %v431 = vsel %vm331, %v411, 0
  %v434 = vsel %vm331, %v412, 0
  %vm436 = vcmask 1043456
  %v438 = vsel %vm436, %v420, 0
  %440 = vmatprep.subr.bf16.mxu0 0
  %441 = vmatpush1.bf16.msra.mxu0 %v414
  %442 = vmatprep.subr.bf16.mxu0 0
  %443 = vmatpush1.bf16.msra.mxu0 %v416
  %444 = vmatprep.subr.bf16.mxu0 0
  %445 = vmatpush1.bf16.msra.mxu0 %v418
  %446 = vmatprep.subr.bf16.mxu0 0
  %447 = vmatpush1.bf16.msra.mxu0 %v438
  %448 = vmatprep.subr.bf16.mxu0 0
  %449 = vmatpush1.bf16.msra.mxu0 0
  %450 = vmatprep.subr.bf16.mxu0 0
  %451 = vmatpush1.bf16.msra.mxu0 0
  %452 = vmatprep.subr.bf16.mxu0 0
  %453 = vmatpush1.bf16.msra.mxu0 0
  %454 = vmatprep.subr.bf16.mxu0 0
  %455 = vmatpush1.bf16.msra.mxu0 0
  %456 = vmatprep.subr.bf16.mxu0 0
  %457 = vmatpush1.bf16.msra.mxu0 0
  %458 = vmatprep.subr.bf16.mxu0 0
  %459 = vmatpush1.bf16.msra.mxu0 0
  %460 = vmatprep.subr.bf16.mxu0 0
  %461 = vmatpush1.bf16.msra.mxu0 0
  %462 = vmatprep.subr.bf16.mxu0 0
  %463 = vmatpush1.bf16.msra.mxu0 0
  %464 = vmatprep.subr.bf16.mxu0 0
  %465 = vmatpush1.bf16.msra.mxu0 0
  %466 = vmatprep.subr.bf16.mxu0 0
  %467 = vmatpush1.bf16.msra.mxu0 0
  %468 = vmatprep.subr.bf16.mxu0 0
  %469 = vmatpush1.bf16.msra.mxu0 0
  %470 = vmatprep.subr.bf16.mxu0 0
  %471 = vmatpush1.bf16.msra.mxu0 0
  %472 = vmatprep.mubr.bf16.mxu0 0
  %473 = vmatmul.mubr.bf16.gmra.mrb[0].mxu0 %v425
  %v474 = vpop.f32.mrb[0].mxu0
  %v475 = vadd.f32 0.0, %v474
  %v476 = vpop.f32.mrb[0].mxu0
  %v477 = vpop.f32.mrb[0].mxu0
  %v478 = vadd.f32 0.0, %v477
  %v479 = vpop.f32.mrb[0].mxu0
  %480 = vmatprep.mubr.bf16.mxu0 0
  %481 = vmatmul.mubr.bf16.gmra.mrb[0].mxu0 %v428
  %v482 = vpop.f32.mrb[0].mxu0
  %v483 = vadd.f32 0.0, %v482
  %v484 = vpop.f32.mrb[0].mxu0
  %v485 = vpop.f32.mrb[0].mxu0
  %v486 = vadd.f32 0.0, %v485
  %v487 = vpop.f32.mrb[0].mxu0
  %488 = vmatprep.mubr.bf16.mxu0 0
  %489 = vmatmul.mubr.bf16.gmra.mrb[0].mxu0 %v431
  %v490 = vpop.f32.mrb[0].mxu0
  %v491 = vadd.f32 0.0, %v490
  %v492 = vpop.f32.mrb[0].mxu0
  %v493 = vpop.f32.mrb[0].mxu0
  %v494 = vadd.f32 0.0, %v493
  %v495 = vpop.f32.mrb[0].mxu0
  %496 = vmatprep.mubr.bf16.mxu0 0
  %497 = vmatmul.mubr.bf16.gmra.mrb[0].mxu0 %v434
  %v498 = vpop.f32.mrb[0].mxu0
  %v499 = vadd.f32 0.0, %v498
  %v500 = vpop.f32.mrb[0].mxu0
  %v501 = vpop.f32.mrb[0].mxu0
  %v502 = vpop.f32.mrb[0].mxu0
  %503 = vdwg.mxu0
  %504 = vrot.lane.b32.xlu0 %v212, 120
  %v505 = vpop.permute.xlu0 %504
  %506 = vrot.lane.b32.xlu0 %v213, 120
  %v507 = vpop.permute.xlu0 %506
  %508 = vrot.lane.b32.xlu0 %v214, 120
  %v509 = vpop.permute.xlu0 %508
  %510 = vrot.lane.b32.xlu0 %v215, 120
  %v511 = vpop.permute.xlu0 %510
  %512 = vrot.lane.b32.xlu0 %v212, 88
  %v513 = vpop.permute.xlu0 %512
  %514 = vrot.lane.b32.xlu0 %v213, 88
  %v515 = vpop.permute.xlu0 %514
  %516 = vrot.lane.b32.xlu0 %v214, 88
  %v517 = vpop.permute.xlu0 %516
  %518 = vrot.lane.b32.xlu0 %v215, 88
  %v519 = vpop.permute.xlu0 %518
  %v521 = vsel %vm228, %v505, 0
  %v524 = vsel %vm228, %v507, 0
  %v527 = vsel %vm228, %v509, 0
  %v530 = vsel %vm228, %v511, 0
  %v533 = vsel %vm228, %v513, 0
  %v536 = vsel %vm228, %v515, 0
  %v539 = vsel %vm228, %v517, 0
  %v542 = vsel %vm228, %v519, 0
  %544 = vmatprep.subr.bf16.mxu0 0
  %545 = vmatpush1.bf16.xpose.msra.mxu0 %v533
  %546 = vmatprep.subr.bf16.mxu0 0
  %547 = vmatpush1.bf16.xpose.msra.mxu0 %v536
  %548 = vmatprep.subr.bf16.mxu0 0
  %549 = vmatpush1.bf16.xpose.msra.mxu0 %v539
  %550 = vmatprep.subr.bf16.mxu0 0
  %551 = vmatpush1.bf16.xpose.msra.mxu0 %v542
  %552 = vmatprep.subr.bf16.mxu0 0
  %553 = vmatpush1.bf16.xpose.msra.mxu0 0
  %554 = vmatprep.subr.bf16.mxu0 0
  %555 = vmatpush1.bf16.xpose.msra.mxu0 0
  %556 = vmatprep.subr.bf16.mxu0 0
  %557 = vmatpush1.bf16.xpose.msra.mxu0 0
  %558 = vmatprep.subr.bf16.mxu0 0
  %559 = vmatpush1.bf16.xpose.msra.mxu0 0
  %560 = vmatprep.subr.bf16.mxu0 0
  %561 = vmatpush1.bf16.xpose.msra.mxu0 0
  %562 = vmatprep.subr.bf16.mxu0 0
  %563 = vmatpush1.bf16.xpose.msra.mxu0 0
  %564 = vmatprep.subr.bf16.mxu0 0
  %565 = vmatpush1.bf16.xpose.msra.mxu0 0
  %566 = vmatprep.subr.bf16.mxu0 0
  %567 = vmatpush1.bf16.xpose.msra.mxu0 0
  %568 = vmatprep.subr.bf16.mxu0 0
  %569 = vmatpush1.bf16.xpose.msra.mxu0 0
  %570 = vmatprep.subr.bf16.mxu0 0
  %571 = vmatpush1.bf16.xpose.msra.mxu0 0
  %572 = vmatprep.subr.bf16.mxu0 0
  %573 = vmatpush1.bf16.xpose.msra.mxu0 0
  %574 = vmatprep.subr.bf16.mxu0 0
  %575 = vmatpush1.bf16.xpose.msra.mxu0 0
  %576 = vmatprep.mubr.bf16.mxu0 0
  %577 = vmatmul.mubr.bf16.gmra.mrb[0].mxu0 %v521
  %v578 = vpop.f32.mrb[0].mxu0
  %v579 = vadd.f32 0.0, %v578
  %v580 = vpop.f32.mrb[0].mxu0
  %v581 = vpop.f32.mrb[0].mxu0
  %v582 = vadd.f32 0.0, %v581
  %v583 = vpop.f32.mrb[0].mxu0
  %584 = vmatprep.mubr.bf16.mxu0 0
  %585 = vmatmul.mubr.bf16.gmra.mrb[0].mxu0 %v524
  %v586 = vpop.f32.mrb[0].mxu0
  %v587 = vadd.f32 0.0, %v586
  %v588 = vpop.f32.mrb[0].mxu0
  %v589 = vpop.f32.mrb[0].mxu0
  %v590 = vadd.f32 0.0, %v589
  %v591 = vpop.f32.mrb[0].mxu0
  %592 = vmatprep.mubr.bf16.mxu0 0
  %593 = vmatmul.mubr.bf16.gmra.mrb[0].mxu0 %v527
  %v594 = vpop.f32.mrb[0].mxu0
  %v595 = vadd.f32 0.0, %v594
  %v596 = vpop.f32.mrb[0].mxu0
  %v597 = vpop.f32.mrb[0].mxu0
  %v598 = vadd.f32 0.0, %v597
  %v599 = vpop.f32.mrb[0].mxu0
  %600 = vmatprep.mubr.bf16.mxu0 0
  %601 = vmatmul.mubr.bf16.gmra.mrb[0].mxu0 %v530
  %v602 = vpop.f32.mrb[0].mxu0
  %v603 = vadd.f32 0.0, %v602
  %v604 = vpop.f32.mrb[0].mxu0
  %v605 = vpop.f32.mrb[0].mxu0
  %v606 = vpop.f32.mrb[0].mxu0
  %607 = vdwg.mxu0
  %v608 = vmul.f32 %v579, 0.35355338
  %v609 = vmul.f32 %v582, 0.35355338
  %v610 = vmul.f32 %v587, 0.35355338
  %v611 = vmul.f32 %v590, 0.35355338
  %v612 = vmul.f32 %v595, 0.35355338
  %v613 = vmul.f32 %v598, 0.35355338
  %v614 = vmul.f32 %v603, 0.35355338
  %v615 = vadd.f32 %v608, %v101
  %v616 = vadd.f32 %v609, %v102
  %v617 = vadd.f32 %v610, %v103
  %v618 = vadd.f32 %v611, %v104
  %v619 = vadd.f32 %v612, %v105
  %v620 = vadd.f32 %v613, %v106
  %v621 = vadd.f32 %v614, %v107
  %v622 = vsel %vm331, %v615, -inf
  %623 = vmax.xlane.f32.xlu0 %v622
  %v624 = vpop.xlane.xlu0 %623
  %v625 = vsel %vm331, %v616, -inf
  %626 = vmax.xlane.f32.xlu0 %v625
  %v627 = vpop.xlane.xlu0 %626
  %v628 = vsel %vm331, %v617, -inf
  %629 = vmax.xlane.f32.xlu0 %v628
  %v630 = vpop.xlane.xlu0 %629
  %v631 = vsel %vm331, %v618, -inf
  %632 = vmax.xlane.f32.xlu0 %v631
  %v633 = vpop.xlane.xlu0 %632
  %v634 = vsel %vm331, %v619, -inf
  %635 = vmax.xlane.f32.xlu0 %v634
  %v636 = vpop.xlane.xlu0 %635
  %v637 = vsel %vm331, %v620, -inf
  %638 = vmax.xlane.f32.xlu0 %v637
  %v639 = vpop.xlane.xlu0 %638
  %v640 = vsel %vm331, %v621, -inf
  %641 = vmax.xlane.f32.xlu0 %v640
  %v642 = vpop.xlane.xlu0 %641
  %v643 = vsub.f32 %v615, %v624
  %v644 = vsub.f32 %v616, %v627
  %v645 = vsub.f32 %v617, %v630
  %v646 = vsub.f32 %v618, %v633
  %v647 = vsub.f32 %v619, %v636
  %v648 = vsub.f32 %v620, %v639
  %v649 = vsub.f32 %v621, %v642
  %v650 = vmul.f32 %v643, 1.442695
  %v651 = vpow.pop %v650
  %v652 = vmul.f32 %v644, 1.442695
  %v653 = vpow.pop %v652
  %v654 = vmul.f32 %v645, 1.442695
  %v655 = vpow.pop %v654
  %v656 = vmul.f32 %v646, 1.442695
  %v657 = vpow.pop %v656
  %v658 = vmul.f32 %v647, 1.442695
  %v659 = vpow.pop %v658
  %v660 = vmul.f32 %v648, 1.442695
  %v661 = vpow.pop %v660
  %v662 = vmul.f32 %v649, 1.442695
  %v663 = vpow.pop %v662
  %v664 = vsel %vm331, %v651, 0.0
  %665 = vadd.xlane.f32.xlu0 %v664
  %v666 = vpop.xlane.xlu0 %665
  %v667 = vsel %vm331, %v653, 0.0
  %668 = vadd.xlane.f32.xlu0 %v667
  %v669 = vpop.xlane.xlu0 %668
  %v670 = vsel %vm331, %v655, 0.0
  %671 = vadd.xlane.f32.xlu0 %v670
  %v672 = vpop.xlane.xlu0 %671
  %v673 = vsel %vm331, %v657, 0.0
  %674 = vadd.xlane.f32.xlu0 %v673
  %v675 = vpop.xlane.xlu0 %674
  %v676 = vsel %vm331, %v659, 0.0
  %677 = vadd.xlane.f32.xlu0 %v676
  %v678 = vpop.xlane.xlu0 %677
  %v679 = vsel %vm331, %v661, 0.0
  %680 = vadd.xlane.f32.xlu0 %v679
  %v681 = vpop.xlane.xlu0 %680
  %v682 = vsel %vm331, %v663, 0.0
  %683 = vadd.xlane.f32.xlu0 %v682
  %v684 = vpop.xlane.xlu0 %683
  %v685 = vrcp.pop %v666
  %v686 = vrcp.pop %v669
  %v687 = vrcp.pop %v672
  %v688 = vrcp.pop %v675
  %v689 = vrcp.pop %v678
  %v690 = vrcp.pop %v681
  %v691 = vrcp.pop %v684
  %v692 = vmul.f32 %v651, %v685
  %v693 = vmul.f32 %v653, %v686
  %v694 = vmul.f32 %v655, %v687
  %v695 = vmul.f32 %v657, %v688
  %v696 = vmul.f32 %v659, %v689
  %v697 = vmul.f32 %v661, %v690
  %v698 = vmul.f32 %v663, %v691
  %v699 = vpack.c.bf16 %v693, %v692
  %v700 = vpack.c.bf16 %v695, %v694
  %v701 = vpack.c.bf16 %v697, %v696
  %v702 = vpack.c.bf16 %v698, %v698
  %703 = vrot.lane.b32.xlu0 %v212, 56
  %v704 = vpop.permute.xlu0 %703
  %705 = vrot.lane.b32.xlu0 %v213, 56
  %v706 = vpop.permute.xlu0 %705
  %707 = vrot.lane.b32.xlu0 %v214, 56
  %v708 = vpop.permute.xlu0 %707
  %709 = vrot.lane.b32.xlu0 %v215, 56
  %v710 = vpop.permute.xlu0 %709
  %v715 = vsel %vm331, %v699, 0
  %v718 = vsel %vm331, %v700, 0
  %v721 = vsel %vm331, %v701, 0
  %v724 = vsel %vm331, %v702, 0
  %v727 = vsel %vm436, %v710, 0
  %729 = vmatprep.subr.bf16.mxu0 0
  %730 = vmatpush1.bf16.msra.mxu0 %v704
  %731 = vmatprep.subr.bf16.mxu0 0
  %732 = vmatpush1.bf16.msra.mxu0 %v706
  %733 = vmatprep.subr.bf16.mxu0 0
  %734 = vmatpush1.bf16.msra.mxu0 %v708
  %735 = vmatprep.subr.bf16.mxu0 0
  %736 = vmatpush1.bf16.msra.mxu0 %v727
  %737 = vmatprep.subr.bf16.mxu0 0
  %738 = vmatpush1.bf16.msra.mxu0 0
  %739 = vmatprep.subr.bf16.mxu0 0
  %740 = vmatpush1.bf16.msra.mxu0 0
  %741 = vmatprep.subr.bf16.mxu0 0
  %742 = vmatpush1.bf16.msra.mxu0 0
  %743 = vmatprep.subr.bf16.mxu0 0
  %744 = vmatpush1.bf16.msra.mxu0 0
  %745 = vmatprep.subr.bf16.mxu0 0
  %746 = vmatpush1.bf16.msra.mxu0 0
  %747 = vmatprep.subr.bf16.mxu0 0
  %748 = vmatpush1.bf16.msra.mxu0 0
  %749 = vmatprep.subr.bf16.mxu0 0
  %750 = vmatpush1.bf16.msra.mxu0 0
  %751 = vmatprep.subr.bf16.mxu0 0
  %752 = vmatpush1.bf16.msra.mxu0 0
  %753 = vmatprep.subr.bf16.mxu0 0
  %754 = vmatpush1.bf16.msra.mxu0 0
  %755 = vmatprep.subr.bf16.mxu0 0
  %756 = vmatpush1.bf16.msra.mxu0 0
  %757 = vmatprep.subr.bf16.mxu0 0
  %758 = vmatpush1.bf16.msra.mxu0 0
  %759 = vmatprep.subr.bf16.mxu0 0
  %760 = vmatpush1.bf16.msra.mxu0 0
  %761 = vmatprep.mubr.bf16.mxu0 0
  %762 = vmatmul.mubr.bf16.gmra.mrb[0].mxu0 %v715
  %v763 = vpop.f32.mrb[0].mxu0
  %v764 = vadd.f32 0.0, %v763
  %v765 = vpop.f32.mrb[0].mxu0
  %v766 = vpop.f32.mrb[0].mxu0
  %v767 = vadd.f32 0.0, %v766
  %v768 = vpop.f32.mrb[0].mxu0
  %769 = vmatprep.mubr.bf16.mxu0 0
  %770 = vmatmul.mubr.bf16.gmra.mrb[0].mxu0 %v718
  %v771 = vpop.f32.mrb[0].mxu0
  %v772 = vadd.f32 0.0, %v771
  %v773 = vpop.f32.mrb[0].mxu0
  %v774 = vpop.f32.mrb[0].mxu0
  %v775 = vadd.f32 0.0, %v774
  %v776 = vpop.f32.mrb[0].mxu0
  %777 = vmatprep.mubr.bf16.mxu0 0
  %778 = vmatmul.mubr.bf16.gmra.mrb[0].mxu0 %v721
  %v779 = vpop.f32.mrb[0].mxu0
  %v780 = vadd.f32 0.0, %v779
  %v781 = vpop.f32.mrb[0].mxu0
  %v782 = vpop.f32.mrb[0].mxu0
  %v783 = vadd.f32 0.0, %v782
  %v784 = vpop.f32.mrb[0].mxu0
  %785 = vmatprep.mubr.bf16.mxu0 0
  %786 = vmatmul.mubr.bf16.gmra.mrb[0].mxu0 %v724
  %v787 = vpop.f32.mrb[0].mxu0
  %v788 = vadd.f32 0.0, %v787
  %v789 = vpop.f32.mrb[0].mxu0
  %v790 = vpop.f32.mrb[0].mxu0
  %v791 = vpop.f32.mrb[0].mxu0
  %792 = vdwg.mxu0
  %793 = vrot.lane.b32.xlu0 %v212, 112
  %v794 = vpop.permute.xlu0 %793
  %795 = vrot.lane.b32.xlu0 %v213, 112
  %v796 = vpop.permute.xlu0 %795
  %797 = vrot.lane.b32.xlu0 %v214, 112
  %v798 = vpop.permute.xlu0 %797
  %799 = vrot.lane.b32.xlu0 %v215, 112
  %v800 = vpop.permute.xlu0 %799
  %801 = vrot.lane.b32.xlu0 %v212, 80
  %v802 = vpop.permute.xlu0 %801
  %803 = vrot.lane.b32.xlu0 %v213, 80
  %v804 = vpop.permute.xlu0 %803
  %805 = vrot.lane.b32.xlu0 %v214, 80
  %v806 = vpop.permute.xlu0 %805
  %807 = vrot.lane.b32.xlu0 %v215, 80
  %v808 = vpop.permute.xlu0 %807
  %v810 = vsel %vm228, %v794, 0
  %v813 = vsel %vm228, %v796, 0
  %v816 = vsel %vm228, %v798, 0
  %v819 = vsel %vm228, %v800, 0
  %v822 = vsel %vm228, %v802, 0
  %v825 = vsel %vm228, %v804, 0
  %v828 = vsel %vm228, %v806, 0
  %v831 = vsel %vm228, %v808, 0
  %833 = vmatprep.subr.bf16.mxu0 0
  %834 = vmatpush1.bf16.xpose.msra.mxu0 %v822
  %835 = vmatprep.subr.bf16.mxu0 0
  %836 = vmatpush1.bf16.xpose.msra.mxu0 %v825
  %837 = vmatprep.subr.bf16.mxu0 0
  %838 = vmatpush1.bf16.xpose.msra.mxu0 %v828
  %839 = vmatprep.subr.bf16.mxu0 0
  %840 = vmatpush1.bf16.xpose.msra.mxu0 %v831
  %841 = vmatprep.subr.bf16.mxu0 0
  %842 = vmatpush1.bf16.xpose.msra.mxu0 0
  %843 = vmatprep.subr.bf16.mxu0 0
  %844 = vmatpush1.bf16.xpose.msra.mxu0 0
  %845 = vmatprep.subr.bf16.mxu0 0
  %846 = vmatpush1.bf16.xpose.msra.mxu0 0
  %847 = vmatprep.subr.bf16.mxu0 0
  %848 = vmatpush1.bf16.xpose.msra.mxu0 0
  %849 = vmatprep.subr.bf16.mxu0 0
  %850 = vmatpush1.bf16.xpose.msra.mxu0 0
  %851 = vmatprep.subr.bf16.mxu0 0
  %852 = vmatpush1.bf16.xpose.msra.mxu0 0
  %853 = vmatprep.subr.bf16.mxu0 0
  %854 = vmatpush1.bf16.xpose.msra.mxu0 0
  %855 = vmatprep.subr.bf16.mxu0 0
  %856 = vmatpush1.bf16.xpose.msra.mxu0 0
  %857 = vmatprep.subr.bf16.mxu0 0
  %858 = vmatpush1.bf16.xpose.msra.mxu0 0
  %859 = vmatprep.subr.bf16.mxu0 0
  %860 = vmatpush1.bf16.xpose.msra.mxu0 0
  %861 = vmatprep.subr.bf16.mxu0 0
  %862 = vmatpush1.bf16.xpose.msra.mxu0 0
  %863 = vmatprep.subr.bf16.mxu0 0
  %864 = vmatpush1.bf16.xpose.msra.mxu0 0
  %865 = vmatprep.mubr.bf16.mxu0 0
  %866 = vmatmul.mubr.bf16.gmra.mrb[0].mxu0 %v810
  %v867 = vpop.f32.mrb[0].mxu0
  %v868 = vadd.f32 0.0, %v867
  %v869 = vpop.f32.mrb[0].mxu0
  %v870 = vpop.f32.mrb[0].mxu0
  %v871 = vadd.f32 0.0, %v870
  %v872 = vpop.f32.mrb[0].mxu0
  %873 = vmatprep.mubr.bf16.mxu0 0
  %874 = vmatmul.mubr.bf16.gmra.mrb[0].mxu0 %v813
  %v875 = vpop.f32.mrb[0].mxu0
  %v876 = vadd.f32 0.0, %v875
  %v877 = vpop.f32.mrb[0].mxu0
  %v878 = vpop.f32.mrb[0].mxu0
  %v879 = vadd.f32 0.0, %v878
  %v880 = vpop.f32.mrb[0].mxu0
  %881 = vmatprep.mubr.bf16.mxu0 0
  %882 = vmatmul.mubr.bf16.gmra.mrb[0].mxu0 %v816
  %v883 = vpop.f32.mrb[0].mxu0
  %v884 = vadd.f32 0.0, %v883
  %v885 = vpop.f32.mrb[0].mxu0
  %v886 = vpop.f32.mrb[0].mxu0
  %v887 = vadd.f32 0.0, %v886
  %v888 = vpop.f32.mrb[0].mxu0
  %889 = vmatprep.mubr.bf16.mxu0 0
  %890 = vmatmul.mubr.bf16.gmra.mrb[0].mxu0 %v819
  %v891 = vpop.f32.mrb[0].mxu0
  %v892 = vadd.f32 0.0, %v891
  %v893 = vpop.f32.mrb[0].mxu0
  %v894 = vpop.f32.mrb[0].mxu0
  %v895 = vpop.f32.mrb[0].mxu0
  %896 = vdwg.mxu0
  %v897 = vmul.f32 %v868, 0.35355338
  %v898 = vmul.f32 %v871, 0.35355338
  %v899 = vmul.f32 %v876, 0.35355338
  %v900 = vmul.f32 %v879, 0.35355338
  %v901 = vmul.f32 %v884, 0.35355338
  %v902 = vmul.f32 %v887, 0.35355338
  %v903 = vmul.f32 %v892, 0.35355338
  %v904 = vadd.f32 %v897, %v101
  %v905 = vadd.f32 %v898, %v102
  %v906 = vadd.f32 %v899, %v103
  %v907 = vadd.f32 %v900, %v104
  %v908 = vadd.f32 %v901, %v105
  %v909 = vadd.f32 %v902, %v106
  %v910 = vadd.f32 %v903, %v107
  %v911 = vsel %vm331, %v904, -inf
  %912 = vmax.xlane.f32.xlu0 %v911
  %v913 = vpop.xlane.xlu0 %912
  %v914 = vsel %vm331, %v905, -inf
  %915 = vmax.xlane.f32.xlu0 %v914
  %v916 = vpop.xlane.xlu0 %915
  %v917 = vsel %vm331, %v906, -inf
  %918 = vmax.xlane.f32.xlu0 %v917
  %v919 = vpop.xlane.xlu0 %918
  %v920 = vsel %vm331, %v907, -inf
  %921 = vmax.xlane.f32.xlu0 %v920
  %v922 = vpop.xlane.xlu0 %921
  %v923 = vsel %vm331, %v908, -inf
  %924 = vmax.xlane.f32.xlu0 %v923
  %v925 = vpop.xlane.xlu0 %924
  %v926 = vsel %vm331, %v909, -inf
  %927 = vmax.xlane.f32.xlu0 %v926
  %v928 = vpop.xlane.xlu0 %927
  %v929 = vsel %vm331, %v910, -inf
  %930 = vmax.xlane.f32.xlu0 %v929
  %v931 = vpop.xlane.xlu0 %930
  %v932 = vsub.f32 %v904, %v913
  %v933 = vsub.f32 %v905, %v916
  %v934 = vsub.f32 %v906, %v919
  %v935 = vsub.f32 %v907, %v922
  %v936 = vsub.f32 %v908, %v925
  %v937 = vsub.f32 %v909, %v928
  %v938 = vsub.f32 %v910, %v931
  %v939 = vmul.f32 %v932, 1.442695
  %v940 = vpow.pop %v939
  %v941 = vmul.f32 %v933, 1.442695
  %v942 = vpow.pop %v941
  %v943 = vmul.f32 %v934, 1.442695
  %v944 = vpow.pop %v943
  %v945 = vmul.f32 %v935, 1.442695
  %v946 = vpow.pop %v945
  %v947 = vmul.f32 %v936, 1.442695
  %v948 = vpow.pop %v947
  %v949 = vmul.f32 %v937, 1.442695
  %v950 = vpow.pop %v949
  %v951 = vmul.f32 %v938, 1.442695
  %v952 = vpow.pop %v951
  %v953 = vsel %vm331, %v940, 0.0
  %954 = vadd.xlane.f32.xlu0 %v953
  %v955 = vpop.xlane.xlu0 %954
  %v956 = vsel %vm331, %v942, 0.0
  %957 = vadd.xlane.f32.xlu0 %v956
  %v958 = vpop.xlane.xlu0 %957
  %v959 = vsel %vm331, %v944, 0.0
  %960 = vadd.xlane.f32.xlu0 %v959
  %v961 = vpop.xlane.xlu0 %960
  %v962 = vsel %vm331, %v946, 0.0
  %963 = vadd.xlane.f32.xlu0 %v962
  %v964 = vpop.xlane.xlu0 %963
  %v965 = vsel %vm331, %v948, 0.0
  %966 = vadd.xlane.f32.xlu0 %v965
  %v967 = vpop.xlane.xlu0 %966
  %v968 = vsel %vm331, %v950, 0.0
  %969 = vadd.xlane.f32.xlu0 %v968
  %v970 = vpop.xlane.xlu0 %969
  %v971 = vsel %vm331, %v952, 0.0
  %972 = vadd.xlane.f32.xlu0 %v971
  %v973 = vpop.xlane.xlu0 %972
  %v974 = vrcp.pop %v955
  %v975 = vrcp.pop %v958
  %v976 = vrcp.pop %v961
  %v977 = vrcp.pop %v964
  %v978 = vrcp.pop %v967
  %v979 = vrcp.pop %v970
  %v980 = vrcp.pop %v973
  %v981 = vmul.f32 %v940, %v974
  %v982 = vmul.f32 %v942, %v975
  %v983 = vmul.f32 %v944, %v976
  %v984 = vmul.f32 %v946, %v977
  %v985 = vmul.f32 %v948, %v978
  %v986 = vmul.f32 %v950, %v979
  %v987 = vmul.f32 %v952, %v980
  %v988 = vpack.c.bf16 %v982, %v981
  %v989 = vpack.c.bf16 %v984, %v983
  %v990 = vpack.c.bf16 %v986, %v985
  %v991 = vpack.c.bf16 %v987, %v987
  %992 = vrot.lane.b32.xlu0 %v212, 48
  %v993 = vpop.permute.xlu0 %992
  %994 = vrot.lane.b32.xlu0 %v213, 48
  %v995 = vpop.permute.xlu0 %994
  %996 = vrot.lane.b32.xlu0 %v214, 48
  %v997 = vpop.permute.xlu0 %996
  %998 = vrot.lane.b32.xlu0 %v215, 48
  %v999 = vpop.permute.xlu0 %998
  %v1004 = vsel %vm331, %v988, 0
  %v1007 = vsel %vm331, %v989, 0
  %v1010 = vsel %vm331, %v990, 0
  %v1013 = vsel %vm331, %v991, 0
  %v1016 = vsel %vm436, %v999, 0
  %1018 = vmatprep.subr.bf16.mxu0 0
  %1019 = vmatpush1.bf16.msra.mxu0 %v993
  %1020 = vmatprep.subr.bf16.mxu0 0
  %1021 = vmatpush1.bf16.msra.mxu0 %v995
  %1022 = vmatprep.subr.bf16.mxu0 0
  %1023 = vmatpush1.bf16.msra.mxu0 %v997
  %1024 = vmatprep.subr.bf16.mxu0 0
  %1025 = vmatpush1.bf16.msra.mxu0 %v1016
  %1026 = vmatprep.subr.bf16.mxu0 0
  %1027 = vmatpush1.bf16.msra.mxu0 0
  %1028 = vmatprep.subr.bf16.mxu0 0
  %1029 = vmatpush1.bf16.msra.mxu0 0
  %1030 = vmatprep.subr.bf16.mxu0 0
  %1031 = vmatpush1.bf16.msra.mxu0 0
  %1032 = vmatprep.subr.bf16.mxu0 0
  %1033 = vmatpush1.bf16.msra.mxu0 0
  %1034 = vmatprep.subr.bf16.mxu0 0
  %1035 = vmatpush1.bf16.msra.mxu0 0
  %1036 = vmatprep.subr.bf16.mxu0 0
  %1037 = vmatpush1.bf16.msra.mxu0 0
  %1038 = vmatprep.subr.bf16.mxu0 0
  %1039 = vmatpush1.bf16.msra.mxu0 0
  %1040 = vmatprep.subr.bf16.mxu0 0
  %1041 = vmatpush1.bf16.msra.mxu0 0
  %1042 = vmatprep.subr.bf16.mxu0 0
  %1043 = vmatpush1.bf16.msra.mxu0 0
  %1044 = vmatprep.subr.bf16.mxu0 0
  %1045 = vmatpush1.bf16.msra.mxu0 0
  %1046 = vmatprep.subr.bf16.mxu0 0
  %1047 = vmatpush1.bf16.msra.mxu0 0
  %1048 = vmatprep.subr.bf16.mxu0 0
  %1049 = vmatpush1.bf16.msra.mxu0 0
  %1050 = vmatprep.mubr.bf16.mxu0 0
  %1051 = vmatmul.mubr.bf16.gmra.mrb[0].mxu0 %v1004
  %v1052 = vpop.f32.mrb[0].mxu0
  %v1053 = vadd.f32 0.0, %v1052
  %v1054 = vpop.f32.mrb[0].mxu0
  %v1055 = vpop.f32.mrb[0].mxu0
  %v1056 = vadd.f32 0.0, %v1055
  %v1057 = vpop.f32.mrb[0].mxu0
  %1058 = vmatprep.mubr.bf16.mxu0 0
  %1059 = vmatmul.mubr.bf16.gmra.mrb[0].mxu0 %v1007
  %v1060 = vpop.f32.mrb[0].mxu0
  %v1061 = vadd.f32 0.0, %v1060
  %v1062 = vpop.f32.mrb[0].mxu0
  %v1063 = vpop.f32.mrb[0].mxu0
  %v1064 = vadd.f32 0.0, %v1063
  %v1065 = vpop.f32.mrb[0].mxu0
  %1066 = vmatprep.mubr.bf16.mxu0 0
  %1067 = vmatmul.mubr.bf16.gmra.mrb[0].mxu0 %v1010
  %v1068 = vpop.f32.mrb[0].mxu0
  %v1069 = vadd.f32 0.0, %v1068
  %v1070 = vpop.f32.mrb[0].mxu0
  %v1071 = vpop.f32.mrb[0].mxu0
  %v1072 = vadd.f32 0.0, %v1071
  %v1073 = vpop.f32.mrb[0].mxu0
  %1074 = vmatprep.mubr.bf16.mxu0 0
  %1075 = vmatmul.mubr.bf16.gmra.mrb[0].mxu0 %v1013
  %v1076 = vpop.f32.mrb[0].mxu0
  %v1077 = vadd.f32 0.0, %v1076
  %v1078 = vpop.f32.mrb[0].mxu0
  %v1079 = vpop.f32.mrb[0].mxu0
  %v1080 = vpop.f32.mrb[0].mxu0
  %1081 = vdwg.mxu0
  %1082 = vrot.lane.b32.xlu0 %v212, 104
  %v1083 = vpop.permute.xlu0 %1082
  %1084 = vrot.lane.b32.xlu0 %v213, 104
  %v1085 = vpop.permute.xlu0 %1084
  %1086 = vrot.lane.b32.xlu0 %v214, 104
  %v1087 = vpop.permute.xlu0 %1086
  %1088 = vrot.lane.b32.xlu0 %v215, 104
  %v1089 = vpop.permute.xlu0 %1088
  %1090 = vrot.lane.b32.xlu0 %v212, 72
  %v1091 = vpop.permute.xlu0 %1090
  %1092 = vrot.lane.b32.xlu0 %v213, 72
  %v1093 = vpop.permute.xlu0 %1092
  %1094 = vrot.lane.b32.xlu0 %v214, 72
  %v1095 = vpop.permute.xlu0 %1094
  %1096 = vrot.lane.b32.xlu0 %v215, 72
  %v1097 = vpop.permute.xlu0 %1096
  %v1099 = vsel %vm228, %v1083, 0
  %v1102 = vsel %vm228, %v1085, 0
  %v1105 = vsel %vm228, %v1087, 0
  %v1108 = vsel %vm228, %v1089, 0
  %v1111 = vsel %vm228, %v1091, 0
  %v1114 = vsel %vm228, %v1093, 0
  %v1117 = vsel %vm228, %v1095, 0
  %v1120 = vsel %vm228, %v1097, 0
  %1122 = vmatprep.subr.bf16.mxu0 0
  %1123 = vmatpush1.bf16.xpose.msra.mxu0 %v1111
  %1124 = vmatprep.subr.bf16.mxu0 0
  %1125 = vmatpush1.bf16.xpose.msra.mxu0 %v1114
  %1126 = vmatprep.subr.bf16.mxu0 0
  %1127 = vmatpush1.bf16.xpose.msra.mxu0 %v1117
  %1128 = vmatprep.subr.bf16.mxu0 0
  %1129 = vmatpush1.bf16.xpose.msra.mxu0 %v1120
  %1130 = vmatprep.subr.bf16.mxu0 0
  %1131 = vmatpush1.bf16.xpose.msra.mxu0 0
  %1132 = vmatprep.subr.bf16.mxu0 0
  %1133 = vmatpush1.bf16.xpose.msra.mxu0 0
  %1134 = vmatprep.subr.bf16.mxu0 0
  %1135 = vmatpush1.bf16.xpose.msra.mxu0 0
  %1136 = vmatprep.subr.bf16.mxu0 0
  %1137 = vmatpush1.bf16.xpose.msra.mxu0 0
  %1138 = vmatprep.subr.bf16.mxu0 0
  %1139 = vmatpush1.bf16.xpose.msra.mxu0 0
  %1140 = vmatprep.subr.bf16.mxu0 0
  %1141 = vmatpush1.bf16.xpose.msra.mxu0 0
  %1142 = vmatprep.subr.bf16.mxu0 0
  %1143 = vmatpush1.bf16.xpose.msra.mxu0 0
  %1144 = vmatprep.subr.bf16.mxu0 0
  %1145 = vmatpush1.bf16.xpose.msra.mxu0 0
  %1146 = vmatprep.subr.bf16.mxu0 0
  %1147 = vmatpush1.bf16.xpose.msra.mxu0 0
  %1148 = vmatprep.subr.bf16.mxu0 0
  %1149 = vmatpush1.bf16.xpose.msra.mxu0 0
  %1150 = vmatprep.subr.bf16.mxu0 0
  %1151 = vmatpush1.bf16.xpose.msra.mxu0 0
  %1152 = vmatprep.subr.bf16.mxu0 0
  %1153 = vmatpush1.bf16.xpose.msra.mxu0 0
  %1154 = vmatprep.mubr.bf16.mxu0 0
  %1155 = vmatmul.mubr.bf16.gmra.mrb[0].mxu0 %v1099
  %v1156 = vpop.f32.mrb[0].mxu0
  %v1157 = vadd.f32 0.0, %v1156
  %v1158 = vpop.f32.mrb[0].mxu0
  %v1159 = vpop.f32.mrb[0].mxu0
  %v1160 = vadd.f32 0.0, %v1159
  %v1161 = vpop.f32.mrb[0].mxu0
  %1162 = vmatprep.mubr.bf16.mxu0 0
  %1163 = vmatmul.mubr.bf16.gmra.mrb[0].mxu0 %v1102
  %v1164 = vpop.f32.mrb[0].mxu0
  %v1165 = vadd.f32 0.0, %v1164
  %v1166 = vpop.f32.mrb[0].mxu0
  %v1167 = vpop.f32.mrb[0].mxu0
  %v1168 = vadd.f32 0.0, %v1167
  %v1169 = vpop.f32.mrb[0].mxu0
  %1170 = vmatprep.mubr.bf16.mxu0 0
  %1171 = vmatmul.mubr.bf16.gmra.mrb[0].mxu0 %v1105
  %v1172 = vpop.f32.mrb[0].mxu0
  %v1173 = vadd.f32 0.0, %v1172
  %v1174 = vpop.f32.mrb[0].mxu0
  %v1175 = vpop.f32.mrb[0].mxu0
  %v1176 = vadd.f32 0.0, %v1175
  %v1177 = vpop.f32.mrb[0].mxu0
  %1178 = vmatprep.mubr.bf16.mxu0 0
  %1179 = vmatmul.mubr.bf16.gmra.mrb[0].mxu0 %v1108
  %v1180 = vpop.f32.mrb[0].mxu0
  %v1181 = vadd.f32 0.0, %v1180
  %v1182 = vpop.f32.mrb[0].mxu0
  %v1183 = vpop.f32.mrb[0].mxu0
  %v1184 = vpop.f32.mrb[0].mxu0
  %1185 = vdwg.mxu0
  %v1186 = vmul.f32 %v1157, 0.35355338
  %v1187 = vmul.f32 %v1160, 0.35355338
  %v1188 = vmul.f32 %v1165, 0.35355338
  %v1189 = vmul.f32 %v1168, 0.35355338
  %v1190 = vmul.f32 %v1173, 0.35355338
  %v1191 = vmul.f32 %v1176, 0.35355338
  %v1192 = vmul.f32 %v1181, 0.35355338
  %v1193 = vadd.f32 %v1186, %v101
  %v1194 = vadd.f32 %v1187, %v102
  %v1195 = vadd.f32 %v1188, %v103
  %v1196 = vadd.f32 %v1189, %v104
  %v1197 = vadd.f32 %v1190, %v105
  %v1198 = vadd.f32 %v1191, %v106
  %v1199 = vadd.f32 %v1192, %v107
  %v1200 = vsel %vm331, %v1193, -inf
  %1201 = vmax.xlane.f32.xlu0 %v1200
  %v1202 = vpop.xlane.xlu0 %1201
  %v1203 = vsel %vm331, %v1194, -inf
  %1204 = vmax.xlane.f32.xlu0 %v1203
  %v1205 = vpop.xlane.xlu0 %1204
  %v1206 = vsel %vm331, %v1195, -inf
  %1207 = vmax.xlane.f32.xlu0 %v1206
  %v1208 = vpop.xlane.xlu0 %1207
  %v1209 = vsel %vm331, %v1196, -inf
  %1210 = vmax.xlane.f32.xlu0 %v1209
  %v1211 = vpop.xlane.xlu0 %1210
  %v1212 = vsel %vm331, %v1197, -inf
  %1213 = vmax.xlane.f32.xlu0 %v1212
  %v1214 = vpop.xlane.xlu0 %1213
  %v1215 = vsel %vm331, %v1198, -inf
  %1216 = vmax.xlane.f32.xlu0 %v1215
  %v1217 = vpop.xlane.xlu0 %1216
  %v1218 = vsel %vm331, %v1199, -inf
  %1219 = vmax.xlane.f32.xlu0 %v1218
  %v1220 = vpop.xlane.xlu0 %1219
  %v1221 = vsub.f32 %v1193, %v1202
  %v1222 = vsub.f32 %v1194, %v1205
  %v1223 = vsub.f32 %v1195, %v1208
  %v1224 = vsub.f32 %v1196, %v1211
  %v1225 = vsub.f32 %v1197, %v1214
  %v1226 = vsub.f32 %v1198, %v1217
  %v1227 = vsub.f32 %v1199, %v1220
  %v1228 = vmul.f32 %v1221, 1.442695
  %v1229 = vpow.pop %v1228
  %v1230 = vmul.f32 %v1222, 1.442695
  %v1231 = vpow.pop %v1230
  %v1232 = vmul.f32 %v1223, 1.442695
  %v1233 = vpow.pop %v1232
  %v1234 = vmul.f32 %v1224, 1.442695
  %v1235 = vpow.pop %v1234
  %v1236 = vmul.f32 %v1225, 1.442695
  %v1237 = vpow.pop %v1236
  %v1238 = vmul.f32 %v1226, 1.442695
  %v1239 = vpow.pop %v1238
  %v1240 = vmul.f32 %v1227, 1.442695
  %v1241 = vpow.pop %v1240
  %v1242 = vsel %vm331, %v1229, 0.0
  %1243 = vadd.xlane.f32.xlu0 %v1242
  %v1244 = vpop.xlane.xlu0 %1243
  %v1245 = vsel %vm331, %v1231, 0.0
  %1246 = vadd.xlane.f32.xlu0 %v1245
  %v1247 = vpop.xlane.xlu0 %1246
  %v1248 = vsel %vm331, %v1233, 0.0
  %1249 = vadd.xlane.f32.xlu0 %v1248
  %v1250 = vpop.xlane.xlu0 %1249
  %v1251 = vsel %vm331, %v1235, 0.0
  %1252 = vadd.xlane.f32.xlu0 %v1251
  %v1253 = vpop.xlane.xlu0 %1252
  %v1254 = vsel %vm331, %v1237, 0.0
  %1255 = vadd.xlane.f32.xlu0 %v1254
  %v1256 = vpop.xlane.xlu0 %1255
  %v1257 = vsel %vm331, %v1239, 0.0
  %1258 = vadd.xlane.f32.xlu0 %v1257
  %v1259 = vpop.xlane.xlu0 %1258
  %v1260 = vsel %vm331, %v1241, 0.0
  %1261 = vadd.xlane.f32.xlu0 %v1260
  %v1262 = vpop.xlane.xlu0 %1261
  %v1263 = vrcp.pop %v1244
  %v1264 = vrcp.pop %v1247
  %v1265 = vrcp.pop %v1250
  %v1266 = vrcp.pop %v1253
  %v1267 = vrcp.pop %v1256
  %v1268 = vrcp.pop %v1259
  %v1269 = vrcp.pop %v1262
  %v1270 = vmul.f32 %v1229, %v1263
  %v1271 = vmul.f32 %v1231, %v1264
  %v1272 = vmul.f32 %v1233, %v1265
  %v1273 = vmul.f32 %v1235, %v1266
  %v1274 = vmul.f32 %v1237, %v1267
  %v1275 = vmul.f32 %v1239, %v1268
  %v1276 = vmul.f32 %v1241, %v1269
  %v1277 = vpack.c.bf16 %v1271, %v1270
  %v1278 = vpack.c.bf16 %v1273, %v1272
  %v1279 = vpack.c.bf16 %v1275, %v1274
  %v1280 = vpack.c.bf16 %v1276, %v1276
  %1281 = vrot.lane.b32.xlu0 %v212, 40
  %v1282 = vpop.permute.xlu0 %1281
  %1283 = vrot.lane.b32.xlu0 %v213, 40
  %v1284 = vpop.permute.xlu0 %1283
  %1285 = vrot.lane.b32.xlu0 %v214, 40
  %v1286 = vpop.permute.xlu0 %1285
  %1287 = vrot.lane.b32.xlu0 %v215, 40
  %v1288 = vpop.permute.xlu0 %1287
  %v1293 = vsel %vm331, %v1277, 0
  %v1296 = vsel %vm331, %v1278, 0
  %v1299 = vsel %vm331, %v1279, 0
  %v1302 = vsel %vm331, %v1280, 0
  %v1305 = vsel %vm436, %v1288, 0
  %1307 = vmatprep.subr.bf16.mxu0 0
  %1308 = vmatpush1.bf16.msra.mxu0 %v1282
  %1309 = vmatprep.subr.bf16.mxu0 0
  %1310 = vmatpush1.bf16.msra.mxu0 %v1284
  %1311 = vmatprep.subr.bf16.mxu0 0
  %1312 = vmatpush1.bf16.msra.mxu0 %v1286
  %1313 = vmatprep.subr.bf16.mxu0 0
  %1314 = vmatpush1.bf16.msra.mxu0 %v1305
  %1315 = vmatprep.subr.bf16.mxu0 0
  %1316 = vmatpush1.bf16.msra.mxu0 0
  %1317 = vmatprep.subr.bf16.mxu0 0
  %1318 = vmatpush1.bf16.msra.mxu0 0
  %1319 = vmatprep.subr.bf16.mxu0 0
  %1320 = vmatpush1.bf16.msra.mxu0 0
  %1321 = vmatprep.subr.bf16.mxu0 0
  %1322 = vmatpush1.bf16.msra.mxu0 0
  %1323 = vmatprep.subr.bf16.mxu0 0
  %1324 = vmatpush1.bf16.msra.mxu0 0
  %1325 = vmatprep.subr.bf16.mxu0 0
  %1326 = vmatpush1.bf16.msra.mxu0 0
  %1327 = vmatprep.subr.bf16.mxu0 0
  %1328 = vmatpush1.bf16.msra.mxu0 0
  %1329 = vmatprep.subr.bf16.mxu0 0
  %1330 = vmatpush1.bf16.msra.mxu0 0
  %1331 = vmatprep.subr.bf16.mxu0 0
  %1332 = vmatpush1.bf16.msra.mxu0 0
  %1333 = vmatprep.subr.bf16.mxu0 0
  %1334 = vmatpush1.bf16.msra.mxu0 0
  %1335 = vmatprep.subr.bf16.mxu0 0
  %1336 = vmatpush1.bf16.msra.mxu0 0
  %1337 = vmatprep.subr.bf16.mxu0 0
  %1338 = vmatpush1.bf16.msra.mxu0 0
  %1339 = vmatprep.mubr.bf16.mxu0 0
  %1340 = vmatmul.mubr.bf16.gmra.mrb[0].mxu0 %v1293
  %v1341 = vpop.f32.mrb[0].mxu0
  %v1342 = vadd.f32 0.0, %v1341
  %v1343 = vpop.f32.mrb[0].mxu0
  %v1344 = vpop.f32.mrb[0].mxu0
  %v1345 = vadd.f32 0.0, %v1344
  %v1346 = vpop.f32.mrb[0].mxu0
  %1347 = vmatprep.mubr.bf16.mxu0 0
  %1348 = vmatmul.mubr.bf16.gmra.mrb[0].mxu0 %v1296
  %v1349 = vpop.f32.mrb[0].mxu0
  %v1350 = vadd.f32 0.0, %v1349
  %v1351 = vpop.f32.mrb[0].mxu0
  %v1352 = vpop.f32.mrb[0].mxu0
  %v1353 = vadd.f32 0.0, %v1352
  %v1354 = vpop.f32.mrb[0].mxu0
  %1355 = vmatprep.mubr.bf16.mxu0 0
  %1356 = vmatmul.mubr.bf16.gmra.mrb[0].mxu0 %v1299
  %v1357 = vpop.f32.mrb[0].mxu0
  %v1358 = vadd.f32 0.0, %v1357
  %v1359 = vpop.f32.mrb[0].mxu0
  %v1360 = vpop.f32.mrb[0].mxu0
  %v1361 = vadd.f32 0.0, %v1360
  %v1362 = vpop.f32.mrb[0].mxu0
  %1363 = vmatprep.mubr.bf16.mxu0 0
  %1364 = vmatmul.mubr.bf16.gmra.mrb[0].mxu0 %v1302
  %v1365 = vpop.f32.mrb[0].mxu0
  %v1366 = vadd.f32 0.0, %v1365
  %v1367 = vpop.f32.mrb[0].mxu0
  %v1368 = vpop.f32.mrb[0].mxu0
  %v1369 = vpop.f32.mrb[0].mxu0
  %1370 = vdwg.mxu0
  %1378 = vrot.lane.b32.xlu0 %v764, 8
  %v1379 = vpop.permute.xlu0 %1378
  %1380 = vrot.lane.b32.xlu0 %v767, 8
  %v1381 = vpop.permute.xlu0 %1380
  %1382 = vrot.lane.b32.xlu0 %v772, 8
  %v1383 = vpop.permute.xlu0 %1382
  %1384 = vrot.lane.b32.xlu0 %v775, 8
  %v1385 = vpop.permute.xlu0 %1384
  %1386 = vrot.lane.b32.xlu0 %v780, 8
  %v1387 = vpop.permute.xlu0 %1386
  %1388 = vrot.lane.b32.xlu0 %v783, 8
  %v1389 = vpop.permute.xlu0 %1388
  %1390 = vrot.lane.b32.xlu0 %v788, 8
  %v1391 = vpop.permute.xlu0 %1390
  %1406 = vrot.lane.b32.xlu0 %v1053, 16
  %v1407 = vpop.permute.xlu0 %1406
  %1408 = vrot.lane.b32.xlu0 %v1056, 16
  %v1409 = vpop.permute.xlu0 %1408
  %1410 = vrot.lane.b32.xlu0 %v1061, 16
  %v1411 = vpop.permute.xlu0 %1410
  %1412 = vrot.lane.b32.xlu0 %v1064, 16
  %v1413 = vpop.permute.xlu0 %1412
  %1414 = vrot.lane.b32.xlu0 %v1069, 16
  %v1415 = vpop.permute.xlu0 %1414
  %1416 = vrot.lane.b32.xlu0 %v1072, 16
  %v1417 = vpop.permute.xlu0 %1416
  %1418 = vrot.lane.b32.xlu0 %v1077, 16
  %v1419 = vpop.permute.xlu0 %1418
  %1434 = vrot.lane.b32.xlu0 %v1342, 24
  %v1435 = vpop.permute.xlu0 %1434
  %1436 = vrot.lane.b32.xlu0 %v1345, 24
  %v1437 = vpop.permute.xlu0 %1436
  %1438 = vrot.lane.b32.xlu0 %v1350, 24
  %v1439 = vpop.permute.xlu0 %1438
  %1440 = vrot.lane.b32.xlu0 %v1353, 24
  %v1441 = vpop.permute.xlu0 %1440
  %1442 = vrot.lane.b32.xlu0 %v1358, 24
  %v1443 = vpop.permute.xlu0 %1442
  %1444 = vrot.lane.b32.xlu0 %v1361, 24
  %v1445 = vpop.permute.xlu0 %1444
  %1446 = vrot.lane.b32.xlu0 %v1366, 24
  %v1447 = vpop.permute.xlu0 %1446
  %v1455 = vsel %vm228, %v475, %v1379
  %v1456 = vsel %vm228, %v478, %v1381
  %v1457 = vsel %vm228, %v483, %v1383
  %v1458 = vsel %vm228, %v486, %v1385
  %v1459 = vsel %vm228, %v491, %v1387
  %v1460 = vsel %vm228, %v494, %v1389
  %v1461 = vsel %vm228, %v499, %v1391
  %vm1462 = vcmask 130048
  %v1463 = vsel %vm1462, %v1455, %v1407
  %v1464 = vsel %vm1462, %v1456, %v1409
  %v1465 = vsel %vm1462, %v1457, %v1411
  %v1466 = vsel %vm1462, %v1458, %v1413
  %v1467 = vsel %vm1462, %v1459, %v1415
  %v1468 = vsel %vm1462, %v1460, %v1417
  %v1469 = vsel %vm1462, %v1461, %v1419
  %vm1470 = vcmask 195584
  %v1471 = vsel %vm1470, %v1463, %v1435
  %v1472 = vsel %vm1470, %v1464, %v1437
  %v1473 = vsel %vm1470, %v1465, %v1439
  %v1474 = vsel %vm1470, %v1466, %v1441
  %v1475 = vsel %vm1470, %v1467, %v1443
  %v1476 = vsel %vm1470, %v1468, %v1445
  %v1477 = vsel %vm1470, %v1469, %v1447
  %v1478 = vld [vmem:[%s3] sm:$0xf]
  %v1479 = vld [vmem:[%s3 + $0x4] sm:$0xf]
  %v1480 = vld [vmem:[%s3 + $0x8] sm:$0xf]
  %v1481 = vld [vmem:[%s3 + $0xc] sm:$0xf]
  %v1482 = vpack.c.bf16 %v1472, %v1471
  %v1483 = vpack.c.bf16 %v1474, %v1473
  %v1484 = vpack.c.bf16 %v1476, %v1475
  %v1485 = vpack.c.bf16 %v1477, %v1477
  %v1486 = vld [vmem:[%s4] sm:$0x1]
  %v1488 = vlaneseq
  %v1489 = vshrl.u32 %v1488, 7
  %v1490 = vsub.s32 0, %v1489
  %v1491 = vrot.slane %v1486, %v1490
  %v1497 = vunpack.c.l.b16 %v1478
  %v1498 = vunpack.c.l.b16 %v1479
  %v1499 = vunpack.c.l.b16 %v1480
  %v1500 = vunpack.c.l.b16 %v1481
  %v1501 = vpack.c.b16 %v1498, %v1497
  %v1502 = vpack.c.b16 %v1500, %v1499
  %v1506 = vsel %vm135, %v1482, 0
  %v1509 = vsel %vm135, %v1483, 0
  %v1512 = vsel %vm135, %v1484, 0
  %v1515 = vsel %vm135, %v1485, 0
  %1517 = vmatprep.subr.bf16.mxu0 0
  %1518 = vmatpush1.bf16.msra.mxu0 %v1501
  %1519 = vmatprep.subr.bf16.mxu0 0
  %1520 = vmatpush1.bf16.msra.mxu0 %v1502
  %1521 = vmatprep.subr.bf16.mxu0 0
  %1522 = vmatpush1.bf16.msra.mxu0 0
  %1523 = vmatprep.subr.bf16.mxu0 0
  %1524 = vmatpush1.bf16.msra.mxu0 0
  %1525 = vmatprep.subr.bf16.mxu0 0
  %1526 = vmatpush1.bf16.msra.mxu0 0
  %1527 = vmatprep.subr.bf16.mxu0 0
  %1528 = vmatpush1.bf16.msra.mxu0 0
  %1529 = vmatprep.subr.bf16.mxu0 0
  %1530 = vmatpush1.bf16.msra.mxu0 0
  %1531 = vmatprep.subr.bf16.mxu0 0
  %1532 = vmatpush1.bf16.msra.mxu0 0
  %1533 = vmatprep.subr.bf16.mxu0 0
  %1534 = vmatpush1.bf16.msra.mxu0 0
  %1535 = vmatprep.subr.bf16.mxu0 0
  %1536 = vmatpush1.bf16.msra.mxu0 0
  %1537 = vmatprep.subr.bf16.mxu0 0
  %1538 = vmatpush1.bf16.msra.mxu0 0
  %1539 = vmatprep.subr.bf16.mxu0 0
  %1540 = vmatpush1.bf16.msra.mxu0 0
  %1541 = vmatprep.subr.bf16.mxu0 0
  %1542 = vmatpush1.bf16.msra.mxu0 0
  %1543 = vmatprep.subr.bf16.mxu0 0
  %1544 = vmatpush1.bf16.msra.mxu0 0
  %1545 = vmatprep.subr.bf16.mxu0 0
  %1546 = vmatpush1.bf16.msra.mxu0 0
  %1547 = vmatprep.subr.bf16.mxu0 0
  %1548 = vmatpush1.bf16.msra.mxu0 0
  %1549 = vmatprep.mubr.bf16.mxu0 0
  %1550 = vmatmul.mubr.bf16.gmra.mrb[0].mxu0 %v1506
  %v1551 = vpop.f32.mrb[0].mxu0
  %v1552 = vadd.f32 %v1491, %v1551
  %v1553 = vpop.f32.mrb[0].mxu0
  %v1554 = vpop.f32.mrb[0].mxu0
  %v1555 = vadd.f32 %v1491, %v1554
  %v1556 = vpop.f32.mrb[0].mxu0
  %1557 = vmatprep.mubr.bf16.mxu0 0
  %1558 = vmatmul.mubr.bf16.gmra.mrb[0].mxu0 %v1509
  %v1559 = vpop.f32.mrb[0].mxu0
  %v1560 = vadd.f32 %v1491, %v1559
  %v1561 = vpop.f32.mrb[0].mxu0
  %v1562 = vpop.f32.mrb[0].mxu0
  %v1563 = vadd.f32 %v1491, %v1562
  %v1564 = vpop.f32.mrb[0].mxu0
  %1565 = vmatprep.mubr.bf16.mxu0 0
  %1566 = vmatmul.mubr.bf16.gmra.mrb[0].mxu0 %v1512
  %v1567 = vpop.f32.mrb[0].mxu0
  %v1568 = vadd.f32 %v1491, %v1567
  %v1569 = vpop.f32.mrb[0].mxu0
  %v1570 = vpop.f32.mrb[0].mxu0
  %v1571 = vadd.f32 %v1491, %v1570
  %v1572 = vpop.f32.mrb[0].mxu0
  %1573 = vmatprep.mubr.bf16.mxu0 0
  %1574 = vmatmul.mubr.bf16.gmra.mrb[0].mxu0 %v1515
  %v1575 = vpop.f32.mrb[0].mxu0
  %v1576 = vadd.f32 %v1491, %v1575
  %v1577 = vpop.f32.mrb[0].mxu0
  %v1578 = vpop.f32.mrb[0].mxu0
  %v1579 = vpop.f32.mrb[0].mxu0
  %1580 = vdwg.mxu0
  %v1581 = vadd.f32 %v45, %v1552
  %v1582 = vadd.f32 %v46, %v1555
  %v1583 = vadd.f32 %v47, %v1560
  %v1584 = vadd.f32 %v48, %v1563
  %v1585 = vadd.f32 %v49, %v1568
  %v1586 = vadd.f32 %v50, %v1571
  %v1587 = vadd.f32 %v51, %v1576
  %v1588 = vld [vmem:[%s5] sm:$0x1]
  %v1589 = vld [vmem:[%s6] sm:$0x1]
  %v1590 = vsel %vm135, %v1581, 0.0
  %1591 = vadd.xlane.f32.xlu0 %v1590
  %v1592 = vpop.xlane.xlu0 %1591
  %v1593 = vsel %vm135, %v1582, 0.0
  %1594 = vadd.xlane.f32.xlu0 %v1593
  %v1595 = vpop.xlane.xlu0 %1594
  %v1596 = vsel %vm135, %v1583, 0.0
  %1597 = vadd.xlane.f32.xlu0 %v1596
  %v1598 = vpop.xlane.xlu0 %1597
  %v1599 = vsel %vm135, %v1584, 0.0
  %1600 = vadd.xlane.f32.xlu0 %v1599
  %v1601 = vpop.xlane.xlu0 %1600
  %v1602 = vsel %vm135, %v1585, 0.0
  %1603 = vadd.xlane.f32.xlu0 %v1602
  %v1604 = vpop.xlane.xlu0 %1603
  %v1605 = vsel %vm135, %v1586, 0.0
  %1606 = vadd.xlane.f32.xlu0 %v1605
  %v1607 = vpop.xlane.xlu0 %1606
  %v1608 = vsel %vm135, %v1587, 0.0
  %1609 = vadd.xlane.f32.xlu0 %v1608
  %v1610 = vpop.xlane.xlu0 %1609
  %v1611 = vrcp.pop 32.0
  %v1612 = vmul.f32 %v1592, %v1611
  %v1613 = vmul.f32 %v1595, %v1611
  %v1614 = vmul.f32 %v1598, %v1611
  %v1615 = vmul.f32 %v1601, %v1611
  %v1616 = vmul.f32 %v1604, %v1611
  %v1617 = vmul.f32 %v1607, %v1611
  %v1618 = vmul.f32 %v1610, %v1611
  %v1619 = vsub.f32 %v1581, %v1612
  %v1620 = vsub.f32 %v1582, %v1613
  %v1621 = vsub.f32 %v1583, %v1614
  %v1622 = vsub.f32 %v1584, %v1615
  %v1623 = vsub.f32 %v1585, %v1616
  %v1624 = vsub.f32 %v1586, %v1617
  %v1625 = vsub.f32 %v1587, %v1618
  %v1626 = vmul.f32 %v1619, %v1619
  %v1627 = vmul.f32 %v1620, %v1620
  %v1628 = vmul.f32 %v1621, %v1621
  %v1629 = vmul.f32 %v1622, %v1622
  %v1630 = vmul.f32 %v1623, %v1623
  %v1631 = vmul.f32 %v1624, %v1624
  %v1632 = vmul.f32 %v1625, %v1625
  %v1633 = vsel %vm135, %v1626, 0.0
  %1634 = vadd.xlane.f32.xlu0 %v1633
  %v1635 = vpop.xlane.xlu0 %1634
  %v1636 = vsel %vm135, %v1627, 0.0
  %1637 = vadd.xlane.f32.xlu0 %v1636
  %v1638 = vpop.xlane.xlu0 %1637
  %v1639 = vsel %vm135, %v1628, 0.0
  %1640 = vadd.xlane.f32.xlu0 %v1639
  %v1641 = vpop.xlane.xlu0 %1640
  %v1642 = vsel %vm135, %v1629, 0.0
  %1643 = vadd.xlane.f32.xlu0 %v1642
  %v1644 = vpop.xlane.xlu0 %1643
  %v1645 = vsel %vm135, %v1630, 0.0
  %1646 = vadd.xlane.f32.xlu0 %v1645
  %v1647 = vpop.xlane.xlu0 %1646
  %v1648 = vsel %vm135, %v1631, 0.0
  %1649 = vadd.xlane.f32.xlu0 %v1648
  %v1650 = vpop.xlane.xlu0 %1649
  %v1651 = vsel %vm135, %v1632, 0.0
  %1652 = vadd.xlane.f32.xlu0 %v1651
  %v1653 = vpop.xlane.xlu0 %1652
  %v1654 = vmul.f32 %v1635, %v1611
  %v1655 = vmul.f32 %v1638, %v1611
  %v1656 = vmul.f32 %v1641, %v1611
  %v1657 = vmul.f32 %v1644, %v1611
  %v1658 = vmul.f32 %v1647, %v1611
  %v1659 = vmul.f32 %v1650, %v1611
  %v1660 = vmul.f32 %v1653, %v1611
  %v1661 = vadd.f32 %v1654, 1e-05
  %v1662 = vadd.f32 %v1655, 1e-05
  %v1663 = vadd.f32 %v1656, 1e-05
  %v1664 = vadd.f32 %v1657, 1e-05
  %v1665 = vadd.f32 %v1658, 1e-05
  %v1666 = vadd.f32 %v1659, 1e-05
  %v1667 = vadd.f32 %v1660, 1e-05
  %v1668 = vrsqrt.pop %v1661
  %v1669 = vrsqrt.pop %v1662
  %v1670 = vrsqrt.pop %v1663
  %v1671 = vrsqrt.pop %v1664
  %v1672 = vrsqrt.pop %v1665
  %v1673 = vrsqrt.pop %v1666
  %v1674 = vrsqrt.pop %v1667
  %v1675 = vmul.f32 %v1619, %v1668
  %v1676 = vmul.f32 %v1620, %v1669
  %v1677 = vmul.f32 %v1621, %v1670
  %v1678 = vmul.f32 %v1622, %v1671
  %v1679 = vmul.f32 %v1623, %v1672
  %v1680 = vmul.f32 %v1624, %v1673
  %v1681 = vmul.f32 %v1625, %v1674
  %v1683 = vlaneseq
  %v1684 = vshrl.u32 %v1683, 7
  %v1685 = vsub.s32 0, %v1684
  %v1686 = vrot.slane %v1588, %v1685
  %v1688 = vmul.f32 %v1675, %v1686
  %v1689 = vmul.f32 %v1676, %v1686
  %v1690 = vmul.f32 %v1677, %v1686
  %v1691 = vmul.f32 %v1678, %v1686
  %v1692 = vmul.f32 %v1679, %v1686
  %v1693 = vmul.f32 %v1680, %v1686
  %v1694 = vmul.f32 %v1681, %v1686
  %v1696 = vlaneseq
  %v1697 = vshrl.u32 %v1696, 7
  %v1698 = vsub.s32 0, %v1697
  %v1699 = vrot.slane %v1589, %v1698
  %v1701 = vadd.f32 %v1688, %v1699
  %v1702 = vadd.f32 %v1689, %v1699
  %v1703 = vadd.f32 %v1690, %v1699
  %v1704 = vadd.f32 %v1691, %v1699
  %v1705 = vadd.f32 %v1692, %v1699
  %v1706 = vadd.f32 %v1693, %v1699
  %v1707 = vadd.f32 %v1694, %v1699
  %v1708 = vld [vmem:[%s7] sm:$0xf]
  %v1709 = vld [vmem:[%s7 + $0x4] sm:$0xf]
  %v1710 = vld [vmem:[%s7 + $0x8] sm:$0xf]
  %v1711 = vld [vmem:[%s7 + $0xc] sm:$0xf]
  %v1712 = vpack.c.bf16 %v1702, %v1701
  %v1713 = vpack.c.bf16 %v1704, %v1703
  %v1714 = vpack.c.bf16 %v1706, %v1705
  %v1715 = vpack.c.bf16 %v1707, %v1707
  %v1716 = vld [vmem:[%s8] sm:$0x1]
  %v1718 = vlaneseq
  %v1719 = vshrl.u32 %v1718, 7
  %v1720 = vsub.s32 0, %v1719
  %v1721 = vrot.slane %v1716, %v1720
  %v1727 = vunpack.c.l.b16 %v1708
  %v1728 = vunpack.c.l.b16 %v1709
  %v1729 = vunpack.c.l.b16 %v1710
  %v1730 = vunpack.c.l.b16 %v1711
  %v1731 = vpack.c.b16 %v1728, %v1727
  %v1732 = vpack.c.b16 %v1730, %v1729
  %v1736 = vsel %vm135, %v1712, 0
  %v1739 = vsel %vm135, %v1713, 0
  %v1742 = vsel %vm135, %v1714, 0
  %v1745 = vsel %vm135, %v1715, 0
  %1747 = vmatprep.subr.bf16.mxu0 0
  %1748 = vmatpush1.bf16.msra.mxu0 %v1731
  %1749 = vmatprep.subr.bf16.mxu0 0
  %1750 = vmatpush1.bf16.msra.mxu0 %v1732
  %1751 = vmatprep.subr.bf16.mxu0 0
  %1752 = vmatpush1.bf16.msra.mxu0 0
  %1753 = vmatprep.subr.bf16.mxu0 0
  %1754 = vmatpush1.bf16.msra.mxu0 0
  %1755 = vmatprep.subr.bf16.mxu0 0
  %1756 = vmatpush1.bf16.msra.mxu0 0
  %1757 = vmatprep.subr.bf16.mxu0 0
  %1758 = vmatpush1.bf16.msra.mxu0 0
  %1759 = vmatprep.subr.bf16.mxu0 0
  %1760 = vmatpush1.bf16.msra.mxu0 0
  %1761 = vmatprep.subr.bf16.mxu0 0
  %1762 = vmatpush1.bf16.msra.mxu0 0
  %1763 = vmatprep.subr.bf16.mxu0 0
  %1764 = vmatpush1.bf16.msra.mxu0 0
  %1765 = vmatprep.subr.bf16.mxu0 0
  %1766 = vmatpush1.bf16.msra.mxu0 0
  %1767 = vmatprep.subr.bf16.mxu0 0
  %1768 = vmatpush1.bf16.msra.mxu0 0
  %1769 = vmatprep.subr.bf16.mxu0 0
  %1770 = vmatpush1.bf16.msra.mxu0 0
  %1771 = vmatprep.subr.bf16.mxu0 0
  %1772 = vmatpush1.bf16.msra.mxu0 0
  %1773 = vmatprep.subr.bf16.mxu0 0
  %1774 = vmatpush1.bf16.msra.mxu0 0
  %1775 = vmatprep.subr.bf16.mxu0 0
  %1776 = vmatpush1.bf16.msra.mxu0 0
  %1777 = vmatprep.subr.bf16.mxu0 0
  %1778 = vmatpush1.bf16.msra.mxu0 0
  %1779 = vmatprep.mubr.bf16.mxu0 0
  %1780 = vmatmul.mubr.bf16.gmra.mrb[0].mxu0 %v1736
  %v1781 = vpop.f32.mrb[0].mxu0
  %v1782 = vadd.f32 %v1721, %v1781
  %v1783 = vpop.f32.mrb[0].mxu0
  %v1784 = vpop.f32.mrb[0].mxu0
  %v1785 = vadd.f32 %v1721, %v1784
  %v1786 = vpop.f32.mrb[0].mxu0
  %1787 = vmatprep.mubr.bf16.mxu0 0
  %1788 = vmatmul.mubr.bf16.gmra.mrb[0].mxu0 %v1739
  %v1789 = vpop.f32.mrb[0].mxu0
  %v1790 = vadd.f32 %v1721, %v1789
  %v1791 = vpop.f32.mrb[0].mxu0
  %v1792 = vpop.f32.mrb[0].mxu0
  %v1793 = vadd.f32 %v1721, %v1792
  %v1794 = vpop.f32.mrb[0].mxu0
  %1795 = vmatprep.mubr.bf16.mxu0 0
  %1796 = vmatmul.mubr.bf16.gmra.mrb[0].mxu0 %v1742
  %v1797 = vpop.f32.mrb[0].mxu0
  %v1798 = vadd.f32 %v1721, %v1797
  %v1799 = vpop.f32.mrb[0].mxu0
  %v1800 = vpop.f32.mrb[0].mxu0
  %v1801 = vadd.f32 %v1721, %v1800
  %v1802 = vpop.f32.mrb[0].mxu0
  %1803 = vmatprep.mubr.bf16.mxu0 0
  %1804 = vmatmul.mubr.bf16.gmra.mrb[0].mxu0 %v1745
  %v1805 = vpop.f32.mrb[0].mxu0
  %v1806 = vadd.f32 %v1721, %v1805
  %v1807 = vpop.f32.mrb[0].mxu0
  %v1808 = vpop.f32.mrb[0].mxu0
  %v1809 = vpop.f32.mrb[0].mxu0
  %1810 = vdwg.mxu0
  %v1811 = vmax.f32 %v1782, 0.0
  %v1812 = vmax.f32 %v1785, 0.0
  %v1813 = vmax.f32 %v1790, 0.0
  %v1814 = vmax.f32 %v1793, 0.0
  %v1815 = vmax.f32 %v1798, 0.0
  %v1816 = vmax.f32 %v1801, 0.0
  %v1817 = vmax.f32 %v1806, 0.0
  %v1818 = vld [vmem:[%s9] sm:$0xf]
  %v1819 = vld [vmem:[%s9 + $0x4] sm:$0xf]
  %v1820 = vld [vmem:[%s9 + $0x8] sm:$0xf]
  %v1821 = vld [vmem:[%s9 + $0xc] sm:$0xf]
  %v1822 = vpack.c.bf16 %v1812, %v1811
  %v1823 = vpack.c.bf16 %v1814, %v1813
  %v1824 = vpack.c.bf16 %v1816, %v1815
  %v1825 = vpack.c.bf16 %v1817, %v1817
  %v1826 = vld [vmem:[%s10] sm:$0x1]
  %v1828 = vlaneseq
  %v1829 = vshrl.u32 %v1828, 7
  %v1830 = vsub.s32 0, %v1829
  %v1831 = vrot.slane %v1826, %v1830
  %v1837 = vunpack.c.l.b16 %v1818
  %v1838 = vunpack.c.l.b16 %v1819
  %v1839 = vunpack.c.l.b16 %v1820
  %v1840 = vunpack.c.l.b16 %v1821
  %v1841 = vpack.c.b16 %v1838, %v1837
  %v1842 = vpack.c.b16 %v1840, %v1839
  %v1846 = vsel %vm135, %v1822, 0
  %v1849 = vsel %vm135, %v1823, 0
  %v1852 = vsel %vm135, %v1824, 0
  %v1855 = vsel %vm135, %v1825, 0
  %1857 = vmatprep.subr.bf16.mxu0 0
  %1858 = vmatpush1.bf16.msra.mxu0 %v1841
  %1859 = vmatprep.subr.bf16.mxu0 0
  %1860 = vmatpush1.bf16.msra.mxu0 %v1842
  %1861 = vmatprep.subr.bf16.mxu0 0
  %1862 = vmatpush1.bf16.msra.mxu0 0
  %1863 = vmatprep.subr.bf16.mxu0 0
  %1864 = vmatpush1.bf16.msra.mxu0 0
  %1865 = vmatprep.subr.bf16.mxu0 0
  %1866 = vmatpush1.bf16.msra.mxu0 0
  %1867 = vmatprep.subr.bf16.mxu0 0
  %1868 = vmatpush1.bf16.msra.mxu0 0
  %1869 = vmatprep.subr.bf16.mxu0 0
  %1870 = vmatpush1.bf16.msra.mxu0 0
  %1871 = vmatprep.subr.bf16.mxu0 0
  %1872 = vmatpush1.bf16.msra.mxu0 0
  %1873 = vmatprep.subr.bf16.mxu0 0
  %1874 = vmatpush1.bf16.msra.mxu0 0
  %1875 = vmatprep.subr.bf16.mxu0 0
  %1876 = vmatpush1.bf16.msra.mxu0 0
  %1877 = vmatprep.subr.bf16.mxu0 0
  %1878 = vmatpush1.bf16.msra.mxu0 0
  %1879 = vmatprep.subr.bf16.mxu0 0
  %1880 = vmatpush1.bf16.msra.mxu0 0
  %1881 = vmatprep.subr.bf16.mxu0 0
  %1882 = vmatpush1.bf16.msra.mxu0 0
  %1883 = vmatprep.subr.bf16.mxu0 0
  %1884 = vmatpush1.bf16.msra.mxu0 0
  %1885 = vmatprep.subr.bf16.mxu0 0
  %1886 = vmatpush1.bf16.msra.mxu0 0
  %1887 = vmatprep.subr.bf16.mxu0 0
  %1888 = vmatpush1.bf16.msra.mxu0 0
  %1889 = vmatprep.mubr.bf16.mxu0 0
  %1890 = vmatmul.mubr.bf16.gmra.mrb[0].mxu0 %v1846
  %v1891 = vpop.f32.mrb[0].mxu0
  %v1892 = vadd.f32 %v1831, %v1891
  %v1893 = vpop.f32.mrb[0].mxu0
  %v1894 = vpop.f32.mrb[0].mxu0
  %v1895 = vadd.f32 %v1831, %v1894
  %v1896 = vpop.f32.mrb[0].mxu0
  %1897 = vmatprep.mubr.bf16.mxu0 0
  %1898 = vmatmul.mubr.bf16.gmra.mrb[0].mxu0 %v1849
  %v1899 = vpop.f32.mrb[0].mxu0
  %v1900 = vadd.f32 %v1831, %v1899
  %v1901 = vpop.f32.mrb[0].mxu0
  %v1902 = vpop.f32.mrb[0].mxu0
  %v1903 = vadd.f32 %v1831, %v1902
  %v1904 = vpop.f32.mrb[0].mxu0
  %1905 = vmatprep.mubr.bf16.mxu0 0
  %1906 = vmatmul.mubr.bf16.gmra.mrb[0].mxu0 %v1852
  %v1907 = vpop.f32.mrb[0].mxu0
  %v1908 = vadd.f32 %v1831, %v1907
  %v1909 = vpop.f32.mrb[0].mxu0
  %v1910 = vpop.f32.mrb[0].mxu0
  %v1911 = vadd.f32 %v1831, %v1910
  %v1912 = vpop.f32.mrb[0].mxu0
  %1913 = vmatprep.mubr.bf16.mxu0 0
  %1914 = vmatmul.mubr.bf16.gmra.mrb[0].mxu0 %v1855
  %v1915 = vpop.f32.mrb[0].mxu0
  %v1916 = vadd.f32 %v1831, %v1915
  %v1917 = vpop.f32.mrb[0].mxu0
  %v1918 = vpop.f32.mrb[0].mxu0
  %v1919 = vpop.f32.mrb[0].mxu0
  %1920 = vdwg.mxu0
  %v1921 = vadd.f32 %v1701, %v1892
  %v1922 = vadd.f32 %v1702, %v1895
  %v1923 = vadd.f32 %v1703, %v1900
  %v1924 = vadd.f32 %v1704, %v1903
  %v1925 = vadd.f32 %v1705, %v1908
  %v1926 = vadd.f32 %v1706, %v1911
  %v1927 = vadd.f32 %v1707, %v1916
  %v1928 = vld [vmem:[%s11] sm:$0x1]
  %v1929 = vld [vmem:[%s12] sm:$0x1]
  %v1930 = vsel %vm135, %v1921, 0.0
  %1931 = vadd.xlane.f32.xlu0 %v1930
  %v1932 = vpop.xlane.xlu0 %1931
  %v1933 = vsel %vm135, %v1922, 0.0
  %1934 = vadd.xlane.f32.xlu0 %v1933
  %v1935 = vpop.xlane.xlu0 %1934
  %v1936 = vsel %vm135, %v1923, 0.0
  %1937 = vadd.xlane.f32.xlu0 %v1936
  %v1938 = vpop.xlane.xlu0 %1937
  %v1939 = vsel %vm135, %v1924, 0.0
  %1940 = vadd.xlane.f32.xlu0 %v1939
  %v1941 = vpop.xlane.xlu0 %1940
  %v1942 = vsel %vm135, %v1925, 0.0
  %1943 = vadd.xlane.f32.xlu0 %v1942
  %v1944 = vpop.xlane.xlu0 %1943
  %v1945 = vsel %vm135, %v1926, 0.0
  %1946 = vadd.xlane.f32.xlu0 %v1945
  %v1947 = vpop.xlane.xlu0 %1946
  %v1948 = vsel %vm135, %v1927, 0.0
  %1949 = vadd.xlane.f32.xlu0 %v1948
  %v1950 = vpop.xlane.xlu0 %1949
  %v1951 = vmul.f32 %v1932, %v1611
  %v1952 = vmul.f32 %v1935, %v1611
  %v1953 = vmul.f32 %v1938, %v1611
  %v1954 = vmul.f32 %v1941, %v1611
  %v1955 = vmul.f32 %v1944, %v1611
  %v1956 = vmul.f32 %v1947, %v1611
  %v1957 = vmul.f32 %v1950, %v1611
  %v1958 = vsub.f32 %v1921, %v1951
  %v1959 = vsub.f32 %v1922, %v1952
  %v1960 = vsub.f32 %v1923, %v1953
  %v1961 = vsub.f32 %v1924, %v1954
  %v1962 = vsub.f32 %v1925, %v1955
  %v1963 = vsub.f32 %v1926, %v1956
  %v1964 = vsub.f32 %v1927, %v1957
  %v1965 = vmul.f32 %v1958, %v1958
  %v1966 = vmul.f32 %v1959, %v1959
  %v1967 = vmul.f32 %v1960, %v1960
  %v1968 = vmul.f32 %v1961, %v1961
  %v1969 = vmul.f32 %v1962, %v1962
  %v1970 = vmul.f32 %v1963, %v1963
  %v1971 = vmul.f32 %v1964, %v1964
  %v1972 = vsel %vm135, %v1965, 0.0
  %1973 = vadd.xlane.f32.xlu0 %v1972
  %v1974 = vpop.xlane.xlu0 %1973
  %v1975 = vsel %vm135, %v1966, 0.0
  %1976 = vadd.xlane.f32.xlu0 %v1975
  %v1977 = vpop.xlane.xlu0 %1976
  %v1978 = vsel %vm135, %v1967, 0.0
  %1979 = vadd.xlane.f32.xlu0 %v1978
  %v1980 = vpop.xlane.xlu0 %1979
  %v1981 = vsel %vm135, %v1968, 0.0
  %1982 = vadd.xlane.f32.xlu0 %v1981
  %v1983 = vpop.xlane.xlu0 %1982
  %v1984 = vsel %vm135, %v1969, 0.0
  %1985 = vadd.xlane.f32.xlu0 %v1984
  %v1986 = vpop.xlane.xlu0 %1985
  %v1987 = vsel %vm135, %v1970, 0.0
  %1988 = vadd.xlane.f32.xlu0 %v1987
  %v1989 = vpop.xlane.xlu0 %1988
  %v1990 = vsel %vm135, %v1971, 0.0
  %1991 = vadd.xlane.f32.xlu0 %v1990
  %v1992 = vpop.xlane.xlu0 %1991
  %v1993 = vmul.f32 %v1974, %v1611
  %v1994 = vmul.f32 %v1977, %v1611
  %v1995 = vmul.f32 %v1980, %v1611
  %v1996 = vmul.f32 %v1983, %v1611
  %v1997 = vmul.f32 %v1986, %v1611
  %v1998 = vmul.f32 %v1989, %v1611
  %v1999 = vmul.f32 %v1992, %v1611
  %v2000 = vadd.f32 %v1993, 1e-05
  %v2001 = vadd.f32 %v1994, 1e-05
  %v2002 = vadd.f32 %v1995, 1e-05
  %v2003 = vadd.f32 %v1996, 1e-05
  %v2004 = vadd.f32 %v1997, 1e-05
  %v2005 = vadd.f32 %v1998, 1e-05
  %v2006 = vadd.f32 %v1999, 1e-05
  %v2007 = vrsqrt.pop %v2000
  %v2008 = vrsqrt.pop %v2001
  %v2009 = vrsqrt.pop %v2002
  %v2010 = vrsqrt.pop %v2003
  %v2011 = vrsqrt.pop %v2004
  %v2012 = vrsqrt.pop %v2005
  %v2013 = vrsqrt.pop %v2006
  %v2014 = vmul.f32 %v1958, %v2007
  %v2015 = vmul.f32 %v1959, %v2008
  %v2016 = vmul.f32 %v1960, %v2009
  %v2017 = vmul.f32 %v1961, %v2010
  %v2018 = vmul.f32 %v1962, %v2011
  %v2019 = vmul.f32 %v1963, %v2012
  %v2020 = vmul.f32 %v1964, %v2013
  %v2022 = vlaneseq
  %v2023 = vshrl.u32 %v2022, 7
  %v2024 = vsub.s32 0, %v2023
  %v2025 = vrot.slane %v1928, %v2024
  %v2027 = vmul.f32 %v2014, %v2025
  %v2028 = vmul.f32 %v2015, %v2025
  %v2029 = vmul.f32 %v2016, %v2025
  %v2030 = vmul.f32 %v2017, %v2025
  %v2031 = vmul.f32 %v2018, %v2025
  %v2032 = vmul.f32 %v2019, %v2025
  %v2033 = vmul.f32 %v2020, %v2025
  %v2035 = vlaneseq
  %v2036 = vshrl.u32 %v2035, 7
  %v2037 = vsub.s32 0, %v2036
  %v2038 = vrot.slane %v1929, %v2037
  %v2040 = vadd.f32 %v2027, %v2038
  %v2041 = vadd.f32 %v2028, %v2038
  %v2042 = vadd.f32 %v2029, %v2038
  %v2043 = vadd.f32 %v2030, %v2038
  %v2044 = vadd.f32 %v2031, %v2038
  %v2045 = vadd.f32 %v2032, %v2038
  %v2046 = vadd.f32 %v2033, %v2038
  %v2047 = vpack.c.bf16 %v2041, %v2040
  %v2048 = vpack.c.bf16 %v2043, %v2042
  %v2049 = vpack.c.bf16 %v2045, %v2044
  %v2050 = vpack.c.bf16 %v2046, %v2046
  %v2055 = vunpack.c.l.b16 %v2047
  %v2056 = vunpack.c.h.b16 %v2047
  %v2057 = vunpack.c.l.b16 %v2048
  %v2058 = vunpack.c.h.b16 %v2048
  %v2059 = vunpack.c.l.b16 %v2049
  %v2060 = vunpack.c.h.b16 %v2049
  %v2061 = vunpack.c.l.b16 %v2050
  %v2062 = vpack.c.b16 %v2055, %v2055
  %v2063 = vpack.c.b16 %v2056, %v2056
  %v2064 = vpack.c.b16 %v2057, %v2057
  %v2065 = vpack.c.b16 %v2058, %v2058
  %v2066 = vpack.c.b16 %v2059, %v2059
  %v2067 = vpack.c.b16 %v2060, %v2060
  %v2068 = vpack.c.b16 %v2061, %v2061
  %vm2076 = vcmask 257024
  %2077 = vst.msk [vmem:[%s13] sm:$0xf] %vm2076, %v2062
  %2078 = vst.msk [vmem:[%s13 + $0x4] sm:$0xf] %vm2076, %v2063
  %2079 = vst.msk [vmem:[%s13 + $0x8] sm:$0xf] %vm2076, %v2064
  %2080 = vst.msk [vmem:[%s13 + $0xc] sm:$0xf] %vm2076, %v2065
  %2081 = vst.msk [vmem:[%s13 + $0x10] sm:$0xf] %vm2076, %v2066
  %2082 = vst.msk [vmem:[%s13 + $0x14] sm:$0xf] %vm2076, %v2067
  %2083 = vst.msk [vmem:[%s13 + $0x18] sm:$0xf] %vm2076, %v2068
  // Predicated region
  $region54: #{spatial_first_transformer_forward.16} parent=0 // pred_check
    _
  $region55: #{spatial_first_transformer_forward.16} parent=0 // pred_check_branch
    %2085 = sbr.rel (0) target = $region57
  $region56: #{spatial_first_transformer_forward.16} parent=0 // pred_region
    _
  $region57: #{spatial_first_transformer_forward.16} parent=0 // pred_fallthru
    _
  // Predicated region
  $region58: #{spatial_first_transformer_forward.16} parent=0 // pred_check
    _
  $region59: #{spatial_first_transformer_forward.16} parent=0 // pred_check_branch
    %2087 = sbr.rel (0) target = $region61
  $region60: #{spatial_first_transformer_forward.16} parent=0 // pred_region
    _
  $region61: #{spatial_first_transformer_forward.16} parent=0 // pred_fallthru
    _

// kernel: spatial_first_transformer_forward.18
$region0: #{spatial_first_transformer_forward.18}
  #allocation0 [shape = 'u32[]', space=smem, size = 0x4, offset = 0x4, fixed_abs, tag = 'smem constant byte address 0x4 - core index']
  #allocation1 [shape = 'u32[144,128]{1,0:T(1,128)}', space=vmem, size = 0x12000, scoped, tag = 'internal scratch']
  %s0 = inlined_call_operand.vmem [shape: bf16[16,32], index: 0, kind: input, shape index: {}]
  %s1 = inlined_call_operand.vmem [shape: f32[1,32], index: 1, kind: input, shape index: {}]
  %s2 = inlined_call_operand.vmem [shape: f32[1,32], index: 2, kind: input, shape index: {}]
  %s3 = inlined_call_operand.vmem [shape: f32[16,32], index: 3, kind: output, shape index: {}]
  %s4 = sld [smem:[#allocation0]]
  $region22: #{spatial_first_transformer_forward.18} parent=0
    _
  %s6 = ssub.s32 1, %s4
  %s7 = scalar_select 0, %s6, %s4
  // Predicated region
  $region2: #{spatial_first_transformer_forward.18} parent=0 // pred_check
    _
  $region3: #{spatial_first_transformer_forward.18} parent=0 // pred_check_branch
    %9 = sbr.rel (0) target = $region5
  $region4: #{spatial_first_transformer_forward.18} parent=0 // pred_region
    _
  $region5: #{spatial_first_transformer_forward.18} parent=0 // pred_fallthru
    _
  // Predicated region
  $region6: #{spatial_first_transformer_forward.18} parent=0 // pred_check
    _
  $region7: #{spatial_first_transformer_forward.18} parent=0 // pred_check_branch
    %11 = sbr.rel (0) target = $region9
  $region8: #{spatial_first_transformer_forward.18} parent=0 // pred_region
    _
  $region9: #{spatial_first_transformer_forward.18} parent=0 // pred_fallthru
    _
  // Predicated region
  $region10: #{spatial_first_transformer_forward.18} parent=0 // pred_check
    _
  $region11: #{spatial_first_transformer_forward.18} parent=0 // pred_check_branch
    %13 = sbr.rel (0) target = $region13
  $region12: #{spatial_first_transformer_forward.18} parent=0 // pred_region
    _
  $region13: #{spatial_first_transformer_forward.18} parent=0 // pred_fallthru
    _
  %v14 = vld [vmem:[%s0] sm:$0xf]
  %v15 = vld [vmem:[%s0 + $0x4] sm:$0xf]
  %v16 = vunpack.c.l.bf16 %v14
  %v17 = vunpack.c.l.bf16 %v15
  %v18 = vld [vmem:[%s1] sm:$0x1]
  %v19 = vld [vmem:[%s2] sm:$0x1]
  %vm20 = vcmask 261120
  %v21 = vsel %vm20, %v16, 0.0
  %22 = vadd.xlane.f32.xlu0 %v21
  %v23 = vpop.xlane.xlu0 %22
  %v24 = vsel %vm20, %v17, 0.0
  %25 = vadd.xlane.f32.xlu0 %v24
  %v26 = vpop.xlane.xlu0 %25
  %v27 = vrcp.pop 32.0
  %v28 = vmul.f32 %v23, %v27
  %v29 = vmul.f32 %v26, %v27
  %v30 = vsub.f32 %v16, %v28
  %v31 = vsub.f32 %v17, %v29
  %v32 = vmul.f32 %v30, %v30
  %v33 = vmul.f32 %v31, %v31
  %v34 = vsel %vm20, %v32, 0.0
  %35 = vadd.xlane.f32.xlu0 %v34
  %v36 = vpop.xlane.xlu0 %35
  %v37 = vsel %vm20, %v33, 0.0
  %38 = vadd.xlane.f32.xlu0 %v37
  %v39 = vpop.xlane.xlu0 %38
  %v40 = vmul.f32 %v36, %v27
  %v41 = vmul.f32 %v39, %v27
  %v42 = vadd.f32 %v40, 1e-05
  %v43 = vadd.f32 %v41, 1e-05
  %v44 = vrsqrt.pop %v42
  %v45 = vrsqrt.pop %v43
  %v46 = vmul.f32 %v30, %v44
  %v47 = vmul.f32 %v31, %v45
  %v49 = vlaneseq
  %v50 = vshrl.u32 %v49, 7
  %v51 = vsub.s32 0, %v50
  %v52 = vrot.slane %v18, %v51
  %v54 = vmul.f32 %v46, %v52
  %v55 = vmul.f32 %v47, %v52
  %v57 = vlaneseq
  %v58 = vshrl.u32 %v57, 7
  %v59 = vsub.s32 0, %v58
  %v60 = vrot.slane %v19, %v59
  %v62 = vadd.f32 %v54, %v60
  %v63 = vadd.f32 %v55, %v60
  %64 = vst.msk [vmem:[%s3] sm:$0xff] %vm20, %v62
  %65 = vst.msk [vmem:[%s3 + $0x8] sm:$0xff] %vm20, %v63
  // Predicated region
  $region14: #{spatial_first_transformer_forward.18} parent=0 // pred_check
    _
  $region15: #{spatial_first_transformer_forward.18} parent=0 // pred_check_branch
    %67 = sbr.rel (0) target = $region17
  $region16: #{spatial_first_transformer_forward.18} parent=0 // pred_region
    _
  $region17: #{spatial_first_transformer_forward.18} parent=0 // pred_fallthru
    _
  // Predicated region
  $region18: #{spatial_first_transformer_forward.18} parent=0 // pred_check
    _
  $region19: #{spatial_first_transformer_forward.18} parent=0 // pred_check_branch
    %69 = sbr.rel (0) target = $region21
  $region20: #{spatial_first_transformer_forward.18} parent=0 // pred_region
    _
  $region21: #{spatial_first_transformer_forward.18} parent=0 // pred_fallthru
    _

// kernel: spatial_first_transformer_forward.17
$region0: #{spatial_first_transformer_forward.17}
  #allocation0 [shape = 'u32[]', space=smem, size = 0x4, offset = 0x4, fixed_abs, tag = 'smem constant byte address 0x4 - core index']
  #allocation1 [shape = 'u32[144,128]{1,0:T(1,128)}', space=vmem, size = 0x12000, scoped, tag = 'internal scratch']
  %s0 = inlined_call_operand.vmem [shape: bf16[56,32], index: 0, kind: input, shape index: {}]
  %s1 = inlined_call_operand.vmem [shape: bf16[32,96], index: 1, kind: input, shape index: {}]
  %s2 = inlined_call_operand.vmem [shape: f32[1,96], index: 2, kind: input, shape index: {}]
  %s3 = inlined_call_operand.vmem [shape: bf16[32,32], index: 3, kind: input, shape index: {}]
  %s4 = inlined_call_operand.vmem [shape: f32[1,32], index: 4, kind: input, shape index: {}]
  %s5 = inlined_call_operand.vmem [shape: f32[1,32], index: 5, kind: input, shape index: {}]
  %s6 = inlined_call_operand.vmem [shape: f32[1,32], index: 6, kind: input, shape index: {}]
  %s7 = inlined_call_operand.vmem [shape: bf16[32,32], index: 7, kind: input, shape index: {}]
  %s8 = inlined_call_operand.vmem [shape: f32[1,32], index: 8, kind: input, shape index: {}]
  %s9 = inlined_call_operand.vmem [shape: bf16[32,32], index: 9, kind: input, shape index: {}]
  %s10 = inlined_call_operand.vmem [shape: f32[1,32], index: 10, kind: input, shape index: {}]
  %s11 = inlined_call_operand.vmem [shape: f32[1,32], index: 11, kind: input, shape index: {}]
  %s12 = inlined_call_operand.vmem [shape: f32[1,32], index: 12, kind: input, shape index: {}]
  %s13 = inlined_call_operand.vmem [shape: bf16[56,32], index: 13, kind: output, shape index: {}]
  %s14 = sld [smem:[#allocation0]]
  $region62: #{spatial_first_transformer_forward.17} parent=0
    _
  %s16 = ssub.s32 1, %s14
  %s17 = scalar_select 0, %s16, %s14
  // Predicated region
  $region2: #{spatial_first_transformer_forward.17} parent=0 // pred_check
    _
  $region3: #{spatial_first_transformer_forward.17} parent=0 // pred_check_branch
    %19 = sbr.rel (0) target = $region5
  $region4: #{spatial_first_transformer_forward.17} parent=0 // pred_region
    _
  $region5: #{spatial_first_transformer_forward.17} parent=0 // pred_fallthru
    _
  // Predicated region
  $region6: #{spatial_first_transformer_forward.17} parent=0 // pred_check
    _
  $region7: #{spatial_first_transformer_forward.17} parent=0 // pred_check_branch
    %21 = sbr.rel (0) target = $region9
  $region8: #{spatial_first_transformer_forward.17} parent=0 // pred_region
    _
  $region9: #{spatial_first_transformer_forward.17} parent=0 // pred_fallthru
    _
  // Predicated region
  $region10: #{spatial_first_transformer_forward.17} parent=0 // pred_check
    _
  $region11: #{spatial_first_transformer_forward.17} parent=0 // pred_check_branch
    %23 = sbr.rel (0) target = $region13
  $region12: #{spatial_first_transformer_forward.17} parent=0 // pred_region
    _
  $region13: #{spatial_first_transformer_forward.17} parent=0 // pred_fallthru
    _
  // Predicated region
  $region14: #{spatial_first_transformer_forward.17} parent=0 // pred_check
    _
  $region15: #{spatial_first_transformer_forward.17} parent=0 // pred_check_branch
    %25 = sbr.rel (0) target = $region17
  $region16: #{spatial_first_transformer_forward.17} parent=0 // pred_region
    _
  $region17: #{spatial_first_transformer_forward.17} parent=0 // pred_fallthru
    _
  // Predicated region
  $region18: #{spatial_first_transformer_forward.17} parent=0 // pred_check
    _
  $region19: #{spatial_first_transformer_forward.17} parent=0 // pred_check_branch
    %27 = sbr.rel (0) target = $region21
  $region20: #{spatial_first_transformer_forward.17} parent=0 // pred_region
    _
  $region21: #{spatial_first_transformer_forward.17} parent=0 // pred_fallthru
    _
  // Predicated region
  $region22: #{spatial_first_transformer_forward.17} parent=0 // pred_check
    _
  $region23: #{spatial_first_transformer_forward.17} parent=0 // pred_check_branch
    %29 = sbr.rel (0) target = $region25
  $region24: #{spatial_first_transformer_forward.17} parent=0 // pred_region
    _
  $region25: #{spatial_first_transformer_forward.17} parent=0 // pred_fallthru
    _
  // Predicated region
  $region26: #{spatial_first_transformer_forward.17} parent=0 // pred_check
    _
  $region27: #{spatial_first_transformer_forward.17} parent=0 // pred_check_branch
    %31 = sbr.rel (0) target = $region29
  $region28: #{spatial_first_transformer_forward.17} parent=0 // pred_region
    _
  $region29: #{spatial_first_transformer_forward.17} parent=0 // pred_fallthru
    _
  // Predicated region
  $region30: #{spatial_first_transformer_forward.17} parent=0 // pred_check
    _
  $region31: #{spatial_first_transformer_forward.17} parent=0 // pred_check_branch
    %33 = sbr.rel (0) target = $region33
  $region32: #{spatial_first_transformer_forward.17} parent=0 // pred_region
    _
  $region33: #{spatial_first_transformer_forward.17} parent=0 // pred_fallthru
    _
  // Predicated region
  $region34: #{spatial_first_transformer_forward.17} parent=0 // pred_check
    _
  $region35: #{spatial_first_transformer_forward.17} parent=0 // pred_check_branch
    %35 = sbr.rel (0) target = $region37
  $region36: #{spatial_first_transformer_forward.17} parent=0 // pred_region
    _
  $region37: #{spatial_first_transformer_forward.17} parent=0 // pred_fallthru
    _
  // Predicated region
  $region38: #{spatial_first_transformer_forward.17} parent=0 // pred_check
    _
  $region39: #{spatial_first_transformer_forward.17} parent=0 // pred_check_branch
    %37 = sbr.rel (0) target = $region41
  $region40: #{spatial_first_transformer_forward.17} parent=0 // pred_region
    _
  $region41: #{spatial_first_transformer_forward.17} parent=0 // pred_fallthru
    _
  // Predicated region
  $region42: #{spatial_first_transformer_forward.17} parent=0 // pred_check
    _
  $region43: #{spatial_first_transformer_forward.17} parent=0 // pred_check_branch
    %39 = sbr.rel (0) target = $region45
  $region44: #{spatial_first_transformer_forward.17} parent=0 // pred_region
    _
  $region45: #{spatial_first_transformer_forward.17} parent=0 // pred_fallthru
    _
  // Predicated region
  $region46: #{spatial_first_transformer_forward.17} parent=0 // pred_check
    _
  $region47: #{spatial_first_transformer_forward.17} parent=0 // pred_check_branch
    %41 = sbr.rel (0) target = $region49
  $region48: #{spatial_first_transformer_forward.17} parent=0 // pred_region
    _
  $region49: #{spatial_first_transformer_forward.17} parent=0 // pred_fallthru
    _
  // Predicated region
  $region50: #{spatial_first_transformer_forward.17} parent=0 // pred_check
    _
  $region51: #{spatial_first_transformer_forward.17} parent=0 // pred_check_branch
    %43 = sbr.rel (0) target = $region53
  $region52: #{spatial_first_transformer_forward.17} parent=0 // pred_region
    _
  $region53: #{spatial_first_transformer_forward.17} parent=0 // pred_fallthru
    _
  %v45 = vld [vmem:[%s0] sm:$0xf]
  %v46 = vld [vmem:[%s0 + $0x4] sm:$0xf]
  %v47 = vld [vmem:[%s0 + $0x8] sm:$0xf]
  %v48 = vld [vmem:[%s0 + $0xc] sm:$0xf]
  %v49 = vld [vmem:[%s0 + $0x10] sm:$0xf]
  %v50 = vld [vmem:[%s0 + $0x14] sm:$0xf]
  %v51 = vld [vmem:[%s0 + $0x18] sm:$0xf]
  %v52 = vunpack.c.l.bf16 %v45
  %v53 = vunpack.c.l.bf16 %v46
  %v54 = vunpack.c.l.bf16 %v47
  %v55 = vunpack.c.l.bf16 %v48
  %v56 = vunpack.c.l.bf16 %v49
  %v57 = vunpack.c.l.bf16 %v50
  %v58 = vunpack.c.l.bf16 %v51
  %v59 = vlaneseq
  %v60 = vshrl.u32 %v59, 7
  %v61 = vadd.s32 %v60, 8
  %v62 = vadd.s32 %v60, 16
  %v63 = vadd.s32 %v60, 24
  %v64 = vadd.s32 %v60, 32
  %v65 = vadd.s32 %v60, 40
  %v66 = vadd.s32 %v60, 48
  %v67 = vcvt.s32.f32 %v60
  %v68 = vcvt.s32.f32 %v61
  %v69 = vcvt.s32.f32 %v62
  %v70 = vcvt.s32.f32 %v63
  %v71 = vcvt.s32.f32 %v64
  %v72 = vcvt.s32.f32 %v65
  %v73 = vcvt.s32.f32 %v66
  %v74 = vlaneseq
  %v75 = vand.u32 %v74, 127
  %v76 = vcvt.s32.f32 %v75
  %v77 = vadd.f32 %v67, 0.5
  %v78 = vadd.f32 %v68, 0.5
  %v79 = vadd.f32 %v69, 0.5
  %v80 = vadd.f32 %v70, 0.5
  %v81 = vadd.f32 %v71, 0.5
  %v82 = vadd.f32 %v72, 0.5
  %v83 = vadd.f32 %v73, 0.5
  %v84 = vmul.f32 %v77, 0.071428575
  %v85 = vmul.f32 %v78, 0.071428575
  %v86 = vmul.f32 %v79, 0.071428575
  %v87 = vmul.f32 %v80, 0.071428575
  %v88 = vmul.f32 %v81, 0.071428575
  %v89 = vmul.f32 %v82, 0.071428575
  %v90 = vmul.f32 %v83, 0.071428575
  %v91 = vfloor.f32 %v84
  %v92 = vfloor.f32 %v85
  %v93 = vfloor.f32 %v86
  %v94 = vfloor.f32 %v87
  %v95 = vfloor.f32 %v88
  %v96 = vfloor.f32 %v89
  %v97 = vfloor.f32 %v90
  %v98 = vadd.f32 %v76, 0.5
  %v99 = vmul.f32 %v98, 0.071428575
  %v100 = vfloor.f32 %v99
  %vm101 = vcmp.eq.f32.partialorder %v91, %v100
  %vm102 = vcmp.eq.f32.partialorder %v92, %v100
  %vm103 = vcmp.eq.f32.partialorder %v93, %v100
  %vm104 = vcmp.eq.f32.partialorder %v94, %v100
  %vm105 = vcmp.eq.f32.partialorder %v95, %v100
  %vm106 = vcmp.eq.f32.partialorder %v96, %v100
  %vm107 = vcmp.eq.f32.partialorder %v97, %v100
  %v108 = vsel %vm101, 0.0, -1e+30
  %v109 = vsel %vm102, 0.0, -1e+30
  %v110 = vsel %vm103, 0.0, -1e+30
  %v111 = vsel %vm104, 0.0, -1e+30
  %v112 = vsel %vm105, 0.0, -1e+30
  %v113 = vsel %vm106, 0.0, -1e+30
  %v114 = vsel %vm107, 0.0, -1e+30
  %v115 = vld [vmem:[%s1] sm:$0xf]
  %v116 = vld [vmem:[%s1 + $0x4] sm:$0xf]
  %v117 = vld [vmem:[%s1 + $0x8] sm:$0xf]
  %v118 = vld [vmem:[%s1 + $0xc] sm:$0xf]
  %v119 = vld [vmem:[%s2] sm:$0x1]
  %v121 = vlaneseq
  %v122 = vshrl.u32 %v121, 7
  %v123 = vsub.s32 0, %v122
  %v124 = vrot.slane %v119, %v123
  %v133 = vunpack.c.l.b16 %v45
  %v134 = vunpack.c.l.b16 %v46
  %v135 = vunpack.c.l.b16 %v47
  %v136 = vunpack.c.l.b16 %v48
  %v137 = vunpack.c.l.b16 %v49
  %v138 = vunpack.c.l.b16 %v50
  %v139 = vunpack.c.l.b16 %v51
  %v140 = vpack.c.b16 %v134, %v133
  %v141 = vpack.c.b16 %v136, %v135
  %v142 = vpack.c.b16 %v138, %v137
  %v143 = vpack.c.b16 %v139, %v139
  %v148 = vunpack.c.l.b16 %v115
  %v149 = vunpack.c.l.b16 %v116
  %v150 = vunpack.c.l.b16 %v117
  %v151 = vunpack.c.l.b16 %v118
  %v152 = vpack.c.b16 %v149, %v148
  %v153 = vpack.c.b16 %v151, %v150
  %vm156 = vcmask 261120
  %v158 = vsel %vm156, %v140, 0
  %v161 = vsel %vm156, %v141, 0
  %v164 = vsel %vm156, %v142, 0
  %v167 = vsel %vm156, %v143, 0
  %169 = vmatprep.subr.bf16.mxu0 0
  %170 = vmatpush1.bf16.msra.mxu0 %v152
  %171 = vmatprep.subr.bf16.mxu0 0
  %172 = vmatpush1.bf16.msra.mxu0 %v153
  %173 = vmatprep.subr.bf16.mxu0 0
  %174 = vmatpush1.bf16.msra.mxu0 0
  %175 = vmatprep.subr.bf16.mxu0 0
  %176 = vmatpush1.bf16.msra.mxu0 0
  %177 = vmatprep.subr.bf16.mxu0 0
  %178 = vmatpush1.bf16.msra.mxu0 0
  %179 = vmatprep.subr.bf16.mxu0 0
  %180 = vmatpush1.bf16.msra.mxu0 0
  %181 = vmatprep.subr.bf16.mxu0 0
  %182 = vmatpush1.bf16.msra.mxu0 0
  %183 = vmatprep.subr.bf16.mxu0 0
  %184 = vmatpush1.bf16.msra.mxu0 0
  %185 = vmatprep.subr.bf16.mxu0 0
  %186 = vmatpush1.bf16.msra.mxu0 0
  %187 = vmatprep.subr.bf16.mxu0 0
  %188 = vmatpush1.bf16.msra.mxu0 0
  %189 = vmatprep.subr.bf16.mxu0 0
  %190 = vmatpush1.bf16.msra.mxu0 0
  %191 = vmatprep.subr.bf16.mxu0 0
  %192 = vmatpush1.bf16.msra.mxu0 0
  %193 = vmatprep.subr.bf16.mxu0 0
  %194 = vmatpush1.bf16.msra.mxu0 0
  %195 = vmatprep.subr.bf16.mxu0 0
  %196 = vmatpush1.bf16.msra.mxu0 0
  %197 = vmatprep.subr.bf16.mxu0 0
  %198 = vmatpush1.bf16.msra.mxu0 0
  %199 = vmatprep.subr.bf16.mxu0 0
  %200 = vmatpush1.bf16.msra.mxu0 0
  %201 = vmatprep.mubr.bf16.mxu0 0
  %202 = vmatmul.mubr.bf16.gmra.mrb[0].mxu0 %v158
  %v203 = vpop.f32.mrb[0].mxu0
  %v204 = vadd.f32 %v124, %v203
  %v205 = vpop.f32.mrb[0].mxu0
  %v206 = vpop.f32.mrb[0].mxu0
  %v207 = vadd.f32 %v124, %v206
  %v208 = vpop.f32.mrb[0].mxu0
  %209 = vmatprep.mubr.bf16.mxu0 0
  %210 = vmatmul.mubr.bf16.gmra.mrb[0].mxu0 %v161
  %v211 = vpop.f32.mrb[0].mxu0
  %v212 = vadd.f32 %v124, %v211
  %v213 = vpop.f32.mrb[0].mxu0
  %v214 = vpop.f32.mrb[0].mxu0
  %v215 = vadd.f32 %v124, %v214
  %v216 = vpop.f32.mrb[0].mxu0
  %217 = vmatprep.mubr.bf16.mxu0 0
  %218 = vmatmul.mubr.bf16.gmra.mrb[0].mxu0 %v164
  %v219 = vpop.f32.mrb[0].mxu0
  %v220 = vadd.f32 %v124, %v219
  %v221 = vpop.f32.mrb[0].mxu0
  %v222 = vpop.f32.mrb[0].mxu0
  %v223 = vadd.f32 %v124, %v222
  %v224 = vpop.f32.mrb[0].mxu0
  %225 = vmatprep.mubr.bf16.mxu0 0
  %226 = vmatmul.mubr.bf16.gmra.mrb[0].mxu0 %v167
  %v227 = vpop.f32.mrb[0].mxu0
  %v228 = vadd.f32 %v124, %v227
  %v229 = vpop.f32.mrb[0].mxu0
  %v230 = vpop.f32.mrb[0].mxu0
  %v231 = vpop.f32.mrb[0].mxu0
  %232 = vdwg.mxu0
  %v233 = vpack.c.bf16 %v207, %v204
  %v234 = vpack.c.bf16 %v215, %v212
  %v235 = vpack.c.bf16 %v223, %v220
  %v236 = vpack.c.bf16 %v228, %v228
  %241 = vrot.lane.b32.xlu0 %v233, 96
  %v242 = vpop.permute.xlu0 %241
  %243 = vrot.lane.b32.xlu0 %v234, 96
  %v244 = vpop.permute.xlu0 %243
  %245 = vrot.lane.b32.xlu0 %v235, 96
  %v246 = vpop.permute.xlu0 %245
  %247 = vrot.lane.b32.xlu0 %v236, 96
  %v248 = vpop.permute.xlu0 %247
  %vm249 = vcmask 64512
  %v251 = vsel %vm249, %v233, 0
  %v254 = vsel %vm249, %v234, 0
  %v257 = vsel %vm249, %v235, 0
  %v260 = vsel %vm249, %v236, 0
  %v263 = vsel %vm249, %v242, 0
  %v266 = vsel %vm249, %v244, 0
  %v269 = vsel %vm249, %v246, 0
  %v272 = vsel %vm249, %v248, 0
  %274 = vmatprep.subr.bf16.mxu0 0
  %275 = vmatpush1.bf16.xpose.msra.mxu0 %v263
  %276 = vmatprep.subr.bf16.mxu0 0
  %277 = vmatpush1.bf16.xpose.msra.mxu0 %v266
  %278 = vmatprep.subr.bf16.mxu0 0
  %279 = vmatpush1.bf16.xpose.msra.mxu0 %v269
  %280 = vmatprep.subr.bf16.mxu0 0
  %281 = vmatpush1.bf16.xpose.msra.mxu0 %v272
  %282 = vmatprep.subr.bf16.mxu0 0
  %283 = vmatpush1.bf16.xpose.msra.mxu0 0
  %284 = vmatprep.subr.bf16.mxu0 0
  %285 = vmatpush1.bf16.xpose.msra.mxu0 0
  %286 = vmatprep.subr.bf16.mxu0 0
  %287 = vmatpush1.bf16.xpose.msra.mxu0 0
  %288 = vmatprep.subr.bf16.mxu0 0
  %289 = vmatpush1.bf16.xpose.msra.mxu0 0
  %290 = vmatprep.subr.bf16.mxu0 0
  %291 = vmatpush1.bf16.xpose.msra.mxu0 0
  %292 = vmatprep.subr.bf16.mxu0 0
  %293 = vmatpush1.bf16.xpose.msra.mxu0 0
  %294 = vmatprep.subr.bf16.mxu0 0
  %295 = vmatpush1.bf16.xpose.msra.mxu0 0
  %296 = vmatprep.subr.bf16.mxu0 0
  %297 = vmatpush1.bf16.xpose.msra.mxu0 0
  %298 = vmatprep.subr.bf16.mxu0 0
  %299 = vmatpush1.bf16.xpose.msra.mxu0 0
  %300 = vmatprep.subr.bf16.mxu0 0
  %301 = vmatpush1.bf16.xpose.msra.mxu0 0
  %302 = vmatprep.subr.bf16.mxu0 0
  %303 = vmatpush1.bf16.xpose.msra.mxu0 0
  %304 = vmatprep.subr.bf16.mxu0 0
  %305 = vmatpush1.bf16.xpose.msra.mxu0 0
  %306 = vmatprep.mubr.bf16.mxu0 0
  %307 = vmatmul.mubr.bf16.gmra.mrb[0].mxu0 %v251
  %v308 = vpop.f32.mrb[0].mxu0
  %v309 = vadd.f32 0.0, %v308
  %v310 = vpop.f32.mrb[0].mxu0
  %v311 = vpop.f32.mrb[0].mxu0
  %v312 = vadd.f32 0.0, %v311
  %v313 = vpop.f32.mrb[0].mxu0
  %314 = vmatprep.mubr.bf16.mxu0 0
  %315 = vmatmul.mubr.bf16.gmra.mrb[0].mxu0 %v254
  %v316 = vpop.f32.mrb[0].mxu0
  %v317 = vadd.f32 0.0, %v316
  %v318 = vpop.f32.mrb[0].mxu0
  %v319 = vpop.f32.mrb[0].mxu0
  %v320 = vadd.f32 0.0, %v319
  %v321 = vpop.f32.mrb[0].mxu0
  %322 = vmatprep.mubr.bf16.mxu0 0
  %323 = vmatmul.mubr.bf16.gmra.mrb[0].mxu0 %v257
  %v324 = vpop.f32.mrb[0].mxu0
  %v325 = vadd.f32 0.0, %v324
  %v326 = vpop.f32.mrb[0].mxu0
  %v327 = vpop.f32.mrb[0].mxu0
  %v328 = vadd.f32 0.0, %v327
  %v329 = vpop.f32.mrb[0].mxu0
  %330 = vmatprep.mubr.bf16.mxu0 0
  %331 = vmatmul.mubr.bf16.gmra.mrb[0].mxu0 %v260
  %v332 = vpop.f32.mrb[0].mxu0
  %v333 = vadd.f32 0.0, %v332
  %v334 = vpop.f32.mrb[0].mxu0
  %v335 = vpop.f32.mrb[0].mxu0
  %v336 = vpop.f32.mrb[0].mxu0
  %337 = vdwg.mxu0
  %v338 = vmul.f32 %v309, 0.35355338
  %v339 = vmul.f32 %v312, 0.35355338
  %v340 = vmul.f32 %v317, 0.35355338
  %v341 = vmul.f32 %v320, 0.35355338
  %v342 = vmul.f32 %v325, 0.35355338
  %v343 = vmul.f32 %v328, 0.35355338
  %v344 = vmul.f32 %v333, 0.35355338
  %v345 = vadd.f32 %v338, %v108
  %v346 = vadd.f32 %v339, %v109
  %v347 = vadd.f32 %v340, %v110
  %v348 = vadd.f32 %v341, %v111
  %v349 = vadd.f32 %v342, %v112
  %v350 = vadd.f32 %v343, %v113
  %v351 = vadd.f32 %v344, %v114
  %vm352 = vcmask 457728
  %v353 = vsel %vm352, %v345, -inf
  %354 = vmax.xlane.f32.xlu0 %v353
  %v355 = vpop.xlane.xlu0 %354
  %v356 = vsel %vm352, %v346, -inf
  %357 = vmax.xlane.f32.xlu0 %v356
  %v358 = vpop.xlane.xlu0 %357
  %v359 = vsel %vm352, %v347, -inf
  %360 = vmax.xlane.f32.xlu0 %v359
  %v361 = vpop.xlane.xlu0 %360
  %v362 = vsel %vm352, %v348, -inf
  %363 = vmax.xlane.f32.xlu0 %v362
  %v364 = vpop.xlane.xlu0 %363
  %v365 = vsel %vm352, %v349, -inf
  %366 = vmax.xlane.f32.xlu0 %v365
  %v367 = vpop.xlane.xlu0 %366
  %v368 = vsel %vm352, %v350, -inf
  %369 = vmax.xlane.f32.xlu0 %v368
  %v370 = vpop.xlane.xlu0 %369
  %v371 = vsel %vm352, %v351, -inf
  %372 = vmax.xlane.f32.xlu0 %v371
  %v373 = vpop.xlane.xlu0 %372
  %v374 = vsub.f32 %v345, %v355
  %v375 = vsub.f32 %v346, %v358
  %v376 = vsub.f32 %v347, %v361
  %v377 = vsub.f32 %v348, %v364
  %v378 = vsub.f32 %v349, %v367
  %v379 = vsub.f32 %v350, %v370
  %v380 = vsub.f32 %v351, %v373
  %v381 = vmul.f32 %v374, 1.442695
  %v382 = vpow.pop %v381
  %v383 = vmul.f32 %v375, 1.442695
  %v384 = vpow.pop %v383
  %v385 = vmul.f32 %v376, 1.442695
  %v386 = vpow.pop %v385
  %v387 = vmul.f32 %v377, 1.442695
  %v388 = vpow.pop %v387
  %v389 = vmul.f32 %v378, 1.442695
  %v390 = vpow.pop %v389
  %v391 = vmul.f32 %v379, 1.442695
  %v392 = vpow.pop %v391
  %v393 = vmul.f32 %v380, 1.442695
  %v394 = vpow.pop %v393
  %v395 = vsel %vm352, %v382, 0.0
  %396 = vadd.xlane.f32.xlu0 %v395
  %v397 = vpop.xlane.xlu0 %396
  %v398 = vsel %vm352, %v384, 0.0
  %399 = vadd.xlane.f32.xlu0 %v398
  %v400 = vpop.xlane.xlu0 %399
  %v401 = vsel %vm352, %v386, 0.0
  %402 = vadd.xlane.f32.xlu0 %v401
  %v403 = vpop.xlane.xlu0 %402
  %v404 = vsel %vm352, %v388, 0.0
  %405 = vadd.xlane.f32.xlu0 %v404
  %v406 = vpop.xlane.xlu0 %405
  %v407 = vsel %vm352, %v390, 0.0
  %408 = vadd.xlane.f32.xlu0 %v407
  %v409 = vpop.xlane.xlu0 %408
  %v410 = vsel %vm352, %v392, 0.0
  %411 = vadd.xlane.f32.xlu0 %v410
  %v412 = vpop.xlane.xlu0 %411
  %v413 = vsel %vm352, %v394, 0.0
  %414 = vadd.xlane.f32.xlu0 %v413
  %v415 = vpop.xlane.xlu0 %414
  %v416 = vrcp.pop %v397
  %v417 = vrcp.pop %v400
  %v418 = vrcp.pop %v403
  %v419 = vrcp.pop %v406
  %v420 = vrcp.pop %v409
  %v421 = vrcp.pop %v412
  %v422 = vrcp.pop %v415
  %v423 = vmul.f32 %v382, %v416
  %v424 = vmul.f32 %v384, %v417
  %v425 = vmul.f32 %v386, %v418
  %v426 = vmul.f32 %v388, %v419
  %v427 = vmul.f32 %v390, %v420
  %v428 = vmul.f32 %v392, %v421
  %v429 = vmul.f32 %v394, %v422
  %v430 = vpack.c.bf16 %v424, %v423
  %v431 = vpack.c.bf16 %v426, %v425
  %v432 = vpack.c.bf16 %v428, %v427
  %v433 = vpack.c.bf16 %v429, %v429
  %434 = vrot.lane.b32.xlu0 %v233, 64
  %v435 = vpop.permute.xlu0 %434
  %436 = vrot.lane.b32.xlu0 %v234, 64
  %v437 = vpop.permute.xlu0 %436
  %438 = vrot.lane.b32.xlu0 %v235, 64
  %v439 = vpop.permute.xlu0 %438
  %440 = vrot.lane.b32.xlu0 %v236, 64
  %v441 = vpop.permute.xlu0 %440
  %v446 = vsel %vm352, %v430, 0
  %v449 = vsel %vm352, %v431, 0
  %v452 = vsel %vm352, %v432, 0
  %v455 = vsel %vm352, %v433, 0
  %vm457 = vcmask 1043456
  %v459 = vsel %vm457, %v441, 0
  %461 = vmatprep.subr.bf16.mxu0 0
  %462 = vmatpush1.bf16.msra.mxu0 %v435
  %463 = vmatprep.subr.bf16.mxu0 0
  %464 = vmatpush1.bf16.msra.mxu0 %v437
  %465 = vmatprep.subr.bf16.mxu0 0
  %466 = vmatpush1.bf16.msra.mxu0 %v439
  %467 = vmatprep.subr.bf16.mxu0 0
  %468 = vmatpush1.bf16.msra.mxu0 %v459
  %469 = vmatprep.subr.bf16.mxu0 0
  %470 = vmatpush1.bf16.msra.mxu0 0
  %471 = vmatprep.subr.bf16.mxu0 0
  %472 = vmatpush1.bf16.msra.mxu0 0
  %473 = vmatprep.subr.bf16.mxu0 0
  %474 = vmatpush1.bf16.msra.mxu0 0
  %475 = vmatprep.subr.bf16.mxu0 0
  %476 = vmatpush1.bf16.msra.mxu0 0
  %477 = vmatprep.subr.bf16.mxu0 0
  %478 = vmatpush1.bf16.msra.mxu0 0
  %479 = vmatprep.subr.bf16.mxu0 0
  %480 = vmatpush1.bf16.msra.mxu0 0
  %481 = vmatprep.subr.bf16.mxu0 0
  %482 = vmatpush1.bf16.msra.mxu0 0
  %483 = vmatprep.subr.bf16.mxu0 0
  %484 = vmatpush1.bf16.msra.mxu0 0
  %485 = vmatprep.subr.bf16.mxu0 0
  %486 = vmatpush1.bf16.msra.mxu0 0
  %487 = vmatprep.subr.bf16.mxu0 0
  %488 = vmatpush1.bf16.msra.mxu0 0
  %489 = vmatprep.subr.bf16.mxu0 0
  %490 = vmatpush1.bf16.msra.mxu0 0
  %491 = vmatprep.subr.bf16.mxu0 0
  %492 = vmatpush1.bf16.msra.mxu0 0
  %493 = vmatprep.mubr.bf16.mxu0 0
  %494 = vmatmul.mubr.bf16.gmra.mrb[0].mxu0 %v446
  %v495 = vpop.f32.mrb[0].mxu0
  %v496 = vadd.f32 0.0, %v495
  %v497 = vpop.f32.mrb[0].mxu0
  %v498 = vpop.f32.mrb[0].mxu0
  %v499 = vadd.f32 0.0, %v498
  %v500 = vpop.f32.mrb[0].mxu0
  %501 = vmatprep.mubr.bf16.mxu0 0
  %502 = vmatmul.mubr.bf16.gmra.mrb[0].mxu0 %v449
  %v503 = vpop.f32.mrb[0].mxu0
  %v504 = vadd.f32 0.0, %v503
  %v505 = vpop.f32.mrb[0].mxu0
  %v506 = vpop.f32.mrb[0].mxu0
  %v507 = vadd.f32 0.0, %v506
  %v508 = vpop.f32.mrb[0].mxu0
  %509 = vmatprep.mubr.bf16.mxu0 0
  %510 = vmatmul.mubr.bf16.gmra.mrb[0].mxu0 %v452
  %v511 = vpop.f32.mrb[0].mxu0
  %v512 = vadd.f32 0.0, %v511
  %v513 = vpop.f32.mrb[0].mxu0
  %v514 = vpop.f32.mrb[0].mxu0
  %v515 = vadd.f32 0.0, %v514
  %v516 = vpop.f32.mrb[0].mxu0
  %517 = vmatprep.mubr.bf16.mxu0 0
  %518 = vmatmul.mubr.bf16.gmra.mrb[0].mxu0 %v455
  %v519 = vpop.f32.mrb[0].mxu0
  %v520 = vadd.f32 0.0, %v519
  %v521 = vpop.f32.mrb[0].mxu0
  %v522 = vpop.f32.mrb[0].mxu0
  %v523 = vpop.f32.mrb[0].mxu0
  %524 = vdwg.mxu0
  %525 = vrot.lane.b32.xlu0 %v233, 120
  %v526 = vpop.permute.xlu0 %525
  %527 = vrot.lane.b32.xlu0 %v234, 120
  %v528 = vpop.permute.xlu0 %527
  %529 = vrot.lane.b32.xlu0 %v235, 120
  %v530 = vpop.permute.xlu0 %529
  %531 = vrot.lane.b32.xlu0 %v236, 120
  %v532 = vpop.permute.xlu0 %531
  %533 = vrot.lane.b32.xlu0 %v233, 88
  %v534 = vpop.permute.xlu0 %533
  %535 = vrot.lane.b32.xlu0 %v234, 88
  %v536 = vpop.permute.xlu0 %535
  %537 = vrot.lane.b32.xlu0 %v235, 88
  %v538 = vpop.permute.xlu0 %537
  %539 = vrot.lane.b32.xlu0 %v236, 88
  %v540 = vpop.permute.xlu0 %539
  %v542 = vsel %vm249, %v526, 0
  %v545 = vsel %vm249, %v528, 0
  %v548 = vsel %vm249, %v530, 0
  %v551 = vsel %vm249, %v532, 0
  %v554 = vsel %vm249, %v534, 0
  %v557 = vsel %vm249, %v536, 0
  %v560 = vsel %vm249, %v538, 0
  %v563 = vsel %vm249, %v540, 0
  %565 = vmatprep.subr.bf16.mxu0 0
  %566 = vmatpush1.bf16.xpose.msra.mxu0 %v554
  %567 = vmatprep.subr.bf16.mxu0 0
  %568 = vmatpush1.bf16.xpose.msra.mxu0 %v557
  %569 = vmatprep.subr.bf16.mxu0 0
  %570 = vmatpush1.bf16.xpose.msra.mxu0 %v560
  %571 = vmatprep.subr.bf16.mxu0 0
  %572 = vmatpush1.bf16.xpose.msra.mxu0 %v563
  %573 = vmatprep.subr.bf16.mxu0 0
  %574 = vmatpush1.bf16.xpose.msra.mxu0 0
  %575 = vmatprep.subr.bf16.mxu0 0
  %576 = vmatpush1.bf16.xpose.msra.mxu0 0
  %577 = vmatprep.subr.bf16.mxu0 0
  %578 = vmatpush1.bf16.xpose.msra.mxu0 0
  %579 = vmatprep.subr.bf16.mxu0 0
  %580 = vmatpush1.bf16.xpose.msra.mxu0 0
  %581 = vmatprep.subr.bf16.mxu0 0
  %582 = vmatpush1.bf16.xpose.msra.mxu0 0
  %583 = vmatprep.subr.bf16.mxu0 0
  %584 = vmatpush1.bf16.xpose.msra.mxu0 0
  %585 = vmatprep.subr.bf16.mxu0 0
  %586 = vmatpush1.bf16.xpose.msra.mxu0 0
  %587 = vmatprep.subr.bf16.mxu0 0
  %588 = vmatpush1.bf16.xpose.msra.mxu0 0
  %589 = vmatprep.subr.bf16.mxu0 0
  %590 = vmatpush1.bf16.xpose.msra.mxu0 0
  %591 = vmatprep.subr.bf16.mxu0 0
  %592 = vmatpush1.bf16.xpose.msra.mxu0 0
  %593 = vmatprep.subr.bf16.mxu0 0
  %594 = vmatpush1.bf16.xpose.msra.mxu0 0
  %595 = vmatprep.subr.bf16.mxu0 0
  %596 = vmatpush1.bf16.xpose.msra.mxu0 0
  %597 = vmatprep.mubr.bf16.mxu0 0
  %598 = vmatmul.mubr.bf16.gmra.mrb[0].mxu0 %v542
  %v599 = vpop.f32.mrb[0].mxu0
  %v600 = vadd.f32 0.0, %v599
  %v601 = vpop.f32.mrb[0].mxu0
  %v602 = vpop.f32.mrb[0].mxu0
  %v603 = vadd.f32 0.0, %v602
  %v604 = vpop.f32.mrb[0].mxu0
  %605 = vmatprep.mubr.bf16.mxu0 0
  %606 = vmatmul.mubr.bf16.gmra.mrb[0].mxu0 %v545
  %v607 = vpop.f32.mrb[0].mxu0
  %v608 = vadd.f32 0.0, %v607
  %v609 = vpop.f32.mrb[0].mxu0
  %v610 = vpop.f32.mrb[0].mxu0
  %v611 = vadd.f32 0.0, %v610
  %v612 = vpop.f32.mrb[0].mxu0
  %613 = vmatprep.mubr.bf16.mxu0 0
  %614 = vmatmul.mubr.bf16.gmra.mrb[0].mxu0 %v548
  %v615 = vpop.f32.mrb[0].mxu0
  %v616 = vadd.f32 0.0, %v615
  %v617 = vpop.f32.mrb[0].mxu0
  %v618 = vpop.f32.mrb[0].mxu0
  %v619 = vadd.f32 0.0, %v618
  %v620 = vpop.f32.mrb[0].mxu0
  %621 = vmatprep.mubr.bf16.mxu0 0
  %622 = vmatmul.mubr.bf16.gmra.mrb[0].mxu0 %v551
  %v623 = vpop.f32.mrb[0].mxu0
  %v624 = vadd.f32 0.0, %v623
  %v625 = vpop.f32.mrb[0].mxu0
  %v626 = vpop.f32.mrb[0].mxu0
  %v627 = vpop.f32.mrb[0].mxu0
  %628 = vdwg.mxu0
  %v629 = vmul.f32 %v600, 0.35355338
  %v630 = vmul.f32 %v603, 0.35355338
  %v631 = vmul.f32 %v608, 0.35355338
  %v632 = vmul.f32 %v611, 0.35355338
  %v633 = vmul.f32 %v616, 0.35355338
  %v634 = vmul.f32 %v619, 0.35355338
  %v635 = vmul.f32 %v624, 0.35355338
  %v636 = vadd.f32 %v629, %v108
  %v637 = vadd.f32 %v630, %v109
  %v638 = vadd.f32 %v631, %v110
  %v639 = vadd.f32 %v632, %v111
  %v640 = vadd.f32 %v633, %v112
  %v641 = vadd.f32 %v634, %v113
  %v642 = vadd.f32 %v635, %v114
  %v643 = vsel %vm352, %v636, -inf
  %644 = vmax.xlane.f32.xlu0 %v643
  %v645 = vpop.xlane.xlu0 %644
  %v646 = vsel %vm352, %v637, -inf
  %647 = vmax.xlane.f32.xlu0 %v646
  %v648 = vpop.xlane.xlu0 %647
  %v649 = vsel %vm352, %v638, -inf
  %650 = vmax.xlane.f32.xlu0 %v649
  %v651 = vpop.xlane.xlu0 %650
  %v652 = vsel %vm352, %v639, -inf
  %653 = vmax.xlane.f32.xlu0 %v652
  %v654 = vpop.xlane.xlu0 %653
  %v655 = vsel %vm352, %v640, -inf
  %656 = vmax.xlane.f32.xlu0 %v655
  %v657 = vpop.xlane.xlu0 %656
  %v658 = vsel %vm352, %v641, -inf
  %659 = vmax.xlane.f32.xlu0 %v658
  %v660 = vpop.xlane.xlu0 %659
  %v661 = vsel %vm352, %v642, -inf
  %662 = vmax.xlane.f32.xlu0 %v661
  %v663 = vpop.xlane.xlu0 %662
  %v664 = vsub.f32 %v636, %v645
  %v665 = vsub.f32 %v637, %v648
  %v666 = vsub.f32 %v638, %v651
  %v667 = vsub.f32 %v639, %v654
  %v668 = vsub.f32 %v640, %v657
  %v669 = vsub.f32 %v641, %v660
  %v670 = vsub.f32 %v642, %v663
  %v671 = vmul.f32 %v664, 1.442695
  %v672 = vpow.pop %v671
  %v673 = vmul.f32 %v665, 1.442695
  %v674 = vpow.pop %v673
  %v675 = vmul.f32 %v666, 1.442695
  %v676 = vpow.pop %v675
  %v677 = vmul.f32 %v667, 1.442695
  %v678 = vpow.pop %v677
  %v679 = vmul.f32 %v668, 1.442695
  %v680 = vpow.pop %v679
  %v681 = vmul.f32 %v669, 1.442695
  %v682 = vpow.pop %v681
  %v683 = vmul.f32 %v670, 1.442695
  %v684 = vpow.pop %v683
  %v685 = vsel %vm352, %v672, 0.0
  %686 = vadd.xlane.f32.xlu0 %v685
  %v687 = vpop.xlane.xlu0 %686
  %v688 = vsel %vm352, %v674, 0.0
  %689 = vadd.xlane.f32.xlu0 %v688
  %v690 = vpop.xlane.xlu0 %689
  %v691 = vsel %vm352, %v676, 0.0
  %692 = vadd.xlane.f32.xlu0 %v691
  %v693 = vpop.xlane.xlu0 %692
  %v694 = vsel %vm352, %v678, 0.0
  %695 = vadd.xlane.f32.xlu0 %v694
  %v696 = vpop.xlane.xlu0 %695
  %v697 = vsel %vm352, %v680, 0.0
  %698 = vadd.xlane.f32.xlu0 %v697
  %v699 = vpop.xlane.xlu0 %698
  %v700 = vsel %vm352, %v682, 0.0
  %701 = vadd.xlane.f32.xlu0 %v700
  %v702 = vpop.xlane.xlu0 %701
  %v703 = vsel %vm352, %v684, 0.0
  %704 = vadd.xlane.f32.xlu0 %v703
  %v705 = vpop.xlane.xlu0 %704
  %v706 = vrcp.pop %v687
  %v707 = vrcp.pop %v690
  %v708 = vrcp.pop %v693
  %v709 = vrcp.pop %v696
  %v710 = vrcp.pop %v699
  %v711 = vrcp.pop %v702
  %v712 = vrcp.pop %v705
  %v713 = vmul.f32 %v672, %v706
  %v714 = vmul.f32 %v674, %v707
  %v715 = vmul.f32 %v676, %v708
  %v716 = vmul.f32 %v678, %v709
  %v717 = vmul.f32 %v680, %v710
  %v718 = vmul.f32 %v682, %v711
  %v719 = vmul.f32 %v684, %v712
  %v720 = vpack.c.bf16 %v714, %v713
  %v721 = vpack.c.bf16 %v716, %v715
  %v722 = vpack.c.bf16 %v718, %v717
  %v723 = vpack.c.bf16 %v719, %v719
  %724 = vrot.lane.b32.xlu0 %v233, 56
  %v725 = vpop.permute.xlu0 %724
  %726 = vrot.lane.b32.xlu0 %v234, 56
  %v727 = vpop.permute.xlu0 %726
  %728 = vrot.lane.b32.xlu0 %v235, 56
  %v729 = vpop.permute.xlu0 %728
  %730 = vrot.lane.b32.xlu0 %v236, 56
  %v731 = vpop.permute.xlu0 %730
  %v736 = vsel %vm352, %v720, 0
  %v739 = vsel %vm352, %v721, 0
  %v742 = vsel %vm352, %v722, 0
  %v745 = vsel %vm352, %v723, 0
  %v748 = vsel %vm457, %v731, 0
  %750 = vmatprep.subr.bf16.mxu0 0
  %751 = vmatpush1.bf16.msra.mxu0 %v725
  %752 = vmatprep.subr.bf16.mxu0 0
  %753 = vmatpush1.bf16.msra.mxu0 %v727
  %754 = vmatprep.subr.bf16.mxu0 0
  %755 = vmatpush1.bf16.msra.mxu0 %v729
  %756 = vmatprep.subr.bf16.mxu0 0
  %757 = vmatpush1.bf16.msra.mxu0 %v748
  %758 = vmatprep.subr.bf16.mxu0 0
  %759 = vmatpush1.bf16.msra.mxu0 0
  %760 = vmatprep.subr.bf16.mxu0 0
  %761 = vmatpush1.bf16.msra.mxu0 0
  %762 = vmatprep.subr.bf16.mxu0 0
  %763 = vmatpush1.bf16.msra.mxu0 0
  %764 = vmatprep.subr.bf16.mxu0 0
  %765 = vmatpush1.bf16.msra.mxu0 0
  %766 = vmatprep.subr.bf16.mxu0 0
  %767 = vmatpush1.bf16.msra.mxu0 0
  %768 = vmatprep.subr.bf16.mxu0 0
  %769 = vmatpush1.bf16.msra.mxu0 0
  %770 = vmatprep.subr.bf16.mxu0 0
  %771 = vmatpush1.bf16.msra.mxu0 0
  %772 = vmatprep.subr.bf16.mxu0 0
  %773 = vmatpush1.bf16.msra.mxu0 0
  %774 = vmatprep.subr.bf16.mxu0 0
  %775 = vmatpush1.bf16.msra.mxu0 0
  %776 = vmatprep.subr.bf16.mxu0 0
  %777 = vmatpush1.bf16.msra.mxu0 0
  %778 = vmatprep.subr.bf16.mxu0 0
  %779 = vmatpush1.bf16.msra.mxu0 0
  %780 = vmatprep.subr.bf16.mxu0 0
  %781 = vmatpush1.bf16.msra.mxu0 0
  %782 = vmatprep.mubr.bf16.mxu0 0
  %783 = vmatmul.mubr.bf16.gmra.mrb[0].mxu0 %v736
  %v784 = vpop.f32.mrb[0].mxu0
  %v785 = vadd.f32 0.0, %v784
  %v786 = vpop.f32.mrb[0].mxu0
  %v787 = vpop.f32.mrb[0].mxu0
  %v788 = vadd.f32 0.0, %v787
  %v789 = vpop.f32.mrb[0].mxu0
  %790 = vmatprep.mubr.bf16.mxu0 0
  %791 = vmatmul.mubr.bf16.gmra.mrb[0].mxu0 %v739
  %v792 = vpop.f32.mrb[0].mxu0
  %v793 = vadd.f32 0.0, %v792
  %v794 = vpop.f32.mrb[0].mxu0
  %v795 = vpop.f32.mrb[0].mxu0
  %v796 = vadd.f32 0.0, %v795
  %v797 = vpop.f32.mrb[0].mxu0
  %798 = vmatprep.mubr.bf16.mxu0 0
  %799 = vmatmul.mubr.bf16.gmra.mrb[0].mxu0 %v742
  %v800 = vpop.f32.mrb[0].mxu0
  %v801 = vadd.f32 0.0, %v800
  %v802 = vpop.f32.mrb[0].mxu0
  %v803 = vpop.f32.mrb[0].mxu0
  %v804 = vadd.f32 0.0, %v803
  %v805 = vpop.f32.mrb[0].mxu0
  %806 = vmatprep.mubr.bf16.mxu0 0
  %807 = vmatmul.mubr.bf16.gmra.mrb[0].mxu0 %v745
  %v808 = vpop.f32.mrb[0].mxu0
  %v809 = vadd.f32 0.0, %v808
  %v810 = vpop.f32.mrb[0].mxu0
  %v811 = vpop.f32.mrb[0].mxu0
  %v812 = vpop.f32.mrb[0].mxu0
  %813 = vdwg.mxu0
  %814 = vrot.lane.b32.xlu0 %v233, 112
  %v815 = vpop.permute.xlu0 %814
  %816 = vrot.lane.b32.xlu0 %v234, 112
  %v817 = vpop.permute.xlu0 %816
  %818 = vrot.lane.b32.xlu0 %v235, 112
  %v819 = vpop.permute.xlu0 %818
  %820 = vrot.lane.b32.xlu0 %v236, 112
  %v821 = vpop.permute.xlu0 %820
  %822 = vrot.lane.b32.xlu0 %v233, 80
  %v823 = vpop.permute.xlu0 %822
  %824 = vrot.lane.b32.xlu0 %v234, 80
  %v825 = vpop.permute.xlu0 %824
  %826 = vrot.lane.b32.xlu0 %v235, 80
  %v827 = vpop.permute.xlu0 %826
  %828 = vrot.lane.b32.xlu0 %v236, 80
  %v829 = vpop.permute.xlu0 %828
  %v831 = vsel %vm249, %v815, 0
  %v834 = vsel %vm249, %v817, 0
  %v837 = vsel %vm249, %v819, 0
  %v840 = vsel %vm249, %v821, 0
  %v843 = vsel %vm249, %v823, 0
  %v846 = vsel %vm249, %v825, 0
  %v849 = vsel %vm249, %v827, 0
  %v852 = vsel %vm249, %v829, 0
  %854 = vmatprep.subr.bf16.mxu0 0
  %855 = vmatpush1.bf16.xpose.msra.mxu0 %v843
  %856 = vmatprep.subr.bf16.mxu0 0
  %857 = vmatpush1.bf16.xpose.msra.mxu0 %v846
  %858 = vmatprep.subr.bf16.mxu0 0
  %859 = vmatpush1.bf16.xpose.msra.mxu0 %v849
  %860 = vmatprep.subr.bf16.mxu0 0
  %861 = vmatpush1.bf16.xpose.msra.mxu0 %v852
  %862 = vmatprep.subr.bf16.mxu0 0
  %863 = vmatpush1.bf16.xpose.msra.mxu0 0
  %864 = vmatprep.subr.bf16.mxu0 0
  %865 = vmatpush1.bf16.xpose.msra.mxu0 0
  %866 = vmatprep.subr.bf16.mxu0 0
  %867 = vmatpush1.bf16.xpose.msra.mxu0 0
  %868 = vmatprep.subr.bf16.mxu0 0
  %869 = vmatpush1.bf16.xpose.msra.mxu0 0
  %870 = vmatprep.subr.bf16.mxu0 0
  %871 = vmatpush1.bf16.xpose.msra.mxu0 0
  %872 = vmatprep.subr.bf16.mxu0 0
  %873 = vmatpush1.bf16.xpose.msra.mxu0 0
  %874 = vmatprep.subr.bf16.mxu0 0
  %875 = vmatpush1.bf16.xpose.msra.mxu0 0
  %876 = vmatprep.subr.bf16.mxu0 0
  %877 = vmatpush1.bf16.xpose.msra.mxu0 0
  %878 = vmatprep.subr.bf16.mxu0 0
  %879 = vmatpush1.bf16.xpose.msra.mxu0 0
  %880 = vmatprep.subr.bf16.mxu0 0
  %881 = vmatpush1.bf16.xpose.msra.mxu0 0
  %882 = vmatprep.subr.bf16.mxu0 0
  %883 = vmatpush1.bf16.xpose.msra.mxu0 0
  %884 = vmatprep.subr.bf16.mxu0 0
  %885 = vmatpush1.bf16.xpose.msra.mxu0 0
  %886 = vmatprep.mubr.bf16.mxu0 0
  %887 = vmatmul.mubr.bf16.gmra.mrb[0].mxu0 %v831
  %v888 = vpop.f32.mrb[0].mxu0
  %v889 = vadd.f32 0.0, %v888
  %v890 = vpop.f32.mrb[0].mxu0
  %v891 = vpop.f32.mrb[0].mxu0
  %v892 = vadd.f32 0.0, %v891
  %v893 = vpop.f32.mrb[0].mxu0
  %894 = vmatprep.mubr.bf16.mxu0 0
  %895 = vmatmul.mubr.bf16.gmra.mrb[0].mxu0 %v834
  %v896 = vpop.f32.mrb[0].mxu0
  %v897 = vadd.f32 0.0, %v896
  %v898 = vpop.f32.mrb[0].mxu0
  %v899 = vpop.f32.mrb[0].mxu0
  %v900 = vadd.f32 0.0, %v899
  %v901 = vpop.f32.mrb[0].mxu0
  %902 = vmatprep.mubr.bf16.mxu0 0
  %903 = vmatmul.mubr.bf16.gmra.mrb[0].mxu0 %v837
  %v904 = vpop.f32.mrb[0].mxu0
  %v905 = vadd.f32 0.0, %v904
  %v906 = vpop.f32.mrb[0].mxu0
  %v907 = vpop.f32.mrb[0].mxu0
  %v908 = vadd.f32 0.0, %v907
  %v909 = vpop.f32.mrb[0].mxu0
  %910 = vmatprep.mubr.bf16.mxu0 0
  %911 = vmatmul.mubr.bf16.gmra.mrb[0].mxu0 %v840
  %v912 = vpop.f32.mrb[0].mxu0
  %v913 = vadd.f32 0.0, %v912
  %v914 = vpop.f32.mrb[0].mxu0
  %v915 = vpop.f32.mrb[0].mxu0
  %v916 = vpop.f32.mrb[0].mxu0
  %917 = vdwg.mxu0
  %v918 = vmul.f32 %v889, 0.35355338
  %v919 = vmul.f32 %v892, 0.35355338
  %v920 = vmul.f32 %v897, 0.35355338
  %v921 = vmul.f32 %v900, 0.35355338
  %v922 = vmul.f32 %v905, 0.35355338
  %v923 = vmul.f32 %v908, 0.35355338
  %v924 = vmul.f32 %v913, 0.35355338
  %v925 = vadd.f32 %v918, %v108
  %v926 = vadd.f32 %v919, %v109
  %v927 = vadd.f32 %v920, %v110
  %v928 = vadd.f32 %v921, %v111
  %v929 = vadd.f32 %v922, %v112
  %v930 = vadd.f32 %v923, %v113
  %v931 = vadd.f32 %v924, %v114
  %v932 = vsel %vm352, %v925, -inf
  %933 = vmax.xlane.f32.xlu0 %v932
  %v934 = vpop.xlane.xlu0 %933
  %v935 = vsel %vm352, %v926, -inf
  %936 = vmax.xlane.f32.xlu0 %v935
  %v937 = vpop.xlane.xlu0 %936
  %v938 = vsel %vm352, %v927, -inf
  %939 = vmax.xlane.f32.xlu0 %v938
  %v940 = vpop.xlane.xlu0 %939
  %v941 = vsel %vm352, %v928, -inf
  %942 = vmax.xlane.f32.xlu0 %v941
  %v943 = vpop.xlane.xlu0 %942
  %v944 = vsel %vm352, %v929, -inf
  %945 = vmax.xlane.f32.xlu0 %v944
  %v946 = vpop.xlane.xlu0 %945
  %v947 = vsel %vm352, %v930, -inf
  %948 = vmax.xlane.f32.xlu0 %v947
  %v949 = vpop.xlane.xlu0 %948
  %v950 = vsel %vm352, %v931, -inf
  %951 = vmax.xlane.f32.xlu0 %v950
  %v952 = vpop.xlane.xlu0 %951
  %v953 = vsub.f32 %v925, %v934
  %v954 = vsub.f32 %v926, %v937
  %v955 = vsub.f32 %v927, %v940
  %v956 = vsub.f32 %v928, %v943
  %v957 = vsub.f32 %v929, %v946
  %v958 = vsub.f32 %v930, %v949
  %v959 = vsub.f32 %v931, %v952
  %v960 = vmul.f32 %v953, 1.442695
  %v961 = vpow.pop %v960
  %v962 = vmul.f32 %v954, 1.442695
  %v963 = vpow.pop %v962
  %v964 = vmul.f32 %v955, 1.442695
  %v965 = vpow.pop %v964
  %v966 = vmul.f32 %v956, 1.442695
  %v967 = vpow.pop %v966
  %v968 = vmul.f32 %v957, 1.442695
  %v969 = vpow.pop %v968
  %v970 = vmul.f32 %v958, 1.442695
  %v971 = vpow.pop %v970
  %v972 = vmul.f32 %v959, 1.442695
  %v973 = vpow.pop %v972
  %v974 = vsel %vm352, %v961, 0.0
  %975 = vadd.xlane.f32.xlu0 %v974
  %v976 = vpop.xlane.xlu0 %975
  %v977 = vsel %vm352, %v963, 0.0
  %978 = vadd.xlane.f32.xlu0 %v977
  %v979 = vpop.xlane.xlu0 %978
  %v980 = vsel %vm352, %v965, 0.0
  %981 = vadd.xlane.f32.xlu0 %v980
  %v982 = vpop.xlane.xlu0 %981
  %v983 = vsel %vm352, %v967, 0.0
  %984 = vadd.xlane.f32.xlu0 %v983
  %v985 = vpop.xlane.xlu0 %984
  %v986 = vsel %vm352, %v969, 0.0
  %987 = vadd.xlane.f32.xlu0 %v986
  %v988 = vpop.xlane.xlu0 %987
  %v989 = vsel %vm352, %v971, 0.0
  %990 = vadd.xlane.f32.xlu0 %v989
  %v991 = vpop.xlane.xlu0 %990
  %v992 = vsel %vm352, %v973, 0.0
  %993 = vadd.xlane.f32.xlu0 %v992
  %v994 = vpop.xlane.xlu0 %993
  %v995 = vrcp.pop %v976
  %v996 = vrcp.pop %v979
  %v997 = vrcp.pop %v982
  %v998 = vrcp.pop %v985
  %v999 = vrcp.pop %v988
  %v1000 = vrcp.pop %v991
  %v1001 = vrcp.pop %v994
  %v1002 = vmul.f32 %v961, %v995
  %v1003 = vmul.f32 %v963, %v996
  %v1004 = vmul.f32 %v965, %v997
  %v1005 = vmul.f32 %v967, %v998
  %v1006 = vmul.f32 %v969, %v999
  %v1007 = vmul.f32 %v971, %v1000
  %v1008 = vmul.f32 %v973, %v1001
  %v1009 = vpack.c.bf16 %v1003, %v1002
  %v1010 = vpack.c.bf16 %v1005, %v1004
  %v1011 = vpack.c.bf16 %v1007, %v1006
  %v1012 = vpack.c.bf16 %v1008, %v1008
  %1013 = vrot.lane.b32.xlu0 %v233, 48
  %v1014 = vpop.permute.xlu0 %1013
  %1015 = vrot.lane.b32.xlu0 %v234, 48
  %v1016 = vpop.permute.xlu0 %1015
  %1017 = vrot.lane.b32.xlu0 %v235, 48
  %v1018 = vpop.permute.xlu0 %1017
  %1019 = vrot.lane.b32.xlu0 %v236, 48
  %v1020 = vpop.permute.xlu0 %1019
  %v1025 = vsel %vm352, %v1009, 0
  %v1028 = vsel %vm352, %v1010, 0
  %v1031 = vsel %vm352, %v1011, 0
  %v1034 = vsel %vm352, %v1012, 0
  %v1037 = vsel %vm457, %v1020, 0
  %1039 = vmatprep.subr.bf16.mxu0 0
  %1040 = vmatpush1.bf16.msra.mxu0 %v1014
  %1041 = vmatprep.subr.bf16.mxu0 0
  %1042 = vmatpush1.bf16.msra.mxu0 %v1016
  %1043 = vmatprep.subr.bf16.mxu0 0
  %1044 = vmatpush1.bf16.msra.mxu0 %v1018
  %1045 = vmatprep.subr.bf16.mxu0 0
  %1046 = vmatpush1.bf16.msra.mxu0 %v1037
  %1047 = vmatprep.subr.bf16.mxu0 0
  %1048 = vmatpush1.bf16.msra.mxu0 0
  %1049 = vmatprep.subr.bf16.mxu0 0
  %1050 = vmatpush1.bf16.msra.mxu0 0
  %1051 = vmatprep.subr.bf16.mxu0 0
  %1052 = vmatpush1.bf16.msra.mxu0 0
  %1053 = vmatprep.subr.bf16.mxu0 0
  %1054 = vmatpush1.bf16.msra.mxu0 0
  %1055 = vmatprep.subr.bf16.mxu0 0
  %1056 = vmatpush1.bf16.msra.mxu0 0
  %1057 = vmatprep.subr.bf16.mxu0 0
  %1058 = vmatpush1.bf16.msra.mxu0 0
  %1059 = vmatprep.subr.bf16.mxu0 0
  %1060 = vmatpush1.bf16.msra.mxu0 0
  %1061 = vmatprep.subr.bf16.mxu0 0
  %1062 = vmatpush1.bf16.msra.mxu0 0
  %1063 = vmatprep.subr.bf16.mxu0 0
  %1064 = vmatpush1.bf16.msra.mxu0 0
  %1065 = vmatprep.subr.bf16.mxu0 0
  %1066 = vmatpush1.bf16.msra.mxu0 0
  %1067 = vmatprep.subr.bf16.mxu0 0
  %1068 = vmatpush1.bf16.msra.mxu0 0
  %1069 = vmatprep.subr.bf16.mxu0 0
  %1070 = vmatpush1.bf16.msra.mxu0 0
  %1071 = vmatprep.mubr.bf16.mxu0 0
  %1072 = vmatmul.mubr.bf16.gmra.mrb[0].mxu0 %v1025
  %v1073 = vpop.f32.mrb[0].mxu0
  %v1074 = vadd.f32 0.0, %v1073
  %v1075 = vpop.f32.mrb[0].mxu0
  %v1076 = vpop.f32.mrb[0].mxu0
  %v1077 = vadd.f32 0.0, %v1076
  %v1078 = vpop.f32.mrb[0].mxu0
  %1079 = vmatprep.mubr.bf16.mxu0 0
  %1080 = vmatmul.mubr.bf16.gmra.mrb[0].mxu0 %v1028
  %v1081 = vpop.f32.mrb[0].mxu0
  %v1082 = vadd.f32 0.0, %v1081
  %v1083 = vpop.f32.mrb[0].mxu0
  %v1084 = vpop.f32.mrb[0].mxu0
  %v1085 = vadd.f32 0.0, %v1084
  %v1086 = vpop.f32.mrb[0].mxu0
  %1087 = vmatprep.mubr.bf16.mxu0 0
  %1088 = vmatmul.mubr.bf16.gmra.mrb[0].mxu0 %v1031
  %v1089 = vpop.f32.mrb[0].mxu0
  %v1090 = vadd.f32 0.0, %v1089
  %v1091 = vpop.f32.mrb[0].mxu0
  %v1092 = vpop.f32.mrb[0].mxu0
  %v1093 = vadd.f32 0.0, %v1092
  %v1094 = vpop.f32.mrb[0].mxu0
  %1095 = vmatprep.mubr.bf16.mxu0 0
  %1096 = vmatmul.mubr.bf16.gmra.mrb[0].mxu0 %v1034
  %v1097 = vpop.f32.mrb[0].mxu0
  %v1098 = vadd.f32 0.0, %v1097
  %v1099 = vpop.f32.mrb[0].mxu0
  %v1100 = vpop.f32.mrb[0].mxu0
  %v1101 = vpop.f32.mrb[0].mxu0
  %1102 = vdwg.mxu0
  %1103 = vrot.lane.b32.xlu0 %v233, 104
  %v1104 = vpop.permute.xlu0 %1103
  %1105 = vrot.lane.b32.xlu0 %v234, 104
  %v1106 = vpop.permute.xlu0 %1105
  %1107 = vrot.lane.b32.xlu0 %v235, 104
  %v1108 = vpop.permute.xlu0 %1107
  %1109 = vrot.lane.b32.xlu0 %v236, 104
  %v1110 = vpop.permute.xlu0 %1109
  %1111 = vrot.lane.b32.xlu0 %v233, 72
  %v1112 = vpop.permute.xlu0 %1111
  %1113 = vrot.lane.b32.xlu0 %v234, 72
  %v1114 = vpop.permute.xlu0 %1113
  %1115 = vrot.lane.b32.xlu0 %v235, 72
  %v1116 = vpop.permute.xlu0 %1115
  %1117 = vrot.lane.b32.xlu0 %v236, 72
  %v1118 = vpop.permute.xlu0 %1117
  %v1120 = vsel %vm249, %v1104, 0
  %v1123 = vsel %vm249, %v1106, 0
  %v1126 = vsel %vm249, %v1108, 0
  %v1129 = vsel %vm249, %v1110, 0
  %v1132 = vsel %vm249, %v1112, 0
  %v1135 = vsel %vm249, %v1114, 0
  %v1138 = vsel %vm249, %v1116, 0
  %v1141 = vsel %vm249, %v1118, 0
  %1143 = vmatprep.subr.bf16.mxu0 0
  %1144 = vmatpush1.bf16.xpose.msra.mxu0 %v1132
  %1145 = vmatprep.subr.bf16.mxu0 0
  %1146 = vmatpush1.bf16.xpose.msra.mxu0 %v1135
  %1147 = vmatprep.subr.bf16.mxu0 0
  %1148 = vmatpush1.bf16.xpose.msra.mxu0 %v1138
  %1149 = vmatprep.subr.bf16.mxu0 0
  %1150 = vmatpush1.bf16.xpose.msra.mxu0 %v1141
  %1151 = vmatprep.subr.bf16.mxu0 0
  %1152 = vmatpush1.bf16.xpose.msra.mxu0 0
  %1153 = vmatprep.subr.bf16.mxu0 0
  %1154 = vmatpush1.bf16.xpose.msra.mxu0 0
  %1155 = vmatprep.subr.bf16.mxu0 0
  %1156 = vmatpush1.bf16.xpose.msra.mxu0 0
  %1157 = vmatprep.subr.bf16.mxu0 0
  %1158 = vmatpush1.bf16.xpose.msra.mxu0 0
  %1159 = vmatprep.subr.bf16.mxu0 0
  %1160 = vmatpush1.bf16.xpose.msra.mxu0 0
  %1161 = vmatprep.subr.bf16.mxu0 0
  %1162 = vmatpush1.bf16.xpose.msra.mxu0 0
  %1163 = vmatprep.subr.bf16.mxu0 0
  %1164 = vmatpush1.bf16.xpose.msra.mxu0 0
  %1165 = vmatprep.subr.bf16.mxu0 0
  %1166 = vmatpush1.bf16.xpose.msra.mxu0 0
  %1167 = vmatprep.subr.bf16.mxu0 0
  %1168 = vmatpush1.bf16.xpose.msra.mxu0 0
  %1169 = vmatprep.subr.bf16.mxu0 0
  %1170 = vmatpush1.bf16.xpose.msra.mxu0 0
  %1171 = vmatprep.subr.bf16.mxu0 0
  %1172 = vmatpush1.bf16.xpose.msra.mxu0 0
  %1173 = vmatprep.subr.bf16.mxu0 0
  %1174 = vmatpush1.bf16.xpose.msra.mxu0 0
  %1175 = vmatprep.mubr.bf16.mxu0 0
  %1176 = vmatmul.mubr.bf16.gmra.mrb[0].mxu0 %v1120
  %v1177 = vpop.f32.mrb[0].mxu0
  %v1178 = vadd.f32 0.0, %v1177
  %v1179 = vpop.f32.mrb[0].mxu0
  %v1180 = vpop.f32.mrb[0].mxu0
  %v1181 = vadd.f32 0.0, %v1180
  %v1182 = vpop.f32.mrb[0].mxu0
  %1183 = vmatprep.mubr.bf16.mxu0 0
  %1184 = vmatmul.mubr.bf16.gmra.mrb[0].mxu0 %v1123
  %v1185 = vpop.f32.mrb[0].mxu0
  %v1186 = vadd.f32 0.0, %v1185
  %v1187 = vpop.f32.mrb[0].mxu0
  %v1188 = vpop.f32.mrb[0].mxu0
  %v1189 = vadd.f32 0.0, %v1188
  %v1190 = vpop.f32.mrb[0].mxu0
  %1191 = vmatprep.mubr.bf16.mxu0 0
  %1192 = vmatmul.mubr.bf16.gmra.mrb[0].mxu0 %v1126
  %v1193 = vpop.f32.mrb[0].mxu0
  %v1194 = vadd.f32 0.0, %v1193
  %v1195 = vpop.f32.mrb[0].mxu0
  %v1196 = vpop.f32.mrb[0].mxu0
  %v1197 = vadd.f32 0.0, %v1196
  %v1198 = vpop.f32.mrb[0].mxu0
  %1199 = vmatprep.mubr.bf16.mxu0 0
  %1200 = vmatmul.mubr.bf16.gmra.mrb[0].mxu0 %v1129
  %v1201 = vpop.f32.mrb[0].mxu0
  %v1202 = vadd.f32 0.0, %v1201
  %v1203 = vpop.f32.mrb[0].mxu0
  %v1204 = vpop.f32.mrb[0].mxu0
  %v1205 = vpop.f32.mrb[0].mxu0
  %1206 = vdwg.mxu0
  %v1207 = vmul.f32 %v1178, 0.35355338
  %v1208 = vmul.f32 %v1181, 0.35355338
  %v1209 = vmul.f32 %v1186, 0.35355338
  %v1210 = vmul.f32 %v1189, 0.35355338
  %v1211 = vmul.f32 %v1194, 0.35355338
  %v1212 = vmul.f32 %v1197, 0.35355338
  %v1213 = vmul.f32 %v1202, 0.35355338
  %v1214 = vadd.f32 %v1207, %v108
  %v1215 = vadd.f32 %v1208, %v109
  %v1216 = vadd.f32 %v1209, %v110
  %v1217 = vadd.f32 %v1210, %v111
  %v1218 = vadd.f32 %v1211, %v112
  %v1219 = vadd.f32 %v1212, %v113
  %v1220 = vadd.f32 %v1213, %v114
  %v1221 = vsel %vm352, %v1214, -inf
  %1222 = vmax.xlane.f32.xlu0 %v1221
  %v1223 = vpop.xlane.xlu0 %1222
  %v1224 = vsel %vm352, %v1215, -inf
  %1225 = vmax.xlane.f32.xlu0 %v1224
  %v1226 = vpop.xlane.xlu0 %1225
  %v1227 = vsel %vm352, %v1216, -inf
  %1228 = vmax.xlane.f32.xlu0 %v1227
  %v1229 = vpop.xlane.xlu0 %1228
  %v1230 = vsel %vm352, %v1217, -inf
  %1231 = vmax.xlane.f32.xlu0 %v1230
  %v1232 = vpop.xlane.xlu0 %1231
  %v1233 = vsel %vm352, %v1218, -inf
  %1234 = vmax.xlane.f32.xlu0 %v1233
  %v1235 = vpop.xlane.xlu0 %1234
  %v1236 = vsel %vm352, %v1219, -inf
  %1237 = vmax.xlane.f32.xlu0 %v1236
  %v1238 = vpop.xlane.xlu0 %1237
  %v1239 = vsel %vm352, %v1220, -inf
  %1240 = vmax.xlane.f32.xlu0 %v1239
  %v1241 = vpop.xlane.xlu0 %1240
  %v1242 = vsub.f32 %v1214, %v1223
  %v1243 = vsub.f32 %v1215, %v1226
  %v1244 = vsub.f32 %v1216, %v1229
  %v1245 = vsub.f32 %v1217, %v1232
  %v1246 = vsub.f32 %v1218, %v1235
  %v1247 = vsub.f32 %v1219, %v1238
  %v1248 = vsub.f32 %v1220, %v1241
  %v1249 = vmul.f32 %v1242, 1.442695
  %v1250 = vpow.pop %v1249
  %v1251 = vmul.f32 %v1243, 1.442695
  %v1252 = vpow.pop %v1251
  %v1253 = vmul.f32 %v1244, 1.442695
  %v1254 = vpow.pop %v1253
  %v1255 = vmul.f32 %v1245, 1.442695
  %v1256 = vpow.pop %v1255
  %v1257 = vmul.f32 %v1246, 1.442695
  %v1258 = vpow.pop %v1257
  %v1259 = vmul.f32 %v1247, 1.442695
  %v1260 = vpow.pop %v1259
  %v1261 = vmul.f32 %v1248, 1.442695
  %v1262 = vpow.pop %v1261
  %v1263 = vsel %vm352, %v1250, 0.0
  %1264 = vadd.xlane.f32.xlu0 %v1263
  %v1265 = vpop.xlane.xlu0 %1264
  %v1266 = vsel %vm352, %v1252, 0.0
  %1267 = vadd.xlane.f32.xlu0 %v1266
  %v1268 = vpop.xlane.xlu0 %1267
  %v1269 = vsel %vm352, %v1254, 0.0
  %1270 = vadd.xlane.f32.xlu0 %v1269
  %v1271 = vpop.xlane.xlu0 %1270
  %v1272 = vsel %vm352, %v1256, 0.0
  %1273 = vadd.xlane.f32.xlu0 %v1272
  %v1274 = vpop.xlane.xlu0 %1273
  %v1275 = vsel %vm352, %v1258, 0.0
  %1276 = vadd.xlane.f32.xlu0 %v1275
  %v1277 = vpop.xlane.xlu0 %1276
  %v1278 = vsel %vm352, %v1260, 0.0
  %1279 = vadd.xlane.f32.xlu0 %v1278
  %v1280 = vpop.xlane.xlu0 %1279
  %v1281 = vsel %vm352, %v1262, 0.0
  %1282 = vadd.xlane.f32.xlu0 %v1281
  %v1283 = vpop.xlane.xlu0 %1282
  %v1284 = vrcp.pop %v1265
  %v1285 = vrcp.pop %v1268
  %v1286 = vrcp.pop %v1271
  %v1287 = vrcp.pop %v1274
  %v1288 = vrcp.pop %v1277
  %v1289 = vrcp.pop %v1280
  %v1290 = vrcp.pop %v1283
  %v1291 = vmul.f32 %v1250, %v1284
  %v1292 = vmul.f32 %v1252, %v1285
  %v1293 = vmul.f32 %v1254, %v1286
  %v1294 = vmul.f32 %v1256, %v1287
  %v1295 = vmul.f32 %v1258, %v1288
  %v1296 = vmul.f32 %v1260, %v1289
  %v1297 = vmul.f32 %v1262, %v1290
  %v1298 = vpack.c.bf16 %v1292, %v1291
  %v1299 = vpack.c.bf16 %v1294, %v1293
  %v1300 = vpack.c.bf16 %v1296, %v1295
  %v1301 = vpack.c.bf16 %v1297, %v1297
  %1302 = vrot.lane.b32.xlu0 %v233, 40
  %v1303 = vpop.permute.xlu0 %1302
  %1304 = vrot.lane.b32.xlu0 %v234, 40
  %v1305 = vpop.permute.xlu0 %1304
  %1306 = vrot.lane.b32.xlu0 %v235, 40
  %v1307 = vpop.permute.xlu0 %1306
  %1308 = vrot.lane.b32.xlu0 %v236, 40
  %v1309 = vpop.permute.xlu0 %1308
  %v1314 = vsel %vm352, %v1298, 0
  %v1317 = vsel %vm352, %v1299, 0
  %v1320 = vsel %vm352, %v1300, 0
  %v1323 = vsel %vm352, %v1301, 0
  %v1326 = vsel %vm457, %v1309, 0
  %1328 = vmatprep.subr.bf16.mxu0 0
  %1329 = vmatpush1.bf16.msra.mxu0 %v1303
  %1330 = vmatprep.subr.bf16.mxu0 0
  %1331 = vmatpush1.bf16.msra.mxu0 %v1305
  %1332 = vmatprep.subr.bf16.mxu0 0
  %1333 = vmatpush1.bf16.msra.mxu0 %v1307
  %1334 = vmatprep.subr.bf16.mxu0 0
  %1335 = vmatpush1.bf16.msra.mxu0 %v1326
  %1336 = vmatprep.subr.bf16.mxu0 0
  %1337 = vmatpush1.bf16.msra.mxu0 0
  %1338 = vmatprep.subr.bf16.mxu0 0
  %1339 = vmatpush1.bf16.msra.mxu0 0
  %1340 = vmatprep.subr.bf16.mxu0 0
  %1341 = vmatpush1.bf16.msra.mxu0 0
  %1342 = vmatprep.subr.bf16.mxu0 0
  %1343 = vmatpush1.bf16.msra.mxu0 0
  %1344 = vmatprep.subr.bf16.mxu0 0
  %1345 = vmatpush1.bf16.msra.mxu0 0
  %1346 = vmatprep.subr.bf16.mxu0 0
  %1347 = vmatpush1.bf16.msra.mxu0 0
  %1348 = vmatprep.subr.bf16.mxu0 0
  %1349 = vmatpush1.bf16.msra.mxu0 0
  %1350 = vmatprep.subr.bf16.mxu0 0
  %1351 = vmatpush1.bf16.msra.mxu0 0
  %1352 = vmatprep.subr.bf16.mxu0 0
  %1353 = vmatpush1.bf16.msra.mxu0 0
  %1354 = vmatprep.subr.bf16.mxu0 0
  %1355 = vmatpush1.bf16.msra.mxu0 0
  %1356 = vmatprep.subr.bf16.mxu0 0
  %1357 = vmatpush1.bf16.msra.mxu0 0
  %1358 = vmatprep.subr.bf16.mxu0 0
  %1359 = vmatpush1.bf16.msra.mxu0 0
  %1360 = vmatprep.mubr.bf16.mxu0 0
  %1361 = vmatmul.mubr.bf16.gmra.mrb[0].mxu0 %v1314
  %v1362 = vpop.f32.mrb[0].mxu0
  %v1363 = vadd.f32 0.0, %v1362
  %v1364 = vpop.f32.mrb[0].mxu0
  %v1365 = vpop.f32.mrb[0].mxu0
  %v1366 = vadd.f32 0.0, %v1365
  %v1367 = vpop.f32.mrb[0].mxu0
  %1368 = vmatprep.mubr.bf16.mxu0 0
  %1369 = vmatmul.mubr.bf16.gmra.mrb[0].mxu0 %v1317
  %v1370 = vpop.f32.mrb[0].mxu0
  %v1371 = vadd.f32 0.0, %v1370
  %v1372 = vpop.f32.mrb[0].mxu0
  %v1373 = vpop.f32.mrb[0].mxu0
  %v1374 = vadd.f32 0.0, %v1373
  %v1375 = vpop.f32.mrb[0].mxu0
  %1376 = vmatprep.mubr.bf16.mxu0 0
  %1377 = vmatmul.mubr.bf16.gmra.mrb[0].mxu0 %v1320
  %v1378 = vpop.f32.mrb[0].mxu0
  %v1379 = vadd.f32 0.0, %v1378
  %v1380 = vpop.f32.mrb[0].mxu0
  %v1381 = vpop.f32.mrb[0].mxu0
  %v1382 = vadd.f32 0.0, %v1381
  %v1383 = vpop.f32.mrb[0].mxu0
  %1384 = vmatprep.mubr.bf16.mxu0 0
  %1385 = vmatmul.mubr.bf16.gmra.mrb[0].mxu0 %v1323
  %v1386 = vpop.f32.mrb[0].mxu0
  %v1387 = vadd.f32 0.0, %v1386
  %v1388 = vpop.f32.mrb[0].mxu0
  %v1389 = vpop.f32.mrb[0].mxu0
  %v1390 = vpop.f32.mrb[0].mxu0
  %1391 = vdwg.mxu0
  %1399 = vrot.lane.b32.xlu0 %v785, 8
  %v1400 = vpop.permute.xlu0 %1399
  %1401 = vrot.lane.b32.xlu0 %v788, 8
  %v1402 = vpop.permute.xlu0 %1401
  %1403 = vrot.lane.b32.xlu0 %v793, 8
  %v1404 = vpop.permute.xlu0 %1403
  %1405 = vrot.lane.b32.xlu0 %v796, 8
  %v1406 = vpop.permute.xlu0 %1405
  %1407 = vrot.lane.b32.xlu0 %v801, 8
  %v1408 = vpop.permute.xlu0 %1407
  %1409 = vrot.lane.b32.xlu0 %v804, 8
  %v1410 = vpop.permute.xlu0 %1409
  %1411 = vrot.lane.b32.xlu0 %v809, 8
  %v1412 = vpop.permute.xlu0 %1411
  %1427 = vrot.lane.b32.xlu0 %v1074, 16
  %v1428 = vpop.permute.xlu0 %1427
  %1429 = vrot.lane.b32.xlu0 %v1077, 16
  %v1430 = vpop.permute.xlu0 %1429
  %1431 = vrot.lane.b32.xlu0 %v1082, 16
  %v1432 = vpop.permute.xlu0 %1431
  %1433 = vrot.lane.b32.xlu0 %v1085, 16
  %v1434 = vpop.permute.xlu0 %1433
  %1435 = vrot.lane.b32.xlu0 %v1090, 16
  %v1436 = vpop.permute.xlu0 %1435
  %1437 = vrot.lane.b32.xlu0 %v1093, 16
  %v1438 = vpop.permute.xlu0 %1437
  %1439 = vrot.lane.b32.xlu0 %v1098, 16
  %v1440 = vpop.permute.xlu0 %1439
  %1455 = vrot.lane.b32.xlu0 %v1363, 24
  %v1456 = vpop.permute.xlu0 %1455
  %1457 = vrot.lane.b32.xlu0 %v1366, 24
  %v1458 = vpop.permute.xlu0 %1457
  %1459 = vrot.lane.b32.xlu0 %v1371, 24
  %v1460 = vpop.permute.xlu0 %1459
  %1461 = vrot.lane.b32.xlu0 %v1374, 24
  %v1462 = vpop.permute.xlu0 %1461
  %1463 = vrot.lane.b32.xlu0 %v1379, 24
  %v1464 = vpop.permute.xlu0 %1463
  %1465 = vrot.lane.b32.xlu0 %v1382, 24
  %v1466 = vpop.permute.xlu0 %1465
  %1467 = vrot.lane.b32.xlu0 %v1387, 24
  %v1468 = vpop.permute.xlu0 %1467
  %v1476 = vsel %vm249, %v496, %v1400
  %v1477 = vsel %vm249, %v499, %v1402
  %v1478 = vsel %vm249, %v504, %v1404
  %v1479 = vsel %vm249, %v507, %v1406
  %v1480 = vsel %vm249, %v512, %v1408
  %v1481 = vsel %vm249, %v515, %v1410
  %v1482 = vsel %vm249, %v520, %v1412
  %vm1483 = vcmask 130048
  %v1484 = vsel %vm1483, %v1476, %v1428
  %v1485 = vsel %vm1483, %v1477, %v1430
  %v1486 = vsel %vm1483, %v1478, %v1432
  %v1487 = vsel %vm1483, %v1479, %v1434
  %v1488 = vsel %vm1483, %v1480, %v1436
  %v1489 = vsel %vm1483, %v1481, %v1438
  %v1490 = vsel %vm1483, %v1482, %v1440
  %vm1491 = vcmask 195584
  %v1492 = vsel %vm1491, %v1484, %v1456
  %v1493 = vsel %vm1491, %v1485, %v1458
  %v1494 = vsel %vm1491, %v1486, %v1460
  %v1495 = vsel %vm1491, %v1487, %v1462
  %v1496 = vsel %vm1491, %v1488, %v1464
  %v1497 = vsel %vm1491, %v1489, %v1466
  %v1498 = vsel %vm1491, %v1490, %v1468
  %v1499 = vld [vmem:[%s3] sm:$0xf]
  %v1500 = vld [vmem:[%s3 + $0x4] sm:$0xf]
  %v1501 = vld [vmem:[%s3 + $0x8] sm:$0xf]
  %v1502 = vld [vmem:[%s3 + $0xc] sm:$0xf]
  %v1503 = vpack.c.bf16 %v1493, %v1492
  %v1504 = vpack.c.bf16 %v1495, %v1494
  %v1505 = vpack.c.bf16 %v1497, %v1496
  %v1506 = vpack.c.bf16 %v1498, %v1498
  %v1507 = vld [vmem:[%s4] sm:$0x1]
  %v1509 = vlaneseq
  %v1510 = vshrl.u32 %v1509, 7
  %v1511 = vsub.s32 0, %v1510
  %v1512 = vrot.slane %v1507, %v1511
  %v1518 = vunpack.c.l.b16 %v1499
  %v1519 = vunpack.c.l.b16 %v1500
  %v1520 = vunpack.c.l.b16 %v1501
  %v1521 = vunpack.c.l.b16 %v1502
  %v1522 = vpack.c.b16 %v1519, %v1518
  %v1523 = vpack.c.b16 %v1521, %v1520
  %v1527 = vsel %vm156, %v1503, 0
  %v1530 = vsel %vm156, %v1504, 0
  %v1533 = vsel %vm156, %v1505, 0
  %v1536 = vsel %vm156, %v1506, 0
  %1538 = vmatprep.subr.bf16.mxu0 0
  %1539 = vmatpush1.bf16.msra.mxu0 %v1522
  %1540 = vmatprep.subr.bf16.mxu0 0
  %1541 = vmatpush1.bf16.msra.mxu0 %v1523
  %1542 = vmatprep.subr.bf16.mxu0 0
  %1543 = vmatpush1.bf16.msra.mxu0 0
  %1544 = vmatprep.subr.bf16.mxu0 0
  %1545 = vmatpush1.bf16.msra.mxu0 0
  %1546 = vmatprep.subr.bf16.mxu0 0
  %1547 = vmatpush1.bf16.msra.mxu0 0
  %1548 = vmatprep.subr.bf16.mxu0 0
  %1549 = vmatpush1.bf16.msra.mxu0 0
  %1550 = vmatprep.subr.bf16.mxu0 0
  %1551 = vmatpush1.bf16.msra.mxu0 0
  %1552 = vmatprep.subr.bf16.mxu0 0
  %1553 = vmatpush1.bf16.msra.mxu0 0
  %1554 = vmatprep.subr.bf16.mxu0 0
  %1555 = vmatpush1.bf16.msra.mxu0 0
  %1556 = vmatprep.subr.bf16.mxu0 0
  %1557 = vmatpush1.bf16.msra.mxu0 0
  %1558 = vmatprep.subr.bf16.mxu0 0
  %1559 = vmatpush1.bf16.msra.mxu0 0
  %1560 = vmatprep.subr.bf16.mxu0 0
  %1561 = vmatpush1.bf16.msra.mxu0 0
  %1562 = vmatprep.subr.bf16.mxu0 0
  %1563 = vmatpush1.bf16.msra.mxu0 0
  %1564 = vmatprep.subr.bf16.mxu0 0
  %1565 = vmatpush1.bf16.msra.mxu0 0
  %1566 = vmatprep.subr.bf16.mxu0 0
  %1567 = vmatpush1.bf16.msra.mxu0 0
  %1568 = vmatprep.subr.bf16.mxu0 0
  %1569 = vmatpush1.bf16.msra.mxu0 0
  %1570 = vmatprep.mubr.bf16.mxu0 0
  %1571 = vmatmul.mubr.bf16.gmra.mrb[0].mxu0 %v1527
  %v1572 = vpop.f32.mrb[0].mxu0
  %v1573 = vadd.f32 %v1512, %v1572
  %v1574 = vpop.f32.mrb[0].mxu0
  %v1575 = vpop.f32.mrb[0].mxu0
  %v1576 = vadd.f32 %v1512, %v1575
  %v1577 = vpop.f32.mrb[0].mxu0
  %1578 = vmatprep.mubr.bf16.mxu0 0
  %1579 = vmatmul.mubr.bf16.gmra.mrb[0].mxu0 %v1530
  %v1580 = vpop.f32.mrb[0].mxu0
  %v1581 = vadd.f32 %v1512, %v1580
  %v1582 = vpop.f32.mrb[0].mxu0
  %v1583 = vpop.f32.mrb[0].mxu0
  %v1584 = vadd.f32 %v1512, %v1583
  %v1585 = vpop.f32.mrb[0].mxu0
  %1586 = vmatprep.mubr.bf16.mxu0 0
  %1587 = vmatmul.mubr.bf16.gmra.mrb[0].mxu0 %v1533
  %v1588 = vpop.f32.mrb[0].mxu0
  %v1589 = vadd.f32 %v1512, %v1588
  %v1590 = vpop.f32.mrb[0].mxu0
  %v1591 = vpop.f32.mrb[0].mxu0
  %v1592 = vadd.f32 %v1512, %v1591
  %v1593 = vpop.f32.mrb[0].mxu0
  %1594 = vmatprep.mubr.bf16.mxu0 0
  %1595 = vmatmul.mubr.bf16.gmra.mrb[0].mxu0 %v1536
  %v1596 = vpop.f32.mrb[0].mxu0
  %v1597 = vadd.f32 %v1512, %v1596
  %v1598 = vpop.f32.mrb[0].mxu0
  %v1599 = vpop.f32.mrb[0].mxu0
  %v1600 = vpop.f32.mrb[0].mxu0
  %1601 = vdwg.mxu0
  %v1602 = vadd.f32 %v52, %v1573
  %v1603 = vadd.f32 %v53, %v1576
  %v1604 = vadd.f32 %v54, %v1581
  %v1605 = vadd.f32 %v55, %v1584
  %v1606 = vadd.f32 %v56, %v1589
  %v1607 = vadd.f32 %v57, %v1592
  %v1608 = vadd.f32 %v58, %v1597
  %v1609 = vld [vmem:[%s5] sm:$0x1]
  %v1610 = vld [vmem:[%s6] sm:$0x1]
  %v1611 = vsel %vm156, %v1602, 0.0
  %1612 = vadd.xlane.f32.xlu0 %v1611
  %v1613 = vpop.xlane.xlu0 %1612
  %v1614 = vsel %vm156, %v1603, 0.0
  %1615 = vadd.xlane.f32.xlu0 %v1614
  %v1616 = vpop.xlane.xlu0 %1615
  %v1617 = vsel %vm156, %v1604, 0.0
  %1618 = vadd.xlane.f32.xlu0 %v1617
  %v1619 = vpop.xlane.xlu0 %1618
  %v1620 = vsel %vm156, %v1605, 0.0
  %1621 = vadd.xlane.f32.xlu0 %v1620
  %v1622 = vpop.xlane.xlu0 %1621
  %v1623 = vsel %vm156, %v1606, 0.0
  %1624 = vadd.xlane.f32.xlu0 %v1623
  %v1625 = vpop.xlane.xlu0 %1624
  %v1626 = vsel %vm156, %v1607, 0.0
  %1627 = vadd.xlane.f32.xlu0 %v1626
  %v1628 = vpop.xlane.xlu0 %1627
  %v1629 = vsel %vm156, %v1608, 0.0
  %1630 = vadd.xlane.f32.xlu0 %v1629
  %v1631 = vpop.xlane.xlu0 %1630
  %v1632 = vrcp.pop 32.0
  %v1633 = vmul.f32 %v1613, %v1632
  %v1634 = vmul.f32 %v1616, %v1632
  %v1635 = vmul.f32 %v1619, %v1632
  %v1636 = vmul.f32 %v1622, %v1632
  %v1637 = vmul.f32 %v1625, %v1632
  %v1638 = vmul.f32 %v1628, %v1632
  %v1639 = vmul.f32 %v1631, %v1632
  %v1640 = vsub.f32 %v1602, %v1633
  %v1641 = vsub.f32 %v1603, %v1634
  %v1642 = vsub.f32 %v1604, %v1635
  %v1643 = vsub.f32 %v1605, %v1636
  %v1644 = vsub.f32 %v1606, %v1637
  %v1645 = vsub.f32 %v1607, %v1638
  %v1646 = vsub.f32 %v1608, %v1639
  %v1647 = vmul.f32 %v1640, %v1640
  %v1648 = vmul.f32 %v1641, %v1641
  %v1649 = vmul.f32 %v1642, %v1642
  %v1650 = vmul.f32 %v1643, %v1643
  %v1651 = vmul.f32 %v1644, %v1644
  %v1652 = vmul.f32 %v1645, %v1645
  %v1653 = vmul.f32 %v1646, %v1646
  %v1654 = vsel %vm156, %v1647, 0.0
  %1655 = vadd.xlane.f32.xlu0 %v1654
  %v1656 = vpop.xlane.xlu0 %1655
  %v1657 = vsel %vm156, %v1648, 0.0
  %1658 = vadd.xlane.f32.xlu0 %v1657
  %v1659 = vpop.xlane.xlu0 %1658
  %v1660 = vsel %vm156, %v1649, 0.0
  %1661 = vadd.xlane.f32.xlu0 %v1660
  %v1662 = vpop.xlane.xlu0 %1661
  %v1663 = vsel %vm156, %v1650, 0.0
  %1664 = vadd.xlane.f32.xlu0 %v1663
  %v1665 = vpop.xlane.xlu0 %1664
  %v1666 = vsel %vm156, %v1651, 0.0
  %1667 = vadd.xlane.f32.xlu0 %v1666
  %v1668 = vpop.xlane.xlu0 %1667
  %v1669 = vsel %vm156, %v1652, 0.0
  %1670 = vadd.xlane.f32.xlu0 %v1669
  %v1671 = vpop.xlane.xlu0 %1670
  %v1672 = vsel %vm156, %v1653, 0.0
  %1673 = vadd.xlane.f32.xlu0 %v1672
  %v1674 = vpop.xlane.xlu0 %1673
  %v1675 = vmul.f32 %v1656, %v1632
  %v1676 = vmul.f32 %v1659, %v1632
  %v1677 = vmul.f32 %v1662, %v1632
  %v1678 = vmul.f32 %v1665, %v1632
  %v1679 = vmul.f32 %v1668, %v1632
  %v1680 = vmul.f32 %v1671, %v1632
  %v1681 = vmul.f32 %v1674, %v1632
  %v1682 = vadd.f32 %v1675, 1e-05
  %v1683 = vadd.f32 %v1676, 1e-05
  %v1684 = vadd.f32 %v1677, 1e-05
  %v1685 = vadd.f32 %v1678, 1e-05
  %v1686 = vadd.f32 %v1679, 1e-05
  %v1687 = vadd.f32 %v1680, 1e-05
  %v1688 = vadd.f32 %v1681, 1e-05
  %v1689 = vrsqrt.pop %v1682
  %v1690 = vrsqrt.pop %v1683
  %v1691 = vrsqrt.pop %v1684
  %v1692 = vrsqrt.pop %v1685
  %v1693 = vrsqrt.pop %v1686
  %v1694 = vrsqrt.pop %v1687
  %v1695 = vrsqrt.pop %v1688
  %v1696 = vmul.f32 %v1640, %v1689
  %v1697 = vmul.f32 %v1641, %v1690
  %v1698 = vmul.f32 %v1642, %v1691
  %v1699 = vmul.f32 %v1643, %v1692
  %v1700 = vmul.f32 %v1644, %v1693
  %v1701 = vmul.f32 %v1645, %v1694
  %v1702 = vmul.f32 %v1646, %v1695
  %v1704 = vlaneseq
  %v1705 = vshrl.u32 %v1704, 7
  %v1706 = vsub.s32 0, %v1705
  %v1707 = vrot.slane %v1609, %v1706
  %v1709 = vmul.f32 %v1696, %v1707
  %v1710 = vmul.f32 %v1697, %v1707
  %v1711 = vmul.f32 %v1698, %v1707
  %v1712 = vmul.f32 %v1699, %v1707
  %v1713 = vmul.f32 %v1700, %v1707
  %v1714 = vmul.f32 %v1701, %v1707
  %v1715 = vmul.f32 %v1702, %v1707
  %v1717 = vlaneseq
  %v1718 = vshrl.u32 %v1717, 7
  %v1719 = vsub.s32 0, %v1718
  %v1720 = vrot.slane %v1610, %v1719
  %v1722 = vadd.f32 %v1709, %v1720
  %v1723 = vadd.f32 %v1710, %v1720
  %v1724 = vadd.f32 %v1711, %v1720
  %v1725 = vadd.f32 %v1712, %v1720
  %v1726 = vadd.f32 %v1713, %v1720
  %v1727 = vadd.f32 %v1714, %v1720
  %v1728 = vadd.f32 %v1715, %v1720
  %v1729 = vld [vmem:[%s7] sm:$0xf]
  %v1730 = vld [vmem:[%s7 + $0x4] sm:$0xf]
  %v1731 = vld [vmem:[%s7 + $0x8] sm:$0xf]
  %v1732 = vld [vmem:[%s7 + $0xc] sm:$0xf]
  %v1733 = vpack.c.bf16 %v1723, %v1722
  %v1734 = vpack.c.bf16 %v1725, %v1724
  %v1735 = vpack.c.bf16 %v1727, %v1726
  %v1736 = vpack.c.bf16 %v1728, %v1728
  %v1737 = vld [vmem:[%s8] sm:$0x1]
  %v1739 = vlaneseq
  %v1740 = vshrl.u32 %v1739, 7
  %v1741 = vsub.s32 0, %v1740
  %v1742 = vrot.slane %v1737, %v1741
  %v1748 = vunpack.c.l.b16 %v1729
  %v1749 = vunpack.c.l.b16 %v1730
  %v1750 = vunpack.c.l.b16 %v1731
  %v1751 = vunpack.c.l.b16 %v1732
  %v1752 = vpack.c.b16 %v1749, %v1748
  %v1753 = vpack.c.b16 %v1751, %v1750
  %v1757 = vsel %vm156, %v1733, 0
  %v1760 = vsel %vm156, %v1734, 0
  %v1763 = vsel %vm156, %v1735, 0
  %v1766 = vsel %vm156, %v1736, 0
  %1768 = vmatprep.subr.bf16.mxu0 0
  %1769 = vmatpush1.bf16.msra.mxu0 %v1752
  %1770 = vmatprep.subr.bf16.mxu0 0
  %1771 = vmatpush1.bf16.msra.mxu0 %v1753
  %1772 = vmatprep.subr.bf16.mxu0 0
  %1773 = vmatpush1.bf16.msra.mxu0 0
  %1774 = vmatprep.subr.bf16.mxu0 0
  %1775 = vmatpush1.bf16.msra.mxu0 0
  %1776 = vmatprep.subr.bf16.mxu0 0
  %1777 = vmatpush1.bf16.msra.mxu0 0
  %1778 = vmatprep.subr.bf16.mxu0 0
  %1779 = vmatpush1.bf16.msra.mxu0 0
  %1780 = vmatprep.subr.bf16.mxu0 0
  %1781 = vmatpush1.bf16.msra.mxu0 0
  %1782 = vmatprep.subr.bf16.mxu0 0
  %1783 = vmatpush1.bf16.msra.mxu0 0
  %1784 = vmatprep.subr.bf16.mxu0 0
  %1785 = vmatpush1.bf16.msra.mxu0 0
  %1786 = vmatprep.subr.bf16.mxu0 0
  %1787 = vmatpush1.bf16.msra.mxu0 0
  %1788 = vmatprep.subr.bf16.mxu0 0
  %1789 = vmatpush1.bf16.msra.mxu0 0
  %1790 = vmatprep.subr.bf16.mxu0 0
  %1791 = vmatpush1.bf16.msra.mxu0 0
  %1792 = vmatprep.subr.bf16.mxu0 0
  %1793 = vmatpush1.bf16.msra.mxu0 0
  %1794 = vmatprep.subr.bf16.mxu0 0
  %1795 = vmatpush1.bf16.msra.mxu0 0
  %1796 = vmatprep.subr.bf16.mxu0 0
  %1797 = vmatpush1.bf16.msra.mxu0 0
  %1798 = vmatprep.subr.bf16.mxu0 0
  %1799 = vmatpush1.bf16.msra.mxu0 0
  %1800 = vmatprep.mubr.bf16.mxu0 0
  %1801 = vmatmul.mubr.bf16.gmra.mrb[0].mxu0 %v1757
  %v1802 = vpop.f32.mrb[0].mxu0
  %v1803 = vadd.f32 %v1742, %v1802
  %v1804 = vpop.f32.mrb[0].mxu0
  %v1805 = vpop.f32.mrb[0].mxu0
  %v1806 = vadd.f32 %v1742, %v1805
  %v1807 = vpop.f32.mrb[0].mxu0
  %1808 = vmatprep.mubr.bf16.mxu0 0
  %1809 = vmatmul.mubr.bf16.gmra.mrb[0].mxu0 %v1760
  %v1810 = vpop.f32.mrb[0].mxu0
  %v1811 = vadd.f32 %v1742, %v1810
  %v1812 = vpop.f32.mrb[0].mxu0
  %v1813 = vpop.f32.mrb[0].mxu0
  %v1814 = vadd.f32 %v1742, %v1813
  %v1815 = vpop.f32.mrb[0].mxu0
  %1816 = vmatprep.mubr.bf16.mxu0 0
  %1817 = vmatmul.mubr.bf16.gmra.mrb[0].mxu0 %v1763
  %v1818 = vpop.f32.mrb[0].mxu0
  %v1819 = vadd.f32 %v1742, %v1818
  %v1820 = vpop.f32.mrb[0].mxu0
  %v1821 = vpop.f32.mrb[0].mxu0
  %v1822 = vadd.f32 %v1742, %v1821
  %v1823 = vpop.f32.mrb[0].mxu0
  %1824 = vmatprep.mubr.bf16.mxu0 0
  %1825 = vmatmul.mubr.bf16.gmra.mrb[0].mxu0 %v1766
  %v1826 = vpop.f32.mrb[0].mxu0
  %v1827 = vadd.f32 %v1742, %v1826
  %v1828 = vpop.f32.mrb[0].mxu0
  %v1829 = vpop.f32.mrb[0].mxu0
  %v1830 = vpop.f32.mrb[0].mxu0
  %1831 = vdwg.mxu0
  %v1832 = vmax.f32 %v1803, 0.0
  %v1833 = vmax.f32 %v1806, 0.0
  %v1834 = vmax.f32 %v1811, 0.0
  %v1835 = vmax.f32 %v1814, 0.0
  %v1836 = vmax.f32 %v1819, 0.0
  %v1837 = vmax.f32 %v1822, 0.0
  %v1838 = vmax.f32 %v1827, 0.0
  %v1839 = vld [vmem:[%s9] sm:$0xf]
  %v1840 = vld [vmem:[%s9 + $0x4] sm:$0xf]
  %v1841 = vld [vmem:[%s9 + $0x8] sm:$0xf]
  %v1842 = vld [vmem:[%s9 + $0xc] sm:$0xf]
  %v1843 = vpack.c.bf16 %v1833, %v1832
  %v1844 = vpack.c.bf16 %v1835, %v1834
  %v1845 = vpack.c.bf16 %v1837, %v1836
  %v1846 = vpack.c.bf16 %v1838, %v1838
  %v1847 = vld [vmem:[%s10] sm:$0x1]
  %v1849 = vlaneseq
  %v1850 = vshrl.u32 %v1849, 7
  %v1851 = vsub.s32 0, %v1850
  %v1852 = vrot.slane %v1847, %v1851
  %v1858 = vunpack.c.l.b16 %v1839
  %v1859 = vunpack.c.l.b16 %v1840
  %v1860 = vunpack.c.l.b16 %v1841
  %v1861 = vunpack.c.l.b16 %v1842
  %v1862 = vpack.c.b16 %v1859, %v1858
  %v1863 = vpack.c.b16 %v1861, %v1860
  %v1867 = vsel %vm156, %v1843, 0
  %v1870 = vsel %vm156, %v1844, 0
  %v1873 = vsel %vm156, %v1845, 0
  %v1876 = vsel %vm156, %v1846, 0
  %1878 = vmatprep.subr.bf16.mxu0 0
  %1879 = vmatpush1.bf16.msra.mxu0 %v1862
  %1880 = vmatprep.subr.bf16.mxu0 0
  %1881 = vmatpush1.bf16.msra.mxu0 %v1863
  %1882 = vmatprep.subr.bf16.mxu0 0
  %1883 = vmatpush1.bf16.msra.mxu0 0
  %1884 = vmatprep.subr.bf16.mxu0 0
  %1885 = vmatpush1.bf16.msra.mxu0 0
  %1886 = vmatprep.subr.bf16.mxu0 0
  %1887 = vmatpush1.bf16.msra.mxu0 0
  %1888 = vmatprep.subr.bf16.mxu0 0
  %1889 = vmatpush1.bf16.msra.mxu0 0
  %1890 = vmatprep.subr.bf16.mxu0 0
  %1891 = vmatpush1.bf16.msra.mxu0 0
  %1892 = vmatprep.subr.bf16.mxu0 0
  %1893 = vmatpush1.bf16.msra.mxu0 0
  %1894 = vmatprep.subr.bf16.mxu0 0
  %1895 = vmatpush1.bf16.msra.mxu0 0
  %1896 = vmatprep.subr.bf16.mxu0 0
  %1897 = vmatpush1.bf16.msra.mxu0 0
  %1898 = vmatprep.subr.bf16.mxu0 0
  %1899 = vmatpush1.bf16.msra.mxu0 0
  %1900 = vmatprep.subr.bf16.mxu0 0
  %1901 = vmatpush1.bf16.msra.mxu0 0
  %1902 = vmatprep.subr.bf16.mxu0 0
  %1903 = vmatpush1.bf16.msra.mxu0 0
  %1904 = vmatprep.subr.bf16.mxu0 0
  %1905 = vmatpush1.bf16.msra.mxu0 0
  %1906 = vmatprep.subr.bf16.mxu0 0
  %1907 = vmatpush1.bf16.msra.mxu0 0
  %1908 = vmatprep.subr.bf16.mxu0 0
  %1909 = vmatpush1.bf16.msra.mxu0 0
  %1910 = vmatprep.mubr.bf16.mxu0 0
  %1911 = vmatmul.mubr.bf16.gmra.mrb[0].mxu0 %v1867
  %v1912 = vpop.f32.mrb[0].mxu0
  %v1913 = vadd.f32 %v1852, %v1912
  %v1914 = vpop.f32.mrb[0].mxu0
  %v1915 = vpop.f32.mrb[0].mxu0
  %v1916 = vadd.f32 %v1852, %v1915
  %v1917 = vpop.f32.mrb[0].mxu0
  %1918 = vmatprep.mubr.bf16.mxu0 0
  %1919 = vmatmul.mubr.bf16.gmra.mrb[0].mxu0 %v1870
  %v1920 = vpop.f32.mrb[0].mxu0
  %v1921 = vadd.f32 %v1852, %v1920
  %v1922 = vpop.f32.mrb[0].mxu0
  %v1923 = vpop.f32.mrb[0].mxu0
  %v1924 = vadd.f32 %v1852, %v1923
  %v1925 = vpop.f32.mrb[0].mxu0
  %1926 = vmatprep.mubr.bf16.mxu0 0
  %1927 = vmatmul.mubr.bf16.gmra.mrb[0].mxu0 %v1873
  %v1928 = vpop.f32.mrb[0].mxu0
  %v1929 = vadd.f32 %v1852, %v1928
  %v1930 = vpop.f32.mrb[0].mxu0
  %v1931 = vpop.f32.mrb[0].mxu0
  %v1932 = vadd.f32 %v1852, %v1931
  %v1933 = vpop.f32.mrb[0].mxu0
  %1934 = vmatprep.mubr.bf16.mxu0 0
  %1935 = vmatmul.mubr.bf16.gmra.mrb[0].mxu0 %v1876
  %v1936 = vpop.f32.mrb[0].mxu0
  %v1937 = vadd.f32 %v1852, %v1936
  %v1938 = vpop.f32.mrb[0].mxu0
  %v1939 = vpop.f32.mrb[0].mxu0
  %v1940 = vpop.f32.mrb[0].mxu0
  %1941 = vdwg.mxu0
  %v1942 = vadd.f32 %v1722, %v1913
  %v1943 = vadd.f32 %v1723, %v1916
  %v1944 = vadd.f32 %v1724, %v1921
  %v1945 = vadd.f32 %v1725, %v1924
  %v1946 = vadd.f32 %v1726, %v1929
  %v1947 = vadd.f32 %v1727, %v1932
  %v1948 = vadd.f32 %v1728, %v1937
  %v1949 = vld [vmem:[%s11] sm:$0x1]
  %v1950 = vld [vmem:[%s12] sm:$0x1]
  %v1951 = vsel %vm156, %v1942, 0.0
  %1952 = vadd.xlane.f32.xlu0 %v1951
  %v1953 = vpop.xlane.xlu0 %1952
  %v1954 = vsel %vm156, %v1943, 0.0
  %1955 = vadd.xlane.f32.xlu0 %v1954
  %v1956 = vpop.xlane.xlu0 %1955
  %v1957 = vsel %vm156, %v1944, 0.0
  %1958 = vadd.xlane.f32.xlu0 %v1957
  %v1959 = vpop.xlane.xlu0 %1958
  %v1960 = vsel %vm156, %v1945, 0.0
  %1961 = vadd.xlane.f32.xlu0 %v1960
  %v1962 = vpop.xlane.xlu0 %1961
  %v1963 = vsel %vm156, %v1946, 0.0
  %1964 = vadd.xlane.f32.xlu0 %v1963
  %v1965 = vpop.xlane.xlu0 %1964
  %v1966 = vsel %vm156, %v1947, 0.0
  %1967 = vadd.xlane.f32.xlu0 %v1966
  %v1968 = vpop.xlane.xlu0 %1967
  %v1969 = vsel %vm156, %v1948, 0.0
  %1970 = vadd.xlane.f32.xlu0 %v1969
  %v1971 = vpop.xlane.xlu0 %1970
  %v1972 = vmul.f32 %v1953, %v1632
  %v1973 = vmul.f32 %v1956, %v1632
  %v1974 = vmul.f32 %v1959, %v1632
  %v1975 = vmul.f32 %v1962, %v1632
  %v1976 = vmul.f32 %v1965, %v1632
  %v1977 = vmul.f32 %v1968, %v1632
  %v1978 = vmul.f32 %v1971, %v1632
  %v1979 = vsub.f32 %v1942, %v1972
  %v1980 = vsub.f32 %v1943, %v1973
  %v1981 = vsub.f32 %v1944, %v1974
  %v1982 = vsub.f32 %v1945, %v1975
  %v1983 = vsub.f32 %v1946, %v1976
  %v1984 = vsub.f32 %v1947, %v1977
  %v1985 = vsub.f32 %v1948, %v1978
  %v1986 = vmul.f32 %v1979, %v1979
  %v1987 = vmul.f32 %v1980, %v1980
  %v1988 = vmul.f32 %v1981, %v1981
  %v1989 = vmul.f32 %v1982, %v1982
  %v1990 = vmul.f32 %v1983, %v1983
  %v1991 = vmul.f32 %v1984, %v1984
  %v1992 = vmul.f32 %v1985, %v1985
  %v1993 = vsel %vm156, %v1986, 0.0
  %1994 = vadd.xlane.f32.xlu0 %v1993
  %v1995 = vpop.xlane.xlu0 %1994
  %v1996 = vsel %vm156, %v1987, 0.0
  %1997 = vadd.xlane.f32.xlu0 %v1996
  %v1998 = vpop.xlane.xlu0 %1997
  %v1999 = vsel %vm156, %v1988, 0.0
  %2000 = vadd.xlane.f32.xlu0 %v1999
  %v2001 = vpop.xlane.xlu0 %2000
  %v2002 = vsel %vm156, %v1989, 0.0
  %2003 = vadd.xlane.f32.xlu0 %v2002
  %v2004 = vpop.xlane.xlu0 %2003
  %v2005 = vsel %vm156, %v1990, 0.0
  %2006 = vadd.xlane.f32.xlu0 %v2005
  %v2007 = vpop.xlane.xlu0 %2006
  %v2008 = vsel %vm156, %v1991, 0.0
  %2009 = vadd.xlane.f32.xlu0 %v2008
  %v2010 = vpop.xlane.xlu0 %2009
  %v2011 = vsel %vm156, %v1992, 0.0
  %2012 = vadd.xlane.f32.xlu0 %v2011
  %v2013 = vpop.xlane.xlu0 %2012
  %v2014 = vmul.f32 %v1995, %v1632
  %v2015 = vmul.f32 %v1998, %v1632
  %v2016 = vmul.f32 %v2001, %v1632
  %v2017 = vmul.f32 %v2004, %v1632
  %v2018 = vmul.f32 %v2007, %v1632
  %v2019 = vmul.f32 %v2010, %v1632
  %v2020 = vmul.f32 %v2013, %v1632
  %v2021 = vadd.f32 %v2014, 1e-05
  %v2022 = vadd.f32 %v2015, 1e-05
  %v2023 = vadd.f32 %v2016, 1e-05
  %v2024 = vadd.f32 %v2017, 1e-05
  %v2025 = vadd.f32 %v2018, 1e-05
  %v2026 = vadd.f32 %v2019, 1e-05
  %v2027 = vadd.f32 %v2020, 1e-05
  %v2028 = vrsqrt.pop %v2021
  %v2029 = vrsqrt.pop %v2022
  %v2030 = vrsqrt.pop %v2023
  %v2031 = vrsqrt.pop %v2024
  %v2032 = vrsqrt.pop %v2025
  %v2033 = vrsqrt.pop %v2026
  %v2034 = vrsqrt.pop %v2027
  %v2035 = vmul.f32 %v1979, %v2028
  %v2036 = vmul.f32 %v1980, %v2029
  %v2037 = vmul.f32 %v1981, %v2030
  %v2038 = vmul.f32 %v1982, %v2031
  %v2039 = vmul.f32 %v1983, %v2032
  %v2040 = vmul.f32 %v1984, %v2033
  %v2041 = vmul.f32 %v1985, %v2034
  %v2043 = vlaneseq
  %v2044 = vshrl.u32 %v2043, 7
  %v2045 = vsub.s32 0, %v2044
  %v2046 = vrot.slane %v1949, %v2045
  %v2048 = vmul.f32 %v2035, %v2046
  %v2049 = vmul.f32 %v2036, %v2046
  %v2050 = vmul.f32 %v2037, %v2046
  %v2051 = vmul.f32 %v2038, %v2046
  %v2052 = vmul.f32 %v2039, %v2046
  %v2053 = vmul.f32 %v2040, %v2046
  %v2054 = vmul.f32 %v2041, %v2046
  %v2056 = vlaneseq
  %v2057 = vshrl.u32 %v2056, 7
  %v2058 = vsub.s32 0, %v2057
  %v2059 = vrot.slane %v1950, %v2058
  %v2061 = vadd.f32 %v2048, %v2059
  %v2062 = vadd.f32 %v2049, %v2059
  %v2063 = vadd.f32 %v2050, %v2059
  %v2064 = vadd.f32 %v2051, %v2059
  %v2065 = vadd.f32 %v2052, %v2059
  %v2066 = vadd.f32 %v2053, %v2059
  %v2067 = vadd.f32 %v2054, %v2059
  %v2068 = vpack.c.bf16 %v2062, %v2061
  %v2069 = vpack.c.bf16 %v2064, %v2063
  %v2070 = vpack.c.bf16 %v2066, %v2065
  %v2071 = vpack.c.bf16 %v2067, %v2067
  %v2076 = vunpack.c.l.b16 %v2068
  %v2077 = vunpack.c.h.b16 %v2068
  %v2078 = vunpack.c.l.b16 %v2069
  %v2079 = vunpack.c.h.b16 %v2069
  %v2080 = vunpack.c.l.b16 %v2070
  %v2081 = vunpack.c.h.b16 %v2070
  %v2082 = vunpack.c.l.b16 %v2071
  %v2083 = vpack.c.b16 %v2076, %v2076
  %v2084 = vpack.c.b16 %v2077, %v2077
  %v2085 = vpack.c.b16 %v2078, %v2078
  %v2086 = vpack.c.b16 %v2079, %v2079
  %v2087 = vpack.c.b16 %v2080, %v2080
  %v2088 = vpack.c.b16 %v2081, %v2081
  %v2089 = vpack.c.b16 %v2082, %v2082
  %vm2097 = vcmask 257024
  %2098 = vst.msk [vmem:[%s13] sm:$0xf] %vm2097, %v2083
  %2099 = vst.msk [vmem:[%s13 + $0x4] sm:$0xf] %vm2097, %v2084
  %2100 = vst.msk [vmem:[%s13 + $0x8] sm:$0xf] %vm2097, %v2085
  %2101 = vst.msk [vmem:[%s13 + $0xc] sm:$0xf] %vm2097, %v2086
  %2102 = vst.msk [vmem:[%s13 + $0x10] sm:$0xf] %vm2097, %v2087
  %2103 = vst.msk [vmem:[%s13 + $0x14] sm:$0xf] %vm2097, %v2088
  %2104 = vst.msk [vmem:[%s13 + $0x18] sm:$0xf] %vm2097, %v2089
  // Predicated region
  $region54: #{spatial_first_transformer_forward.17} parent=0 // pred_check
    _
  $region55: #{spatial_first_transformer_forward.17} parent=0 // pred_check_branch
    %2106 = sbr.rel (0) target = $region57
  $region56: #{spatial_first_transformer_forward.17} parent=0 // pred_region
    _
  $region57: #{spatial_first_transformer_forward.17} parent=0 // pred_fallthru
    _
  // Predicated region
  $region58: #{spatial_first_transformer_forward.17} parent=0 // pred_check
    _
  $region59: #{spatial_first_transformer_forward.17} parent=0 // pred_check_branch
    %2108 = sbr.rel (0) target = $region61
  $region60: #{spatial_first_transformer_forward.17} parent=0 // pred_region
    _
  $region61: #{spatial_first_transformer_forward.17} parent=0 // pred_fallthru
    _

// kernel: spatial_first_transformer_forward.19
$region0: #{spatial_first_transformer_forward.19}
  #allocation0 [shape = 'u32[]', space=smem, size = 0x4, offset = 0x4, fixed_abs, tag = 'smem constant byte address 0x4 - core index']
  #allocation1 [shape = 'u32[144,128]{1,0:T(1,128)}', space=vmem, size = 0x12000, scoped, tag = 'internal scratch']
  %s0 = inlined_call_operand.vmem [shape: f32[8,32], index: 0, kind: input, shape index: {}]
  %s1 = inlined_call_operand.vmem [shape: bf16[32,32], index: 1, kind: input, shape index: {}]
  %s2 = inlined_call_operand.vmem [shape: f32[1,32], index: 2, kind: input, shape index: {}]
  %s3 = inlined_call_operand.vmem [shape: bf16[32,128], index: 3, kind: input, shape index: {}]
  %s4 = inlined_call_operand.vmem [shape: f32[1,128], index: 4, kind: input, shape index: {}]
  %s5 = inlined_call_operand.vmem [shape: f32[8,128], index: 5, kind: output, shape index: {}]
  %s6 = sld [smem:[#allocation0]]
  $region30: #{spatial_first_transformer_forward.19} parent=0
    _
  %s8 = ssub.s32 1, %s6
  %s9 = scalar_select 0, %s8, %s6
  // Predicated region
  $region2: #{spatial_first_transformer_forward.19} parent=0 // pred_check
    _
  $region3: #{spatial_first_transformer_forward.19} parent=0 // pred_check_branch
    %11 = sbr.rel (0) target = $region5
  $region4: #{spatial_first_transformer_forward.19} parent=0 // pred_region
    _
  $region5: #{spatial_first_transformer_forward.19} parent=0 // pred_fallthru
    _
  // Predicated region
  $region6: #{spatial_first_transformer_forward.19} parent=0 // pred_check
    _
  $region7: #{spatial_first_transformer_forward.19} parent=0 // pred_check_branch
    %13 = sbr.rel (0) target = $region9
  $region8: #{spatial_first_transformer_forward.19} parent=0 // pred_region
    _
  $region9: #{spatial_first_transformer_forward.19} parent=0 // pred_fallthru
    _
  // Predicated region
  $region10: #{spatial_first_transformer_forward.19} parent=0 // pred_check
    _
  $region11: #{spatial_first_transformer_forward.19} parent=0 // pred_check_branch
    %15 = sbr.rel (0) target = $region13
  $region12: #{spatial_first_transformer_forward.19} parent=0 // pred_region
    _
  $region13: #{spatial_first_transformer_forward.19} parent=0 // pred_fallthru
    _
  // Predicated region
  $region14: #{spatial_first_transformer_forward.19} parent=0 // pred_check
    _
  $region15: #{spatial_first_transformer_forward.19} parent=0 // pred_check_branch
    %17 = sbr.rel (0) target = $region17
  $region16: #{spatial_first_transformer_forward.19} parent=0 // pred_region
    _
  $region17: #{spatial_first_transformer_forward.19} parent=0 // pred_fallthru
    _
  // Predicated region
  $region18: #{spatial_first_transformer_forward.19} parent=0 // pred_check
    _
  $region19: #{spatial_first_transformer_forward.19} parent=0 // pred_check_branch
    %19 = sbr.rel (0) target = $region21
  $region20: #{spatial_first_transformer_forward.19} parent=0 // pred_region
    _
  $region21: #{spatial_first_transformer_forward.19} parent=0 // pred_fallthru
    _
  %v21 = vld [vmem:[%s0] sm:$0xff]
  %v22 = vld [vmem:[%s1] sm:$0xf]
  %v23 = vld [vmem:[%s1 + $0x4] sm:$0xf]
  %v24 = vld [vmem:[%s1 + $0x8] sm:$0xf]
  %v25 = vld [vmem:[%s1 + $0xc] sm:$0xf]
  %v26 = vpack.c.bf16 %v21, %v21
  %v27 = vld [vmem:[%s2] sm:$0x1]
  %v29 = vlaneseq
  %v30 = vshrl.u32 %v29, 7
  %v31 = vsub.s32 0, %v30
  %v32 = vrot.slane %v27, %v31
  %v38 = vunpack.c.l.b16 %v22
  %v39 = vunpack.c.l.b16 %v23
  %v40 = vunpack.c.l.b16 %v24
  %v41 = vunpack.c.l.b16 %v25
  %v42 = vpack.c.b16 %v39, %v38
  %v43 = vpack.c.b16 %v41, %v40
  %vm46 = vcmask 261120
  %v48 = vsel %vm46, %v26, 0
  %50 = vmatprep.subr.bf16.mxu0 0
  %51 = vmatpush1.bf16.msra.mxu0 %v42
  %52 = vmatprep.subr.bf16.mxu0 0
  %53 = vmatpush1.bf16.msra.mxu0 %v43
  %54 = vmatprep.subr.bf16.mxu0 0
  %55 = vmatpush1.bf16.msra.mxu0 0
  %56 = vmatprep.subr.bf16.mxu0 0
  %57 = vmatpush1.bf16.msra.mxu0 0
  %58 = vmatprep.subr.bf16.mxu0 0
  %59 = vmatpush1.bf16.msra.mxu0 0
  %60 = vmatprep.subr.bf16.mxu0 0
  %61 = vmatpush1.bf16.msra.mxu0 0
  %62 = vmatprep.subr.bf16.mxu0 0
  %63 = vmatpush1.bf16.msra.mxu0 0
  %64 = vmatprep.subr.bf16.mxu0 0
  %65 = vmatpush1.bf16.msra.mxu0 0
  %66 = vmatprep.subr.bf16.mxu0 0
  %67 = vmatpush1.bf16.msra.mxu0 0
  %68 = vmatprep.subr.bf16.mxu0 0
  %69 = vmatpush1.bf16.msra.mxu0 0
  %70 = vmatprep.subr.bf16.mxu0 0
  %71 = vmatpush1.bf16.msra.mxu0 0
  %72 = vmatprep.subr.bf16.mxu0 0
  %73 = vmatpush1.bf16.msra.mxu0 0
  %74 = vmatprep.subr.bf16.mxu0 0
  %75 = vmatpush1.bf16.msra.mxu0 0
  %76 = vmatprep.subr.bf16.mxu0 0
  %77 = vmatpush1.bf16.msra.mxu0 0
  %78 = vmatprep.subr.bf16.mxu0 0
  %79 = vmatpush1.bf16.msra.mxu0 0
  %80 = vmatprep.subr.bf16.mxu0 0
  %81 = vmatpush1.bf16.msra.mxu0 0
  %82 = vmatprep.mubr.bf16.mxu0 0
  %83 = vmatmul.mubr.bf16.gmra.mrb[0].mxu0 %v48
  %v84 = vpop.f32.mrb[0].mxu0
  %v85 = vadd.f32 %v32, %v84
  %v86 = vpop.f32.mrb[0].mxu0
  %v87 = vpop.f32.mrb[0].mxu0
  %v88 = vpop.f32.mrb[0].mxu0
  %89 = vdwg.mxu0
  %v90 = vmax.f32 %v85, 0.0
  %v91 = vld [vmem:[%s3] sm:$0xf]
  %v92 = vld [vmem:[%s3 + $0x4] sm:$0xf]
  %v93 = vld [vmem:[%s3 + $0x8] sm:$0xf]
  %v94 = vld [vmem:[%s3 + $0xc] sm:$0xf]
  %v95 = vpack.c.bf16 %v90, %v90
  %v96 = vld [vmem:[%s4] sm:$0x1]
  %v98 = vlaneseq
  %v99 = vshrl.u32 %v98, 7
  %v100 = vsub.s32 0, %v99
  %v101 = vrot.slane %v96, %v100
  %v107 = vunpack.c.l.b16 %v91
  %v108 = vunpack.c.l.b16 %v92
  %v109 = vunpack.c.l.b16 %v93
  %v110 = vunpack.c.l.b16 %v94
  %v111 = vpack.c.b16 %v108, %v107
  %v112 = vpack.c.b16 %v110, %v109
  %v116 = vsel %vm46, %v95, 0
  %118 = vmatprep.subr.bf16.mxu0 0
  %119 = vmatpush1.bf16.msra.mxu0 %v111
  %120 = vmatprep.subr.bf16.mxu0 0
  %121 = vmatpush1.bf16.msra.mxu0 %v112
  %122 = vmatprep.subr.bf16.mxu0 0
  %123 = vmatpush1.bf16.msra.mxu0 0
  %124 = vmatprep.subr.bf16.mxu0 0
  %125 = vmatpush1.bf16.msra.mxu0 0
  %126 = vmatprep.subr.bf16.mxu0 0
  %127 = vmatpush1.bf16.msra.mxu0 0
  %128 = vmatprep.subr.bf16.mxu0 0
  %129 = vmatpush1.bf16.msra.mxu0 0
  %130 = vmatprep.subr.bf16.mxu0 0
  %131 = vmatpush1.bf16.msra.mxu0 0
  %132 = vmatprep.subr.bf16.mxu0 0
  %133 = vmatpush1.bf16.msra.mxu0 0
  %134 = vmatprep.subr.bf16.mxu0 0
  %135 = vmatpush1.bf16.msra.mxu0 0
  %136 = vmatprep.subr.bf16.mxu0 0
  %137 = vmatpush1.bf16.msra.mxu0 0
  %138 = vmatprep.subr.bf16.mxu0 0
  %139 = vmatpush1.bf16.msra.mxu0 0
  %140 = vmatprep.subr.bf16.mxu0 0
  %141 = vmatpush1.bf16.msra.mxu0 0
  %142 = vmatprep.subr.bf16.mxu0 0
  %143 = vmatpush1.bf16.msra.mxu0 0
  %144 = vmatprep.subr.bf16.mxu0 0
  %145 = vmatpush1.bf16.msra.mxu0 0
  %146 = vmatprep.subr.bf16.mxu0 0
  %147 = vmatpush1.bf16.msra.mxu0 0
  %148 = vmatprep.subr.bf16.mxu0 0
  %149 = vmatpush1.bf16.msra.mxu0 0
  %150 = vmatprep.mubr.bf16.mxu0 0
  %151 = vmatmul.mubr.bf16.gmra.mrb[0].mxu0 %v116
  %v152 = vpop.f32.mrb[0].mxu0
  %v153 = vadd.f32 %v101, %v152
  %v154 = vpop.f32.mrb[0].mxu0
  %v155 = vpop.f32.mrb[0].mxu0
  %v156 = vpop.f32.mrb[0].mxu0
  %157 = vdwg.mxu0
  %v158 = vsub.f32 0.0, %v153
  %v159 = vmul.f32 %v158, 1.442695
  %v160 = vpow.pop %v159
  %v161 = vadd.f32 %v160, 1.0
  %v162 = vrcp.pop %v161
  %v163 = vmul.f32 1.0, %v162
  %164 = vst [vmem:[%s5] sm:$0xff] %v163
  // Predicated region
  $region22: #{spatial_first_transformer_forward.19} parent=0 // pred_check
    _
  $region23: #{spatial_first_transformer_forward.19} parent=0 // pred_check_branch
    %166 = sbr.rel (0) target = $region25
  $region24: #{spatial_first_transformer_forward.19} parent=0 // pred_region
    _
  $region25: #{spatial_first_transformer_forward.19} parent=0 // pred_fallthru
    _
  // Predicated region
  $region26: #{spatial_first_transformer_forward.19} parent=0 // pred_check
    _
  $region27: #{spatial_first_transformer_forward.19} parent=0 // pred_check_branch
    %168 = sbr.rel (0) target = $region29
  $region28: #{spatial_first_transformer_forward.19} parent=0 // pred_region
    _
  $region29: #{spatial_first_transformer_forward.19} parent=0 // pred_fallthru
    _

</llo_original>
